<compile_context>
chip_gen: v7x
topology: tpu7x:2x2x1
jax: 0.10.0
libtpu: 0.0.40
codegen_flags: <defaults>
</compile_context>

<pallas_src>
import jax
import jax.numpy as jnp
from jax.experimental import pallas as pl
from jax.experimental.pallas import tpu as pltpu


_MAX_UNROLL = 64


def _unrolled_loop(n, body, carry):
    """Fully unroll short static recurrences; partial-unroll fori_loop otherwise."""
    if n <= _MAX_UNROLL:
        for i in range(n):
            carry = body(i, carry)
        return carry
    return jax.lax.fori_loop(0, n, body, carry, unroll=8)


# ----------------------------------------------------------------------------
# Fused kernel: GRU utterance encoder -> LSTM dialogue encoder -> q11 head.
# One grid step handles a chunk of BB dialogues.
# ----------------------------------------------------------------------------
def critic_fused_kernel(gi_ref,        # (L, BB*T, 3*Hu) f32  x@W_ih + b_ih (hoisted)
                        gru_whh_ref,   # (Hu, 3*Hu)      f32
                        gru_bhh_ref,   # (1, 3*Hu)       f32
                        gx_rest_ref,   # (BB, T, 4*H)    f32  [bs,db,act]@W + b (hoisted)
                        w_ctx_ref,     # (Hu, 4*H)       f32
                        lstm_whh_ref,  # (H, 4*H)        f32
                        qw_ref,        # (1, H)          f32
                        qb_ref,        # (1, 1)          f32
                        out_ref):      # (BB, T, 1)      f32
    L = gi_ref.shape[0]
    M = gi_ref.shape[1]                  # BB * T rows batched through the GRU
    Hu = gru_whh_ref.shape[0]
    H = lstm_whh_ref.shape[0]
    BB = gx_rest_ref.shape[0]
    T = gx_rest_ref.shape[1]

    # ---- Stage 1: GRU over L word positions, batched over BB*T turns -------
    gru_whh = gru_whh_ref[...]
    gru_bhh = gru_bhh_ref[...]

    def gru_step(l, h):
        gi = gi_ref[l]                                               # (M, 3Hu)
        gh = jnp.dot(h, gru_whh, preferred_element_type=jnp.float32) + gru_bhh
        r = jax.nn.sigmoid(gi[:, :Hu] + gh[:, :Hu])
        z = jax.nn.sigmoid(gi[:, Hu:2 * Hu] + gh[:, Hu:2 * Hu])
        n = jnp.tanh(gi[:, 2 * Hu:] + r * gh[:, 2 * Hu:])
        return (1.0 - z) * n + z * h

    ctx = _unrolled_loop(L, gru_step, jnp.zeros((M, Hu), jnp.float32))

    # ---- Stage 2: hoisted LSTM input projection (ctx part only; the skinny
    #               bs/db/act part was fused & precomputed in the wrapper) ----
    gx = jnp.dot(ctx, w_ctx_ref[...], preferred_element_type=jnp.float32)
    gx = gx.reshape(BB, T, 4 * H) + gx_rest_ref[...]                 # value, no scratch

    # ---- Stage 3: dialogue LSTM recurrence, M = BB dialogues in parallel ---
    lstm_whh = lstm_whh_ref[...]
    qw = qw_ref[...]
    qb = qb_ref[...]

    def lstm_step(t, carry):
        h, c = carry
        gates = gx[:, t, :] + jnp.dot(h, lstm_whh,
                                      preferred_element_type=jnp.float32)  # (BB, 4H)
        i = jax.nn.sigmoid(gates[:, :H])
        f = jax.nn.sigmoid(gates[:, H:2 * H])
        g = jnp.tanh(gates[:, 2 * H:3 * H])
        o = jax.nn.sigmoid(gates[:, 3 * H:])
        c = f * c + i * g
        h = o * jnp.tanh(c)
        # q11 folded into the loop (activation='none', maxq=None): lane reduce.
        q_t = jnp.sum(h * qw, axis=-1, keepdims=True) + qb           # (BB, 1)
        out_ref[:, pl.ds(t, 1), :] = q_t[:, :, None]
        return h, c

    _unrolled_loop(T, lstm_step, (jnp.zeros((BB, H), jnp.float32),
                                  jnp.zeros((BB, H), jnp.float32)))


# ----------------------------------------------------------------------------
# Critic forward over a batch of B dialogues.
# ----------------------------------------------------------------------------
def critic_forward(params, ctx_tokens, bs_label, db_label, act, *, block_b=None):
    B, T, L = ctx_tokens.shape
    Hu = params["gru_w_hh"].shape[0]
    H = params["lstm_w_hh"].shape[0]
    BS = bs_label.shape[2]
    DB = db_label.shape[2]

    if block_b is None:
        block_b = B // 2 if (B % 2 == 0 and B >= 2) else B
    assert B % block_b == 0
    assert (block_b * T) % 8 == 0 or block_b == B, "GRU row block must be 8-aligned"
    grid = (B // block_b,)

    f32 = jnp.float32
    # Embedding gather + GRU input projection: one lane-dense XLA matmul whose
    # result is (L, B*T, 3Hu), dialogue-major rows (matches the block chunking).
    emb = jnp.take(params["embed"], ctx_tokens, axis=0).astype(f32)   # (B, T, L, E)
    gi_all = (jnp.einsum("btle,eg->lbtg", emb, params["gru_w_ih"].astype(f32))
              .reshape(L, B * T, 3 * Hu)
              + params["gru_b_ih"])                                   # (L, B*T, 3Hu)

    # Fused skinny input projection (bs/db/act) hoisted to the wrapper.
    w_ih = params["lstm_w_ih"].astype(f32)
    w_ctx = w_ih[:Hu]                                                 # (Hu, 4H)
    w_rest = w_ih[Hu:]                                                # (BS+DB+A, 4H)
    sdb_act = jnp.concatenate([bs_label, db_label, act], axis=-1).astype(f32)
    gx_rest = (jnp.einsum("btk,kg->btg", sdb_act, w_rest)
               + params["lstm_b"])                                    # (B, T, 4H)

    q1 = pl.pallas_call(
        critic_fused_kernel,
        out_shape=jax.ShapeDtypeStruct((B, T, 1), jnp.float32),
        grid=grid,
        in_specs=[
            pl.BlockSpec((L, block_b * T, 3 * Hu), lambda b: (0, b, 0)),   # gi_all
            pl.BlockSpec((Hu, 3 * Hu), lambda b: (0, 0)),                  # gru_whh
            pl.BlockSpec((1, 3 * Hu), lambda b: (0, 0)),                   # gru_bhh
            pl.BlockSpec((block_b, T, 4 * H), lambda b: (b, 0, 0)),        # gx_rest
            pl.BlockSpec((Hu, 4 * H), lambda b: (0, 0)),                   # w_ctx
            pl.BlockSpec((H, 4 * H), lambda b: (0, 0)),                    # lstm_whh
            pl.BlockSpec((1, H), lambda b: (0, 0)),                        # q_w
            pl.BlockSpec((1, 1), lambda b: (0, 0)),                        # q_b
        ],
        out_specs=pl.BlockSpec((block_b, T, 1), lambda b: (b, 0, 0)),
        compiler_params=pltpu.CompilerParams(
            dimension_semantics=("parallel",)),       # 2 TCs on v7x; no-op elsewhere
    )(gi_all,
      params["gru_w_hh"].astype(f32), params["gru_b_hh"].astype(f32),
      gx_rest, w_ctx,
      params["lstm_w_hh"].astype(f32),
      params["q_w"].T.astype(f32), params["q_b"].astype(f32))
    return q1                                                         # (B, T, 1)


# ----------------------------------------------------------------------------
# Pure-JAX reference (same math, f32, lax.scan)
# ----------------------------------------------------------------------------
def reference_forward(params, ctx_tokens, bs_label, db_label, act):
    B, T, L = ctx_tokens.shape
    Hu = params["gru_w_hh"].shape[0]
    H = params["lstm_w_hh"].shape[0]

    emb = jnp.take(params["embed"], ctx_tokens, axis=0)               # (B, T, L, E)
    gi_all = (jnp.einsum("btle,eg->lbtg", emb, params["gru_w_ih"])
              .reshape(L, B * T, 3 * Hu)
              + params["gru_b_ih"])

    def gru_step(h, gi):
        gh = jnp.dot(h, params["gru_w_hh"]) + params["gru_b_hh"]
        r = jax.nn.sigmoid(gi[:, :Hu] + gh[:, :Hu])
        z = jax.nn.sigmoid(gi[:, Hu:2 * Hu] + gh[:, Hu:2 * Hu])
        n = jnp.tanh(gi[:, 2 * Hu:] + r * gh[:, 2 * Hu:])
        return (1.0 - z) * n + z * h, None

    ctx, _ = jax.lax.scan(gru_step, jnp.zeros((B * T, Hu), jnp.float32), gi_all)
    ctx = ctx.reshape(B, T, Hu)

    sa = jnp.concatenate([ctx, bs_label, db_label, act], axis=-1)     # (B, T, in)
    gx = jnp.einsum("btk,kg->btg", sa, params["lstm_w_ih"]) + params["lstm_b"]
    gx = jnp.swapaxes(gx, 0, 1)                                       # (T, B, 4H)

    def lstm_step(carry, gx_t):
        h, c = carry
        gates = gx_t + jnp.dot(h, params["lstm_w_hh"])
        i = jax.nn.sigmoid(gates[:, :H])
        f = jax.nn.sigmoid(gates[:, H:2 * H])
        g = jnp.tanh(gates[:, 2 * H:3 * H])
        o = jax.nn.sigmoid(gates[:, 3 * H:])
        c = f * c + i * g
        h = o * jnp.tanh(c)
        return (h, c), h

    (_, _), hs = jax.lax.scan(
        lstm_step,
        (jnp.zeros((B, H), jnp.float32), jnp.zeros((B, H), jnp.float32)),
        gx)                                                           # hs: (T, B, H)
    q = jnp.sum(hs * params["q_w"].T, axis=-1, keepdims=True) + params["q_b"]
    return jnp.swapaxes(q, 0, 1)                                      # (B, T, 1)


# ----------------------------------------------------------------------------
if __name__ == "__main__":
    # Small shapes consistent with the module (real model: hidden_size=500,
    # MultiWOZ bs_size=94, db_size=62, action_dim=y_size*k_size=200).
    B = 4          # dialogues per launch (wrapper-level batching)
    T = 8          # dialogue turns (LSTM sequence; batch=1 per dialogue)
    L = 16         # tokens per turn context
    V = 64         # vocab size
    E = 32         # word embedding dim
    Hu = 128       # utterance-encoder hidden = state_dim (lane-aligned)
    BS = 16        # bs_size
    DB = 8         # db_size
    A = 32         # action_dim (y_size=4 * k_size=8)
    H = 128        # dialogue_encoder hidden (module hardcodes 500)

    key = jax.random.PRNGKey(0)
    ks = jax.random.split(key, 16)
    s = 0.1
    params = {
        "embed":     s * jax.random.normal(ks[0], (V, E), jnp.float32),
        "gru_w_ih":  s * jax.random.normal(ks[1], (E, 3 * Hu), jnp.float32),
        "gru_w_hh":  s * jax.random.normal(ks[2], (Hu, 3 * Hu), jnp.float32),
        "gru_b_ih":  s * jax.random.normal(ks[3], (1, 3 * Hu), jnp.float32),
        "gru_b_hh":  s * jax.random.normal(ks[4], (1, 3 * Hu), jnp.float32),
        "lstm_w_ih": s * jax.random.normal(ks[5], (Hu + BS + DB + A, 4 * H), jnp.float32),
        "lstm_w_hh": s * jax.random.normal(ks[6], (H, 4 * H), jnp.float32),
        "lstm_b":    s * jax.random.normal(ks[7], (1, 4 * H), jnp.float32),
        "q_w":       s * jax.random.normal(ks[8], (H, 1), jnp.float32),
        "q_b":       s * jax.random.normal(ks[9], (1, 1), jnp.float32),
    }

    ctx_tokens = jax.random.randint(ks[10], (B, T, L), 0, V, jnp.int32)
    bs_label = (jax.random.uniform(ks[11], (B, T, BS)) > 0.5).astype(jnp.float32)
    db_label = (jax.random.uniform(ks[12], (B, T, DB)) > 0.5).astype(jnp.float32)
    act = jax.random.normal(ks[13], (B, T, A), jnp.float32)

    fwd = jax.jit(lambda p, c, b, d, a: critic_forward(p, c, b, d, a, block_b=2))
    q1 = fwd(params, ctx_tokens, bs_label, db_label, act)
    q1 = jax.block_until_ready(q1)

    q1_ref = reference_forward(params, ctx_tokens, bs_label, db_label, act)
    assert q1.shape == (B, T, 1)
    assert jnp.allclose(q1, q1_ref, rtol=1e-4, atol=1e-4), (q1, q1_ref)

    print("KERNEL_OK")
</pallas_src>

<mosaic_0001>
module attributes {stable_mosaic.version = 11 : i64} {
  func.func @critic_fused_kernel(%arg0: i32, %arg1: memref<16x16x384xf32, #tpu.memory_space<vmem>>, %arg2: memref<128x384xf32, #tpu.memory_space<vmem>>, %arg3: memref<1x384xf32, #tpu.memory_space<vmem>>, %arg4: memref<2x8x512xf32, #tpu.memory_space<vmem>>, %arg5: memref<128x512xf32, #tpu.memory_space<vmem>>, %arg6: memref<128x512xf32, #tpu.memory_space<vmem>>, %arg7: memref<1x128xf32, #tpu.memory_space<vmem>>, %arg8: memref<1x1xf32, #tpu.memory_space<vmem>>, %arg9: memref<2x8x1xf32, #tpu.memory_space<vmem>>) attributes {dimension_semantics = [#tpu.dimension_semantics<parallel>], iteration_bounds = array<i64: 2>, scalar_prefetch = 0 : i64, scratch_operands = 0 : i64, tpu.core_type = #tpu.core_type<tc>, window_params = [{transform_indices = @transform_0, window_bounds = array<i64: 16, 16, 384>}, {pipeline_mode = #tpu.pipeline_mode<synchronous>, transform_indices = @transform_1, window_bounds = array<i64: 128, 384>}, {pipeline_mode = #tpu.pipeline_mode<synchronous>, transform_indices = @transform_2, window_bounds = array<i64: 1, 384>}, {transform_indices = @transform_3, window_bounds = array<i64: 2, 8, 512>}, {pipeline_mode = #tpu.pipeline_mode<synchronous>, transform_indices = @transform_4, window_bounds = array<i64: 128, 512>}, {pipeline_mode = #tpu.pipeline_mode<synchronous>, transform_indices = @transform_5, window_bounds = array<i64: 128, 512>}, {pipeline_mode = #tpu.pipeline_mode<synchronous>, transform_indices = @transform_6, window_bounds = array<i64: 1, 128>}, {pipeline_mode = #tpu.pipeline_mode<synchronous>, transform_indices = @transform_7, window_bounds = array<i64: 1, 1>}, {transform_indices = @transform_8, window_bounds = array<i64: 2, 8, 1>}]} {
    %c0 = arith.constant 0 : index
    %c0_0 = arith.constant 0 : index
    %0 = vector.load %arg2[%c0, %c0_0] : memref<128x384xf32, #tpu.memory_space<vmem>>, vector<128x384xf32>
    %c0_1 = arith.constant 0 : index
    %c0_2 = arith.constant 0 : index
    %1 = vector.load %arg3[%c0_1, %c0_2] : memref<1x384xf32, #tpu.memory_space<vmem>>, vector<1x384xf32>
    %cst = arith.constant 0.000000e+00 : f32
    %2 = vector.broadcast %cst : f32 to vector<16x128xf32>
    %c0_3 = arith.constant 0 : index
    %c0_4 = arith.constant 0 : index
    %c0_5 = arith.constant 0 : index
    %3 = vector.load %arg1[%c0_3, %c0_4, %c0_5] : memref<16x16x384xf32, #tpu.memory_space<vmem>>, vector<1x16x384xf32>
    %4 = vector.shape_cast %3 : vector<1x16x384xf32> to vector<16x384xf32>
    %cst_6 = arith.constant dense<0.000000e+00> : vector<16x384xf32>
    %5 = tpu.matmul %2, %0, %cst_6 {dimension_numbers = #tpu.dot_dimension_numbers<[1], [0], [0], [1], [0, 0, 1, 1], [], []>} : vector<16x128xf32>, vector<128x384xf32>, vector<16x384xf32> -> vector<16x384xf32>
    %6 = vector.broadcast %1 : vector<1x384xf32> to vector<16x384xf32>
    %7 = arith.addf %5, %6 : vector<16x384xf32>
    %8 = vector.extract_strided_slice %4 {offsets = [0, 0], sizes = [16, 128], strides = [1, 1]} : vector<16x384xf32> to vector<16x128xf32>
    %9 = vector.extract_strided_slice %7 {offsets = [0, 0], sizes = [16, 128], strides = [1, 1]} : vector<16x384xf32> to vector<16x128xf32>
    %10 = arith.addf %8, %9 : vector<16x128xf32>
    %11 = arith.negf %10 : vector<16x128xf32>
    %12 = math.exp %11 : vector<16x128xf32>
    %cst_7 = arith.constant 1.000000e+00 : f32
    %13 = vector.broadcast %cst_7 : f32 to vector<16x128xf32>
    %14 = arith.addf %13, %12 : vector<16x128xf32>
    %15 = arith.divf %13, %14 : vector<16x128xf32>
    %16 = vector.extract_strided_slice %4 {offsets = [0, 128], sizes = [16, 128], strides = [1, 1]} : vector<16x384xf32> to vector<16x128xf32>
    %17 = vector.extract_strided_slice %7 {offsets = [0, 128], sizes = [16, 128], strides = [1, 1]} : vector<16x384xf32> to vector<16x128xf32>
    %18 = arith.addf %16, %17 : vector<16x128xf32>
    %19 = arith.negf %18 : vector<16x128xf32>
    %20 = math.exp %19 : vector<16x128xf32>
    %cst_8 = arith.constant 1.000000e+00 : f32
    %21 = vector.broadcast %cst_8 : f32 to vector<16x128xf32>
    %22 = arith.addf %21, %20 : vector<16x128xf32>
    %23 = arith.divf %21, %22 : vector<16x128xf32>
    %24 = vector.extract_strided_slice %4 {offsets = [0, 256], sizes = [16, 128], strides = [1, 1]} : vector<16x384xf32> to vector<16x128xf32>
    %25 = vector.extract_strided_slice %7 {offsets = [0, 256], sizes = [16, 128], strides = [1, 1]} : vector<16x384xf32> to vector<16x128xf32>
    %26 = arith.mulf %15, %25 : vector<16x128xf32>
    %27 = arith.addf %24, %26 : vector<16x128xf32>
    %28 = math.tanh %27 : vector<16x128xf32>
    %cst_9 = arith.constant 1.000000e+00 : f32
    %29 = vector.broadcast %cst_9 : f32 to vector<16x128xf32>
    %30 = arith.subf %29, %23 : vector<16x128xf32>
    %31 = arith.mulf %30, %28 : vector<16x128xf32>
    %32 = arith.mulf %23, %2 : vector<16x128xf32>
    %33 = arith.addf %31, %32 : vector<16x128xf32>
    %c1 = arith.constant 1 : index
    %c0_10 = arith.constant 0 : index
    %c0_11 = arith.constant 0 : index
    %34 = vector.load %arg1[%c1, %c0_10, %c0_11] : memref<16x16x384xf32, #tpu.memory_space<vmem>>, vector<1x16x384xf32>
    %35 = vector.shape_cast %34 : vector<1x16x384xf32> to vector<16x384xf32>
    %cst_12 = arith.constant dense<0.000000e+00> : vector<16x384xf32>
    %36 = tpu.matmul %33, %0, %cst_12 {dimension_numbers = #tpu.dot_dimension_numbers<[1], [0], [0], [1], [0, 0, 1, 1], [], []>} : vector<16x128xf32>, vector<128x384xf32>, vector<16x384xf32> -> vector<16x384xf32>
    %37 = vector.broadcast %1 : vector<1x384xf32> to vector<16x384xf32>
    %38 = arith.addf %36, %37 : vector<16x384xf32>
    %39 = vector.extract_strided_slice %35 {offsets = [0, 0], sizes = [16, 128], strides = [1, 1]} : vector<16x384xf32> to vector<16x128xf32>
    %40 = vector.extract_strided_slice %38 {offsets = [0, 0], sizes = [16, 128], strides = [1, 1]} : vector<16x384xf32> to vector<16x128xf32>
    %41 = arith.addf %39, %40 : vector<16x128xf32>
    %42 = arith.negf %41 : vector<16x128xf32>
    %43 = math.exp %42 : vector<16x128xf32>
    %cst_13 = arith.constant 1.000000e+00 : f32
    %44 = vector.broadcast %cst_13 : f32 to vector<16x128xf32>
    %45 = arith.addf %44, %43 : vector<16x128xf32>
    %46 = arith.divf %44, %45 : vector<16x128xf32>
    %47 = vector.extract_strided_slice %35 {offsets = [0, 128], sizes = [16, 128], strides = [1, 1]} : vector<16x384xf32> to vector<16x128xf32>
    %48 = vector.extract_strided_slice %38 {offsets = [0, 128], sizes = [16, 128], strides = [1, 1]} : vector<16x384xf32> to vector<16x128xf32>
    %49 = arith.addf %47, %48 : vector<16x128xf32>
    %50 = arith.negf %49 : vector<16x128xf32>
    %51 = math.exp %50 : vector<16x128xf32>
    %cst_14 = arith.constant 1.000000e+00 : f32
    %52 = vector.broadcast %cst_14 : f32 to vector<16x128xf32>
    %53 = arith.addf %52, %51 : vector<16x128xf32>
    %54 = arith.divf %52, %53 : vector<16x128xf32>
    %55 = vector.extract_strided_slice %35 {offsets = [0, 256], sizes = [16, 128], strides = [1, 1]} : vector<16x384xf32> to vector<16x128xf32>
    %56 = vector.extract_strided_slice %38 {offsets = [0, 256], sizes = [16, 128], strides = [1, 1]} : vector<16x384xf32> to vector<16x128xf32>
    %57 = arith.mulf %46, %56 : vector<16x128xf32>
    %58 = arith.addf %55, %57 : vector<16x128xf32>
    %59 = math.tanh %58 : vector<16x128xf32>
    %cst_15 = arith.constant 1.000000e+00 : f32
    %60 = vector.broadcast %cst_15 : f32 to vector<16x128xf32>
    %61 = arith.subf %60, %54 : vector<16x128xf32>
    %62 = arith.mulf %61, %59 : vector<16x128xf32>
    %63 = arith.mulf %54, %33 : vector<16x128xf32>
    %64 = arith.addf %62, %63 : vector<16x128xf32>
    %c2 = arith.constant 2 : index
    %c0_16 = arith.constant 0 : index
    %c0_17 = arith.constant 0 : index
    %65 = vector.load %arg1[%c2, %c0_16, %c0_17] : memref<16x16x384xf32, #tpu.memory_space<vmem>>, vector<1x16x384xf32>
    %66 = vector.shape_cast %65 : vector<1x16x384xf32> to vector<16x384xf32>
    %cst_18 = arith.constant dense<0.000000e+00> : vector<16x384xf32>
    %67 = tpu.matmul %64, %0, %cst_18 {dimension_numbers = #tpu.dot_dimension_numbers<[1], [0], [0], [1], [0, 0, 1, 1], [], []>} : vector<16x128xf32>, vector<128x384xf32>, vector<16x384xf32> -> vector<16x384xf32>
    %68 = vector.broadcast %1 : vector<1x384xf32> to vector<16x384xf32>
    %69 = arith.addf %67, %68 : vector<16x384xf32>
    %70 = vector.extract_strided_slice %66 {offsets = [0, 0], sizes = [16, 128], strides = [1, 1]} : vector<16x384xf32> to vector<16x128xf32>
    %71 = vector.extract_strided_slice %69 {offsets = [0, 0], sizes = [16, 128], strides = [1, 1]} : vector<16x384xf32> to vector<16x128xf32>
    %72 = arith.addf %70, %71 : vector<16x128xf32>
    %73 = arith.negf %72 : vector<16x128xf32>
    %74 = math.exp %73 : vector<16x128xf32>
    %cst_19 = arith.constant 1.000000e+00 : f32
    %75 = vector.broadcast %cst_19 : f32 to vector<16x128xf32>
    %76 = arith.addf %75, %74 : vector<16x128xf32>
    %77 = arith.divf %75, %76 : vector<16x128xf32>
    %78 = vector.extract_strided_slice %66 {offsets = [0, 128], sizes = [16, 128], strides = [1, 1]} : vector<16x384xf32> to vector<16x128xf32>
    %79 = vector.extract_strided_slice %69 {offsets = [0, 128], sizes = [16, 128], strides = [1, 1]} : vector<16x384xf32> to vector<16x128xf32>
    %80 = arith.addf %78, %79 : vector<16x128xf32>
    %81 = arith.negf %80 : vector<16x128xf32>
    %82 = math.exp %81 : vector<16x128xf32>
    %cst_20 = arith.constant 1.000000e+00 : f32
    %83 = vector.broadcast %cst_20 : f32 to vector<16x128xf32>
    %84 = arith.addf %83, %82 : vector<16x128xf32>
    %85 = arith.divf %83, %84 : vector<16x128xf32>
    %86 = vector.extract_strided_slice %66 {offsets = [0, 256], sizes = [16, 128], strides = [1, 1]} : vector<16x384xf32> to vector<16x128xf32>
    %87 = vector.extract_strided_slice %69 {offsets = [0, 256], sizes = [16, 128], strides = [1, 1]} : vector<16x384xf32> to vector<16x128xf32>
    %88 = arith.mulf %77, %87 : vector<16x128xf32>
    %89 = arith.addf %86, %88 : vector<16x128xf32>
    %90 = math.tanh %89 : vector<16x128xf32>
    %cst_21 = arith.constant 1.000000e+00 : f32
    %91 = vector.broadcast %cst_21 : f32 to vector<16x128xf32>
    %92 = arith.subf %91, %85 : vector<16x128xf32>
    %93 = arith.mulf %92, %90 : vector<16x128xf32>
    %94 = arith.mulf %85, %64 : vector<16x128xf32>
    %95 = arith.addf %93, %94 : vector<16x128xf32>
    %c3 = arith.constant 3 : index
    %c0_22 = arith.constant 0 : index
    %c0_23 = arith.constant 0 : index
    %96 = vector.load %arg1[%c3, %c0_22, %c0_23] : memref<16x16x384xf32, #tpu.memory_space<vmem>>, vector<1x16x384xf32>
    %97 = vector.shape_cast %96 : vector<1x16x384xf32> to vector<16x384xf32>
    %cst_24 = arith.constant dense<0.000000e+00> : vector<16x384xf32>
    %98 = tpu.matmul %95, %0, %cst_24 {dimension_numbers = #tpu.dot_dimension_numbers<[1], [0], [0], [1], [0, 0, 1, 1], [], []>} : vector<16x128xf32>, vector<128x384xf32>, vector<16x384xf32> -> vector<16x384xf32>
    %99 = vector.broadcast %1 : vector<1x384xf32> to vector<16x384xf32>
    %100 = arith.addf %98, %99 : vector<16x384xf32>
    %101 = vector.extract_strided_slice %97 {offsets = [0, 0], sizes = [16, 128], strides = [1, 1]} : vector<16x384xf32> to vector<16x128xf32>
    %102 = vector.extract_strided_slice %100 {offsets = [0, 0], sizes = [16, 128], strides = [1, 1]} : vector<16x384xf32> to vector<16x128xf32>
    %103 = arith.addf %101, %102 : vector<16x128xf32>
    %104 = arith.negf %103 : vector<16x128xf32>
    %105 = math.exp %104 : vector<16x128xf32>
    %cst_25 = arith.constant 1.000000e+00 : f32
    %106 = vector.broadcast %cst_25 : f32 to vector<16x128xf32>
    %107 = arith.addf %106, %105 : vector<16x128xf32>
    %108 = arith.divf %106, %107 : vector<16x128xf32>
    %109 = vector.extract_strided_slice %97 {offsets = [0, 128], sizes = [16, 128], strides = [1, 1]} : vector<16x384xf32> to vector<16x128xf32>
    %110 = vector.extract_strided_slice %100 {offsets = [0, 128], sizes = [16, 128], strides = [1, 1]} : vector<16x384xf32> to vector<16x128xf32>
    %111 = arith.addf %109, %110 : vector<16x128xf32>
    %112 = arith.negf %111 : vector<16x128xf32>
    %113 = math.exp %112 : vector<16x128xf32>
    %cst_26 = arith.constant 1.000000e+00 : f32
    %114 = vector.broadcast %cst_26 : f32 to vector<16x128xf32>
    %115 = arith.addf %114, %113 : vector<16x128xf32>
    %116 = arith.divf %114, %115 : vector<16x128xf32>
    %117 = vector.extract_strided_slice %97 {offsets = [0, 256], sizes = [16, 128], strides = [1, 1]} : vector<16x384xf32> to vector<16x128xf32>
    %118 = vector.extract_strided_slice %100 {offsets = [0, 256], sizes = [16, 128], strides = [1, 1]} : vector<16x384xf32> to vector<16x128xf32>
    %119 = arith.mulf %108, %118 : vector<16x128xf32>
    %120 = arith.addf %117, %119 : vector<16x128xf32>
    %121 = math.tanh %120 : vector<16x128xf32>
    %cst_27 = arith.constant 1.000000e+00 : f32
    %122 = vector.broadcast %cst_27 : f32 to vector<16x128xf32>
    %123 = arith.subf %122, %116 : vector<16x128xf32>
    %124 = arith.mulf %123, %121 : vector<16x128xf32>
    %125 = arith.mulf %116, %95 : vector<16x128xf32>
    %126 = arith.addf %124, %125 : vector<16x128xf32>
    %c4 = arith.constant 4 : index
    %c0_28 = arith.constant 0 : index
    %c0_29 = arith.constant 0 : index
    %127 = vector.load %arg1[%c4, %c0_28, %c0_29] : memref<16x16x384xf32, #tpu.memory_space<vmem>>, vector<1x16x384xf32>
    %128 = vector.shape_cast %127 : vector<1x16x384xf32> to vector<16x384xf32>
    %cst_30 = arith.constant dense<0.000000e+00> : vector<16x384xf32>
    %129 = tpu.matmul %126, %0, %cst_30 {dimension_numbers = #tpu.dot_dimension_numbers<[1], [0], [0], [1], [0, 0, 1, 1], [], []>} : vector<16x128xf32>, vector<128x384xf32>, vector<16x384xf32> -> vector<16x384xf32>
    %130 = vector.broadcast %1 : vector<1x384xf32> to vector<16x384xf32>
    %131 = arith.addf %129, %130 : vector<16x384xf32>
    %132 = vector.extract_strided_slice %128 {offsets = [0, 0], sizes = [16, 128], strides = [1, 1]} : vector<16x384xf32> to vector<16x128xf32>
    %133 = vector.extract_strided_slice %131 {offsets = [0, 0], sizes = [16, 128], strides = [1, 1]} : vector<16x384xf32> to vector<16x128xf32>
    %134 = arith.addf %132, %133 : vector<16x128xf32>
    %135 = arith.negf %134 : vector<16x128xf32>
    %136 = math.exp %135 : vector<16x128xf32>
    %cst_31 = arith.constant 1.000000e+00 : f32
    %137 = vector.broadcast %cst_31 : f32 to vector<16x128xf32>
    %138 = arith.addf %137, %136 : vector<16x128xf32>
    %139 = arith.divf %137, %138 : vector<16x128xf32>
    %140 = vector.extract_strided_slice %128 {offsets = [0, 128], sizes = [16, 128], strides = [1, 1]} : vector<16x384xf32> to vector<16x128xf32>
    %141 = vector.extract_strided_slice %131 {offsets = [0, 128], sizes = [16, 128], strides = [1, 1]} : vector<16x384xf32> to vector<16x128xf32>
    %142 = arith.addf %140, %141 : vector<16x128xf32>
    %143 = arith.negf %142 : vector<16x128xf32>
    %144 = math.exp %143 : vector<16x128xf32>
    %cst_32 = arith.constant 1.000000e+00 : f32
    %145 = vector.broadcast %cst_32 : f32 to vector<16x128xf32>
    %146 = arith.addf %145, %144 : vector<16x128xf32>
    %147 = arith.divf %145, %146 : vector<16x128xf32>
    %148 = vector.extract_strided_slice %128 {offsets = [0, 256], sizes = [16, 128], strides = [1, 1]} : vector<16x384xf32> to vector<16x128xf32>
    %149 = vector.extract_strided_slice %131 {offsets = [0, 256], sizes = [16, 128], strides = [1, 1]} : vector<16x384xf32> to vector<16x128xf32>
    %150 = arith.mulf %139, %149 : vector<16x128xf32>
    %151 = arith.addf %148, %150 : vector<16x128xf32>
    %152 = math.tanh %151 : vector<16x128xf32>
    %cst_33 = arith.constant 1.000000e+00 : f32
    %153 = vector.broadcast %cst_33 : f32 to vector<16x128xf32>
    %154 = arith.subf %153, %147 : vector<16x128xf32>
    %155 = arith.mulf %154, %152 : vector<16x128xf32>
    %156 = arith.mulf %147, %126 : vector<16x128xf32>
    %157 = arith.addf %155, %156 : vector<16x128xf32>
    %c5 = arith.constant 5 : index
    %c0_34 = arith.constant 0 : index
    %c0_35 = arith.constant 0 : index
    %158 = vector.load %arg1[%c5, %c0_34, %c0_35] : memref<16x16x384xf32, #tpu.memory_space<vmem>>, vector<1x16x384xf32>
    %159 = vector.shape_cast %158 : vector<1x16x384xf32> to vector<16x384xf32>
    %cst_36 = arith.constant dense<0.000000e+00> : vector<16x384xf32>
    %160 = tpu.matmul %157, %0, %cst_36 {dimension_numbers = #tpu.dot_dimension_numbers<[1], [0], [0], [1], [0, 0, 1, 1], [], []>} : vector<16x128xf32>, vector<128x384xf32>, vector<16x384xf32> -> vector<16x384xf32>
    %161 = vector.broadcast %1 : vector<1x384xf32> to vector<16x384xf32>
    %162 = arith.addf %160, %161 : vector<16x384xf32>
    %163 = vector.extract_strided_slice %159 {offsets = [0, 0], sizes = [16, 128], strides = [1, 1]} : vector<16x384xf32> to vector<16x128xf32>
    %164 = vector.extract_strided_slice %162 {offsets = [0, 0], sizes = [16, 128], strides = [1, 1]} : vector<16x384xf32> to vector<16x128xf32>
    %165 = arith.addf %163, %164 : vector<16x128xf32>
    %166 = arith.negf %165 : vector<16x128xf32>
    %167 = math.exp %166 : vector<16x128xf32>
    %cst_37 = arith.constant 1.000000e+00 : f32
    %168 = vector.broadcast %cst_37 : f32 to vector<16x128xf32>
    %169 = arith.addf %168, %167 : vector<16x128xf32>
    %170 = arith.divf %168, %169 : vector<16x128xf32>
    %171 = vector.extract_strided_slice %159 {offsets = [0, 128], sizes = [16, 128], strides = [1, 1]} : vector<16x384xf32> to vector<16x128xf32>
    %172 = vector.extract_strided_slice %162 {offsets = [0, 128], sizes = [16, 128], strides = [1, 1]} : vector<16x384xf32> to vector<16x128xf32>
    %173 = arith.addf %171, %172 : vector<16x128xf32>
    %174 = arith.negf %173 : vector<16x128xf32>
    %175 = math.exp %174 : vector<16x128xf32>
    %cst_38 = arith.constant 1.000000e+00 : f32
    %176 = vector.broadcast %cst_38 : f32 to vector<16x128xf32>
    %177 = arith.addf %176, %175 : vector<16x128xf32>
    %178 = arith.divf %176, %177 : vector<16x128xf32>
    %179 = vector.extract_strided_slice %159 {offsets = [0, 256], sizes = [16, 128], strides = [1, 1]} : vector<16x384xf32> to vector<16x128xf32>
    %180 = vector.extract_strided_slice %162 {offsets = [0, 256], sizes = [16, 128], strides = [1, 1]} : vector<16x384xf32> to vector<16x128xf32>
    %181 = arith.mulf %170, %180 : vector<16x128xf32>
    %182 = arith.addf %179, %181 : vector<16x128xf32>
    %183 = math.tanh %182 : vector<16x128xf32>
    %cst_39 = arith.constant 1.000000e+00 : f32
    %184 = vector.broadcast %cst_39 : f32 to vector<16x128xf32>
    %185 = arith.subf %184, %178 : vector<16x128xf32>
    %186 = arith.mulf %185, %183 : vector<16x128xf32>
    %187 = arith.mulf %178, %157 : vector<16x128xf32>
    %188 = arith.addf %186, %187 : vector<16x128xf32>
    %c6 = arith.constant 6 : index
    %c0_40 = arith.constant 0 : index
    %c0_41 = arith.constant 0 : index
    %189 = vector.load %arg1[%c6, %c0_40, %c0_41] : memref<16x16x384xf32, #tpu.memory_space<vmem>>, vector<1x16x384xf32>
    %190 = vector.shape_cast %189 : vector<1x16x384xf32> to vector<16x384xf32>
    %cst_42 = arith.constant dense<0.000000e+00> : vector<16x384xf32>
    %191 = tpu.matmul %188, %0, %cst_42 {dimension_numbers = #tpu.dot_dimension_numbers<[1], [0], [0], [1], [0, 0, 1, 1], [], []>} : vector<16x128xf32>, vector<128x384xf32>, vector<16x384xf32> -> vector<16x384xf32>
    %192 = vector.broadcast %1 : vector<1x384xf32> to vector<16x384xf32>
    %193 = arith.addf %191, %192 : vector<16x384xf32>
    %194 = vector.extract_strided_slice %190 {offsets = [0, 0], sizes = [16, 128], strides = [1, 1]} : vector<16x384xf32> to vector<16x128xf32>
    %195 = vector.extract_strided_slice %193 {offsets = [0, 0], sizes = [16, 128], strides = [1, 1]} : vector<16x384xf32> to vector<16x128xf32>
    %196 = arith.addf %194, %195 : vector<16x128xf32>
    %197 = arith.negf %196 : vector<16x128xf32>
    %198 = math.exp %197 : vector<16x128xf32>
    %cst_43 = arith.constant 1.000000e+00 : f32
    %199 = vector.broadcast %cst_43 : f32 to vector<16x128xf32>
    %200 = arith.addf %199, %198 : vector<16x128xf32>
    %201 = arith.divf %199, %200 : vector<16x128xf32>
    %202 = vector.extract_strided_slice %190 {offsets = [0, 128], sizes = [16, 128], strides = [1, 1]} : vector<16x384xf32> to vector<16x128xf32>
    %203 = vector.extract_strided_slice %193 {offsets = [0, 128], sizes = [16, 128], strides = [1, 1]} : vector<16x384xf32> to vector<16x128xf32>
    %204 = arith.addf %202, %203 : vector<16x128xf32>
    %205 = arith.negf %204 : vector<16x128xf32>
    %206 = math.exp %205 : vector<16x128xf32>
    %cst_44 = arith.constant 1.000000e+00 : f32
    %207 = vector.broadcast %cst_44 : f32 to vector<16x128xf32>
    %208 = arith.addf %207, %206 : vector<16x128xf32>
    %209 = arith.divf %207, %208 : vector<16x128xf32>
    %210 = vector.extract_strided_slice %190 {offsets = [0, 256], sizes = [16, 128], strides = [1, 1]} : vector<16x384xf32> to vector<16x128xf32>
    %211 = vector.extract_strided_slice %193 {offsets = [0, 256], sizes = [16, 128], strides = [1, 1]} : vector<16x384xf32> to vector<16x128xf32>
    %212 = arith.mulf %201, %211 : vector<16x128xf32>
    %213 = arith.addf %210, %212 : vector<16x128xf32>
    %214 = math.tanh %213 : vector<16x128xf32>
    %cst_45 = arith.constant 1.000000e+00 : f32
    %215 = vector.broadcast %cst_45 : f32 to vector<16x128xf32>
    %216 = arith.subf %215, %209 : vector<16x128xf32>
    %217 = arith.mulf %216, %214 : vector<16x128xf32>
    %218 = arith.mulf %209, %188 : vector<16x128xf32>
    %219 = arith.addf %217, %218 : vector<16x128xf32>
    %c7 = arith.constant 7 : index
    %c0_46 = arith.constant 0 : index
    %c0_47 = arith.constant 0 : index
    %220 = vector.load %arg1[%c7, %c0_46, %c0_47] : memref<16x16x384xf32, #tpu.memory_space<vmem>>, vector<1x16x384xf32>
    %221 = vector.shape_cast %220 : vector<1x16x384xf32> to vector<16x384xf32>
    %cst_48 = arith.constant dense<0.000000e+00> : vector<16x384xf32>
    %222 = tpu.matmul %219, %0, %cst_48 {dimension_numbers = #tpu.dot_dimension_numbers<[1], [0], [0], [1], [0, 0, 1, 1], [], []>} : vector<16x128xf32>, vector<128x384xf32>, vector<16x384xf32> -> vector<16x384xf32>
    %223 = vector.broadcast %1 : vector<1x384xf32> to vector<16x384xf32>
    %224 = arith.addf %222, %223 : vector<16x384xf32>
    %225 = vector.extract_strided_slice %221 {offsets = [0, 0], sizes = [16, 128], strides = [1, 1]} : vector<16x384xf32> to vector<16x128xf32>
    %226 = vector.extract_strided_slice %224 {offsets = [0, 0], sizes = [16, 128], strides = [1, 1]} : vector<16x384xf32> to vector<16x128xf32>
    %227 = arith.addf %225, %226 : vector<16x128xf32>
    %228 = arith.negf %227 : vector<16x128xf32>
    %229 = math.exp %228 : vector<16x128xf32>
    %cst_49 = arith.constant 1.000000e+00 : f32
    %230 = vector.broadcast %cst_49 : f32 to vector<16x128xf32>
    %231 = arith.addf %230, %229 : vector<16x128xf32>
    %232 = arith.divf %230, %231 : vector<16x128xf32>
    %233 = vector.extract_strided_slice %221 {offsets = [0, 128], sizes = [16, 128], strides = [1, 1]} : vector<16x384xf32> to vector<16x128xf32>
    %234 = vector.extract_strided_slice %224 {offsets = [0, 128], sizes = [16, 128], strides = [1, 1]} : vector<16x384xf32> to vector<16x128xf32>
    %235 = arith.addf %233, %234 : vector<16x128xf32>
    %236 = arith.negf %235 : vector<16x128xf32>
    %237 = math.exp %236 : vector<16x128xf32>
    %cst_50 = arith.constant 1.000000e+00 : f32
    %238 = vector.broadcast %cst_50 : f32 to vector<16x128xf32>
    %239 = arith.addf %238, %237 : vector<16x128xf32>
    %240 = arith.divf %238, %239 : vector<16x128xf32>
    %241 = vector.extract_strided_slice %221 {offsets = [0, 256], sizes = [16, 128], strides = [1, 1]} : vector<16x384xf32> to vector<16x128xf32>
    %242 = vector.extract_strided_slice %224 {offsets = [0, 256], sizes = [16, 128], strides = [1, 1]} : vector<16x384xf32> to vector<16x128xf32>
    %243 = arith.mulf %232, %242 : vector<16x128xf32>
    %244 = arith.addf %241, %243 : vector<16x128xf32>
    %245 = math.tanh %244 : vector<16x128xf32>
    %cst_51 = arith.constant 1.000000e+00 : f32
    %246 = vector.broadcast %cst_51 : f32 to vector<16x128xf32>
    %247 = arith.subf %246, %240 : vector<16x128xf32>
    %248 = arith.mulf %247, %245 : vector<16x128xf32>
    %249 = arith.mulf %240, %219 : vector<16x128xf32>
    %250 = arith.addf %248, %249 : vector<16x128xf32>
    %c8 = arith.constant 8 : index
    %c0_52 = arith.constant 0 : index
    %c0_53 = arith.constant 0 : index
    %251 = vector.load %arg1[%c8, %c0_52, %c0_53] : memref<16x16x384xf32, #tpu.memory_space<vmem>>, vector<1x16x384xf32>
    %252 = vector.shape_cast %251 : vector<1x16x384xf32> to vector<16x384xf32>
    %cst_54 = arith.constant dense<0.000000e+00> : vector<16x384xf32>
    %253 = tpu.matmul %250, %0, %cst_54 {dimension_numbers = #tpu.dot_dimension_numbers<[1], [0], [0], [1], [0, 0, 1, 1], [], []>} : vector<16x128xf32>, vector<128x384xf32>, vector<16x384xf32> -> vector<16x384xf32>
    %254 = vector.broadcast %1 : vector<1x384xf32> to vector<16x384xf32>
    %255 = arith.addf %253, %254 : vector<16x384xf32>
    %256 = vector.extract_strided_slice %252 {offsets = [0, 0], sizes = [16, 128], strides = [1, 1]} : vector<16x384xf32> to vector<16x128xf32>
    %257 = vector.extract_strided_slice %255 {offsets = [0, 0], sizes = [16, 128], strides = [1, 1]} : vector<16x384xf32> to vector<16x128xf32>
    %258 = arith.addf %256, %257 : vector<16x128xf32>
    %259 = arith.negf %258 : vector<16x128xf32>
    %260 = math.exp %259 : vector<16x128xf32>
    %cst_55 = arith.constant 1.000000e+00 : f32
    %261 = vector.broadcast %cst_55 : f32 to vector<16x128xf32>
    %262 = arith.addf %261, %260 : vector<16x128xf32>
    %263 = arith.divf %261, %262 : vector<16x128xf32>
    %264 = vector.extract_strided_slice %252 {offsets = [0, 128], sizes = [16, 128], strides = [1, 1]} : vector<16x384xf32> to vector<16x128xf32>
    %265 = vector.extract_strided_slice %255 {offsets = [0, 128], sizes = [16, 128], strides = [1, 1]} : vector<16x384xf32> to vector<16x128xf32>
    %266 = arith.addf %264, %265 : vector<16x128xf32>
    %267 = arith.negf %266 : vector<16x128xf32>
    %268 = math.exp %267 : vector<16x128xf32>
    %cst_56 = arith.constant 1.000000e+00 : f32
    %269 = vector.broadcast %cst_56 : f32 to vector<16x128xf32>
    %270 = arith.addf %269, %268 : vector<16x128xf32>
    %271 = arith.divf %269, %270 : vector<16x128xf32>
    %272 = vector.extract_strided_slice %252 {offsets = [0, 256], sizes = [16, 128], strides = [1, 1]} : vector<16x384xf32> to vector<16x128xf32>
    %273 = vector.extract_strided_slice %255 {offsets = [0, 256], sizes = [16, 128], strides = [1, 1]} : vector<16x384xf32> to vector<16x128xf32>
    %274 = arith.mulf %263, %273 : vector<16x128xf32>
    %275 = arith.addf %272, %274 : vector<16x128xf32>
    %276 = math.tanh %275 : vector<16x128xf32>
    %cst_57 = arith.constant 1.000000e+00 : f32
    %277 = vector.broadcast %cst_57 : f32 to vector<16x128xf32>
    %278 = arith.subf %277, %271 : vector<16x128xf32>
    %279 = arith.mulf %278, %276 : vector<16x128xf32>
    %280 = arith.mulf %271, %250 : vector<16x128xf32>
    %281 = arith.addf %279, %280 : vector<16x128xf32>
    %c9 = arith.constant 9 : index
    %c0_58 = arith.constant 0 : index
    %c0_59 = arith.constant 0 : index
    %282 = vector.load %arg1[%c9, %c0_58, %c0_59] : memref<16x16x384xf32, #tpu.memory_space<vmem>>, vector<1x16x384xf32>
    %283 = vector.shape_cast %282 : vector<1x16x384xf32> to vector<16x384xf32>
    %cst_60 = arith.constant dense<0.000000e+00> : vector<16x384xf32>
    %284 = tpu.matmul %281, %0, %cst_60 {dimension_numbers = #tpu.dot_dimension_numbers<[1], [0], [0], [1], [0, 0, 1, 1], [], []>} : vector<16x128xf32>, vector<128x384xf32>, vector<16x384xf32> -> vector<16x384xf32>
    %285 = vector.broadcast %1 : vector<1x384xf32> to vector<16x384xf32>
    %286 = arith.addf %284, %285 : vector<16x384xf32>
    %287 = vector.extract_strided_slice %283 {offsets = [0, 0], sizes = [16, 128], strides = [1, 1]} : vector<16x384xf32> to vector<16x128xf32>
    %288 = vector.extract_strided_slice %286 {offsets = [0, 0], sizes = [16, 128], strides = [1, 1]} : vector<16x384xf32> to vector<16x128xf32>
    %289 = arith.addf %287, %288 : vector<16x128xf32>
    %290 = arith.negf %289 : vector<16x128xf32>
    %291 = math.exp %290 : vector<16x128xf32>
    %cst_61 = arith.constant 1.000000e+00 : f32
    %292 = vector.broadcast %cst_61 : f32 to vector<16x128xf32>
    %293 = arith.addf %292, %291 : vector<16x128xf32>
    %294 = arith.divf %292, %293 : vector<16x128xf32>
    %295 = vector.extract_strided_slice %283 {offsets = [0, 128], sizes = [16, 128], strides = [1, 1]} : vector<16x384xf32> to vector<16x128xf32>
    %296 = vector.extract_strided_slice %286 {offsets = [0, 128], sizes = [16, 128], strides = [1, 1]} : vector<16x384xf32> to vector<16x128xf32>
    %297 = arith.addf %295, %296 : vector<16x128xf32>
    %298 = arith.negf %297 : vector<16x128xf32>
    %299 = math.exp %298 : vector<16x128xf32>
    %cst_62 = arith.constant 1.000000e+00 : f32
    %300 = vector.broadcast %cst_62 : f32 to vector<16x128xf32>
    %301 = arith.addf %300, %299 : vector<16x128xf32>
    %302 = arith.divf %300, %301 : vector<16x128xf32>
    %303 = vector.extract_strided_slice %283 {offsets = [0, 256], sizes = [16, 128], strides = [1, 1]} : vector<16x384xf32> to vector<16x128xf32>
    %304 = vector.extract_strided_slice %286 {offsets = [0, 256], sizes = [16, 128], strides = [1, 1]} : vector<16x384xf32> to vector<16x128xf32>
    %305 = arith.mulf %294, %304 : vector<16x128xf32>
    %306 = arith.addf %303, %305 : vector<16x128xf32>
    %307 = math.tanh %306 : vector<16x128xf32>
    %cst_63 = arith.constant 1.000000e+00 : f32
    %308 = vector.broadcast %cst_63 : f32 to vector<16x128xf32>
    %309 = arith.subf %308, %302 : vector<16x128xf32>
    %310 = arith.mulf %309, %307 : vector<16x128xf32>
    %311 = arith.mulf %302, %281 : vector<16x128xf32>
    %312 = arith.addf %310, %311 : vector<16x128xf32>
    %c10 = arith.constant 10 : index
    %c0_64 = arith.constant 0 : index
    %c0_65 = arith.constant 0 : index
    %313 = vector.load %arg1[%c10, %c0_64, %c0_65] : memref<16x16x384xf32, #tpu.memory_space<vmem>>, vector<1x16x384xf32>
    %314 = vector.shape_cast %313 : vector<1x16x384xf32> to vector<16x384xf32>
    %cst_66 = arith.constant dense<0.000000e+00> : vector<16x384xf32>
    %315 = tpu.matmul %312, %0, %cst_66 {dimension_numbers = #tpu.dot_dimension_numbers<[1], [0], [0], [1], [0, 0, 1, 1], [], []>} : vector<16x128xf32>, vector<128x384xf32>, vector<16x384xf32> -> vector<16x384xf32>
    %316 = vector.broadcast %1 : vector<1x384xf32> to vector<16x384xf32>
    %317 = arith.addf %315, %316 : vector<16x384xf32>
    %318 = vector.extract_strided_slice %314 {offsets = [0, 0], sizes = [16, 128], strides = [1, 1]} : vector<16x384xf32> to vector<16x128xf32>
    %319 = vector.extract_strided_slice %317 {offsets = [0, 0], sizes = [16, 128], strides = [1, 1]} : vector<16x384xf32> to vector<16x128xf32>
    %320 = arith.addf %318, %319 : vector<16x128xf32>
    %321 = arith.negf %320 : vector<16x128xf32>
    %322 = math.exp %321 : vector<16x128xf32>
    %cst_67 = arith.constant 1.000000e+00 : f32
    %323 = vector.broadcast %cst_67 : f32 to vector<16x128xf32>
    %324 = arith.addf %323, %322 : vector<16x128xf32>
    %325 = arith.divf %323, %324 : vector<16x128xf32>
    %326 = vector.extract_strided_slice %314 {offsets = [0, 128], sizes = [16, 128], strides = [1, 1]} : vector<16x384xf32> to vector<16x128xf32>
    %327 = vector.extract_strided_slice %317 {offsets = [0, 128], sizes = [16, 128], strides = [1, 1]} : vector<16x384xf32> to vector<16x128xf32>
    %328 = arith.addf %326, %327 : vector<16x128xf32>
    %329 = arith.negf %328 : vector<16x128xf32>
    %330 = math.exp %329 : vector<16x128xf32>
    %cst_68 = arith.constant 1.000000e+00 : f32
    %331 = vector.broadcast %cst_68 : f32 to vector<16x128xf32>
    %332 = arith.addf %331, %330 : vector<16x128xf32>
    %333 = arith.divf %331, %332 : vector<16x128xf32>
    %334 = vector.extract_strided_slice %314 {offsets = [0, 256], sizes = [16, 128], strides = [1, 1]} : vector<16x384xf32> to vector<16x128xf32>
    %335 = vector.extract_strided_slice %317 {offsets = [0, 256], sizes = [16, 128], strides = [1, 1]} : vector<16x384xf32> to vector<16x128xf32>
    %336 = arith.mulf %325, %335 : vector<16x128xf32>
    %337 = arith.addf %334, %336 : vector<16x128xf32>
    %338 = math.tanh %337 : vector<16x128xf32>
    %cst_69 = arith.constant 1.000000e+00 : f32
    %339 = vector.broadcast %cst_69 : f32 to vector<16x128xf32>
    %340 = arith.subf %339, %333 : vector<16x128xf32>
    %341 = arith.mulf %340, %338 : vector<16x128xf32>
    %342 = arith.mulf %333, %312 : vector<16x128xf32>
    %343 = arith.addf %341, %342 : vector<16x128xf32>
    %c11 = arith.constant 11 : index
    %c0_70 = arith.constant 0 : index
    %c0_71 = arith.constant 0 : index
    %344 = vector.load %arg1[%c11, %c0_70, %c0_71] : memref<16x16x384xf32, #tpu.memory_space<vmem>>, vector<1x16x384xf32>
    %345 = vector.shape_cast %344 : vector<1x16x384xf32> to vector<16x384xf32>
    %cst_72 = arith.constant dense<0.000000e+00> : vector<16x384xf32>
    %346 = tpu.matmul %343, %0, %cst_72 {dimension_numbers = #tpu.dot_dimension_numbers<[1], [0], [0], [1], [0, 0, 1, 1], [], []>} : vector<16x128xf32>, vector<128x384xf32>, vector<16x384xf32> -> vector<16x384xf32>
    %347 = vector.broadcast %1 : vector<1x384xf32> to vector<16x384xf32>
    %348 = arith.addf %346, %347 : vector<16x384xf32>
    %349 = vector.extract_strided_slice %345 {offsets = [0, 0], sizes = [16, 128], strides = [1, 1]} : vector<16x384xf32> to vector<16x128xf32>
    %350 = vector.extract_strided_slice %348 {offsets = [0, 0], sizes = [16, 128], strides = [1, 1]} : vector<16x384xf32> to vector<16x128xf32>
    %351 = arith.addf %349, %350 : vector<16x128xf32>
    %352 = arith.negf %351 : vector<16x128xf32>
    %353 = math.exp %352 : vector<16x128xf32>
    %cst_73 = arith.constant 1.000000e+00 : f32
    %354 = vector.broadcast %cst_73 : f32 to vector<16x128xf32>
    %355 = arith.addf %354, %353 : vector<16x128xf32>
    %356 = arith.divf %354, %355 : vector<16x128xf32>
    %357 = vector.extract_strided_slice %345 {offsets = [0, 128], sizes = [16, 128], strides = [1, 1]} : vector<16x384xf32> to vector<16x128xf32>
    %358 = vector.extract_strided_slice %348 {offsets = [0, 128], sizes = [16, 128], strides = [1, 1]} : vector<16x384xf32> to vector<16x128xf32>
    %359 = arith.addf %357, %358 : vector<16x128xf32>
    %360 = arith.negf %359 : vector<16x128xf32>
    %361 = math.exp %360 : vector<16x128xf32>
    %cst_74 = arith.constant 1.000000e+00 : f32
    %362 = vector.broadcast %cst_74 : f32 to vector<16x128xf32>
    %363 = arith.addf %362, %361 : vector<16x128xf32>
    %364 = arith.divf %362, %363 : vector<16x128xf32>
    %365 = vector.extract_strided_slice %345 {offsets = [0, 256], sizes = [16, 128], strides = [1, 1]} : vector<16x384xf32> to vector<16x128xf32>
    %366 = vector.extract_strided_slice %348 {offsets = [0, 256], sizes = [16, 128], strides = [1, 1]} : vector<16x384xf32> to vector<16x128xf32>
    %367 = arith.mulf %356, %366 : vector<16x128xf32>
    %368 = arith.addf %365, %367 : vector<16x128xf32>
    %369 = math.tanh %368 : vector<16x128xf32>
    %cst_75 = arith.constant 1.000000e+00 : f32
    %370 = vector.broadcast %cst_75 : f32 to vector<16x128xf32>
    %371 = arith.subf %370, %364 : vector<16x128xf32>
    %372 = arith.mulf %371, %369 : vector<16x128xf32>
    %373 = arith.mulf %364, %343 : vector<16x128xf32>
    %374 = arith.addf %372, %373 : vector<16x128xf32>
    %c12 = arith.constant 12 : index
    %c0_76 = arith.constant 0 : index
    %c0_77 = arith.constant 0 : index
    %375 = vector.load %arg1[%c12, %c0_76, %c0_77] : memref<16x16x384xf32, #tpu.memory_space<vmem>>, vector<1x16x384xf32>
    %376 = vector.shape_cast %375 : vector<1x16x384xf32> to vector<16x384xf32>
    %cst_78 = arith.constant dense<0.000000e+00> : vector<16x384xf32>
    %377 = tpu.matmul %374, %0, %cst_78 {dimension_numbers = #tpu.dot_dimension_numbers<[1], [0], [0], [1], [0, 0, 1, 1], [], []>} : vector<16x128xf32>, vector<128x384xf32>, vector<16x384xf32> -> vector<16x384xf32>
    %378 = vector.broadcast %1 : vector<1x384xf32> to vector<16x384xf32>
    %379 = arith.addf %377, %378 : vector<16x384xf32>
    %380 = vector.extract_strided_slice %376 {offsets = [0, 0], sizes = [16, 128], strides = [1, 1]} : vector<16x384xf32> to vector<16x128xf32>
    %381 = vector.extract_strided_slice %379 {offsets = [0, 0], sizes = [16, 128], strides = [1, 1]} : vector<16x384xf32> to vector<16x128xf32>
    %382 = arith.addf %380, %381 : vector<16x128xf32>
    %383 = arith.negf %382 : vector<16x128xf32>
    %384 = math.exp %383 : vector<16x128xf32>
    %cst_79 = arith.constant 1.000000e+00 : f32
    %385 = vector.broadcast %cst_79 : f32 to vector<16x128xf32>
    %386 = arith.addf %385, %384 : vector<16x128xf32>
    %387 = arith.divf %385, %386 : vector<16x128xf32>
    %388 = vector.extract_strided_slice %376 {offsets = [0, 128], sizes = [16, 128], strides = [1, 1]} : vector<16x384xf32> to vector<16x128xf32>
    %389 = vector.extract_strided_slice %379 {offsets = [0, 128], sizes = [16, 128], strides = [1, 1]} : vector<16x384xf32> to vector<16x128xf32>
    %390 = arith.addf %388, %389 : vector<16x128xf32>
    %391 = arith.negf %390 : vector<16x128xf32>
    %392 = math.exp %391 : vector<16x128xf32>
    %cst_80 = arith.constant 1.000000e+00 : f32
    %393 = vector.broadcast %cst_80 : f32 to vector<16x128xf32>
    %394 = arith.addf %393, %392 : vector<16x128xf32>
    %395 = arith.divf %393, %394 : vector<16x128xf32>
    %396 = vector.extract_strided_slice %376 {offsets = [0, 256], sizes = [16, 128], strides = [1, 1]} : vector<16x384xf32> to vector<16x128xf32>
    %397 = vector.extract_strided_slice %379 {offsets = [0, 256], sizes = [16, 128], strides = [1, 1]} : vector<16x384xf32> to vector<16x128xf32>
    %398 = arith.mulf %387, %397 : vector<16x128xf32>
    %399 = arith.addf %396, %398 : vector<16x128xf32>
    %400 = math.tanh %399 : vector<16x128xf32>
    %cst_81 = arith.constant 1.000000e+00 : f32
    %401 = vector.broadcast %cst_81 : f32 to vector<16x128xf32>
    %402 = arith.subf %401, %395 : vector<16x128xf32>
    %403 = arith.mulf %402, %400 : vector<16x128xf32>
    %404 = arith.mulf %395, %374 : vector<16x128xf32>
    %405 = arith.addf %403, %404 : vector<16x128xf32>
    %c13 = arith.constant 13 : index
    %c0_82 = arith.constant 0 : index
    %c0_83 = arith.constant 0 : index
    %406 = vector.load %arg1[%c13, %c0_82, %c0_83] : memref<16x16x384xf32, #tpu.memory_space<vmem>>, vector<1x16x384xf32>
    %407 = vector.shape_cast %406 : vector<1x16x384xf32> to vector<16x384xf32>
    %cst_84 = arith.constant dense<0.000000e+00> : vector<16x384xf32>
    %408 = tpu.matmul %405, %0, %cst_84 {dimension_numbers = #tpu.dot_dimension_numbers<[1], [0], [0], [1], [0, 0, 1, 1], [], []>} : vector<16x128xf32>, vector<128x384xf32>, vector<16x384xf32> -> vector<16x384xf32>
    %409 = vector.broadcast %1 : vector<1x384xf32> to vector<16x384xf32>
    %410 = arith.addf %408, %409 : vector<16x384xf32>
    %411 = vector.extract_strided_slice %407 {offsets = [0, 0], sizes = [16, 128], strides = [1, 1]} : vector<16x384xf32> to vector<16x128xf32>
    %412 = vector.extract_strided_slice %410 {offsets = [0, 0], sizes = [16, 128], strides = [1, 1]} : vector<16x384xf32> to vector<16x128xf32>
    %413 = arith.addf %411, %412 : vector<16x128xf32>
    %414 = arith.negf %413 : vector<16x128xf32>
    %415 = math.exp %414 : vector<16x128xf32>
    %cst_85 = arith.constant 1.000000e+00 : f32
    %416 = vector.broadcast %cst_85 : f32 to vector<16x128xf32>
    %417 = arith.addf %416, %415 : vector<16x128xf32>
    %418 = arith.divf %416, %417 : vector<16x128xf32>
    %419 = vector.extract_strided_slice %407 {offsets = [0, 128], sizes = [16, 128], strides = [1, 1]} : vector<16x384xf32> to vector<16x128xf32>
    %420 = vector.extract_strided_slice %410 {offsets = [0, 128], sizes = [16, 128], strides = [1, 1]} : vector<16x384xf32> to vector<16x128xf32>
    %421 = arith.addf %419, %420 : vector<16x128xf32>
    %422 = arith.negf %421 : vector<16x128xf32>
    %423 = math.exp %422 : vector<16x128xf32>
    %cst_86 = arith.constant 1.000000e+00 : f32
    %424 = vector.broadcast %cst_86 : f32 to vector<16x128xf32>
    %425 = arith.addf %424, %423 : vector<16x128xf32>
    %426 = arith.divf %424, %425 : vector<16x128xf32>
    %427 = vector.extract_strided_slice %407 {offsets = [0, 256], sizes = [16, 128], strides = [1, 1]} : vector<16x384xf32> to vector<16x128xf32>
    %428 = vector.extract_strided_slice %410 {offsets = [0, 256], sizes = [16, 128], strides = [1, 1]} : vector<16x384xf32> to vector<16x128xf32>
    %429 = arith.mulf %418, %428 : vector<16x128xf32>
    %430 = arith.addf %427, %429 : vector<16x128xf32>
    %431 = math.tanh %430 : vector<16x128xf32>
    %cst_87 = arith.constant 1.000000e+00 : f32
    %432 = vector.broadcast %cst_87 : f32 to vector<16x128xf32>
    %433 = arith.subf %432, %426 : vector<16x128xf32>
    %434 = arith.mulf %433, %431 : vector<16x128xf32>
    %435 = arith.mulf %426, %405 : vector<16x128xf32>
    %436 = arith.addf %434, %435 : vector<16x128xf32>
    %c14 = arith.constant 14 : index
    %c0_88 = arith.constant 0 : index
    %c0_89 = arith.constant 0 : index
    %437 = vector.load %arg1[%c14, %c0_88, %c0_89] : memref<16x16x384xf32, #tpu.memory_space<vmem>>, vector<1x16x384xf32>
    %438 = vector.shape_cast %437 : vector<1x16x384xf32> to vector<16x384xf32>
    %cst_90 = arith.constant dense<0.000000e+00> : vector<16x384xf32>
    %439 = tpu.matmul %436, %0, %cst_90 {dimension_numbers = #tpu.dot_dimension_numbers<[1], [0], [0], [1], [0, 0, 1, 1], [], []>} : vector<16x128xf32>, vector<128x384xf32>, vector<16x384xf32> -> vector<16x384xf32>
    %440 = vector.broadcast %1 : vector<1x384xf32> to vector<16x384xf32>
    %441 = arith.addf %439, %440 : vector<16x384xf32>
    %442 = vector.extract_strided_slice %438 {offsets = [0, 0], sizes = [16, 128], strides = [1, 1]} : vector<16x384xf32> to vector<16x128xf32>
    %443 = vector.extract_strided_slice %441 {offsets = [0, 0], sizes = [16, 128], strides = [1, 1]} : vector<16x384xf32> to vector<16x128xf32>
    %444 = arith.addf %442, %443 : vector<16x128xf32>
    %445 = arith.negf %444 : vector<16x128xf32>
    %446 = math.exp %445 : vector<16x128xf32>
    %cst_91 = arith.constant 1.000000e+00 : f32
    %447 = vector.broadcast %cst_91 : f32 to vector<16x128xf32>
    %448 = arith.addf %447, %446 : vector<16x128xf32>
    %449 = arith.divf %447, %448 : vector<16x128xf32>
    %450 = vector.extract_strided_slice %438 {offsets = [0, 128], sizes = [16, 128], strides = [1, 1]} : vector<16x384xf32> to vector<16x128xf32>
    %451 = vector.extract_strided_slice %441 {offsets = [0, 128], sizes = [16, 128], strides = [1, 1]} : vector<16x384xf32> to vector<16x128xf32>
    %452 = arith.addf %450, %451 : vector<16x128xf32>
    %453 = arith.negf %452 : vector<16x128xf32>
    %454 = math.exp %453 : vector<16x128xf32>
    %cst_92 = arith.constant 1.000000e+00 : f32
    %455 = vector.broadcast %cst_92 : f32 to vector<16x128xf32>
    %456 = arith.addf %455, %454 : vector<16x128xf32>
    %457 = arith.divf %455, %456 : vector<16x128xf32>
    %458 = vector.extract_strided_slice %438 {offsets = [0, 256], sizes = [16, 128], strides = [1, 1]} : vector<16x384xf32> to vector<16x128xf32>
    %459 = vector.extract_strided_slice %441 {offsets = [0, 256], sizes = [16, 128], strides = [1, 1]} : vector<16x384xf32> to vector<16x128xf32>
    %460 = arith.mulf %449, %459 : vector<16x128xf32>
    %461 = arith.addf %458, %460 : vector<16x128xf32>
    %462 = math.tanh %461 : vector<16x128xf32>
    %cst_93 = arith.constant 1.000000e+00 : f32
    %463 = vector.broadcast %cst_93 : f32 to vector<16x128xf32>
    %464 = arith.subf %463, %457 : vector<16x128xf32>
    %465 = arith.mulf %464, %462 : vector<16x128xf32>
    %466 = arith.mulf %457, %436 : vector<16x128xf32>
    %467 = arith.addf %465, %466 : vector<16x128xf32>
    %c15 = arith.constant 15 : index
    %c0_94 = arith.constant 0 : index
    %c0_95 = arith.constant 0 : index
    %468 = vector.load %arg1[%c15, %c0_94, %c0_95] : memref<16x16x384xf32, #tpu.memory_space<vmem>>, vector<1x16x384xf32>
    %469 = vector.shape_cast %468 : vector<1x16x384xf32> to vector<16x384xf32>
    %cst_96 = arith.constant dense<0.000000e+00> : vector<16x384xf32>
    %470 = tpu.matmul %467, %0, %cst_96 {dimension_numbers = #tpu.dot_dimension_numbers<[1], [0], [0], [1], [0, 0, 1, 1], [], []>} : vector<16x128xf32>, vector<128x384xf32>, vector<16x384xf32> -> vector<16x384xf32>
    %471 = vector.broadcast %1 : vector<1x384xf32> to vector<16x384xf32>
    %472 = arith.addf %470, %471 : vector<16x384xf32>
    %473 = vector.extract_strided_slice %469 {offsets = [0, 0], sizes = [16, 128], strides = [1, 1]} : vector<16x384xf32> to vector<16x128xf32>
    %474 = vector.extract_strided_slice %472 {offsets = [0, 0], sizes = [16, 128], strides = [1, 1]} : vector<16x384xf32> to vector<16x128xf32>
    %475 = arith.addf %473, %474 : vector<16x128xf32>
    %476 = arith.negf %475 : vector<16x128xf32>
    %477 = math.exp %476 : vector<16x128xf32>
    %cst_97 = arith.constant 1.000000e+00 : f32
    %478 = vector.broadcast %cst_97 : f32 to vector<16x128xf32>
    %479 = arith.addf %478, %477 : vector<16x128xf32>
    %480 = arith.divf %478, %479 : vector<16x128xf32>
    %481 = vector.extract_strided_slice %469 {offsets = [0, 128], sizes = [16, 128], strides = [1, 1]} : vector<16x384xf32> to vector<16x128xf32>
    %482 = vector.extract_strided_slice %472 {offsets = [0, 128], sizes = [16, 128], strides = [1, 1]} : vector<16x384xf32> to vector<16x128xf32>
    %483 = arith.addf %481, %482 : vector<16x128xf32>
    %484 = arith.negf %483 : vector<16x128xf32>
    %485 = math.exp %484 : vector<16x128xf32>
    %cst_98 = arith.constant 1.000000e+00 : f32
    %486 = vector.broadcast %cst_98 : f32 to vector<16x128xf32>
    %487 = arith.addf %486, %485 : vector<16x128xf32>
    %488 = arith.divf %486, %487 : vector<16x128xf32>
    %489 = vector.extract_strided_slice %469 {offsets = [0, 256], sizes = [16, 128], strides = [1, 1]} : vector<16x384xf32> to vector<16x128xf32>
    %490 = vector.extract_strided_slice %472 {offsets = [0, 256], sizes = [16, 128], strides = [1, 1]} : vector<16x384xf32> to vector<16x128xf32>
    %491 = arith.mulf %480, %490 : vector<16x128xf32>
    %492 = arith.addf %489, %491 : vector<16x128xf32>
    %493 = math.tanh %492 : vector<16x128xf32>
    %cst_99 = arith.constant 1.000000e+00 : f32
    %494 = vector.broadcast %cst_99 : f32 to vector<16x128xf32>
    %495 = arith.subf %494, %488 : vector<16x128xf32>
    %496 = arith.mulf %495, %493 : vector<16x128xf32>
    %497 = arith.mulf %488, %467 : vector<16x128xf32>
    %498 = arith.addf %496, %497 : vector<16x128xf32>
    %c0_100 = arith.constant 0 : index
    %c0_101 = arith.constant 0 : index
    %499 = vector.load %arg5[%c0_100, %c0_101] : memref<128x512xf32, #tpu.memory_space<vmem>>, vector<128x512xf32>
    %cst_102 = arith.constant dense<0.000000e+00> : vector<16x512xf32>
    %500 = tpu.matmul %498, %499, %cst_102 {dimension_numbers = #tpu.dot_dimension_numbers<[1], [0], [0], [1], [0, 0, 1, 1], [], []>} : vector<16x128xf32>, vector<128x512xf32>, vector<16x512xf32> -> vector<16x512xf32>
    %501 = vector.shape_cast %500 : vector<16x512xf32> to vector<2x8x512xf32>
    %c0_103 = arith.constant 0 : index
    %c0_104 = arith.constant 0 : index
    %c0_105 = arith.constant 0 : index
    %502 = vector.load %arg4[%c0_103, %c0_104, %c0_105] : memref<2x8x512xf32, #tpu.memory_space<vmem>>, vector<2x8x512xf32>
    %503 = arith.addf %501, %502 : vector<2x8x512xf32>
    %c0_106 = arith.constant 0 : index
    %c0_107 = arith.constant 0 : index
    %504 = vector.load %arg6[%c0_106, %c0_107] : memref<128x512xf32, #tpu.memory_space<vmem>>, vector<128x512xf32>
    %c0_108 = arith.constant 0 : index
    %c0_109 = arith.constant 0 : index
    %505 = vector.load %arg7[%c0_108, %c0_109] : memref<1x128xf32, #tpu.memory_space<vmem>>, vector<1x128xf32>
    %c0_110 = arith.constant 0 : index
    %c0_111 = arith.constant 0 : index
    %506 = vector.load %arg8[%c0_110, %c0_111] : memref<1x1xf32, #tpu.memory_space<vmem>>, vector<1x1xf32>
    %cst_112 = arith.constant 0.000000e+00 : f32
    %507 = vector.broadcast %cst_112 : f32 to vector<2x128xf32>
    %cst_113 = arith.constant 0.000000e+00 : f32
    %508 = vector.broadcast %cst_113 : f32 to vector<2x128xf32>
    %509 = vector.extract_strided_slice %503 {offsets = [0, 0, 0], sizes = [2, 1, 512], strides = [1, 1, 1]} : vector<2x8x512xf32> to vector<2x1x512xf32>
    %510 = vector.shape_cast %509 : vector<2x1x512xf32> to vector<2x512xf32>
    %cst_114 = arith.constant dense<0.000000e+00> : vector<2x512xf32>
    %511 = tpu.matmul %507, %504, %cst_114 {dimension_numbers = #tpu.dot_dimension_numbers<[1], [0], [0], [1], [0, 0, 1, 1], [], []>} : vector<2x128xf32>, vector<128x512xf32>, vector<2x512xf32> -> vector<2x512xf32>
    %512 = arith.addf %510, %511 : vector<2x512xf32>
    %513 = vector.extract_strided_slice %512 {offsets = [0, 0], sizes = [2, 128], strides = [1, 1]} : vector<2x512xf32> to vector<2x128xf32>
    %514 = arith.negf %513 : vector<2x128xf32>
    %515 = math.exp %514 : vector<2x128xf32>
    %cst_115 = arith.constant 1.000000e+00 : f32
    %516 = vector.broadcast %cst_115 : f32 to vector<2x128xf32>
    %517 = arith.addf %516, %515 : vector<2x128xf32>
    %518 = arith.divf %516, %517 : vector<2x128xf32>
    %519 = vector.extract_strided_slice %512 {offsets = [0, 128], sizes = [2, 128], strides = [1, 1]} : vector<2x512xf32> to vector<2x128xf32>
    %520 = arith.negf %519 : vector<2x128xf32>
    %521 = math.exp %520 : vector<2x128xf32>
    %cst_116 = arith.constant 1.000000e+00 : f32
    %522 = vector.broadcast %cst_116 : f32 to vector<2x128xf32>
    %523 = arith.addf %522, %521 : vector<2x128xf32>
    %524 = arith.divf %522, %523 : vector<2x128xf32>
    %525 = vector.extract_strided_slice %512 {offsets = [0, 256], sizes = [2, 128], strides = [1, 1]} : vector<2x512xf32> to vector<2x128xf32>
    %526 = math.tanh %525 : vector<2x128xf32>
    %527 = vector.extract_strided_slice %512 {offsets = [0, 384], sizes = [2, 128], strides = [1, 1]} : vector<2x512xf32> to vector<2x128xf32>
    %528 = arith.negf %527 : vector<2x128xf32>
    %529 = math.exp %528 : vector<2x128xf32>
    %cst_117 = arith.constant 1.000000e+00 : f32
    %530 = vector.broadcast %cst_117 : f32 to vector<2x128xf32>
    %531 = arith.addf %530, %529 : vector<2x128xf32>
    %532 = arith.divf %530, %531 : vector<2x128xf32>
    %533 = arith.mulf %524, %508 : vector<2x128xf32>
    %534 = arith.mulf %518, %526 : vector<2x128xf32>
    %535 = arith.addf %533, %534 : vector<2x128xf32>
    %536 = math.tanh %535 : vector<2x128xf32>
    %537 = arith.mulf %532, %536 : vector<2x128xf32>
    %538 = vector.broadcast %505 : vector<1x128xf32> to vector<2x128xf32>
    %539 = arith.mulf %537, %538 : vector<2x128xf32>
    %cst_118 = arith.constant dense<0.000000e+00> : vector<2xf32>
    %540 = vector.multi_reduction <add>, %539, %cst_118 [1] : vector<2x128xf32> to vector<2xf32>
    %541 = vector.shape_cast %540 : vector<2xf32> to vector<2x1xf32>
    %542 = vector.broadcast %506 : vector<1x1xf32> to vector<2x1xf32>
    %543 = arith.addf %541, %542 : vector<2x1xf32>
    %544 = vector.shape_cast %543 : vector<2x1xf32> to vector<2x1x1xf32>
    %c0_119 = arith.constant 0 : index
    %c0_120 = arith.constant 0 : index
    %c0_121 = arith.constant 0 : index
    %545 = vector.load %arg9[%c0_119, %c0_120, %c0_121] : memref<2x8x1xf32, #tpu.memory_space<vmem>>, vector<2x1x1xf32>
    tpu.vector_store %arg9[%c0_119, %c0_120, %c0_121], %544 {strides = array<i32>} : memref<2x8x1xf32, #tpu.memory_space<vmem>>, vector<2x1x1xf32>,
    %546 = vector.extract_strided_slice %503 {offsets = [0, 1, 0], sizes = [2, 1, 512], strides = [1, 1, 1]} : vector<2x8x512xf32> to vector<2x1x512xf32>
    %547 = vector.shape_cast %546 : vector<2x1x512xf32> to vector<2x512xf32>
    %cst_122 = arith.constant dense<0.000000e+00> : vector<2x512xf32>
    %548 = tpu.matmul %537, %504, %cst_122 {dimension_numbers = #tpu.dot_dimension_numbers<[1], [0], [0], [1], [0, 0, 1, 1], [], []>} : vector<2x128xf32>, vector<128x512xf32>, vector<2x512xf32> -> vector<2x512xf32>
    %549 = arith.addf %547, %548 : vector<2x512xf32>
    %550 = vector.extract_strided_slice %549 {offsets = [0, 0], sizes = [2, 128], strides = [1, 1]} : vector<2x512xf32> to vector<2x128xf32>
    %551 = arith.negf %550 : vector<2x128xf32>
    %552 = math.exp %551 : vector<2x128xf32>
    %cst_123 = arith.constant 1.000000e+00 : f32
    %553 = vector.broadcast %cst_123 : f32 to vector<2x128xf32>
    %554 = arith.addf %553, %552 : vector<2x128xf32>
    %555 = arith.divf %553, %554 : vector<2x128xf32>
    %556 = vector.extract_strided_slice %549 {offsets = [0, 128], sizes = [2, 128], strides = [1, 1]} : vector<2x512xf32> to vector<2x128xf32>
    %557 = arith.negf %556 : vector<2x128xf32>
    %558 = math.exp %557 : vector<2x128xf32>
    %cst_124 = arith.constant 1.000000e+00 : f32
    %559 = vector.broadcast %cst_124 : f32 to vector<2x128xf32>
    %560 = arith.addf %559, %558 : vector<2x128xf32>
    %561 = arith.divf %559, %560 : vector<2x128xf32>
    %562 = vector.extract_strided_slice %549 {offsets = [0, 256], sizes = [2, 128], strides = [1, 1]} : vector<2x512xf32> to vector<2x128xf32>
    %563 = math.tanh %562 : vector<2x128xf32>
    %564 = vector.extract_strided_slice %549 {offsets = [0, 384], sizes = [2, 128], strides = [1, 1]} : vector<2x512xf32> to vector<2x128xf32>
    %565 = arith.negf %564 : vector<2x128xf32>
    %566 = math.exp %565 : vector<2x128xf32>
    %cst_125 = arith.constant 1.000000e+00 : f32
    %567 = vector.broadcast %cst_125 : f32 to vector<2x128xf32>
    %568 = arith.addf %567, %566 : vector<2x128xf32>
    %569 = arith.divf %567, %568 : vector<2x128xf32>
    %570 = arith.mulf %561, %535 : vector<2x128xf32>
    %571 = arith.mulf %555, %563 : vector<2x128xf32>
    %572 = arith.addf %570, %571 : vector<2x128xf32>
    %573 = math.tanh %572 : vector<2x128xf32>
    %574 = arith.mulf %569, %573 : vector<2x128xf32>
    %575 = vector.broadcast %505 : vector<1x128xf32> to vector<2x128xf32>
    %576 = arith.mulf %574, %575 : vector<2x128xf32>
    %cst_126 = arith.constant dense<0.000000e+00> : vector<2xf32>
    %577 = vector.multi_reduction <add>, %576, %cst_126 [1] : vector<2x128xf32> to vector<2xf32>
    %578 = vector.shape_cast %577 : vector<2xf32> to vector<2x1xf32>
    %579 = vector.broadcast %506 : vector<1x1xf32> to vector<2x1xf32>
    %580 = arith.addf %578, %579 : vector<2x1xf32>
    %581 = vector.shape_cast %580 : vector<2x1xf32> to vector<2x1x1xf32>
    %c0_127 = arith.constant 0 : index
    %c1_128 = arith.constant 1 : index
    %c0_129 = arith.constant 0 : index
    %582 = vector.load %arg9[%c0_127, %c1_128, %c0_129] : memref<2x8x1xf32, #tpu.memory_space<vmem>>, vector<2x1x1xf32>
    tpu.vector_store %arg9[%c0_127, %c1_128, %c0_129], %581 {strides = array<i32>} : memref<2x8x1xf32, #tpu.memory_space<vmem>>, vector<2x1x1xf32>,
    %583 = vector.extract_strided_slice %503 {offsets = [0, 2, 0], sizes = [2, 1, 512], strides = [1, 1, 1]} : vector<2x8x512xf32> to vector<2x1x512xf32>
    %584 = vector.shape_cast %583 : vector<2x1x512xf32> to vector<2x512xf32>
    %cst_130 = arith.constant dense<0.000000e+00> : vector<2x512xf32>
    %585 = tpu.matmul %574, %504, %cst_130 {dimension_numbers = #tpu.dot_dimension_numbers<[1], [0], [0], [1], [0, 0, 1, 1], [], []>} : vector<2x128xf32>, vector<128x512xf32>, vector<2x512xf32> -> vector<2x512xf32>
    %586 = arith.addf %584, %585 : vector<2x512xf32>
    %587 = vector.extract_strided_slice %586 {offsets = [0, 0], sizes = [2, 128], strides = [1, 1]} : vector<2x512xf32> to vector<2x128xf32>
    %588 = arith.negf %587 : vector<2x128xf32>
    %589 = math.exp %588 : vector<2x128xf32>
    %cst_131 = arith.constant 1.000000e+00 : f32
    %590 = vector.broadcast %cst_131 : f32 to vector<2x128xf32>
    %591 = arith.addf %590, %589 : vector<2x128xf32>
    %592 = arith.divf %590, %591 : vector<2x128xf32>
    %593 = vector.extract_strided_slice %586 {offsets = [0, 128], sizes = [2, 128], strides = [1, 1]} : vector<2x512xf32> to vector<2x128xf32>
    %594 = arith.negf %593 : vector<2x128xf32>
    %595 = math.exp %594 : vector<2x128xf32>
    %cst_132 = arith.constant 1.000000e+00 : f32
    %596 = vector.broadcast %cst_132 : f32 to vector<2x128xf32>
    %597 = arith.addf %596, %595 : vector<2x128xf32>
    %598 = arith.divf %596, %597 : vector<2x128xf32>
    %599 = vector.extract_strided_slice %586 {offsets = [0, 256], sizes = [2, 128], strides = [1, 1]} : vector<2x512xf32> to vector<2x128xf32>
    %600 = math.tanh %599 : vector<2x128xf32>
    %601 = vector.extract_strided_slice %586 {offsets = [0, 384], sizes = [2, 128], strides = [1, 1]} : vector<2x512xf32> to vector<2x128xf32>
    %602 = arith.negf %601 : vector<2x128xf32>
    %603 = math.exp %602 : vector<2x128xf32>
    %cst_133 = arith.constant 1.000000e+00 : f32
    %604 = vector.broadcast %cst_133 : f32 to vector<2x128xf32>
    %605 = arith.addf %604, %603 : vector<2x128xf32>
    %606 = arith.divf %604, %605 : vector<2x128xf32>
    %607 = arith.mulf %598, %572 : vector<2x128xf32>
    %608 = arith.mulf %592, %600 : vector<2x128xf32>
    %609 = arith.addf %607, %608 : vector<2x128xf32>
    %610 = math.tanh %609 : vector<2x128xf32>
    %611 = arith.mulf %606, %610 : vector<2x128xf32>
    %612 = vector.broadcast %505 : vector<1x128xf32> to vector<2x128xf32>
    %613 = arith.mulf %611, %612 : vector<2x128xf32>
    %cst_134 = arith.constant dense<0.000000e+00> : vector<2xf32>
    %614 = vector.multi_reduction <add>, %613, %cst_134 [1] : vector<2x128xf32> to vector<2xf32>
    %615 = vector.shape_cast %614 : vector<2xf32> to vector<2x1xf32>
    %616 = vector.broadcast %506 : vector<1x1xf32> to vector<2x1xf32>
    %617 = arith.addf %615, %616 : vector<2x1xf32>
    %618 = vector.shape_cast %617 : vector<2x1xf32> to vector<2x1x1xf32>
    %c0_135 = arith.constant 0 : index
    %c2_136 = arith.constant 2 : index
    %c0_137 = arith.constant 0 : index
    %619 = vector.load %arg9[%c0_135, %c2_136, %c0_137] : memref<2x8x1xf32, #tpu.memory_space<vmem>>, vector<2x1x1xf32>
    tpu.vector_store %arg9[%c0_135, %c2_136, %c0_137], %618 {strides = array<i32>} : memref<2x8x1xf32, #tpu.memory_space<vmem>>, vector<2x1x1xf32>,
    %620 = vector.extract_strided_slice %503 {offsets = [0, 3, 0], sizes = [2, 1, 512], strides = [1, 1, 1]} : vector<2x8x512xf32> to vector<2x1x512xf32>
    %621 = vector.shape_cast %620 : vector<2x1x512xf32> to vector<2x512xf32>
    %cst_138 = arith.constant dense<0.000000e+00> : vector<2x512xf32>
    %622 = tpu.matmul %611, %504, %cst_138 {dimension_numbers = #tpu.dot_dimension_numbers<[1], [0], [0], [1], [0, 0, 1, 1], [], []>} : vector<2x128xf32>, vector<128x512xf32>, vector<2x512xf32> -> vector<2x512xf32>
    %623 = arith.addf %621, %622 : vector<2x512xf32>
    %624 = vector.extract_strided_slice %623 {offsets = [0, 0], sizes = [2, 128], strides = [1, 1]} : vector<2x512xf32> to vector<2x128xf32>
    %625 = arith.negf %624 : vector<2x128xf32>
    %626 = math.exp %625 : vector<2x128xf32>
    %cst_139 = arith.constant 1.000000e+00 : f32
    %627 = vector.broadcast %cst_139 : f32 to vector<2x128xf32>
    %628 = arith.addf %627, %626 : vector<2x128xf32>
    %629 = arith.divf %627, %628 : vector<2x128xf32>
    %630 = vector.extract_strided_slice %623 {offsets = [0, 128], sizes = [2, 128], strides = [1, 1]} : vector<2x512xf32> to vector<2x128xf32>
    %631 = arith.negf %630 : vector<2x128xf32>
    %632 = math.exp %631 : vector<2x128xf32>
    %cst_140 = arith.constant 1.000000e+00 : f32
    %633 = vector.broadcast %cst_140 : f32 to vector<2x128xf32>
    %634 = arith.addf %633, %632 : vector<2x128xf32>
    %635 = arith.divf %633, %634 : vector<2x128xf32>
    %636 = vector.extract_strided_slice %623 {offsets = [0, 256], sizes = [2, 128], strides = [1, 1]} : vector<2x512xf32> to vector<2x128xf32>
    %637 = math.tanh %636 : vector<2x128xf32>
    %638 = vector.extract_strided_slice %623 {offsets = [0, 384], sizes = [2, 128], strides = [1, 1]} : vector<2x512xf32> to vector<2x128xf32>
    %639 = arith.negf %638 : vector<2x128xf32>
    %640 = math.exp %639 : vector<2x128xf32>
    %cst_141 = arith.constant 1.000000e+00 : f32
    %641 = vector.broadcast %cst_141 : f32 to vector<2x128xf32>
    %642 = arith.addf %641, %640 : vector<2x128xf32>
    %643 = arith.divf %641, %642 : vector<2x128xf32>
    %644 = arith.mulf %635, %609 : vector<2x128xf32>
    %645 = arith.mulf %629, %637 : vector<2x128xf32>
    %646 = arith.addf %644, %645 : vector<2x128xf32>
    %647 = math.tanh %646 : vector<2x128xf32>
    %648 = arith.mulf %643, %647 : vector<2x128xf32>
    %649 = vector.broadcast %505 : vector<1x128xf32> to vector<2x128xf32>
    %650 = arith.mulf %648, %649 : vector<2x128xf32>
    %cst_142 = arith.constant dense<0.000000e+00> : vector<2xf32>
    %651 = vector.multi_reduction <add>, %650, %cst_142 [1] : vector<2x128xf32> to vector<2xf32>
    %652 = vector.shape_cast %651 : vector<2xf32> to vector<2x1xf32>
    %653 = vector.broadcast %506 : vector<1x1xf32> to vector<2x1xf32>
    %654 = arith.addf %652, %653 : vector<2x1xf32>
    %655 = vector.shape_cast %654 : vector<2x1xf32> to vector<2x1x1xf32>
    %c0_143 = arith.constant 0 : index
    %c3_144 = arith.constant 3 : index
    %c0_145 = arith.constant 0 : index
    %656 = vector.load %arg9[%c0_143, %c3_144, %c0_145] : memref<2x8x1xf32, #tpu.memory_space<vmem>>, vector<2x1x1xf32>
    tpu.vector_store %arg9[%c0_143, %c3_144, %c0_145], %655 {strides = array<i32>} : memref<2x8x1xf32, #tpu.memory_space<vmem>>, vector<2x1x1xf32>,
    %657 = vector.extract_strided_slice %503 {offsets = [0, 4, 0], sizes = [2, 1, 512], strides = [1, 1, 1]} : vector<2x8x512xf32> to vector<2x1x512xf32>
    %658 = vector.shape_cast %657 : vector<2x1x512xf32> to vector<2x512xf32>
    %cst_146 = arith.constant dense<0.000000e+00> : vector<2x512xf32>
    %659 = tpu.matmul %648, %504, %cst_146 {dimension_numbers = #tpu.dot_dimension_numbers<[1], [0], [0], [1], [0, 0, 1, 1], [], []>} : vector<2x128xf32>, vector<128x512xf32>, vector<2x512xf32> -> vector<2x512xf32>
    %660 = arith.addf %658, %659 : vector<2x512xf32>
    %661 = vector.extract_strided_slice %660 {offsets = [0, 0], sizes = [2, 128], strides = [1, 1]} : vector<2x512xf32> to vector<2x128xf32>
    %662 = arith.negf %661 : vector<2x128xf32>
    %663 = math.exp %662 : vector<2x128xf32>
    %cst_147 = arith.constant 1.000000e+00 : f32
    %664 = vector.broadcast %cst_147 : f32 to vector<2x128xf32>
    %665 = arith.addf %664, %663 : vector<2x128xf32>
    %666 = arith.divf %664, %665 : vector<2x128xf32>
    %667 = vector.extract_strided_slice %660 {offsets = [0, 128], sizes = [2, 128], strides = [1, 1]} : vector<2x512xf32> to vector<2x128xf32>
    %668 = arith.negf %667 : vector<2x128xf32>
    %669 = math.exp %668 : vector<2x128xf32>
    %cst_148 = arith.constant 1.000000e+00 : f32
    %670 = vector.broadcast %cst_148 : f32 to vector<2x128xf32>
    %671 = arith.addf %670, %669 : vector<2x128xf32>
    %672 = arith.divf %670, %671 : vector<2x128xf32>
    %673 = vector.extract_strided_slice %660 {offsets = [0, 256], sizes = [2, 128], strides = [1, 1]} : vector<2x512xf32> to vector<2x128xf32>
    %674 = math.tanh %673 : vector<2x128xf32>
    %675 = vector.extract_strided_slice %660 {offsets = [0, 384], sizes = [2, 128], strides = [1, 1]} : vector<2x512xf32> to vector<2x128xf32>
    %676 = arith.negf %675 : vector<2x128xf32>
    %677 = math.exp %676 : vector<2x128xf32>
    %cst_149 = arith.constant 1.000000e+00 : f32
    %678 = vector.broadcast %cst_149 : f32 to vector<2x128xf32>
    %679 = arith.addf %678, %677 : vector<2x128xf32>
    %680 = arith.divf %678, %679 : vector<2x128xf32>
    %681 = arith.mulf %672, %646 : vector<2x128xf32>
    %682 = arith.mulf %666, %674 : vector<2x128xf32>
    %683 = arith.addf %681, %682 : vector<2x128xf32>
    %684 = math.tanh %683 : vector<2x128xf32>
    %685 = arith.mulf %680, %684 : vector<2x128xf32>
    %686 = vector.broadcast %505 : vector<1x128xf32> to vector<2x128xf32>
    %687 = arith.mulf %685, %686 : vector<2x128xf32>
    %cst_150 = arith.constant dense<0.000000e+00> : vector<2xf32>
    %688 = vector.multi_reduction <add>, %687, %cst_150 [1] : vector<2x128xf32> to vector<2xf32>
    %689 = vector.shape_cast %688 : vector<2xf32> to vector<2x1xf32>
    %690 = vector.broadcast %506 : vector<1x1xf32> to vector<2x1xf32>
    %691 = arith.addf %689, %690 : vector<2x1xf32>
    %692 = vector.shape_cast %691 : vector<2x1xf32> to vector<2x1x1xf32>
    %c0_151 = arith.constant 0 : index
    %c4_152 = arith.constant 4 : index
    %c0_153 = arith.constant 0 : index
    %693 = vector.load %arg9[%c0_151, %c4_152, %c0_153] : memref<2x8x1xf32, #tpu.memory_space<vmem>>, vector<2x1x1xf32>
    tpu.vector_store %arg9[%c0_151, %c4_152, %c0_153], %692 {strides = array<i32>} : memref<2x8x1xf32, #tpu.memory_space<vmem>>, vector<2x1x1xf32>,
    %694 = vector.extract_strided_slice %503 {offsets = [0, 5, 0], sizes = [2, 1, 512], strides = [1, 1, 1]} : vector<2x8x512xf32> to vector<2x1x512xf32>
    %695 = vector.shape_cast %694 : vector<2x1x512xf32> to vector<2x512xf32>
    %cst_154 = arith.constant dense<0.000000e+00> : vector<2x512xf32>
    %696 = tpu.matmul %685, %504, %cst_154 {dimension_numbers = #tpu.dot_dimension_numbers<[1], [0], [0], [1], [0, 0, 1, 1], [], []>} : vector<2x128xf32>, vector<128x512xf32>, vector<2x512xf32> -> vector<2x512xf32>
    %697 = arith.addf %695, %696 : vector<2x512xf32>
    %698 = vector.extract_strided_slice %697 {offsets = [0, 0], sizes = [2, 128], strides = [1, 1]} : vector<2x512xf32> to vector<2x128xf32>
    %699 = arith.negf %698 : vector<2x128xf32>
    %700 = math.exp %699 : vector<2x128xf32>
    %cst_155 = arith.constant 1.000000e+00 : f32
    %701 = vector.broadcast %cst_155 : f32 to vector<2x128xf32>
    %702 = arith.addf %701, %700 : vector<2x128xf32>
    %703 = arith.divf %701, %702 : vector<2x128xf32>
    %704 = vector.extract_strided_slice %697 {offsets = [0, 128], sizes = [2, 128], strides = [1, 1]} : vector<2x512xf32> to vector<2x128xf32>
    %705 = arith.negf %704 : vector<2x128xf32>
    %706 = math.exp %705 : vector<2x128xf32>
    %cst_156 = arith.constant 1.000000e+00 : f32
    %707 = vector.broadcast %cst_156 : f32 to vector<2x128xf32>
    %708 = arith.addf %707, %706 : vector<2x128xf32>
    %709 = arith.divf %707, %708 : vector<2x128xf32>
    %710 = vector.extract_strided_slice %697 {offsets = [0, 256], sizes = [2, 128], strides = [1, 1]} : vector<2x512xf32> to vector<2x128xf32>
    %711 = math.tanh %710 : vector<2x128xf32>
    %712 = vector.extract_strided_slice %697 {offsets = [0, 384], sizes = [2, 128], strides = [1, 1]} : vector<2x512xf32> to vector<2x128xf32>
    %713 = arith.negf %712 : vector<2x128xf32>
    %714 = math.exp %713 : vector<2x128xf32>
    %cst_157 = arith.constant 1.000000e+00 : f32
    %715 = vector.broadcast %cst_157 : f32 to vector<2x128xf32>
    %716 = arith.addf %715, %714 : vector<2x128xf32>
    %717 = arith.divf %715, %716 : vector<2x128xf32>
    %718 = arith.mulf %709, %683 : vector<2x128xf32>
    %719 = arith.mulf %703, %711 : vector<2x128xf32>
    %720 = arith.addf %718, %719 : vector<2x128xf32>
    %721 = math.tanh %720 : vector<2x128xf32>
    %722 = arith.mulf %717, %721 : vector<2x128xf32>
    %723 = vector.broadcast %505 : vector<1x128xf32> to vector<2x128xf32>
    %724 = arith.mulf %722, %723 : vector<2x128xf32>
    %cst_158 = arith.constant dense<0.000000e+00> : vector<2xf32>
    %725 = vector.multi_reduction <add>, %724, %cst_158 [1] : vector<2x128xf32> to vector<2xf32>
    %726 = vector.shape_cast %725 : vector<2xf32> to vector<2x1xf32>
    %727 = vector.broadcast %506 : vector<1x1xf32> to vector<2x1xf32>
    %728 = arith.addf %726, %727 : vector<2x1xf32>
    %729 = vector.shape_cast %728 : vector<2x1xf32> to vector<2x1x1xf32>
    %c0_159 = arith.constant 0 : index
    %c5_160 = arith.constant 5 : index
    %c0_161 = arith.constant 0 : index
    %730 = vector.load %arg9[%c0_159, %c5_160, %c0_161] : memref<2x8x1xf32, #tpu.memory_space<vmem>>, vector<2x1x1xf32>
    tpu.vector_store %arg9[%c0_159, %c5_160, %c0_161], %729 {strides = array<i32>} : memref<2x8x1xf32, #tpu.memory_space<vmem>>, vector<2x1x1xf32>,
    %731 = vector.extract_strided_slice %503 {offsets = [0, 6, 0], sizes = [2, 1, 512], strides = [1, 1, 1]} : vector<2x8x512xf32> to vector<2x1x512xf32>
    %732 = vector.shape_cast %731 : vector<2x1x512xf32> to vector<2x512xf32>
    %cst_162 = arith.constant dense<0.000000e+00> : vector<2x512xf32>
    %733 = tpu.matmul %722, %504, %cst_162 {dimension_numbers = #tpu.dot_dimension_numbers<[1], [0], [0], [1], [0, 0, 1, 1], [], []>} : vector<2x128xf32>, vector<128x512xf32>, vector<2x512xf32> -> vector<2x512xf32>
    %734 = arith.addf %732, %733 : vector<2x512xf32>
    %735 = vector.extract_strided_slice %734 {offsets = [0, 0], sizes = [2, 128], strides = [1, 1]} : vector<2x512xf32> to vector<2x128xf32>
    %736 = arith.negf %735 : vector<2x128xf32>
    %737 = math.exp %736 : vector<2x128xf32>
    %cst_163 = arith.constant 1.000000e+00 : f32
    %738 = vector.broadcast %cst_163 : f32 to vector<2x128xf32>
    %739 = arith.addf %738, %737 : vector<2x128xf32>
    %740 = arith.divf %738, %739 : vector<2x128xf32>
    %741 = vector.extract_strided_slice %734 {offsets = [0, 128], sizes = [2, 128], strides = [1, 1]} : vector<2x512xf32> to vector<2x128xf32>
    %742 = arith.negf %741 : vector<2x128xf32>
    %743 = math.exp %742 : vector<2x128xf32>
    %cst_164 = arith.constant 1.000000e+00 : f32
    %744 = vector.broadcast %cst_164 : f32 to vector<2x128xf32>
    %745 = arith.addf %744, %743 : vector<2x128xf32>
    %746 = arith.divf %744, %745 : vector<2x128xf32>
    %747 = vector.extract_strided_slice %734 {offsets = [0, 256], sizes = [2, 128], strides = [1, 1]} : vector<2x512xf32> to vector<2x128xf32>
    %748 = math.tanh %747 : vector<2x128xf32>
    %749 = vector.extract_strided_slice %734 {offsets = [0, 384], sizes = [2, 128], strides = [1, 1]} : vector<2x512xf32> to vector<2x128xf32>
    %750 = arith.negf %749 : vector<2x128xf32>
    %751 = math.exp %750 : vector<2x128xf32>
    %cst_165 = arith.constant 1.000000e+00 : f32
    %752 = vector.broadcast %cst_165 : f32 to vector<2x128xf32>
    %753 = arith.addf %752, %751 : vector<2x128xf32>
    %754 = arith.divf %752, %753 : vector<2x128xf32>
    %755 = arith.mulf %746, %720 : vector<2x128xf32>
    %756 = arith.mulf %740, %748 : vector<2x128xf32>
    %757 = arith.addf %755, %756 : vector<2x128xf32>
    %758 = math.tanh %757 : vector<2x128xf32>
    %759 = arith.mulf %754, %758 : vector<2x128xf32>
    %760 = vector.broadcast %505 : vector<1x128xf32> to vector<2x128xf32>
    %761 = arith.mulf %759, %760 : vector<2x128xf32>
    %cst_166 = arith.constant dense<0.000000e+00> : vector<2xf32>
    %762 = vector.multi_reduction <add>, %761, %cst_166 [1] : vector<2x128xf32> to vector<2xf32>
    %763 = vector.shape_cast %762 : vector<2xf32> to vector<2x1xf32>
    %764 = vector.broadcast %506 : vector<1x1xf32> to vector<2x1xf32>
    %765 = arith.addf %763, %764 : vector<2x1xf32>
    %766 = vector.shape_cast %765 : vector<2x1xf32> to vector<2x1x1xf32>
    %c0_167 = arith.constant 0 : index
    %c6_168 = arith.constant 6 : index
    %c0_169 = arith.constant 0 : index
    %767 = vector.load %arg9[%c0_167, %c6_168, %c0_169] : memref<2x8x1xf32, #tpu.memory_space<vmem>>, vector<2x1x1xf32>
    tpu.vector_store %arg9[%c0_167, %c6_168, %c0_169], %766 {strides = array<i32>} : memref<2x8x1xf32, #tpu.memory_space<vmem>>, vector<2x1x1xf32>,
    %768 = vector.extract_strided_slice %503 {offsets = [0, 7, 0], sizes = [2, 1, 512], strides = [1, 1, 1]} : vector<2x8x512xf32> to vector<2x1x512xf32>
    %769 = vector.shape_cast %768 : vector<2x1x512xf32> to vector<2x512xf32>
    %cst_170 = arith.constant dense<0.000000e+00> : vector<2x512xf32>
    %770 = tpu.matmul %759, %504, %cst_170 {dimension_numbers = #tpu.dot_dimension_numbers<[1], [0], [0], [1], [0, 0, 1, 1], [], []>} : vector<2x128xf32>, vector<128x512xf32>, vector<2x512xf32> -> vector<2x512xf32>
    %771 = arith.addf %769, %770 : vector<2x512xf32>
    %772 = vector.extract_strided_slice %771 {offsets = [0, 0], sizes = [2, 128], strides = [1, 1]} : vector<2x512xf32> to vector<2x128xf32>
    %773 = arith.negf %772 : vector<2x128xf32>
    %774 = math.exp %773 : vector<2x128xf32>
    %cst_171 = arith.constant 1.000000e+00 : f32
    %775 = vector.broadcast %cst_171 : f32 to vector<2x128xf32>
    %776 = arith.addf %775, %774 : vector<2x128xf32>
    %777 = arith.divf %775, %776 : vector<2x128xf32>
    %778 = vector.extract_strided_slice %771 {offsets = [0, 128], sizes = [2, 128], strides = [1, 1]} : vector<2x512xf32> to vector<2x128xf32>
    %779 = arith.negf %778 : vector<2x128xf32>
    %780 = math.exp %779 : vector<2x128xf32>
    %cst_172 = arith.constant 1.000000e+00 : f32
    %781 = vector.broadcast %cst_172 : f32 to vector<2x128xf32>
    %782 = arith.addf %781, %780 : vector<2x128xf32>
    %783 = arith.divf %781, %782 : vector<2x128xf32>
    %784 = vector.extract_strided_slice %771 {offsets = [0, 256], sizes = [2, 128], strides = [1, 1]} : vector<2x512xf32> to vector<2x128xf32>
    %785 = math.tanh %784 : vector<2x128xf32>
    %786 = vector.extract_strided_slice %771 {offsets = [0, 384], sizes = [2, 128], strides = [1, 1]} : vector<2x512xf32> to vector<2x128xf32>
    %787 = arith.negf %786 : vector<2x128xf32>
    %788 = math.exp %787 : vector<2x128xf32>
    %cst_173 = arith.constant 1.000000e+00 : f32
    %789 = vector.broadcast %cst_173 : f32 to vector<2x128xf32>
    %790 = arith.addf %789, %788 : vector<2x128xf32>
    %791 = arith.divf %789, %790 : vector<2x128xf32>
    %792 = arith.mulf %783, %757 : vector<2x128xf32>
    %793 = arith.mulf %777, %785 : vector<2x128xf32>
    %794 = arith.addf %792, %793 : vector<2x128xf32>
    %795 = math.tanh %794 : vector<2x128xf32>
    %796 = arith.mulf %791, %795 : vector<2x128xf32>
    %797 = vector.broadcast %505 : vector<1x128xf32> to vector<2x128xf32>
    %798 = arith.mulf %796, %797 : vector<2x128xf32>
    %cst_174 = arith.constant dense<0.000000e+00> : vector<2xf32>
    %799 = vector.multi_reduction <add>, %798, %cst_174 [1] : vector<2x128xf32> to vector<2xf32>
    %800 = vector.shape_cast %799 : vector<2xf32> to vector<2x1xf32>
    %801 = vector.broadcast %506 : vector<1x1xf32> to vector<2x1xf32>
    %802 = arith.addf %800, %801 : vector<2x1xf32>
    %803 = vector.shape_cast %802 : vector<2x1xf32> to vector<2x1x1xf32>
    %c0_175 = arith.constant 0 : index
    %c7_176 = arith.constant 7 : index
    %c0_177 = arith.constant 0 : index
    %804 = vector.load %arg9[%c0_175, %c7_176, %c0_177] : memref<2x8x1xf32, #tpu.memory_space<vmem>>, vector<2x1x1xf32>
    tpu.vector_store %arg9[%c0_175, %c7_176, %c0_177], %803 {strides = array<i32>} : memref<2x8x1xf32, #tpu.memory_space<vmem>>, vector<2x1x1xf32>,
    return
  }
  func.func @transform_0(%arg0: i32) -> (i32, i32, i32) {
    %c0_i32 = arith.constant 0 : i32
    %c0_i32_0 = arith.constant 0 : i32
    %c0_i32_1 = arith.constant 0 : i32
    return %c0_i32, %arg0, %c0_i32_0 : i32, i32, i32
  }
  func.func @transform_1(%arg0: i32) -> (i32, i32) {
    %c0_i32 = arith.constant 0 : i32
    %c0_i32_0 = arith.constant 0 : i32
    %c0_i32_1 = arith.constant 0 : i32
    return %c0_i32, %c0_i32_0 : i32, i32
  }
  func.func @transform_2(%arg0: i32) -> (i32, i32) {
    %c0_i32 = arith.constant 0 : i32
    %c0_i32_0 = arith.constant 0 : i32
    %c0_i32_1 = arith.constant 0 : i32
    return %c0_i32, %c0_i32_0 : i32, i32
  }
  func.func @transform_3(%arg0: i32) -> (i32, i32, i32) {
    %c0_i32 = arith.constant 0 : i32
    %c0_i32_0 = arith.constant 0 : i32
    %c0_i32_1 = arith.constant 0 : i32
    return %arg0, %c0_i32, %c0_i32_0 : i32, i32, i32
  }
  func.func @transform_4(%arg0: i32) -> (i32, i32) {
    %c0_i32 = arith.constant 0 : i32
    %c0_i32_0 = arith.constant 0 : i32
    %c0_i32_1 = arith.constant 0 : i32
    return %c0_i32, %c0_i32_0 : i32, i32
  }
  func.func @transform_5(%arg0: i32) -> (i32, i32) {
    %c0_i32 = arith.constant 0 : i32
    %c0_i32_0 = arith.constant 0 : i32
    %c0_i32_1 = arith.constant 0 : i32
    return %c0_i32, %c0_i32_0 : i32, i32
  }
  func.func @transform_6(%arg0: i32) -> (i32, i32) {
    %c0_i32 = arith.constant 0 : i32
    %c0_i32_0 = arith.constant 0 : i32
    %c0_i32_1 = arith.constant 0 : i32
    return %c0_i32, %c0_i32_0 : i32, i32
  }
  func.func @transform_7(%arg0: i32) -> (i32, i32) {
    %c0_i32 = arith.constant 0 : i32
    %c0_i32_0 = arith.constant 0 : i32
    %c0_i32_1 = arith.constant 0 : i32
    return %c0_i32, %c0_i32_0 : i32, i32
  }
  func.func @transform_8(%arg0: i32) -> (i32, i32, i32) {
    %c0_i32 = arith.constant 0 : i32
    %c0_i32_0 = arith.constant 0 : i32
    %c0_i32_1 = arith.constant 0 : i32
    return %arg0, %c0_i32, %c0_i32_0 : i32, i32, i32
  }
}

</mosaic_0001>

<llo_original>
// kernel: _lambda_.1
$region0: #{_lambda_.1}
  #allocation0 [shape = 'u32[]', space=smem, size = 0x4, offset = 0x4, fixed_abs, tag = 'smem constant byte address 0x4 - core index']
  #allocation1 [shape = 'u32[144,128]{1,0:T(1,128)}', space=vmem, size = 0x12000, scoped, tag = 'internal scratch']
  #allocation2 [shape = 'f32[1,1]{1,0:T(1,128)S(1)}', space=vmem, size = 0x200, scoped, tag = 'scoped memory for _lambda_.1']
  %s0 = inlined_call_operand.vmem [shape: f32[16,32,384], index: 0, kind: input, shape index: {}]
  %s1 = inlined_call_operand.vmem [shape: f32[128,384], index: 1, kind: input, shape index: {}]
  %s2 = inlined_call_operand.vmem [shape: f32[1,384], index: 2, kind: input, shape index: {}]
  %s3 = inlined_call_operand.vmem [shape: f32[4,8,512], index: 3, kind: input, shape index: {}]
  %s4 = inlined_call_operand.vmem [shape: f32[128,512], index: 4, kind: input, shape index: {}]
  %s5 = inlined_call_operand.vmem [shape: f32[128,512], index: 5, kind: input, shape index: {}]
  %s6 = inlined_call_operand.vmem [shape: f32[1,128], index: 6, kind: input, shape index: {}]
  %s7 = inlined_call_operand.<no memory space> [shape: f32[1,1], index: 7, kind: input, shape index: {}]
  %s8 = inlined_call_operand.vmem [shape: f32[4,8,1], index: 8, kind: output, shape index: {}]
  %s9 = sld [smem:[#allocation0]]
  $region88: #{_lambda_.1} parent=0
    _
  %s11 = ssub.s32 1, %s9
  %s12 = scalar_select 0, %s11, %s9
  %v13 = vstv %s7
  %14 = vst [vmem:[#allocation2] sm:$0x1] %v13
  $region1: #{_lambda_.1} parent=0
    #allocation3 [shape = 'u8[786432]{0}', space=vmem, size = 0xc0000, scoped, tag = 'input window, operand 0']
    loop: start=0, step=1, limit=4
    $region2: #{_lambda_.1} parent=1 // loop_pre_header
      _
    $region3: #{_lambda_.1} parent=1 // loop_header
      %s16 = sphi 0, %s20
      %p17 = scmp.ge.s32.totalorder %s16, 4
      %s26 = sphi 0, %s28
      %s29 = sphi 0, %s26
      %s30 = sphi 0, %s29
      %s46 = sphi 0, %s30
      %s50 = sphi 0, %s50
      %s52 = sphi 0, %s50
      %s53 = sphi 0, %s52
      %s67 = sphi 0, %s53
      %s71 = sphi 0, %s71
      %s73 = sphi 0, %s71
      %s74 = sphi 0, %s73
      %s88 = sphi 0, %s74
      %s94 = sphi 0, %s96
      %s97 = sphi 0, %s94
      %s98 = sphi 0, %s97
      %s114 = sphi 0, %s98
      %s118 = sphi 0, %s118
      %s120 = sphi 0, %s118
      %s121 = sphi 0, %s120
      %s135 = sphi 0, %s121
      %s139 = sphi 0, %s139
      %s141 = sphi 0, %s139
      %s142 = sphi 0, %s141
      %s156 = sphi 0, %s142
      %s160 = sphi 0, %s160
      %s162 = sphi 0, %s160
      %s163 = sphi 0, %s162
      %s177 = sphi 0, %s163
      %s181 = sphi 0, %s181
      %s183 = sphi 0, %s181
      %s184 = sphi 0, %s183
      %s198 = sphi 0, %s184
      %s204 = sphi 0, %s206
      %s207 = sphi 0, %s204
      %s208 = sphi 0, %s207
      %s224 = sphi 0, %s208
    $region4: #{_lambda_.1} parent=1 // loop_header_branch
      %19 = sbr.rel (%p17) target = $region8
    $region5: #{_lambda_.1} parent=1 // loop_body
      %s21 = ssub.s32 %s16, 1
      %s22 = ssub.s32 %s16, 2
      %s23 = sadd.s32 %s16, 1
      %s24 = ssub.s32 %s16, %s23
      %p25 = scmp.eq.s32.totalorder %s24, 0
      %s27 = sadd.s32 %s26, 1
      %s28 = scalar_select %p25, %s26, %s27
      %p31 = pneg %p25
      %p32 = scmp.eq.s32.totalorder %s16, 1
      %p33 = por %p31, %p32
      %p34 = scmp.ne.s32.totalorder %s26, %s29
      %p35 = scmp.eq.s32.totalorder %s16, 0
      %p36 = por %p34, %p35
      %p37 = scmp.ne.s32.totalorder %s26, %s29
      %p38 = scmp.eq.s32.totalorder %s21, 1
      %p39 = por %p37, %p38
      %p40 = scmp.ne.s32.totalorder %s29, %s30
      %p41 = scmp.eq.s32.totalorder %s21, 0
      %p42 = por %p40, %p41
      %p43 = scmp.ne.s32.totalorder %s29, %s30
      %p44 = scmp.eq.s32.totalorder %s22, 1
      %p45 = por %p43, %p44
      %p47 = scmp.ne.s32.totalorder %s30, %s46
      %p48 = scmp.eq.s32.totalorder %s22, 0
      %p49 = por %p47, %p48
      %s51 = sadd.s32 %s50, 1
      %p54 = scmp.eq.s32.totalorder %s16, 1
      %p55 = scmp.ne.s32.totalorder %s50, %s52
      %p56 = scmp.eq.s32.totalorder %s16, 0
      %p57 = por %p55, %p56
      %p58 = scmp.ne.s32.totalorder %s50, %s52
      %p59 = scmp.eq.s32.totalorder %s21, 1
      %p60 = por %p58, %p59
      %p61 = scmp.ne.s32.totalorder %s52, %s53
      %p62 = scmp.eq.s32.totalorder %s21, 0
      %p63 = por %p61, %p62
      %p64 = scmp.ne.s32.totalorder %s52, %s53
      %p65 = scmp.eq.s32.totalorder %s22, 1
      %p66 = por %p64, %p65
      %p68 = scmp.ne.s32.totalorder %s53, %s67
      %p69 = scmp.eq.s32.totalorder %s22, 0
      %p70 = por %p68, %p69
      %s72 = sadd.s32 %s71, 1
      %p75 = scmp.eq.s32.totalorder %s16, 1
      %p76 = scmp.ne.s32.totalorder %s71, %s73
      %p77 = scmp.eq.s32.totalorder %s16, 0
      %p78 = por %p76, %p77
      %p79 = scmp.ne.s32.totalorder %s71, %s73
      %p80 = scmp.eq.s32.totalorder %s21, 1
      %p81 = por %p79, %p80
      %p82 = scmp.ne.s32.totalorder %s73, %s74
      %p83 = scmp.eq.s32.totalorder %s21, 0
      %p84 = por %p82, %p83
      %p85 = scmp.ne.s32.totalorder %s73, %s74
      %p86 = scmp.eq.s32.totalorder %s22, 1
      %p87 = por %p85, %p86
      %p89 = scmp.ne.s32.totalorder %s74, %s88
      %p90 = scmp.eq.s32.totalorder %s22, 0
      %p91 = por %p89, %p90
      %s92 = ssub.s32 %s16, %s23
      %p93 = scmp.eq.s32.totalorder %s92, 0
      %s95 = sadd.s32 %s94, 1
      %s96 = scalar_select %p93, %s94, %s95
      %p99 = pneg %p93
      %p100 = scmp.eq.s32.totalorder %s16, 1
      %p101 = por %p99, %p100
      %p102 = scmp.ne.s32.totalorder %s94, %s97
      %p103 = scmp.eq.s32.totalorder %s16, 0
      %p104 = por %p102, %p103
      %p105 = scmp.ne.s32.totalorder %s94, %s97
      %p106 = scmp.eq.s32.totalorder %s21, 1
      %p107 = por %p105, %p106
      %p108 = scmp.ne.s32.totalorder %s97, %s98
      %p109 = scmp.eq.s32.totalorder %s21, 0
      %p110 = por %p108, %p109
      %p111 = scmp.ne.s32.totalorder %s97, %s98
      %p112 = scmp.eq.s32.totalorder %s22, 1
      %p113 = por %p111, %p112
      %p115 = scmp.ne.s32.totalorder %s98, %s114
      %p116 = scmp.eq.s32.totalorder %s22, 0
      %p117 = por %p115, %p116
      %s119 = sadd.s32 %s118, 1
      %p122 = scmp.eq.s32.totalorder %s16, 1
      %p123 = scmp.ne.s32.totalorder %s118, %s120
      %p124 = scmp.eq.s32.totalorder %s16, 0
      %p125 = por %p123, %p124
      %p126 = scmp.ne.s32.totalorder %s118, %s120
      %p127 = scmp.eq.s32.totalorder %s21, 1
      %p128 = por %p126, %p127
      %p129 = scmp.ne.s32.totalorder %s120, %s121
      %p130 = scmp.eq.s32.totalorder %s21, 0
      %p131 = por %p129, %p130
      %p132 = scmp.ne.s32.totalorder %s120, %s121
      %p133 = scmp.eq.s32.totalorder %s22, 1
      %p134 = por %p132, %p133
      %p136 = scmp.ne.s32.totalorder %s121, %s135
      %p137 = scmp.eq.s32.totalorder %s22, 0
      %p138 = por %p136, %p137
      %s140 = sadd.s32 %s139, 1
      %p143 = scmp.eq.s32.totalorder %s16, 1
      %p144 = scmp.ne.s32.totalorder %s139, %s141
      %p145 = scmp.eq.s32.totalorder %s16, 0
      %p146 = por %p144, %p145
      %p147 = scmp.ne.s32.totalorder %s139, %s141
      %p148 = scmp.eq.s32.totalorder %s21, 1
      %p149 = por %p147, %p148
      %p150 = scmp.ne.s32.totalorder %s141, %s142
      %p151 = scmp.eq.s32.totalorder %s21, 0
      %p152 = por %p150, %p151
      %p153 = scmp.ne.s32.totalorder %s141, %s142
      %p154 = scmp.eq.s32.totalorder %s22, 1
      %p155 = por %p153, %p154
      %p157 = scmp.ne.s32.totalorder %s142, %s156
      %p158 = scmp.eq.s32.totalorder %s22, 0
      %p159 = por %p157, %p158
      %s161 = sadd.s32 %s160, 1
      %p164 = scmp.eq.s32.totalorder %s16, 1
      %p165 = scmp.ne.s32.totalorder %s160, %s162
      %p166 = scmp.eq.s32.totalorder %s16, 0
      %p167 = por %p165, %p166
      %p168 = scmp.ne.s32.totalorder %s160, %s162
      %p169 = scmp.eq.s32.totalorder %s21, 1
      %p170 = por %p168, %p169
      %p171 = scmp.ne.s32.totalorder %s162, %s163
      %p172 = scmp.eq.s32.totalorder %s21, 0
      %p173 = por %p171, %p172
      %p174 = scmp.ne.s32.totalorder %s162, %s163
      %p175 = scmp.eq.s32.totalorder %s22, 1
      %p176 = por %p174, %p175
      %p178 = scmp.ne.s32.totalorder %s163, %s177
      %p179 = scmp.eq.s32.totalorder %s22, 0
      %p180 = por %p178, %p179
      %s182 = sadd.s32 %s181, 1
      %p185 = scmp.eq.s32.totalorder %s16, 1
      %p186 = scmp.ne.s32.totalorder %s181, %s183
      %p187 = scmp.eq.s32.totalorder %s16, 0
      %p188 = por %p186, %p187
      %p189 = scmp.ne.s32.totalorder %s181, %s183
      %p190 = scmp.eq.s32.totalorder %s21, 1
      %p191 = por %p189, %p190
      %p192 = scmp.ne.s32.totalorder %s183, %s184
      %p193 = scmp.eq.s32.totalorder %s21, 0
      %p194 = por %p192, %p193
      %p195 = scmp.ne.s32.totalorder %s183, %s184
      %p196 = scmp.eq.s32.totalorder %s22, 1
      %p197 = por %p195, %p196
      %p199 = scmp.ne.s32.totalorder %s184, %s198
      %p200 = scmp.eq.s32.totalorder %s22, 0
      %p201 = por %p199, %p200
      %s202 = ssub.s32 %s16, %s23
      %p203 = scmp.eq.s32.totalorder %s202, 0
      %s205 = sadd.s32 %s204, 1
      %s206 = scalar_select %p203, %s204, %s205
      %p209 = pneg %p203
      %p210 = scmp.eq.s32.totalorder %s16, 1
      %p211 = por %p209, %p210
      %p212 = scmp.ne.s32.totalorder %s204, %s207
      %p213 = scmp.eq.s32.totalorder %s16, 0
      %p214 = por %p212, %p213
      %p215 = scmp.ne.s32.totalorder %s204, %s207
      %p216 = scmp.eq.s32.totalorder %s21, 1
      %p217 = por %p215, %p216
      %p218 = scmp.ne.s32.totalorder %s207, %s208
      %p219 = scmp.eq.s32.totalorder %s21, 0
      %p220 = por %p218, %p219
      %p221 = scmp.ne.s32.totalorder %s207, %s208
      %p222 = scmp.eq.s32.totalorder %s22, 1
      %p223 = por %p221, %p222
      %p225 = scmp.ne.s32.totalorder %s208, %s224
      %p226 = scmp.eq.s32.totalorder %s22, 0
      %p227 = por %p225, %p226
      %p228 = scmp.le.s32.totalorder 1, %s16
      %p229 = scmp.lt.s32.totalorder %s16, 3
      %p230 = pnand %p228, %p229
      %p231 = pneg %p230
      // Predicated region
      $region9: #{_lambda_.1} parent=5 // pred_check
        _
      $region10: #{_lambda_.1} parent=5 // pred_check_branch
        %233 = sbr.rel (%p230) target = $region12
      $region11: #{_lambda_.1} parent=5 // pred_region
        %s234 = ssub.s32 %s16, 1
        // Predicated region
        $region13: #{_lambda_.1} parent=11 // pred_check
          %p235 = pneg %p63
        $region14: #{_lambda_.1} parent=11 // pred_check_branch
          %237 = sbr.rel (%p235) target = $region16
        $region15: #{_lambda_.1} parent=11 // pred_region
          _
        $region16: #{_lambda_.1} parent=11 // pred_fallthru
          _
        // Predicated region
        $region17: #{_lambda_.1} parent=11 // pred_check
          %p238 = pneg %p84
        $region18: #{_lambda_.1} parent=11 // pred_check_branch
          %240 = sbr.rel (%p238) target = $region20
        $region19: #{_lambda_.1} parent=11 // pred_region
          _
        $region20: #{_lambda_.1} parent=11 // pred_fallthru
          _
        // Predicated region
        $region21: #{_lambda_.1} parent=11 // pred_check
          %p241 = pneg %p131
        $region22: #{_lambda_.1} parent=11 // pred_check_branch
          %243 = sbr.rel (%p241) target = $region24
        $region23: #{_lambda_.1} parent=11 // pred_region
          _
        $region24: #{_lambda_.1} parent=11 // pred_fallthru
          _
        // Predicated region
        $region25: #{_lambda_.1} parent=11 // pred_check
          %p244 = pneg %p152
        $region26: #{_lambda_.1} parent=11 // pred_check_branch
          %246 = sbr.rel (%p244) target = $region28
        $region27: #{_lambda_.1} parent=11 // pred_region
          _
        $region28: #{_lambda_.1} parent=11 // pred_fallthru
          _
        // Predicated region
        $region29: #{_lambda_.1} parent=11 // pred_check
          %p247 = pneg %p173
        $region30: #{_lambda_.1} parent=11 // pred_check_branch
          %249 = sbr.rel (%p247) target = $region32
        $region31: #{_lambda_.1} parent=11 // pred_region
          _
        $region32: #{_lambda_.1} parent=11 // pred_fallthru
          _
        // Predicated region
        $region33: #{_lambda_.1} parent=11 // pred_check
          %p250 = pneg %p194
        $region34: #{_lambda_.1} parent=11 // pred_check_branch
          %252 = sbr.rel (%p250) target = $region36
        $region35: #{_lambda_.1} parent=11 // pred_region
          _
        $region36: #{_lambda_.1} parent=11 // pred_fallthru
          _
      $region12: #{_lambda_.1} parent=5 // pred_fallthru
        _
      %p253 = scmp.lt.s32.totalorder %s16, 2
      // Predicated region
      $region37: #{_lambda_.1} parent=5 // pred_check
        %p254 = pneg %p253
      $region38: #{_lambda_.1} parent=5 // pred_check_branch
        %256 = sbr.rel (%p254) target = $region40
      $region39: #{_lambda_.1} parent=5 // pred_region
        // Predicated region
        $region41: #{_lambda_.1} parent=39 // pred_check
          %p257 = pneg %p36
        $region42: #{_lambda_.1} parent=39 // pred_check_branch
          %259 = sbr.rel (%p257) target = $region44
        $region43: #{_lambda_.1} parent=39 // pred_region
          %s260 = sand.u32 %s26, 1
          %s261 = sand.u32 %s26, 1
          %s262 = smul.addr %s261, 768
          %s263 = scalar_lea.vmem [#allocation3], %s262
          %s264 = smul.u32 2, %s16
          %s265 = smul.addr %s264, 3
          %s266 = smul.addr %s265, 8
          %s267 = scalar_lea.vmem %s0, %s266
          // Predicated region
          $region45: #{_lambda_.1} parent=43 // pred_check
            _
          $region46: #{_lambda_.1} parent=43 // pred_check_branch
            %269 = sbr.rel (0) target = $region48
          $region47: #{_lambda_.1} parent=43 // pred_region
            // Predicated region
            $region49: #{_lambda_.1} parent=47 // pred_check
              _
            $region50: #{_lambda_.1} parent=47 // pred_check_branch
              %271 = sbr.rel (0) target = $region52
            $region51: #{_lambda_.1} parent=47 // pred_region
              loop: start=0, step=1, limit=1
              $region53: #{_lambda_.1} parent=51 // loop_pre_header
                _
              $region54: #{_lambda_.1} parent=51 // loop_header
                %s273 = sphi 0, %s277
                %p274 = scmp.ge.s32.totalorder %s273, 1
                %s278 = sphi %s267, %s267
                %s279 = sphi %s263, %s263
              $region55: #{_lambda_.1} parent=51 // loop_header_branch
                %276 = sbr.rel (%p274) target = $region59
              $region56: #{_lambda_.1} parent=51 // loop_body
                %v280 = vld [vmem:[%s278] sm:$0xff]
                %281 = vst [vmem:[%s279] sm:$0xff] %v280
                %v282 = vld [vmem:[%s278 + $0x8] sm:$0xff]
                %283 = vst [vmem:[%s279 + $0x8] sm:$0xff] %v282
                %v284 = vld [vmem:[%s278 + $0x10] sm:$0xff]
                %285 = vst [vmem:[%s279 + $0x10] sm:$0xff] %v284
                %v286 = vld [vmem:[%s278 + $0x18] sm:$0xff]
                %287 = vst [vmem:[%s279 + $0x18] sm:$0xff] %v286
                %v288 = vld [vmem:[%s278 + $0x20] sm:$0xff]
                %289 = vst [vmem:[%s279 + $0x20] sm:$0xff] %v288
                %v290 = vld [vmem:[%s278 + $0x28] sm:$0xff]
                %291 = vst [vmem:[%s279 + $0x28] sm:$0xff] %v290
                %v292 = vld [vmem:[%s278 + $0x60] sm:$0xff]
                %293 = vst [vmem:[%s279 + $0x30] sm:$0xff] %v292
                %v294 = vld [vmem:[%s278 + $0x68] sm:$0xff]
                %295 = vst [vmem:[%s279 + $0x38] sm:$0xff] %v294
                %v296 = vld [vmem:[%s278 + $0x70] sm:$0xff]
                %297 = vst [vmem:[%s279 + $0x40] sm:$0xff] %v296
                %v298 = vld [vmem:[%s278 + $0x78] sm:$0xff]
                %299 = vst [vmem:[%s279 + $0x48] sm:$0xff] %v298
                %v300 = vld [vmem:[%s278 + $0x80] sm:$0xff]
                %301 = vst [vmem:[%s279 + $0x50] sm:$0xff] %v300
                %v302 = vld [vmem:[%s278 + $0x88] sm:$0xff]
                %303 = vst [vmem:[%s279 + $0x58] sm:$0xff] %v302
                %v304 = vld [vmem:[%s278 + $0xc0] sm:$0xff]
                %305 = vst [vmem:[%s279 + $0x60] sm:$0xff] %v304
                %v306 = vld [vmem:[%s278 + $0xc8] sm:$0xff]
                %307 = vst [vmem:[%s279 + $0x68] sm:$0xff] %v306
                %v308 = vld [vmem:[%s278 + $0xd0] sm:$0xff]
                %309 = vst [vmem:[%s279 + $0x70] sm:$0xff] %v308
                %v310 = vld [vmem:[%s278 + $0xd8] sm:$0xff]
                %311 = vst [vmem:[%s279 + $0x78] sm:$0xff] %v310
                %v312 = vld [vmem:[%s278 + $0xe0] sm:$0xff]
                %313 = vst [vmem:[%s279 + $0x80] sm:$0xff] %v312
                %v314 = vld [vmem:[%s278 + $0xe8] sm:$0xff]
                %315 = vst [vmem:[%s279 + $0x88] sm:$0xff] %v314
                %v316 = vld [vmem:[%s278 + $0x120] sm:$0xff]
                %317 = vst [vmem:[%s279 + $0x90] sm:$0xff] %v316
                %v318 = vld [vmem:[%s278 + $0x128] sm:$0xff]
                %319 = vst [vmem:[%s279 + $0x98] sm:$0xff] %v318
                %v320 = vld [vmem:[%s278 + $0x130] sm:$0xff]
                %321 = vst [vmem:[%s279 + $0xa0] sm:$0xff] %v320
                %v322 = vld [vmem:[%s278 + $0x138] sm:$0xff]
                %323 = vst [vmem:[%s279 + $0xa8] sm:$0xff] %v322
                %v324 = vld [vmem:[%s278 + $0x140] sm:$0xff]
                %325 = vst [vmem:[%s279 + $0xb0] sm:$0xff] %v324
                %v326 = vld [vmem:[%s278 + $0x148] sm:$0xff]
                %327 = vst [vmem:[%s279 + $0xb8] sm:$0xff] %v326
                %v328 = vld [vmem:[%s278 + $0x180] sm:$0xff]
                %329 = vst [vmem:[%s279 + $0xc0] sm:$0xff] %v328
                %v330 = vld [vmem:[%s278 + $0x188] sm:$0xff]
                %331 = vst [vmem:[%s279 + $0xc8] sm:$0xff] %v330
                %v332 = vld [vmem:[%s278 + $0x190] sm:$0xff]
                %333 = vst [vmem:[%s279 + $0xd0] sm:$0xff] %v332
                %v334 = vld [vmem:[%s278 + $0x198] sm:$0xff]
                %335 = vst [vmem:[%s279 + $0xd8] sm:$0xff] %v334
                %v336 = vld [vmem:[%s278 + $0x1a0] sm:$0xff]
                %337 = vst [vmem:[%s279 + $0xe0] sm:$0xff] %v336
                %v338 = vld [vmem:[%s278 + $0x1a8] sm:$0xff]
                %339 = vst [vmem:[%s279 + $0xe8] sm:$0xff] %v338
                %v340 = vld [vmem:[%s278 + $0x1e0] sm:$0xff]
                %341 = vst [vmem:[%s279 + $0xf0] sm:$0xff] %v340
                %v342 = vld [vmem:[%s278 + $0x1e8] sm:$0xff]
                %343 = vst [vmem:[%s279 + $0xf8] sm:$0xff] %v342
                %v344 = vld [vmem:[%s278 + $0x1f0] sm:$0xff]
                %345 = vst [vmem:[%s279 + $0x100] sm:$0xff] %v344
                %v346 = vld [vmem:[%s278 + $0x1f8] sm:$0xff]
                %347 = vst [vmem:[%s279 + $0x108] sm:$0xff] %v346
                %v348 = vld [vmem:[%s278 + $0x200] sm:$0xff]
                %349 = vst [vmem:[%s279 + $0x110] sm:$0xff] %v348
                %v350 = vld [vmem:[%s278 + $0x208] sm:$0xff]
                %351 = vst [vmem:[%s279 + $0x118] sm:$0xff] %v350
                %v352 = vld [vmem:[%s278 + $0x240] sm:$0xff]
                %353 = vst [vmem:[%s279 + $0x120] sm:$0xff] %v352
                %v354 = vld [vmem:[%s278 + $0x248] sm:$0xff]
                %355 = vst [vmem:[%s279 + $0x128] sm:$0xff] %v354
                %v356 = vld [vmem:[%s278 + $0x250] sm:$0xff]
                %357 = vst [vmem:[%s279 + $0x130] sm:$0xff] %v356
                %v358 = vld [vmem:[%s278 + $0x258] sm:$0xff]
                %359 = vst [vmem:[%s279 + $0x138] sm:$0xff] %v358
                %v360 = vld [vmem:[%s278 + $0x260] sm:$0xff]
                %361 = vst [vmem:[%s279 + $0x140] sm:$0xff] %v360
                %v362 = vld [vmem:[%s278 + $0x268] sm:$0xff]
                %363 = vst [vmem:[%s279 + $0x148] sm:$0xff] %v362
                %v364 = vld [vmem:[%s278 + $0x2a0] sm:$0xff]
                %365 = vst [vmem:[%s279 + $0x150] sm:$0xff] %v364
                %v366 = vld [vmem:[%s278 + $0x2a8] sm:$0xff]
                %367 = vst [vmem:[%s279 + $0x158] sm:$0xff] %v366
                %v368 = vld [vmem:[%s278 + $0x2b0] sm:$0xff]
                %369 = vst [vmem:[%s279 + $0x160] sm:$0xff] %v368
                %v370 = vld [vmem:[%s278 + $0x2b8] sm:$0xff]
                %371 = vst [vmem:[%s279 + $0x168] sm:$0xff] %v370
                %v372 = vld [vmem:[%s278 + $0x2c0] sm:$0xff]
                %373 = vst [vmem:[%s279 + $0x170] sm:$0xff] %v372
                %v374 = vld [vmem:[%s278 + $0x2c8] sm:$0xff]
                %375 = vst [vmem:[%s279 + $0x178] sm:$0xff] %v374
                %v376 = vld [vmem:[%s278 + $0x300] sm:$0xff]
                %377 = vst [vmem:[%s279 + $0x180] sm:$0xff] %v376
                %v378 = vld [vmem:[%s278 + $0x308] sm:$0xff]
                %379 = vst [vmem:[%s279 + $0x188] sm:$0xff] %v378
                %v380 = vld [vmem:[%s278 + $0x310] sm:$0xff]
                %381 = vst [vmem:[%s279 + $0x190] sm:$0xff] %v380
                %v382 = vld [vmem:[%s278 + $0x318] sm:$0xff]
                %383 = vst [vmem:[%s279 + $0x198] sm:$0xff] %v382
                %v384 = vld [vmem:[%s278 + $0x320] sm:$0xff]
                %385 = vst [vmem:[%s279 + $0x1a0] sm:$0xff] %v384
                %v386 = vld [vmem:[%s278 + $0x328] sm:$0xff]
                %387 = vst [vmem:[%s279 + $0x1a8] sm:$0xff] %v386
                %v388 = vld [vmem:[%s278 + $0x360] sm:$0xff]
                %389 = vst [vmem:[%s279 + $0x1b0] sm:$0xff] %v388
                %v390 = vld [vmem:[%s278 + $0x368] sm:$0xff]
                %391 = vst [vmem:[%s279 + $0x1b8] sm:$0xff] %v390
                %v392 = vld [vmem:[%s278 + $0x370] sm:$0xff]
                %393 = vst [vmem:[%s279 + $0x1c0] sm:$0xff] %v392
                %v394 = vld [vmem:[%s278 + $0x378] sm:$0xff]
                %395 = vst [vmem:[%s279 + $0x1c8] sm:$0xff] %v394
                %v396 = vld [vmem:[%s278 + $0x380] sm:$0xff]
                %397 = vst [vmem:[%s279 + $0x1d0] sm:$0xff] %v396
                %v398 = vld [vmem:[%s278 + $0x388] sm:$0xff]
                %399 = vst [vmem:[%s279 + $0x1d8] sm:$0xff] %v398
                %v400 = vld [vmem:[%s278 + $0x3c0] sm:$0xff]
                %401 = vst [vmem:[%s279 + $0x1e0] sm:$0xff] %v400
                %v402 = vld [vmem:[%s278 + $0x3c8] sm:$0xff]
                %403 = vst [vmem:[%s279 + $0x1e8] sm:$0xff] %v402
                %v404 = vld [vmem:[%s278 + $0x3d0] sm:$0xff]
                %405 = vst [vmem:[%s279 + $0x1f0] sm:$0xff] %v404
                %v406 = vld [vmem:[%s278 + $0x3d8] sm:$0xff]
                %407 = vst [vmem:[%s279 + $0x1f8] sm:$0xff] %v406
                %v408 = vld [vmem:[%s278 + $0x3e0] sm:$0xff]
                %409 = vst [vmem:[%s279 + $0x200] sm:$0xff] %v408
                %v410 = vld [vmem:[%s278 + $0x3e8] sm:$0xff]
                %411 = vst [vmem:[%s279 + $0x208] sm:$0xff] %v410
                %v412 = vld [vmem:[%s278 + $0x420] sm:$0xff]
                %413 = vst [vmem:[%s279 + $0x210] sm:$0xff] %v412
                %v414 = vld [vmem:[%s278 + $0x428] sm:$0xff]
                %415 = vst [vmem:[%s279 + $0x218] sm:$0xff] %v414
                %v416 = vld [vmem:[%s278 + $0x430] sm:$0xff]
                %417 = vst [vmem:[%s279 + $0x220] sm:$0xff] %v416
                %v418 = vld [vmem:[%s278 + $0x438] sm:$0xff]
                %419 = vst [vmem:[%s279 + $0x228] sm:$0xff] %v418
                %v420 = vld [vmem:[%s278 + $0x440] sm:$0xff]
                %421 = vst [vmem:[%s279 + $0x230] sm:$0xff] %v420
                %v422 = vld [vmem:[%s278 + $0x448] sm:$0xff]
                %423 = vst [vmem:[%s279 + $0x238] sm:$0xff] %v422
                %v424 = vld [vmem:[%s278 + $0x480] sm:$0xff]
                %425 = vst [vmem:[%s279 + $0x240] sm:$0xff] %v424
                %v426 = vld [vmem:[%s278 + $0x488] sm:$0xff]
                %427 = vst [vmem:[%s279 + $0x248] sm:$0xff] %v426
                %v428 = vld [vmem:[%s278 + $0x490] sm:$0xff]
                %429 = vst [vmem:[%s279 + $0x250] sm:$0xff] %v428
                %v430 = vld [vmem:[%s278 + $0x498] sm:$0xff]
                %431 = vst [vmem:[%s279 + $0x258] sm:$0xff] %v430
                %v432 = vld [vmem:[%s278 + $0x4a0] sm:$0xff]
                %433 = vst [vmem:[%s279 + $0x260] sm:$0xff] %v432
                %v434 = vld [vmem:[%s278 + $0x4a8] sm:$0xff]
                %435 = vst [vmem:[%s279 + $0x268] sm:$0xff] %v434
                %v436 = vld [vmem:[%s278 + $0x4e0] sm:$0xff]
                %437 = vst [vmem:[%s279 + $0x270] sm:$0xff] %v436
                %v438 = vld [vmem:[%s278 + $0x4e8] sm:$0xff]
                %439 = vst [vmem:[%s279 + $0x278] sm:$0xff] %v438
                %v440 = vld [vmem:[%s278 + $0x4f0] sm:$0xff]
                %441 = vst [vmem:[%s279 + $0x280] sm:$0xff] %v440
                %v442 = vld [vmem:[%s278 + $0x4f8] sm:$0xff]
                %443 = vst [vmem:[%s279 + $0x288] sm:$0xff] %v442
                %v444 = vld [vmem:[%s278 + $0x500] sm:$0xff]
                %445 = vst [vmem:[%s279 + $0x290] sm:$0xff] %v444
                %v446 = vld [vmem:[%s278 + $0x508] sm:$0xff]
                %447 = vst [vmem:[%s279 + $0x298] sm:$0xff] %v446
                %v448 = vld [vmem:[%s278 + $0x540] sm:$0xff]
                %449 = vst [vmem:[%s279 + $0x2a0] sm:$0xff] %v448
                %v450 = vld [vmem:[%s278 + $0x548] sm:$0xff]
                %451 = vst [vmem:[%s279 + $0x2a8] sm:$0xff] %v450
                %v452 = vld [vmem:[%s278 + $0x550] sm:$0xff]
                %453 = vst [vmem:[%s279 + $0x2b0] sm:$0xff] %v452
                %v454 = vld [vmem:[%s278 + $0x558] sm:$0xff]
                %455 = vst [vmem:[%s279 + $0x2b8] sm:$0xff] %v454
                %v456 = vld [vmem:[%s278 + $0x560] sm:$0xff]
                %457 = vst [vmem:[%s279 + $0x2c0] sm:$0xff] %v456
                %v458 = vld [vmem:[%s278 + $0x568] sm:$0xff]
                %459 = vst [vmem:[%s279 + $0x2c8] sm:$0xff] %v458
                %v460 = vld [vmem:[%s278 + $0x5a0] sm:$0xff]
                %461 = vst [vmem:[%s279 + $0x2d0] sm:$0xff] %v460
                %v462 = vld [vmem:[%s278 + $0x5a8] sm:$0xff]
                %463 = vst [vmem:[%s279 + $0x2d8] sm:$0xff] %v462
                %v464 = vld [vmem:[%s278 + $0x5b0] sm:$0xff]
                %465 = vst [vmem:[%s279 + $0x2e0] sm:$0xff] %v464
                %v466 = vld [vmem:[%s278 + $0x5b8] sm:$0xff]
                %467 = vst [vmem:[%s279 + $0x2e8] sm:$0xff] %v466
                %v468 = vld [vmem:[%s278 + $0x5c0] sm:$0xff]
                %469 = vst [vmem:[%s279 + $0x2f0] sm:$0xff] %v468
                %v470 = vld [vmem:[%s278 + $0x5c8] sm:$0xff]
                %471 = vst [vmem:[%s279 + $0x2f8] sm:$0xff] %v470
              $region57: #{_lambda_.1} parent=51 // loop_footer
                %s277 = sadd.s32 1, %s273
              $region58: #{_lambda_.1} parent=51 // loop_footer_branch
                %272 = sbr.rel target = $region54
              $region59: #{_lambda_.1} parent=51 // loop_exit
                _
            $region52: #{_lambda_.1} parent=47 // pred_fallthru
              _
            // Predicated region
            $region60: #{_lambda_.1} parent=47 // pred_check
              _
            $region61: #{_lambda_.1} parent=47 // pred_check_branch
              %473 = sbr.rel target = $region63
            $region62: #{_lambda_.1} parent=47 // pred_region
              _
            $region63: #{_lambda_.1} parent=47 // pred_fallthru
              _
          $region48: #{_lambda_.1} parent=43 // pred_fallthru
            _
          %474 = vnop
        $region44: #{_lambda_.1} parent=39 // pred_fallthru
          _
        // Predicated region
        $region64: #{_lambda_.1} parent=39 // pred_check
          %p475 = pneg %p104
        $region65: #{_lambda_.1} parent=39 // pred_check_branch
          %477 = sbr.rel (%p475) target = $region67
        $region66: #{_lambda_.1} parent=39 // pred_region
          %s478 = smul.u32 2, %s16
          %p479 = scmp.lt.s32.totalorder %s478, 3
          %s480 = scalar_select %p479, %s478, 3
          %s481 = smul.addr %s480, 4
          %s482 = smul.addr %s481, 8
          %s483 = scalar_lea.vmem %s3, %s482
          %s484 = smul.u32 2, %s16
        $region67: #{_lambda_.1} parent=39 // pred_fallthru
          _
      $region40: #{_lambda_.1} parent=5 // pred_fallthru
        _
      %p485 = scmp.le.s32.totalorder 1, %s16
      %p486 = scmp.lt.s32.totalorder %s16, 3
      %p487 = pnand %p485, %p486
      %p488 = pneg %p487
      // Predicated region
      $region68: #{_lambda_.1} parent=5 // pred_check
        _
      $region69: #{_lambda_.1} parent=5 // pred_check_branch
        %490 = sbr.rel (%p487) target = $region71
      $region70: #{_lambda_.1} parent=5 // pred_region
        %s491 = ssub.s32 %s16, 1
        %s492 = sand.u32 %s29, 1
        %s493 = sand.u32 %s29, 1
        %s494 = smul.addr %s493, 768
        %s495 = scalar_lea.vmem [#allocation3], %s494
        // Predicated region
        $region72: #{_lambda_.1} parent=70 // pred_check
          %p496 = pneg %p42
        $region73: #{_lambda_.1} parent=70 // pred_check_branch
          %498 = sbr.rel (%p496) target = $region75
        $region74: #{_lambda_.1} parent=70 // pred_region
          _
        $region75: #{_lambda_.1} parent=70 // pred_fallthru
          _
        %s499 = sand.u32 %s29, 1
        %s500 = sand.u32 %s29, 1
        %s501 = smul.addr %s500, 768
        %s502 = scalar_lea.vmem [#allocation3], %s501
        %p503 = pneg %p42
        %p504 = pneg %p39
        %p505 = pneg %p63
        %p506 = pneg %p60
        %p507 = pneg %p84
        %p508 = pneg %p81
        %s509 = smul.u32 2, %s21
        %p510 = scmp.lt.s32.totalorder %s509, 3
        %s511 = scalar_select %p510, %s509, 3
        %s512 = smul.addr %s511, 4
        %s513 = smul.addr %s512, 8
        %s514 = scalar_lea.vmem %s3, %s513
        %p515 = pneg %p110
        %p516 = pneg %p107
        %p517 = pneg %p131
        %p518 = pneg %p128
        %p519 = pneg %p152
        %p520 = pneg %p149
        %p521 = pneg %p173
        %p522 = pneg %p170
        %p523 = pneg %p194
        %p524 = pneg %p191
        %p525 = pneg %p220
        %p526 = pneg %p217
        %s527 = smul.u32 2, %s21
        %p528 = scmp.lt.s32.totalorder %s527, 3
        %s529 = scalar_select %p528, %s527, 3
        %s530 = smul.addr %s529, 8
        %s531 = scalar_lea.vmem %s8, %s530
        %s532 = smul.u32 2, %s21
        %s533 = smul.u32 2, %s21
        %p534 = scmp.lt.s32.totalorder %s533, 3
        %s535 = scalar_select %p534, %s533, 3
        %s536 = smul.addr %s535, 4
        %s537 = smul.addr %s536, 8
        %s538 = scalar_lea.vmem %s3, %s537
        %s539 = smul.u32 2, %s21
        %s540 = smul.u32 2, %s21
        %p541 = scmp.lt.s32.totalorder %s540, 3
        %s542 = scalar_select %p541, %s540, 3
        %s543 = smul.addr %s542, 8
        %s544 = scalar_lea.vmem %s8, %s543
        %s545 = smul.u32 2, %s21
        %v546 = vld [vmem:[%s1] sm:$0xff]
        %v547 = vld [vmem:[%s1 + $0x8] sm:$0xff]
        %v548 = vld [vmem:[%s1 + $0x10] sm:$0xff]
        %v549 = vld [vmem:[%s1 + $0x18] sm:$0xff]
        %v550 = vld [vmem:[%s1 + $0x20] sm:$0xff]
        %v551 = vld [vmem:[%s1 + $0x28] sm:$0xff]
        %v552 = vld [vmem:[%s1 + $0x30] sm:$0xff]
        %v553 = vld [vmem:[%s1 + $0x38] sm:$0xff]
        %v554 = vld [vmem:[%s1 + $0x40] sm:$0xff]
        %v555 = vld [vmem:[%s1 + $0x48] sm:$0xff]
        %v556 = vld [vmem:[%s1 + $0x50] sm:$0xff]
        %v557 = vld [vmem:[%s1 + $0x58] sm:$0xff]
        %v558 = vld [vmem:[%s1 + $0x60] sm:$0xff]
        %v559 = vld [vmem:[%s1 + $0x68] sm:$0xff]
        %v560 = vld [vmem:[%s1 + $0x70] sm:$0xff]
        %v561 = vld [vmem:[%s1 + $0x78] sm:$0xff]
        %v562 = vld [vmem:[%s1 + $0x80] sm:$0xff]
        %v563 = vld [vmem:[%s1 + $0x88] sm:$0xff]
        %v564 = vld [vmem:[%s1 + $0x90] sm:$0xff]
        %v565 = vld [vmem:[%s1 + $0x98] sm:$0xff]
        %v566 = vld [vmem:[%s1 + $0xa0] sm:$0xff]
        %v567 = vld [vmem:[%s1 + $0xa8] sm:$0xff]
        %v568 = vld [vmem:[%s1 + $0xb0] sm:$0xff]
        %v569 = vld [vmem:[%s1 + $0xb8] sm:$0xff]
        %v570 = vld [vmem:[%s1 + $0xc0] sm:$0xff]
        %v571 = vld [vmem:[%s1 + $0xc8] sm:$0xff]
        %v572 = vld [vmem:[%s1 + $0xd0] sm:$0xff]
        %v573 = vld [vmem:[%s1 + $0xd8] sm:$0xff]
        %v574 = vld [vmem:[%s1 + $0xe0] sm:$0xff]
        %v575 = vld [vmem:[%s1 + $0xe8] sm:$0xff]
        %v576 = vld [vmem:[%s1 + $0xf0] sm:$0xff]
        %v577 = vld [vmem:[%s1 + $0xf8] sm:$0xff]
        %v578 = vld [vmem:[%s1 + $0x100] sm:$0xff]
        %v579 = vld [vmem:[%s1 + $0x108] sm:$0xff]
        %v580 = vld [vmem:[%s1 + $0x110] sm:$0xff]
        %v581 = vld [vmem:[%s1 + $0x118] sm:$0xff]
        %v582 = vld [vmem:[%s1 + $0x120] sm:$0xff]
        %v583 = vld [vmem:[%s1 + $0x128] sm:$0xff]
        %v584 = vld [vmem:[%s1 + $0x130] sm:$0xff]
        %v585 = vld [vmem:[%s1 + $0x138] sm:$0xff]
        %v586 = vld [vmem:[%s1 + $0x140] sm:$0xff]
        %v587 = vld [vmem:[%s1 + $0x148] sm:$0xff]
        %v588 = vld [vmem:[%s1 + $0x150] sm:$0xff]
        %v589 = vld [vmem:[%s1 + $0x158] sm:$0xff]
        %v590 = vld [vmem:[%s1 + $0x160] sm:$0xff]
        %v591 = vld [vmem:[%s1 + $0x168] sm:$0xff]
        %v592 = vld [vmem:[%s1 + $0x170] sm:$0xff]
        %v593 = vld [vmem:[%s1 + $0x178] sm:$0xff]
        %v594 = vld [vmem:[%s2] sm:$0x7]
        %v595 = vld [vmem:[%s495] sm:$0xff]
        %v596 = vld [vmem:[%s495 + $0x8] sm:$0xff]
        %v597 = vld [vmem:[%s495 + $0x10] sm:$0xff]
        %v598 = vld [vmem:[%s495 + $0x18] sm:$0xff]
        %v599 = vld [vmem:[%s495 + $0x20] sm:$0xff]
        %v600 = vld [vmem:[%s495 + $0x28] sm:$0xff]
        %v602 = vlaneseq
        %v603 = vshrl.u32 %v602, 7
        %v604 = vsub.s32 0, %v603
        %v605 = vrot.slane %v594, %v604
        %v606 = vlaneseq
        %v607 = vshrl.u32 %v606, 7
        %v608 = vsub.s32 1, %v607
        %v609 = vrot.slane %v594, %v608
        %v610 = vlaneseq
        %v611 = vshrl.u32 %v610, 7
        %v612 = vsub.s32 2, %v611
        %v613 = vrot.slane %v594, %v612
        %617 = vmatprep.subr.mxu0 %v547
        %618 = vmatpush1.msra.mxu0 %v546
        %619 = vmatprep.subr.mxu0 %v550
        %620 = vmatpush1.msra.mxu0 %v549
        %621 = vmatprep.subr.mxu0 %v553
        %622 = vmatpush1.msra.mxu0 %v552
        %623 = vmatprep.subr.mxu0 %v556
        %624 = vmatpush1.msra.mxu0 %v555
        %625 = vmatprep.subr.mxu0 %v559
        %626 = vmatpush1.msra.mxu0 %v558
        %627 = vmatprep.subr.mxu0 %v562
        %628 = vmatpush1.msra.mxu0 %v561
        %629 = vmatprep.subr.mxu0 %v565
        %630 = vmatpush1.msra.mxu0 %v564
        %631 = vmatprep.subr.mxu0 %v568
        %632 = vmatpush1.msra.mxu0 %v567
        %633 = vmatprep.subr.mxu0 %v571
        %634 = vmatpush1.msra.mxu0 %v570
        %635 = vmatprep.subr.mxu0 %v574
        %636 = vmatpush1.msra.mxu0 %v573
        %637 = vmatprep.subr.mxu0 %v577
        %638 = vmatpush1.msra.mxu0 %v576
        %639 = vmatprep.subr.mxu0 %v580
        %640 = vmatpush1.msra.mxu0 %v579
        %641 = vmatprep.subr.mxu0 %v583
        %642 = vmatpush1.msra.mxu0 %v582
        %643 = vmatprep.subr.mxu0 %v586
        %644 = vmatpush1.msra.mxu0 %v585
        %645 = vmatprep.subr.mxu0 %v589
        %646 = vmatpush1.msra.mxu0 %v588
        %647 = vmatprep.subr.mxu0 %v592
        %648 = vmatpush1.msra.mxu0 %v591
        %649 = vmatprep.subr.mxu0 0.0
        %650 = vmatpush1.msra.mxu0 0.0
        %651 = vmatprep.subr.mxu0 0.0
        %652 = vmatpush1.msra.mxu0 0.0
        %653 = vmatprep.subr.mxu0 0.0
        %654 = vmatpush1.msra.mxu0 0.0
        %655 = vmatprep.subr.mxu0 0.0
        %656 = vmatpush1.msra.mxu0 0.0
        %657 = vmatprep.subr.mxu0 0.0
        %658 = vmatpush1.msra.mxu0 0.0
        %659 = vmatprep.subr.mxu0 0.0
        %660 = vmatpush1.msra.mxu0 0.0
        %661 = vmatprep.subr.mxu0 0.0
        %662 = vmatpush1.msra.mxu0 0.0
        %663 = vmatprep.subr.mxu0 0.0
        %664 = vmatpush1.msra.mxu0 0.0
        %665 = vmatprep.subr.mxu0 0.0
        %666 = vmatpush1.msra.mxu0 0.0
        %667 = vmatprep.subr.mxu0 0.0
        %668 = vmatpush1.msra.mxu0 0.0
        %669 = vmatprep.subr.mxu0 0.0
        %670 = vmatpush1.msra.mxu0 0.0
        %671 = vmatprep.subr.mxu0 0.0
        %672 = vmatpush1.msra.mxu0 0.0
        %673 = vmatprep.subr.mxu0 0.0
        %674 = vmatpush1.msra.mxu0 0.0
        %675 = vmatprep.subr.mxu0 0.0
        %676 = vmatpush1.msra.mxu0 0.0
        %677 = vmatprep.subr.mxu0 0.0
        %678 = vmatpush1.msra.mxu0 0.0
        %679 = vmatprep.subr.mxu0 0.0
        %680 = vmatpush1.msra.mxu0 0.0
        %681 = vmatprep.mubr.f32.mxu0 0.0
        %682 = vmatmul.mubr.f32.gmra.mrb[0].mxu0 0.0
        %v683 = vpop.f32.mrb[0].mxu0
        %v684 = vadd.f32 %v605, %v683
        %v685 = vpop.f32.mrb[0].mxu0
        %v686 = vadd.f32 %v609, %v685
        %687 = vmatprep.mubr.f32.mxu0 0.0
        %688 = vmatmul.mubr.f32.gmra.mrb[0].mxu0 0.0
        %v689 = vpop.f32.mrb[0].mxu0
        %v690 = vadd.f32 %v605, %v689
        %v691 = vpop.f32.mrb[0].mxu0
        %v692 = vadd.f32 %v609, %v691
        %693 = vdwg.mxu0
        %694 = vmatprep.subr.mxu0 0.0
        %695 = vmatpush1.msra.mxu0 %v548
        %696 = vmatprep.subr.mxu0 0.0
        %697 = vmatpush1.msra.mxu0 %v551
        %698 = vmatprep.subr.mxu0 0.0
        %699 = vmatpush1.msra.mxu0 %v554
        %700 = vmatprep.subr.mxu0 0.0
        %701 = vmatpush1.msra.mxu0 %v557
        %702 = vmatprep.subr.mxu0 0.0
        %703 = vmatpush1.msra.mxu0 %v560
        %704 = vmatprep.subr.mxu0 0.0
        %705 = vmatpush1.msra.mxu0 %v563
        %706 = vmatprep.subr.mxu0 0.0
        %707 = vmatpush1.msra.mxu0 %v566
        %708 = vmatprep.subr.mxu0 0.0
        %709 = vmatpush1.msra.mxu0 %v569
        %710 = vmatprep.subr.mxu0 0.0
        %711 = vmatpush1.msra.mxu0 %v572
        %712 = vmatprep.subr.mxu0 0.0
        %713 = vmatpush1.msra.mxu0 %v575
        %714 = vmatprep.subr.mxu0 0.0
        %715 = vmatpush1.msra.mxu0 %v578
        %716 = vmatprep.subr.mxu0 0.0
        %717 = vmatpush1.msra.mxu0 %v581
        %718 = vmatprep.subr.mxu0 0.0
        %719 = vmatpush1.msra.mxu0 %v584
        %720 = vmatprep.subr.mxu0 0.0
        %721 = vmatpush1.msra.mxu0 %v587
        %722 = vmatprep.subr.mxu0 0.0
        %723 = vmatpush1.msra.mxu0 %v590
        %724 = vmatprep.subr.mxu0 0.0
        %725 = vmatpush1.msra.mxu0 %v593
        %726 = vmatprep.subr.mxu0 0.0
        %727 = vmatpush1.msra.mxu0 0.0
        %728 = vmatprep.subr.mxu0 0.0
        %729 = vmatpush1.msra.mxu0 0.0
        %730 = vmatprep.subr.mxu0 0.0
        %731 = vmatpush1.msra.mxu0 0.0
        %732 = vmatprep.subr.mxu0 0.0
        %733 = vmatpush1.msra.mxu0 0.0
        %734 = vmatprep.subr.mxu0 0.0
        %735 = vmatpush1.msra.mxu0 0.0
        %736 = vmatprep.subr.mxu0 0.0
        %737 = vmatpush1.msra.mxu0 0.0
        %738 = vmatprep.subr.mxu0 0.0
        %739 = vmatpush1.msra.mxu0 0.0
        %740 = vmatprep.subr.mxu0 0.0
        %741 = vmatpush1.msra.mxu0 0.0
        %742 = vmatprep.subr.mxu0 0.0
        %743 = vmatpush1.msra.mxu0 0.0
        %744 = vmatprep.subr.mxu0 0.0
        %745 = vmatpush1.msra.mxu0 0.0
        %746 = vmatprep.subr.mxu0 0.0
        %747 = vmatpush1.msra.mxu0 0.0
        %748 = vmatprep.subr.mxu0 0.0
        %749 = vmatpush1.msra.mxu0 0.0
        %750 = vmatprep.subr.mxu0 0.0
        %751 = vmatpush1.msra.mxu0 0.0
        %752 = vmatprep.subr.mxu0 0.0
        %753 = vmatpush1.msra.mxu0 0.0
        %754 = vmatprep.subr.mxu0 0.0
        %755 = vmatpush1.msra.mxu0 0.0
        %756 = vmatprep.subr.mxu0 0.0
        %757 = vmatpush1.msra.mxu0 0.0
        %758 = vmatprep.mubr.f32.mxu0 0.0
        %759 = vmatmul.mubr.f32.gmra.mrb[0].mxu0 0.0
        %v760 = vpop.f32.mrb[0].mxu0
        %v761 = vadd.f32 %v613, %v760
        %v762 = vpop.f32.mrb[0].mxu0
        %763 = vmatprep.mubr.f32.mxu0 0.0
        %764 = vmatmul.mubr.f32.gmra.mrb[0].mxu0 0.0
        %v765 = vpop.f32.mrb[0].mxu0
        %v766 = vadd.f32 %v613, %v765
        %v767 = vpop.f32.mrb[0].mxu0
        %768 = vdwg.mxu0
        %v769 = vadd.f32 %v595, %v684
        %v770 = vadd.f32 %v598, %v690
        %v771 = vxor.u32 %v769, 2147483648
        %v772 = vxor.u32 %v770, 2147483648
        %v773 = vmul.f32 %v771, 1.442695
        %v774 = vpow.pop %v773
        %v775 = vmul.f32 %v772, 1.442695
        %v776 = vpow.pop %v775
        %v777 = vadd.f32 %v774, 1.0
        %v778 = vadd.f32 %v776, 1.0
        %v779 = vrcp.pop %v777
        %v780 = vmul.f32 1.0, %v779
        %v781 = vrcp.pop %v778
        %v782 = vmul.f32 1.0, %v781
        %v783 = vadd.f32 %v596, %v686
        %v784 = vadd.f32 %v599, %v692
        %v785 = vxor.u32 %v783, 2147483648
        %v786 = vxor.u32 %v784, 2147483648
        %v787 = vmul.f32 %v785, 1.442695
        %v788 = vpow.pop %v787
        %v789 = vmul.f32 %v786, 1.442695
        %v790 = vpow.pop %v789
        %v791 = vadd.f32 %v788, 1.0
        %v792 = vadd.f32 %v790, 1.0
        %v793 = vrcp.pop %v791
        %v794 = vmul.f32 1.0, %v793
        %v795 = vrcp.pop %v792
        %v796 = vmul.f32 1.0, %v795
        %v797 = vmul.f32 %v780, %v761
        %v798 = vmul.f32 %v782, %v766
        %v799 = vadd.f32 %v597, %v797
        %v800 = vadd.f32 %v600, %v798
        %v801 = vtanh.pop %v799
        %v802 = vtanh.pop %v800
        %v803 = vsub.f32 1.0, %v794
        %v804 = vsub.f32 1.0, %v796
        %v805 = vmul.f32 %v803, %v801
        %v806 = vmul.f32 %v804, %v802
        %v807 = vmul.f32 %v794, 0.0
        %v808 = vmul.f32 %v796, 0.0
        %v809 = vadd.f32 %v805, %v807
        %v810 = vadd.f32 %v806, %v808
        %s811 = scalar_lea.vmem %s495, 48 [#allocation3]
        %v812 = vld [vmem:[%s811] sm:$0xff]
        %v813 = vld [vmem:[%s811 + $0x8] sm:$0xff]
        %v814 = vld [vmem:[%s811 + $0x10] sm:$0xff]
        %v815 = vld [vmem:[%s811 + $0x18] sm:$0xff]
        %v816 = vld [vmem:[%s811 + $0x20] sm:$0xff]
        %v817 = vld [vmem:[%s811 + $0x28] sm:$0xff]
        %818 = vmatprep.subr.mxu0 %v547
        %819 = vmatpush1.msra.mxu0 %v546
        %820 = vmatprep.subr.mxu0 %v550
        %821 = vmatpush1.msra.mxu0 %v549
        %822 = vmatprep.subr.mxu0 %v553
        %823 = vmatpush1.msra.mxu0 %v552
        %824 = vmatprep.subr.mxu0 %v556
        %825 = vmatpush1.msra.mxu0 %v555
        %826 = vmatprep.subr.mxu0 %v559
        %827 = vmatpush1.msra.mxu0 %v558
        %828 = vmatprep.subr.mxu0 %v562
        %829 = vmatpush1.msra.mxu0 %v561
        %830 = vmatprep.subr.mxu0 %v565
        %831 = vmatpush1.msra.mxu0 %v564
        %832 = vmatprep.subr.mxu0 %v568
        %833 = vmatpush1.msra.mxu0 %v567
        %834 = vmatprep.subr.mxu0 %v571
        %835 = vmatpush1.msra.mxu0 %v570
        %836 = vmatprep.subr.mxu0 %v574
        %837 = vmatpush1.msra.mxu0 %v573
        %838 = vmatprep.subr.mxu0 %v577
        %839 = vmatpush1.msra.mxu0 %v576
        %840 = vmatprep.subr.mxu0 %v580
        %841 = vmatpush1.msra.mxu0 %v579
        %842 = vmatprep.subr.mxu0 %v583
        %843 = vmatpush1.msra.mxu0 %v582
        %844 = vmatprep.subr.mxu0 %v586
        %845 = vmatpush1.msra.mxu0 %v585
        %846 = vmatprep.subr.mxu0 %v589
        %847 = vmatpush1.msra.mxu0 %v588
        %848 = vmatprep.subr.mxu0 %v592
        %849 = vmatpush1.msra.mxu0 %v591
        %850 = vmatprep.subr.mxu0 0.0
        %851 = vmatpush1.msra.mxu0 0.0
        %852 = vmatprep.subr.mxu0 0.0
        %853 = vmatpush1.msra.mxu0 0.0
        %854 = vmatprep.subr.mxu0 0.0
        %855 = vmatpush1.msra.mxu0 0.0
        %856 = vmatprep.subr.mxu0 0.0
        %857 = vmatpush1.msra.mxu0 0.0
        %858 = vmatprep.subr.mxu0 0.0
        %859 = vmatpush1.msra.mxu0 0.0
        %860 = vmatprep.subr.mxu0 0.0
        %861 = vmatpush1.msra.mxu0 0.0
        %862 = vmatprep.subr.mxu0 0.0
        %863 = vmatpush1.msra.mxu0 0.0
        %864 = vmatprep.subr.mxu0 0.0
        %865 = vmatpush1.msra.mxu0 0.0
        %866 = vmatprep.subr.mxu0 0.0
        %867 = vmatpush1.msra.mxu0 0.0
        %868 = vmatprep.subr.mxu0 0.0
        %869 = vmatpush1.msra.mxu0 0.0
        %870 = vmatprep.subr.mxu0 0.0
        %871 = vmatpush1.msra.mxu0 0.0
        %872 = vmatprep.subr.mxu0 0.0
        %873 = vmatpush1.msra.mxu0 0.0
        %874 = vmatprep.subr.mxu0 0.0
        %875 = vmatpush1.msra.mxu0 0.0
        %876 = vmatprep.subr.mxu0 0.0
        %877 = vmatpush1.msra.mxu0 0.0
        %878 = vmatprep.subr.mxu0 0.0
        %879 = vmatpush1.msra.mxu0 0.0
        %880 = vmatprep.subr.mxu0 0.0
        %881 = vmatpush1.msra.mxu0 0.0
        %882 = vmatprep.mubr.f32.mxu0 0.0
        %883 = vmatmul.mubr.f32.gmra.mrb[0].mxu0 %v809
        %v884 = vpop.f32.mrb[0].mxu0
        %v885 = vadd.f32 %v605, %v884
        %v886 = vpop.f32.mrb[0].mxu0
        %v887 = vadd.f32 %v609, %v886
        %888 = vmatprep.mubr.f32.mxu0 0.0
        %889 = vmatmul.mubr.f32.gmra.mrb[0].mxu0 %v810
        %v890 = vpop.f32.mrb[0].mxu0
        %v891 = vadd.f32 %v605, %v890
        %v892 = vpop.f32.mrb[0].mxu0
        %v893 = vadd.f32 %v609, %v892
        %894 = vdwg.mxu0
        %895 = vmatprep.subr.mxu0 0.0
        %896 = vmatpush1.msra.mxu0 %v548
        %897 = vmatprep.subr.mxu0 0.0
        %898 = vmatpush1.msra.mxu0 %v551
        %899 = vmatprep.subr.mxu0 0.0
        %900 = vmatpush1.msra.mxu0 %v554
        %901 = vmatprep.subr.mxu0 0.0
        %902 = vmatpush1.msra.mxu0 %v557
        %903 = vmatprep.subr.mxu0 0.0
        %904 = vmatpush1.msra.mxu0 %v560
        %905 = vmatprep.subr.mxu0 0.0
        %906 = vmatpush1.msra.mxu0 %v563
        %907 = vmatprep.subr.mxu0 0.0
        %908 = vmatpush1.msra.mxu0 %v566
        %909 = vmatprep.subr.mxu0 0.0
        %910 = vmatpush1.msra.mxu0 %v569
        %911 = vmatprep.subr.mxu0 0.0
        %912 = vmatpush1.msra.mxu0 %v572
        %913 = vmatprep.subr.mxu0 0.0
        %914 = vmatpush1.msra.mxu0 %v575
        %915 = vmatprep.subr.mxu0 0.0
        %916 = vmatpush1.msra.mxu0 %v578
        %917 = vmatprep.subr.mxu0 0.0
        %918 = vmatpush1.msra.mxu0 %v581
        %919 = vmatprep.subr.mxu0 0.0
        %920 = vmatpush1.msra.mxu0 %v584
        %921 = vmatprep.subr.mxu0 0.0
        %922 = vmatpush1.msra.mxu0 %v587
        %923 = vmatprep.subr.mxu0 0.0
        %924 = vmatpush1.msra.mxu0 %v590
        %925 = vmatprep.subr.mxu0 0.0
        %926 = vmatpush1.msra.mxu0 %v593
        %927 = vmatprep.subr.mxu0 0.0
        %928 = vmatpush1.msra.mxu0 0.0
        %929 = vmatprep.subr.mxu0 0.0
        %930 = vmatpush1.msra.mxu0 0.0
        %931 = vmatprep.subr.mxu0 0.0
        %932 = vmatpush1.msra.mxu0 0.0
        %933 = vmatprep.subr.mxu0 0.0
        %934 = vmatpush1.msra.mxu0 0.0
        %935 = vmatprep.subr.mxu0 0.0
        %936 = vmatpush1.msra.mxu0 0.0
        %937 = vmatprep.subr.mxu0 0.0
        %938 = vmatpush1.msra.mxu0 0.0
        %939 = vmatprep.subr.mxu0 0.0
        %940 = vmatpush1.msra.mxu0 0.0
        %941 = vmatprep.subr.mxu0 0.0
        %942 = vmatpush1.msra.mxu0 0.0
        %943 = vmatprep.subr.mxu0 0.0
        %944 = vmatpush1.msra.mxu0 0.0
        %945 = vmatprep.subr.mxu0 0.0
        %946 = vmatpush1.msra.mxu0 0.0
        %947 = vmatprep.subr.mxu0 0.0
        %948 = vmatpush1.msra.mxu0 0.0
        %949 = vmatprep.subr.mxu0 0.0
        %950 = vmatpush1.msra.mxu0 0.0
        %951 = vmatprep.subr.mxu0 0.0
        %952 = vmatpush1.msra.mxu0 0.0
        %953 = vmatprep.subr.mxu0 0.0
        %954 = vmatpush1.msra.mxu0 0.0
        %955 = vmatprep.subr.mxu0 0.0
        %956 = vmatpush1.msra.mxu0 0.0
        %957 = vmatprep.subr.mxu0 0.0
        %958 = vmatpush1.msra.mxu0 0.0
        %959 = vmatprep.mubr.f32.mxu0 0.0
        %960 = vmatmul.mubr.f32.gmra.mrb[0].mxu0 %v809
        %v961 = vpop.f32.mrb[0].mxu0
        %v962 = vadd.f32 %v613, %v961
        %v963 = vpop.f32.mrb[0].mxu0
        %964 = vmatprep.mubr.f32.mxu0 0.0
        %965 = vmatmul.mubr.f32.gmra.mrb[0].mxu0 %v810
        %v966 = vpop.f32.mrb[0].mxu0
        %v967 = vadd.f32 %v613, %v966
        %v968 = vpop.f32.mrb[0].mxu0
        %969 = vdwg.mxu0
        %v970 = vadd.f32 %v812, %v885
        %v971 = vadd.f32 %v815, %v891
        %v972 = vxor.u32 %v970, 2147483648
        %v973 = vxor.u32 %v971, 2147483648
        %v974 = vmul.f32 %v972, 1.442695
        %v975 = vpow.pop %v974
        %v976 = vmul.f32 %v973, 1.442695
        %v977 = vpow.pop %v976
        %v978 = vadd.f32 %v975, 1.0
        %v979 = vadd.f32 %v977, 1.0
        %v980 = vrcp.pop %v978
        %v981 = vmul.f32 1.0, %v980
        %v982 = vrcp.pop %v979
        %v983 = vmul.f32 1.0, %v982
        %v984 = vadd.f32 %v813, %v887
        %v985 = vadd.f32 %v816, %v893
        %v986 = vxor.u32 %v984, 2147483648
        %v987 = vxor.u32 %v985, 2147483648
        %v988 = vmul.f32 %v986, 1.442695
        %v989 = vpow.pop %v988
        %v990 = vmul.f32 %v987, 1.442695
        %v991 = vpow.pop %v990
        %v992 = vadd.f32 %v989, 1.0
        %v993 = vadd.f32 %v991, 1.0
        %v994 = vrcp.pop %v992
        %v995 = vmul.f32 1.0, %v994
        %v996 = vrcp.pop %v993
        %v997 = vmul.f32 1.0, %v996
        %v998 = vmul.f32 %v981, %v962
        %v999 = vmul.f32 %v983, %v967
        %v1000 = vadd.f32 %v814, %v998
        %v1001 = vadd.f32 %v817, %v999
        %v1002 = vtanh.pop %v1000
        %v1003 = vtanh.pop %v1001
        %v1004 = vsub.f32 1.0, %v995
        %v1005 = vsub.f32 1.0, %v997
        %v1006 = vmul.f32 %v1004, %v1002
        %v1007 = vmul.f32 %v1005, %v1003
        %v1008 = vmul.f32 %v995, %v809
        %v1009 = vmul.f32 %v997, %v810
        %v1010 = vadd.f32 %v1006, %v1008
        %v1011 = vadd.f32 %v1007, %v1009
        %s1012 = scalar_lea.vmem %s495, 96 [#allocation3]
        %v1013 = vld [vmem:[%s1012] sm:$0xff]
        %v1014 = vld [vmem:[%s1012 + $0x8] sm:$0xff]
        %v1015 = vld [vmem:[%s1012 + $0x10] sm:$0xff]
        %v1016 = vld [vmem:[%s1012 + $0x18] sm:$0xff]
        %v1017 = vld [vmem:[%s1012 + $0x20] sm:$0xff]
        %v1018 = vld [vmem:[%s1012 + $0x28] sm:$0xff]
        %1019 = vmatprep.subr.mxu0 %v547
        %1020 = vmatpush1.msra.mxu0 %v546
        %1021 = vmatprep.subr.mxu0 %v550
        %1022 = vmatpush1.msra.mxu0 %v549
        %1023 = vmatprep.subr.mxu0 %v553
        %1024 = vmatpush1.msra.mxu0 %v552
        %1025 = vmatprep.subr.mxu0 %v556
        %1026 = vmatpush1.msra.mxu0 %v555
        %1027 = vmatprep.subr.mxu0 %v559
        %1028 = vmatpush1.msra.mxu0 %v558
        %1029 = vmatprep.subr.mxu0 %v562
        %1030 = vmatpush1.msra.mxu0 %v561
        %1031 = vmatprep.subr.mxu0 %v565
        %1032 = vmatpush1.msra.mxu0 %v564
        %1033 = vmatprep.subr.mxu0 %v568
        %1034 = vmatpush1.msra.mxu0 %v567
        %1035 = vmatprep.subr.mxu0 %v571
        %1036 = vmatpush1.msra.mxu0 %v570
        %1037 = vmatprep.subr.mxu0 %v574
        %1038 = vmatpush1.msra.mxu0 %v573
        %1039 = vmatprep.subr.mxu0 %v577
        %1040 = vmatpush1.msra.mxu0 %v576
        %1041 = vmatprep.subr.mxu0 %v580
        %1042 = vmatpush1.msra.mxu0 %v579
        %1043 = vmatprep.subr.mxu0 %v583
        %1044 = vmatpush1.msra.mxu0 %v582
        %1045 = vmatprep.subr.mxu0 %v586
        %1046 = vmatpush1.msra.mxu0 %v585
        %1047 = vmatprep.subr.mxu0 %v589
        %1048 = vmatpush1.msra.mxu0 %v588
        %1049 = vmatprep.subr.mxu0 %v592
        %1050 = vmatpush1.msra.mxu0 %v591
        %1051 = vmatprep.subr.mxu0 0.0
        %1052 = vmatpush1.msra.mxu0 0.0
        %1053 = vmatprep.subr.mxu0 0.0
        %1054 = vmatpush1.msra.mxu0 0.0
        %1055 = vmatprep.subr.mxu0 0.0
        %1056 = vmatpush1.msra.mxu0 0.0
        %1057 = vmatprep.subr.mxu0 0.0
        %1058 = vmatpush1.msra.mxu0 0.0
        %1059 = vmatprep.subr.mxu0 0.0
        %1060 = vmatpush1.msra.mxu0 0.0
        %1061 = vmatprep.subr.mxu0 0.0
        %1062 = vmatpush1.msra.mxu0 0.0
        %1063 = vmatprep.subr.mxu0 0.0
        %1064 = vmatpush1.msra.mxu0 0.0
        %1065 = vmatprep.subr.mxu0 0.0
        %1066 = vmatpush1.msra.mxu0 0.0
        %1067 = vmatprep.subr.mxu0 0.0
        %1068 = vmatpush1.msra.mxu0 0.0
        %1069 = vmatprep.subr.mxu0 0.0
        %1070 = vmatpush1.msra.mxu0 0.0
        %1071 = vmatprep.subr.mxu0 0.0
        %1072 = vmatpush1.msra.mxu0 0.0
        %1073 = vmatprep.subr.mxu0 0.0
        %1074 = vmatpush1.msra.mxu0 0.0
        %1075 = vmatprep.subr.mxu0 0.0
        %1076 = vmatpush1.msra.mxu0 0.0
        %1077 = vmatprep.subr.mxu0 0.0
        %1078 = vmatpush1.msra.mxu0 0.0
        %1079 = vmatprep.subr.mxu0 0.0
        %1080 = vmatpush1.msra.mxu0 0.0
        %1081 = vmatprep.subr.mxu0 0.0
        %1082 = vmatpush1.msra.mxu0 0.0
        %1083 = vmatprep.mubr.f32.mxu0 0.0
        %1084 = vmatmul.mubr.f32.gmra.mrb[0].mxu0 %v1010
        %v1085 = vpop.f32.mrb[0].mxu0
        %v1086 = vadd.f32 %v605, %v1085
        %v1087 = vpop.f32.mrb[0].mxu0
        %v1088 = vadd.f32 %v609, %v1087
        %1089 = vmatprep.mubr.f32.mxu0 0.0
        %1090 = vmatmul.mubr.f32.gmra.mrb[0].mxu0 %v1011
        %v1091 = vpop.f32.mrb[0].mxu0
        %v1092 = vadd.f32 %v605, %v1091
        %v1093 = vpop.f32.mrb[0].mxu0
        %v1094 = vadd.f32 %v609, %v1093
        %1095 = vdwg.mxu0
        %1096 = vmatprep.subr.mxu0 0.0
        %1097 = vmatpush1.msra.mxu0 %v548
        %1098 = vmatprep.subr.mxu0 0.0
        %1099 = vmatpush1.msra.mxu0 %v551
        %1100 = vmatprep.subr.mxu0 0.0
        %1101 = vmatpush1.msra.mxu0 %v554
        %1102 = vmatprep.subr.mxu0 0.0
        %1103 = vmatpush1.msra.mxu0 %v557
        %1104 = vmatprep.subr.mxu0 0.0
        %1105 = vmatpush1.msra.mxu0 %v560
        %1106 = vmatprep.subr.mxu0 0.0
        %1107 = vmatpush1.msra.mxu0 %v563
        %1108 = vmatprep.subr.mxu0 0.0
        %1109 = vmatpush1.msra.mxu0 %v566
        %1110 = vmatprep.subr.mxu0 0.0
        %1111 = vmatpush1.msra.mxu0 %v569
        %1112 = vmatprep.subr.mxu0 0.0
        %1113 = vmatpush1.msra.mxu0 %v572
        %1114 = vmatprep.subr.mxu0 0.0
        %1115 = vmatpush1.msra.mxu0 %v575
        %1116 = vmatprep.subr.mxu0 0.0
        %1117 = vmatpush1.msra.mxu0 %v578
        %1118 = vmatprep.subr.mxu0 0.0
        %1119 = vmatpush1.msra.mxu0 %v581
        %1120 = vmatprep.subr.mxu0 0.0
        %1121 = vmatpush1.msra.mxu0 %v584
        %1122 = vmatprep.subr.mxu0 0.0
        %1123 = vmatpush1.msra.mxu0 %v587
        %1124 = vmatprep.subr.mxu0 0.0
        %1125 = vmatpush1.msra.mxu0 %v590
        %1126 = vmatprep.subr.mxu0 0.0
        %1127 = vmatpush1.msra.mxu0 %v593
        %1128 = vmatprep.subr.mxu0 0.0
        %1129 = vmatpush1.msra.mxu0 0.0
        %1130 = vmatprep.subr.mxu0 0.0
        %1131 = vmatpush1.msra.mxu0 0.0
        %1132 = vmatprep.subr.mxu0 0.0
        %1133 = vmatpush1.msra.mxu0 0.0
        %1134 = vmatprep.subr.mxu0 0.0
        %1135 = vmatpush1.msra.mxu0 0.0
        %1136 = vmatprep.subr.mxu0 0.0
        %1137 = vmatpush1.msra.mxu0 0.0
        %1138 = vmatprep.subr.mxu0 0.0
        %1139 = vmatpush1.msra.mxu0 0.0
        %1140 = vmatprep.subr.mxu0 0.0
        %1141 = vmatpush1.msra.mxu0 0.0
        %1142 = vmatprep.subr.mxu0 0.0
        %1143 = vmatpush1.msra.mxu0 0.0
        %1144 = vmatprep.subr.mxu0 0.0
        %1145 = vmatpush1.msra.mxu0 0.0
        %1146 = vmatprep.subr.mxu0 0.0
        %1147 = vmatpush1.msra.mxu0 0.0
        %1148 = vmatprep.subr.mxu0 0.0
        %1149 = vmatpush1.msra.mxu0 0.0
        %1150 = vmatprep.subr.mxu0 0.0
        %1151 = vmatpush1.msra.mxu0 0.0
        %1152 = vmatprep.subr.mxu0 0.0
        %1153 = vmatpush1.msra.mxu0 0.0
        %1154 = vmatprep.subr.mxu0 0.0
        %1155 = vmatpush1.msra.mxu0 0.0
        %1156 = vmatprep.subr.mxu0 0.0
        %1157 = vmatpush1.msra.mxu0 0.0
        %1158 = vmatprep.subr.mxu0 0.0
        %1159 = vmatpush1.msra.mxu0 0.0
        %1160 = vmatprep.mubr.f32.mxu0 0.0
        %1161 = vmatmul.mubr.f32.gmra.mrb[0].mxu0 %v1010
        %v1162 = vpop.f32.mrb[0].mxu0
        %v1163 = vadd.f32 %v613, %v1162
        %v1164 = vpop.f32.mrb[0].mxu0
        %1165 = vmatprep.mubr.f32.mxu0 0.0
        %1166 = vmatmul.mubr.f32.gmra.mrb[0].mxu0 %v1011
        %v1167 = vpop.f32.mrb[0].mxu0
        %v1168 = vadd.f32 %v613, %v1167
        %v1169 = vpop.f32.mrb[0].mxu0
        %1170 = vdwg.mxu0
        %v1171 = vadd.f32 %v1013, %v1086
        %v1172 = vadd.f32 %v1016, %v1092
        %v1173 = vxor.u32 %v1171, 2147483648
        %v1174 = vxor.u32 %v1172, 2147483648
        %v1175 = vmul.f32 %v1173, 1.442695
        %v1176 = vpow.pop %v1175
        %v1177 = vmul.f32 %v1174, 1.442695
        %v1178 = vpow.pop %v1177
        %v1179 = vadd.f32 %v1176, 1.0
        %v1180 = vadd.f32 %v1178, 1.0
        %v1181 = vrcp.pop %v1179
        %v1182 = vmul.f32 1.0, %v1181
        %v1183 = vrcp.pop %v1180
        %v1184 = vmul.f32 1.0, %v1183
        %v1185 = vadd.f32 %v1014, %v1088
        %v1186 = vadd.f32 %v1017, %v1094
        %v1187 = vxor.u32 %v1185, 2147483648
        %v1188 = vxor.u32 %v1186, 2147483648
        %v1189 = vmul.f32 %v1187, 1.442695
        %v1190 = vpow.pop %v1189
        %v1191 = vmul.f32 %v1188, 1.442695
        %v1192 = vpow.pop %v1191
        %v1193 = vadd.f32 %v1190, 1.0
        %v1194 = vadd.f32 %v1192, 1.0
        %v1195 = vrcp.pop %v1193
        %v1196 = vmul.f32 1.0, %v1195
        %v1197 = vrcp.pop %v1194
        %v1198 = vmul.f32 1.0, %v1197
        %v1199 = vmul.f32 %v1182, %v1163
        %v1200 = vmul.f32 %v1184, %v1168
        %v1201 = vadd.f32 %v1015, %v1199
        %v1202 = vadd.f32 %v1018, %v1200
        %v1203 = vtanh.pop %v1201
        %v1204 = vtanh.pop %v1202
        %v1205 = vsub.f32 1.0, %v1196
        %v1206 = vsub.f32 1.0, %v1198
        %v1207 = vmul.f32 %v1205, %v1203
        %v1208 = vmul.f32 %v1206, %v1204
        %v1209 = vmul.f32 %v1196, %v1010
        %v1210 = vmul.f32 %v1198, %v1011
        %v1211 = vadd.f32 %v1207, %v1209
        %v1212 = vadd.f32 %v1208, %v1210
        %s1213 = scalar_lea.vmem %s495, 144 [#allocation3]
        %v1214 = vld [vmem:[%s1213] sm:$0xff]
        %v1215 = vld [vmem:[%s1213 + $0x8] sm:$0xff]
        %v1216 = vld [vmem:[%s1213 + $0x10] sm:$0xff]
        %v1217 = vld [vmem:[%s1213 + $0x18] sm:$0xff]
        %v1218 = vld [vmem:[%s1213 + $0x20] sm:$0xff]
        %v1219 = vld [vmem:[%s1213 + $0x28] sm:$0xff]
        %1220 = vmatprep.subr.mxu0 %v547
        %1221 = vmatpush1.msra.mxu0 %v546
        %1222 = vmatprep.subr.mxu0 %v550
        %1223 = vmatpush1.msra.mxu0 %v549
        %1224 = vmatprep.subr.mxu0 %v553
        %1225 = vmatpush1.msra.mxu0 %v552
        %1226 = vmatprep.subr.mxu0 %v556
        %1227 = vmatpush1.msra.mxu0 %v555
        %1228 = vmatprep.subr.mxu0 %v559
        %1229 = vmatpush1.msra.mxu0 %v558
        %1230 = vmatprep.subr.mxu0 %v562
        %1231 = vmatpush1.msra.mxu0 %v561
        %1232 = vmatprep.subr.mxu0 %v565
        %1233 = vmatpush1.msra.mxu0 %v564
        %1234 = vmatprep.subr.mxu0 %v568
        %1235 = vmatpush1.msra.mxu0 %v567
        %1236 = vmatprep.subr.mxu0 %v571
        %1237 = vmatpush1.msra.mxu0 %v570
        %1238 = vmatprep.subr.mxu0 %v574
        %1239 = vmatpush1.msra.mxu0 %v573
        %1240 = vmatprep.subr.mxu0 %v577
        %1241 = vmatpush1.msra.mxu0 %v576
        %1242 = vmatprep.subr.mxu0 %v580
        %1243 = vmatpush1.msra.mxu0 %v579
        %1244 = vmatprep.subr.mxu0 %v583
        %1245 = vmatpush1.msra.mxu0 %v582
        %1246 = vmatprep.subr.mxu0 %v586
        %1247 = vmatpush1.msra.mxu0 %v585
        %1248 = vmatprep.subr.mxu0 %v589
        %1249 = vmatpush1.msra.mxu0 %v588
        %1250 = vmatprep.subr.mxu0 %v592
        %1251 = vmatpush1.msra.mxu0 %v591
        %1252 = vmatprep.subr.mxu0 0.0
        %1253 = vmatpush1.msra.mxu0 0.0
        %1254 = vmatprep.subr.mxu0 0.0
        %1255 = vmatpush1.msra.mxu0 0.0
        %1256 = vmatprep.subr.mxu0 0.0
        %1257 = vmatpush1.msra.mxu0 0.0
        %1258 = vmatprep.subr.mxu0 0.0
        %1259 = vmatpush1.msra.mxu0 0.0
        %1260 = vmatprep.subr.mxu0 0.0
        %1261 = vmatpush1.msra.mxu0 0.0
        %1262 = vmatprep.subr.mxu0 0.0
        %1263 = vmatpush1.msra.mxu0 0.0
        %1264 = vmatprep.subr.mxu0 0.0
        %1265 = vmatpush1.msra.mxu0 0.0
        %1266 = vmatprep.subr.mxu0 0.0
        %1267 = vmatpush1.msra.mxu0 0.0
        %1268 = vmatprep.subr.mxu0 0.0
        %1269 = vmatpush1.msra.mxu0 0.0
        %1270 = vmatprep.subr.mxu0 0.0
        %1271 = vmatpush1.msra.mxu0 0.0
        %1272 = vmatprep.subr.mxu0 0.0
        %1273 = vmatpush1.msra.mxu0 0.0
        %1274 = vmatprep.subr.mxu0 0.0
        %1275 = vmatpush1.msra.mxu0 0.0
        %1276 = vmatprep.subr.mxu0 0.0
        %1277 = vmatpush1.msra.mxu0 0.0
        %1278 = vmatprep.subr.mxu0 0.0
        %1279 = vmatpush1.msra.mxu0 0.0
        %1280 = vmatprep.subr.mxu0 0.0
        %1281 = vmatpush1.msra.mxu0 0.0
        %1282 = vmatprep.subr.mxu0 0.0
        %1283 = vmatpush1.msra.mxu0 0.0
        %1284 = vmatprep.mubr.f32.mxu0 0.0
        %1285 = vmatmul.mubr.f32.gmra.mrb[0].mxu0 %v1211
        %v1286 = vpop.f32.mrb[0].mxu0
        %v1287 = vadd.f32 %v605, %v1286
        %v1288 = vpop.f32.mrb[0].mxu0
        %v1289 = vadd.f32 %v609, %v1288
        %1290 = vmatprep.mubr.f32.mxu0 0.0
        %1291 = vmatmul.mubr.f32.gmra.mrb[0].mxu0 %v1212
        %v1292 = vpop.f32.mrb[0].mxu0
        %v1293 = vadd.f32 %v605, %v1292
        %v1294 = vpop.f32.mrb[0].mxu0
        %v1295 = vadd.f32 %v609, %v1294
        %1296 = vdwg.mxu0
        %1297 = vmatprep.subr.mxu0 0.0
        %1298 = vmatpush1.msra.mxu0 %v548
        %1299 = vmatprep.subr.mxu0 0.0
        %1300 = vmatpush1.msra.mxu0 %v551
        %1301 = vmatprep.subr.mxu0 0.0
        %1302 = vmatpush1.msra.mxu0 %v554
        %1303 = vmatprep.subr.mxu0 0.0
        %1304 = vmatpush1.msra.mxu0 %v557
        %1305 = vmatprep.subr.mxu0 0.0
        %1306 = vmatpush1.msra.mxu0 %v560
        %1307 = vmatprep.subr.mxu0 0.0
        %1308 = vmatpush1.msra.mxu0 %v563
        %1309 = vmatprep.subr.mxu0 0.0
        %1310 = vmatpush1.msra.mxu0 %v566
        %1311 = vmatprep.subr.mxu0 0.0
        %1312 = vmatpush1.msra.mxu0 %v569
        %1313 = vmatprep.subr.mxu0 0.0
        %1314 = vmatpush1.msra.mxu0 %v572
        %1315 = vmatprep.subr.mxu0 0.0
        %1316 = vmatpush1.msra.mxu0 %v575
        %1317 = vmatprep.subr.mxu0 0.0
        %1318 = vmatpush1.msra.mxu0 %v578
        %1319 = vmatprep.subr.mxu0 0.0
        %1320 = vmatpush1.msra.mxu0 %v581
        %1321 = vmatprep.subr.mxu0 0.0
        %1322 = vmatpush1.msra.mxu0 %v584
        %1323 = vmatprep.subr.mxu0 0.0
        %1324 = vmatpush1.msra.mxu0 %v587
        %1325 = vmatprep.subr.mxu0 0.0
        %1326 = vmatpush1.msra.mxu0 %v590
        %1327 = vmatprep.subr.mxu0 0.0
        %1328 = vmatpush1.msra.mxu0 %v593
        %1329 = vmatprep.subr.mxu0 0.0
        %1330 = vmatpush1.msra.mxu0 0.0
        %1331 = vmatprep.subr.mxu0 0.0
        %1332 = vmatpush1.msra.mxu0 0.0
        %1333 = vmatprep.subr.mxu0 0.0
        %1334 = vmatpush1.msra.mxu0 0.0
        %1335 = vmatprep.subr.mxu0 0.0
        %1336 = vmatpush1.msra.mxu0 0.0
        %1337 = vmatprep.subr.mxu0 0.0
        %1338 = vmatpush1.msra.mxu0 0.0
        %1339 = vmatprep.subr.mxu0 0.0
        %1340 = vmatpush1.msra.mxu0 0.0
        %1341 = vmatprep.subr.mxu0 0.0
        %1342 = vmatpush1.msra.mxu0 0.0
        %1343 = vmatprep.subr.mxu0 0.0
        %1344 = vmatpush1.msra.mxu0 0.0
        %1345 = vmatprep.subr.mxu0 0.0
        %1346 = vmatpush1.msra.mxu0 0.0
        %1347 = vmatprep.subr.mxu0 0.0
        %1348 = vmatpush1.msra.mxu0 0.0
        %1349 = vmatprep.subr.mxu0 0.0
        %1350 = vmatpush1.msra.mxu0 0.0
        %1351 = vmatprep.subr.mxu0 0.0
        %1352 = vmatpush1.msra.mxu0 0.0
        %1353 = vmatprep.subr.mxu0 0.0
        %1354 = vmatpush1.msra.mxu0 0.0
        %1355 = vmatprep.subr.mxu0 0.0
        %1356 = vmatpush1.msra.mxu0 0.0
        %1357 = vmatprep.subr.mxu0 0.0
        %1358 = vmatpush1.msra.mxu0 0.0
        %1359 = vmatprep.subr.mxu0 0.0
        %1360 = vmatpush1.msra.mxu0 0.0
        %1361 = vmatprep.mubr.f32.mxu0 0.0
        %1362 = vmatmul.mubr.f32.gmra.mrb[0].mxu0 %v1211
        %v1363 = vpop.f32.mrb[0].mxu0
        %v1364 = vadd.f32 %v613, %v1363
        %v1365 = vpop.f32.mrb[0].mxu0
        %1366 = vmatprep.mubr.f32.mxu0 0.0
        %1367 = vmatmul.mubr.f32.gmra.mrb[0].mxu0 %v1212
        %v1368 = vpop.f32.mrb[0].mxu0
        %v1369 = vadd.f32 %v613, %v1368
        %v1370 = vpop.f32.mrb[0].mxu0
        %1371 = vdwg.mxu0
        %v1372 = vadd.f32 %v1214, %v1287
        %v1373 = vadd.f32 %v1217, %v1293
        %v1374 = vxor.u32 %v1372, 2147483648
        %v1375 = vxor.u32 %v1373, 2147483648
        %v1376 = vmul.f32 %v1374, 1.442695
        %v1377 = vpow.pop %v1376
        %v1378 = vmul.f32 %v1375, 1.442695
        %v1379 = vpow.pop %v1378
        %v1380 = vadd.f32 %v1377, 1.0
        %v1381 = vadd.f32 %v1379, 1.0
        %v1382 = vrcp.pop %v1380
        %v1383 = vmul.f32 1.0, %v1382
        %v1384 = vrcp.pop %v1381
        %v1385 = vmul.f32 1.0, %v1384
        %v1386 = vadd.f32 %v1215, %v1289
        %v1387 = vadd.f32 %v1218, %v1295
        %v1388 = vxor.u32 %v1386, 2147483648
        %v1389 = vxor.u32 %v1387, 2147483648
        %v1390 = vmul.f32 %v1388, 1.442695
        %v1391 = vpow.pop %v1390
        %v1392 = vmul.f32 %v1389, 1.442695
        %v1393 = vpow.pop %v1392
        %v1394 = vadd.f32 %v1391, 1.0
        %v1395 = vadd.f32 %v1393, 1.0
        %v1396 = vrcp.pop %v1394
        %v1397 = vmul.f32 1.0, %v1396
        %v1398 = vrcp.pop %v1395
        %v1399 = vmul.f32 1.0, %v1398
        %v1400 = vmul.f32 %v1383, %v1364
        %v1401 = vmul.f32 %v1385, %v1369
        %v1402 = vadd.f32 %v1216, %v1400
        %v1403 = vadd.f32 %v1219, %v1401
        %v1404 = vtanh.pop %v1402
        %v1405 = vtanh.pop %v1403
        %v1406 = vsub.f32 1.0, %v1397
        %v1407 = vsub.f32 1.0, %v1399
        %v1408 = vmul.f32 %v1406, %v1404
        %v1409 = vmul.f32 %v1407, %v1405
        %v1410 = vmul.f32 %v1397, %v1211
        %v1411 = vmul.f32 %v1399, %v1212
        %v1412 = vadd.f32 %v1408, %v1410
        %v1413 = vadd.f32 %v1409, %v1411
        %s1414 = scalar_lea.vmem %s495, 192 [#allocation3]
        %v1415 = vld [vmem:[%s1414] sm:$0xff]
        %v1416 = vld [vmem:[%s1414 + $0x8] sm:$0xff]
        %v1417 = vld [vmem:[%s1414 + $0x10] sm:$0xff]
        %v1418 = vld [vmem:[%s1414 + $0x18] sm:$0xff]
        %v1419 = vld [vmem:[%s1414 + $0x20] sm:$0xff]
        %v1420 = vld [vmem:[%s1414 + $0x28] sm:$0xff]
        %1421 = vmatprep.subr.mxu0 %v547
        %1422 = vmatpush1.msra.mxu0 %v546
        %1423 = vmatprep.subr.mxu0 %v550
        %1424 = vmatpush1.msra.mxu0 %v549
        %1425 = vmatprep.subr.mxu0 %v553
        %1426 = vmatpush1.msra.mxu0 %v552
        %1427 = vmatprep.subr.mxu0 %v556
        %1428 = vmatpush1.msra.mxu0 %v555
        %1429 = vmatprep.subr.mxu0 %v559
        %1430 = vmatpush1.msra.mxu0 %v558
        %1431 = vmatprep.subr.mxu0 %v562
        %1432 = vmatpush1.msra.mxu0 %v561
        %1433 = vmatprep.subr.mxu0 %v565
        %1434 = vmatpush1.msra.mxu0 %v564
        %1435 = vmatprep.subr.mxu0 %v568
        %1436 = vmatpush1.msra.mxu0 %v567
        %1437 = vmatprep.subr.mxu0 %v571
        %1438 = vmatpush1.msra.mxu0 %v570
        %1439 = vmatprep.subr.mxu0 %v574
        %1440 = vmatpush1.msra.mxu0 %v573
        %1441 = vmatprep.subr.mxu0 %v577
        %1442 = vmatpush1.msra.mxu0 %v576
        %1443 = vmatprep.subr.mxu0 %v580
        %1444 = vmatpush1.msra.mxu0 %v579
        %1445 = vmatprep.subr.mxu0 %v583
        %1446 = vmatpush1.msra.mxu0 %v582
        %1447 = vmatprep.subr.mxu0 %v586
        %1448 = vmatpush1.msra.mxu0 %v585
        %1449 = vmatprep.subr.mxu0 %v589
        %1450 = vmatpush1.msra.mxu0 %v588
        %1451 = vmatprep.subr.mxu0 %v592
        %1452 = vmatpush1.msra.mxu0 %v591
        %1453 = vmatprep.subr.mxu0 0.0
        %1454 = vmatpush1.msra.mxu0 0.0
        %1455 = vmatprep.subr.mxu0 0.0
        %1456 = vmatpush1.msra.mxu0 0.0
        %1457 = vmatprep.subr.mxu0 0.0
        %1458 = vmatpush1.msra.mxu0 0.0
        %1459 = vmatprep.subr.mxu0 0.0
        %1460 = vmatpush1.msra.mxu0 0.0
        %1461 = vmatprep.subr.mxu0 0.0
        %1462 = vmatpush1.msra.mxu0 0.0
        %1463 = vmatprep.subr.mxu0 0.0
        %1464 = vmatpush1.msra.mxu0 0.0
        %1465 = vmatprep.subr.mxu0 0.0
        %1466 = vmatpush1.msra.mxu0 0.0
        %1467 = vmatprep.subr.mxu0 0.0
        %1468 = vmatpush1.msra.mxu0 0.0
        %1469 = vmatprep.subr.mxu0 0.0
        %1470 = vmatpush1.msra.mxu0 0.0
        %1471 = vmatprep.subr.mxu0 0.0
        %1472 = vmatpush1.msra.mxu0 0.0
        %1473 = vmatprep.subr.mxu0 0.0
        %1474 = vmatpush1.msra.mxu0 0.0
        %1475 = vmatprep.subr.mxu0 0.0
        %1476 = vmatpush1.msra.mxu0 0.0
        %1477 = vmatprep.subr.mxu0 0.0
        %1478 = vmatpush1.msra.mxu0 0.0
        %1479 = vmatprep.subr.mxu0 0.0
        %1480 = vmatpush1.msra.mxu0 0.0
        %1481 = vmatprep.subr.mxu0 0.0
        %1482 = vmatpush1.msra.mxu0 0.0
        %1483 = vmatprep.subr.mxu0 0.0
        %1484 = vmatpush1.msra.mxu0 0.0
        %1485 = vmatprep.mubr.f32.mxu0 0.0
        %1486 = vmatmul.mubr.f32.gmra.mrb[0].mxu0 %v1412
        %v1487 = vpop.f32.mrb[0].mxu0
        %v1488 = vadd.f32 %v605, %v1487
        %v1489 = vpop.f32.mrb[0].mxu0
        %v1490 = vadd.f32 %v609, %v1489
        %1491 = vmatprep.mubr.f32.mxu0 0.0
        %1492 = vmatmul.mubr.f32.gmra.mrb[0].mxu0 %v1413
        %v1493 = vpop.f32.mrb[0].mxu0
        %v1494 = vadd.f32 %v605, %v1493
        %v1495 = vpop.f32.mrb[0].mxu0
        %v1496 = vadd.f32 %v609, %v1495
        %1497 = vdwg.mxu0
        %1498 = vmatprep.subr.mxu0 0.0
        %1499 = vmatpush1.msra.mxu0 %v548
        %1500 = vmatprep.subr.mxu0 0.0
        %1501 = vmatpush1.msra.mxu0 %v551
        %1502 = vmatprep.subr.mxu0 0.0
        %1503 = vmatpush1.msra.mxu0 %v554
        %1504 = vmatprep.subr.mxu0 0.0
        %1505 = vmatpush1.msra.mxu0 %v557
        %1506 = vmatprep.subr.mxu0 0.0
        %1507 = vmatpush1.msra.mxu0 %v560
        %1508 = vmatprep.subr.mxu0 0.0
        %1509 = vmatpush1.msra.mxu0 %v563
        %1510 = vmatprep.subr.mxu0 0.0
        %1511 = vmatpush1.msra.mxu0 %v566
        %1512 = vmatprep.subr.mxu0 0.0
        %1513 = vmatpush1.msra.mxu0 %v569
        %1514 = vmatprep.subr.mxu0 0.0
        %1515 = vmatpush1.msra.mxu0 %v572
        %1516 = vmatprep.subr.mxu0 0.0
        %1517 = vmatpush1.msra.mxu0 %v575
        %1518 = vmatprep.subr.mxu0 0.0
        %1519 = vmatpush1.msra.mxu0 %v578
        %1520 = vmatprep.subr.mxu0 0.0
        %1521 = vmatpush1.msra.mxu0 %v581
        %1522 = vmatprep.subr.mxu0 0.0
        %1523 = vmatpush1.msra.mxu0 %v584
        %1524 = vmatprep.subr.mxu0 0.0
        %1525 = vmatpush1.msra.mxu0 %v587
        %1526 = vmatprep.subr.mxu0 0.0
        %1527 = vmatpush1.msra.mxu0 %v590
        %1528 = vmatprep.subr.mxu0 0.0
        %1529 = vmatpush1.msra.mxu0 %v593
        %1530 = vmatprep.subr.mxu0 0.0
        %1531 = vmatpush1.msra.mxu0 0.0
        %1532 = vmatprep.subr.mxu0 0.0
        %1533 = vmatpush1.msra.mxu0 0.0
        %1534 = vmatprep.subr.mxu0 0.0
        %1535 = vmatpush1.msra.mxu0 0.0
        %1536 = vmatprep.subr.mxu0 0.0
        %1537 = vmatpush1.msra.mxu0 0.0
        %1538 = vmatprep.subr.mxu0 0.0
        %1539 = vmatpush1.msra.mxu0 0.0
        %1540 = vmatprep.subr.mxu0 0.0
        %1541 = vmatpush1.msra.mxu0 0.0
        %1542 = vmatprep.subr.mxu0 0.0
        %1543 = vmatpush1.msra.mxu0 0.0
        %1544 = vmatprep.subr.mxu0 0.0
        %1545 = vmatpush1.msra.mxu0 0.0
        %1546 = vmatprep.subr.mxu0 0.0
        %1547 = vmatpush1.msra.mxu0 0.0
        %1548 = vmatprep.subr.mxu0 0.0
        %1549 = vmatpush1.msra.mxu0 0.0
        %1550 = vmatprep.subr.mxu0 0.0
        %1551 = vmatpush1.msra.mxu0 0.0
        %1552 = vmatprep.subr.mxu0 0.0
        %1553 = vmatpush1.msra.mxu0 0.0
        %1554 = vmatprep.subr.mxu0 0.0
        %1555 = vmatpush1.msra.mxu0 0.0
        %1556 = vmatprep.subr.mxu0 0.0
        %1557 = vmatpush1.msra.mxu0 0.0
        %1558 = vmatprep.subr.mxu0 0.0
        %1559 = vmatpush1.msra.mxu0 0.0
        %1560 = vmatprep.subr.mxu0 0.0
        %1561 = vmatpush1.msra.mxu0 0.0
        %1562 = vmatprep.mubr.f32.mxu0 0.0
        %1563 = vmatmul.mubr.f32.gmra.mrb[0].mxu0 %v1412
        %v1564 = vpop.f32.mrb[0].mxu0
        %v1565 = vadd.f32 %v613, %v1564
        %v1566 = vpop.f32.mrb[0].mxu0
        %1567 = vmatprep.mubr.f32.mxu0 0.0
        %1568 = vmatmul.mubr.f32.gmra.mrb[0].mxu0 %v1413
        %v1569 = vpop.f32.mrb[0].mxu0
        %v1570 = vadd.f32 %v613, %v1569
        %v1571 = vpop.f32.mrb[0].mxu0
        %1572 = vdwg.mxu0
        %v1573 = vadd.f32 %v1415, %v1488
        %v1574 = vadd.f32 %v1418, %v1494
        %v1575 = vxor.u32 %v1573, 2147483648
        %v1576 = vxor.u32 %v1574, 2147483648
        %v1577 = vmul.f32 %v1575, 1.442695
        %v1578 = vpow.pop %v1577
        %v1579 = vmul.f32 %v1576, 1.442695
        %v1580 = vpow.pop %v1579
        %v1581 = vadd.f32 %v1578, 1.0
        %v1582 = vadd.f32 %v1580, 1.0
        %v1583 = vrcp.pop %v1581
        %v1584 = vmul.f32 1.0, %v1583
        %v1585 = vrcp.pop %v1582
        %v1586 = vmul.f32 1.0, %v1585
        %v1587 = vadd.f32 %v1416, %v1490
        %v1588 = vadd.f32 %v1419, %v1496
        %v1589 = vxor.u32 %v1587, 2147483648
        %v1590 = vxor.u32 %v1588, 2147483648
        %v1591 = vmul.f32 %v1589, 1.442695
        %v1592 = vpow.pop %v1591
        %v1593 = vmul.f32 %v1590, 1.442695
        %v1594 = vpow.pop %v1593
        %v1595 = vadd.f32 %v1592, 1.0
        %v1596 = vadd.f32 %v1594, 1.0
        %v1597 = vrcp.pop %v1595
        %v1598 = vmul.f32 1.0, %v1597
        %v1599 = vrcp.pop %v1596
        %v1600 = vmul.f32 1.0, %v1599
        %v1601 = vmul.f32 %v1584, %v1565
        %v1602 = vmul.f32 %v1586, %v1570
        %v1603 = vadd.f32 %v1417, %v1601
        %v1604 = vadd.f32 %v1420, %v1602
        %v1605 = vtanh.pop %v1603
        %v1606 = vtanh.pop %v1604
        %v1607 = vsub.f32 1.0, %v1598
        %v1608 = vsub.f32 1.0, %v1600
        %v1609 = vmul.f32 %v1607, %v1605
        %v1610 = vmul.f32 %v1608, %v1606
        %v1611 = vmul.f32 %v1598, %v1412
        %v1612 = vmul.f32 %v1600, %v1413
        %v1613 = vadd.f32 %v1609, %v1611
        %v1614 = vadd.f32 %v1610, %v1612
        %s1615 = scalar_lea.vmem %s495, 240 [#allocation3]
        %v1616 = vld [vmem:[%s1615] sm:$0xff]
        %v1617 = vld [vmem:[%s1615 + $0x8] sm:$0xff]
        %v1618 = vld [vmem:[%s1615 + $0x10] sm:$0xff]
        %v1619 = vld [vmem:[%s1615 + $0x18] sm:$0xff]
        %v1620 = vld [vmem:[%s1615 + $0x20] sm:$0xff]
        %v1621 = vld [vmem:[%s1615 + $0x28] sm:$0xff]
        %1622 = vmatprep.subr.mxu0 %v547
        %1623 = vmatpush1.msra.mxu0 %v546
        %1624 = vmatprep.subr.mxu0 %v550
        %1625 = vmatpush1.msra.mxu0 %v549
        %1626 = vmatprep.subr.mxu0 %v553
        %1627 = vmatpush1.msra.mxu0 %v552
        %1628 = vmatprep.subr.mxu0 %v556
        %1629 = vmatpush1.msra.mxu0 %v555
        %1630 = vmatprep.subr.mxu0 %v559
        %1631 = vmatpush1.msra.mxu0 %v558
        %1632 = vmatprep.subr.mxu0 %v562
        %1633 = vmatpush1.msra.mxu0 %v561
        %1634 = vmatprep.subr.mxu0 %v565
        %1635 = vmatpush1.msra.mxu0 %v564
        %1636 = vmatprep.subr.mxu0 %v568
        %1637 = vmatpush1.msra.mxu0 %v567
        %1638 = vmatprep.subr.mxu0 %v571
        %1639 = vmatpush1.msra.mxu0 %v570
        %1640 = vmatprep.subr.mxu0 %v574
        %1641 = vmatpush1.msra.mxu0 %v573
        %1642 = vmatprep.subr.mxu0 %v577
        %1643 = vmatpush1.msra.mxu0 %v576
        %1644 = vmatprep.subr.mxu0 %v580
        %1645 = vmatpush1.msra.mxu0 %v579
        %1646 = vmatprep.subr.mxu0 %v583
        %1647 = vmatpush1.msra.mxu0 %v582
        %1648 = vmatprep.subr.mxu0 %v586
        %1649 = vmatpush1.msra.mxu0 %v585
        %1650 = vmatprep.subr.mxu0 %v589
        %1651 = vmatpush1.msra.mxu0 %v588
        %1652 = vmatprep.subr.mxu0 %v592
        %1653 = vmatpush1.msra.mxu0 %v591
        %1654 = vmatprep.subr.mxu0 0.0
        %1655 = vmatpush1.msra.mxu0 0.0
        %1656 = vmatprep.subr.mxu0 0.0
        %1657 = vmatpush1.msra.mxu0 0.0
        %1658 = vmatprep.subr.mxu0 0.0
        %1659 = vmatpush1.msra.mxu0 0.0
        %1660 = vmatprep.subr.mxu0 0.0
        %1661 = vmatpush1.msra.mxu0 0.0
        %1662 = vmatprep.subr.mxu0 0.0
        %1663 = vmatpush1.msra.mxu0 0.0
        %1664 = vmatprep.subr.mxu0 0.0
        %1665 = vmatpush1.msra.mxu0 0.0
        %1666 = vmatprep.subr.mxu0 0.0
        %1667 = vmatpush1.msra.mxu0 0.0
        %1668 = vmatprep.subr.mxu0 0.0
        %1669 = vmatpush1.msra.mxu0 0.0
        %1670 = vmatprep.subr.mxu0 0.0
        %1671 = vmatpush1.msra.mxu0 0.0
        %1672 = vmatprep.subr.mxu0 0.0
        %1673 = vmatpush1.msra.mxu0 0.0
        %1674 = vmatprep.subr.mxu0 0.0
        %1675 = vmatpush1.msra.mxu0 0.0
        %1676 = vmatprep.subr.mxu0 0.0
        %1677 = vmatpush1.msra.mxu0 0.0
        %1678 = vmatprep.subr.mxu0 0.0
        %1679 = vmatpush1.msra.mxu0 0.0
        %1680 = vmatprep.subr.mxu0 0.0
        %1681 = vmatpush1.msra.mxu0 0.0
        %1682 = vmatprep.subr.mxu0 0.0
        %1683 = vmatpush1.msra.mxu0 0.0
        %1684 = vmatprep.subr.mxu0 0.0
        %1685 = vmatpush1.msra.mxu0 0.0
        %1686 = vmatprep.mubr.f32.mxu0 0.0
        %1687 = vmatmul.mubr.f32.gmra.mrb[0].mxu0 %v1613
        %v1688 = vpop.f32.mrb[0].mxu0
        %v1689 = vadd.f32 %v605, %v1688
        %v1690 = vpop.f32.mrb[0].mxu0
        %v1691 = vadd.f32 %v609, %v1690
        %1692 = vmatprep.mubr.f32.mxu0 0.0
        %1693 = vmatmul.mubr.f32.gmra.mrb[0].mxu0 %v1614
        %v1694 = vpop.f32.mrb[0].mxu0
        %v1695 = vadd.f32 %v605, %v1694
        %v1696 = vpop.f32.mrb[0].mxu0
        %v1697 = vadd.f32 %v609, %v1696
        %1698 = vdwg.mxu0
        %1699 = vmatprep.subr.mxu0 0.0
        %1700 = vmatpush1.msra.mxu0 %v548
        %1701 = vmatprep.subr.mxu0 0.0
        %1702 = vmatpush1.msra.mxu0 %v551
        %1703 = vmatprep.subr.mxu0 0.0
        %1704 = vmatpush1.msra.mxu0 %v554
        %1705 = vmatprep.subr.mxu0 0.0
        %1706 = vmatpush1.msra.mxu0 %v557
        %1707 = vmatprep.subr.mxu0 0.0
        %1708 = vmatpush1.msra.mxu0 %v560
        %1709 = vmatprep.subr.mxu0 0.0
        %1710 = vmatpush1.msra.mxu0 %v563
        %1711 = vmatprep.subr.mxu0 0.0
        %1712 = vmatpush1.msra.mxu0 %v566
        %1713 = vmatprep.subr.mxu0 0.0
        %1714 = vmatpush1.msra.mxu0 %v569
        %1715 = vmatprep.subr.mxu0 0.0
        %1716 = vmatpush1.msra.mxu0 %v572
        %1717 = vmatprep.subr.mxu0 0.0
        %1718 = vmatpush1.msra.mxu0 %v575
        %1719 = vmatprep.subr.mxu0 0.0
        %1720 = vmatpush1.msra.mxu0 %v578
        %1721 = vmatprep.subr.mxu0 0.0
        %1722 = vmatpush1.msra.mxu0 %v581
        %1723 = vmatprep.subr.mxu0 0.0
        %1724 = vmatpush1.msra.mxu0 %v584
        %1725 = vmatprep.subr.mxu0 0.0
        %1726 = vmatpush1.msra.mxu0 %v587
        %1727 = vmatprep.subr.mxu0 0.0
        %1728 = vmatpush1.msra.mxu0 %v590
        %1729 = vmatprep.subr.mxu0 0.0
        %1730 = vmatpush1.msra.mxu0 %v593
        %1731 = vmatprep.subr.mxu0 0.0
        %1732 = vmatpush1.msra.mxu0 0.0
        %1733 = vmatprep.subr.mxu0 0.0
        %1734 = vmatpush1.msra.mxu0 0.0
        %1735 = vmatprep.subr.mxu0 0.0
        %1736 = vmatpush1.msra.mxu0 0.0
        %1737 = vmatprep.subr.mxu0 0.0
        %1738 = vmatpush1.msra.mxu0 0.0
        %1739 = vmatprep.subr.mxu0 0.0
        %1740 = vmatpush1.msra.mxu0 0.0
        %1741 = vmatprep.subr.mxu0 0.0
        %1742 = vmatpush1.msra.mxu0 0.0
        %1743 = vmatprep.subr.mxu0 0.0
        %1744 = vmatpush1.msra.mxu0 0.0
        %1745 = vmatprep.subr.mxu0 0.0
        %1746 = vmatpush1.msra.mxu0 0.0
        %1747 = vmatprep.subr.mxu0 0.0
        %1748 = vmatpush1.msra.mxu0 0.0
        %1749 = vmatprep.subr.mxu0 0.0
        %1750 = vmatpush1.msra.mxu0 0.0
        %1751 = vmatprep.subr.mxu0 0.0
        %1752 = vmatpush1.msra.mxu0 0.0
        %1753 = vmatprep.subr.mxu0 0.0
        %1754 = vmatpush1.msra.mxu0 0.0
        %1755 = vmatprep.subr.mxu0 0.0
        %1756 = vmatpush1.msra.mxu0 0.0
        %1757 = vmatprep.subr.mxu0 0.0
        %1758 = vmatpush1.msra.mxu0 0.0
        %1759 = vmatprep.subr.mxu0 0.0
        %1760 = vmatpush1.msra.mxu0 0.0
        %1761 = vmatprep.subr.mxu0 0.0
        %1762 = vmatpush1.msra.mxu0 0.0
        %1763 = vmatprep.mubr.f32.mxu0 0.0
        %1764 = vmatmul.mubr.f32.gmra.mrb[0].mxu0 %v1613
        %v1765 = vpop.f32.mrb[0].mxu0
        %v1766 = vadd.f32 %v613, %v1765
        %v1767 = vpop.f32.mrb[0].mxu0
        %1768 = vmatprep.mubr.f32.mxu0 0.0
        %1769 = vmatmul.mubr.f32.gmra.mrb[0].mxu0 %v1614
        %v1770 = vpop.f32.mrb[0].mxu0
        %v1771 = vadd.f32 %v613, %v1770
        %v1772 = vpop.f32.mrb[0].mxu0
        %1773 = vdwg.mxu0
        %v1774 = vadd.f32 %v1616, %v1689
        %v1775 = vadd.f32 %v1619, %v1695
        %v1776 = vxor.u32 %v1774, 2147483648
        %v1777 = vxor.u32 %v1775, 2147483648
        %v1778 = vmul.f32 %v1776, 1.442695
        %v1779 = vpow.pop %v1778
        %v1780 = vmul.f32 %v1777, 1.442695
        %v1781 = vpow.pop %v1780
        %v1782 = vadd.f32 %v1779, 1.0
        %v1783 = vadd.f32 %v1781, 1.0
        %v1784 = vrcp.pop %v1782
        %v1785 = vmul.f32 1.0, %v1784
        %v1786 = vrcp.pop %v1783
        %v1787 = vmul.f32 1.0, %v1786
        %v1788 = vadd.f32 %v1617, %v1691
        %v1789 = vadd.f32 %v1620, %v1697
        %v1790 = vxor.u32 %v1788, 2147483648
        %v1791 = vxor.u32 %v1789, 2147483648
        %v1792 = vmul.f32 %v1790, 1.442695
        %v1793 = vpow.pop %v1792
        %v1794 = vmul.f32 %v1791, 1.442695
        %v1795 = vpow.pop %v1794
        %v1796 = vadd.f32 %v1793, 1.0
        %v1797 = vadd.f32 %v1795, 1.0
        %v1798 = vrcp.pop %v1796
        %v1799 = vmul.f32 1.0, %v1798
        %v1800 = vrcp.pop %v1797
        %v1801 = vmul.f32 1.0, %v1800
        %v1802 = vmul.f32 %v1785, %v1766
        %v1803 = vmul.f32 %v1787, %v1771
        %v1804 = vadd.f32 %v1618, %v1802
        %v1805 = vadd.f32 %v1621, %v1803
        %v1806 = vtanh.pop %v1804
        %v1807 = vtanh.pop %v1805
        %v1808 = vsub.f32 1.0, %v1799
        %v1809 = vsub.f32 1.0, %v1801
        %v1810 = vmul.f32 %v1808, %v1806
        %v1811 = vmul.f32 %v1809, %v1807
        %v1812 = vmul.f32 %v1799, %v1613
        %v1813 = vmul.f32 %v1801, %v1614
        %v1814 = vadd.f32 %v1810, %v1812
        %v1815 = vadd.f32 %v1811, %v1813
        %s1816 = scalar_lea.vmem %s495, 288 [#allocation3]
        %v1817 = vld [vmem:[%s1816] sm:$0xff]
        %v1818 = vld [vmem:[%s1816 + $0x8] sm:$0xff]
        %v1819 = vld [vmem:[%s1816 + $0x10] sm:$0xff]
        %v1820 = vld [vmem:[%s1816 + $0x18] sm:$0xff]
        %v1821 = vld [vmem:[%s1816 + $0x20] sm:$0xff]
        %v1822 = vld [vmem:[%s1816 + $0x28] sm:$0xff]
        %1823 = vmatprep.subr.mxu0 %v547
        %1824 = vmatpush1.msra.mxu0 %v546
        %1825 = vmatprep.subr.mxu0 %v550
        %1826 = vmatpush1.msra.mxu0 %v549
        %1827 = vmatprep.subr.mxu0 %v553
        %1828 = vmatpush1.msra.mxu0 %v552
        %1829 = vmatprep.subr.mxu0 %v556
        %1830 = vmatpush1.msra.mxu0 %v555
        %1831 = vmatprep.subr.mxu0 %v559
        %1832 = vmatpush1.msra.mxu0 %v558
        %1833 = vmatprep.subr.mxu0 %v562
        %1834 = vmatpush1.msra.mxu0 %v561
        %1835 = vmatprep.subr.mxu0 %v565
        %1836 = vmatpush1.msra.mxu0 %v564
        %1837 = vmatprep.subr.mxu0 %v568
        %1838 = vmatpush1.msra.mxu0 %v567
        %1839 = vmatprep.subr.mxu0 %v571
        %1840 = vmatpush1.msra.mxu0 %v570
        %1841 = vmatprep.subr.mxu0 %v574
        %1842 = vmatpush1.msra.mxu0 %v573
        %1843 = vmatprep.subr.mxu0 %v577
        %1844 = vmatpush1.msra.mxu0 %v576
        %1845 = vmatprep.subr.mxu0 %v580
        %1846 = vmatpush1.msra.mxu0 %v579
        %1847 = vmatprep.subr.mxu0 %v583
        %1848 = vmatpush1.msra.mxu0 %v582
        %1849 = vmatprep.subr.mxu0 %v586
        %1850 = vmatpush1.msra.mxu0 %v585
        %1851 = vmatprep.subr.mxu0 %v589
        %1852 = vmatpush1.msra.mxu0 %v588
        %1853 = vmatprep.subr.mxu0 %v592
        %1854 = vmatpush1.msra.mxu0 %v591
        %1855 = vmatprep.subr.mxu0 0.0
        %1856 = vmatpush1.msra.mxu0 0.0
        %1857 = vmatprep.subr.mxu0 0.0
        %1858 = vmatpush1.msra.mxu0 0.0
        %1859 = vmatprep.subr.mxu0 0.0
        %1860 = vmatpush1.msra.mxu0 0.0
        %1861 = vmatprep.subr.mxu0 0.0
        %1862 = vmatpush1.msra.mxu0 0.0
        %1863 = vmatprep.subr.mxu0 0.0
        %1864 = vmatpush1.msra.mxu0 0.0
        %1865 = vmatprep.subr.mxu0 0.0
        %1866 = vmatpush1.msra.mxu0 0.0
        %1867 = vmatprep.subr.mxu0 0.0
        %1868 = vmatpush1.msra.mxu0 0.0
        %1869 = vmatprep.subr.mxu0 0.0
        %1870 = vmatpush1.msra.mxu0 0.0
        %1871 = vmatprep.subr.mxu0 0.0
        %1872 = vmatpush1.msra.mxu0 0.0
        %1873 = vmatprep.subr.mxu0 0.0
        %1874 = vmatpush1.msra.mxu0 0.0
        %1875 = vmatprep.subr.mxu0 0.0
        %1876 = vmatpush1.msra.mxu0 0.0
        %1877 = vmatprep.subr.mxu0 0.0
        %1878 = vmatpush1.msra.mxu0 0.0
        %1879 = vmatprep.subr.mxu0 0.0
        %1880 = vmatpush1.msra.mxu0 0.0
        %1881 = vmatprep.subr.mxu0 0.0
        %1882 = vmatpush1.msra.mxu0 0.0
        %1883 = vmatprep.subr.mxu0 0.0
        %1884 = vmatpush1.msra.mxu0 0.0
        %1885 = vmatprep.subr.mxu0 0.0
        %1886 = vmatpush1.msra.mxu0 0.0
        %1887 = vmatprep.mubr.f32.mxu0 0.0
        %1888 = vmatmul.mubr.f32.gmra.mrb[0].mxu0 %v1814
        %v1889 = vpop.f32.mrb[0].mxu0
        %v1890 = vadd.f32 %v605, %v1889
        %v1891 = vpop.f32.mrb[0].mxu0
        %v1892 = vadd.f32 %v609, %v1891
        %1893 = vmatprep.mubr.f32.mxu0 0.0
        %1894 = vmatmul.mubr.f32.gmra.mrb[0].mxu0 %v1815
        %v1895 = vpop.f32.mrb[0].mxu0
        %v1896 = vadd.f32 %v605, %v1895
        %v1897 = vpop.f32.mrb[0].mxu0
        %v1898 = vadd.f32 %v609, %v1897
        %1899 = vdwg.mxu0
        %1900 = vmatprep.subr.mxu0 0.0
        %1901 = vmatpush1.msra.mxu0 %v548
        %1902 = vmatprep.subr.mxu0 0.0
        %1903 = vmatpush1.msra.mxu0 %v551
        %1904 = vmatprep.subr.mxu0 0.0
        %1905 = vmatpush1.msra.mxu0 %v554
        %1906 = vmatprep.subr.mxu0 0.0
        %1907 = vmatpush1.msra.mxu0 %v557
        %1908 = vmatprep.subr.mxu0 0.0
        %1909 = vmatpush1.msra.mxu0 %v560
        %1910 = vmatprep.subr.mxu0 0.0
        %1911 = vmatpush1.msra.mxu0 %v563
        %1912 = vmatprep.subr.mxu0 0.0
        %1913 = vmatpush1.msra.mxu0 %v566
        %1914 = vmatprep.subr.mxu0 0.0
        %1915 = vmatpush1.msra.mxu0 %v569
        %1916 = vmatprep.subr.mxu0 0.0
        %1917 = vmatpush1.msra.mxu0 %v572
        %1918 = vmatprep.subr.mxu0 0.0
        %1919 = vmatpush1.msra.mxu0 %v575
        %1920 = vmatprep.subr.mxu0 0.0
        %1921 = vmatpush1.msra.mxu0 %v578
        %1922 = vmatprep.subr.mxu0 0.0
        %1923 = vmatpush1.msra.mxu0 %v581
        %1924 = vmatprep.subr.mxu0 0.0
        %1925 = vmatpush1.msra.mxu0 %v584
        %1926 = vmatprep.subr.mxu0 0.0
        %1927 = vmatpush1.msra.mxu0 %v587
        %1928 = vmatprep.subr.mxu0 0.0
        %1929 = vmatpush1.msra.mxu0 %v590
        %1930 = vmatprep.subr.mxu0 0.0
        %1931 = vmatpush1.msra.mxu0 %v593
        %1932 = vmatprep.subr.mxu0 0.0
        %1933 = vmatpush1.msra.mxu0 0.0
        %1934 = vmatprep.subr.mxu0 0.0
        %1935 = vmatpush1.msra.mxu0 0.0
        %1936 = vmatprep.subr.mxu0 0.0
        %1937 = vmatpush1.msra.mxu0 0.0
        %1938 = vmatprep.subr.mxu0 0.0
        %1939 = vmatpush1.msra.mxu0 0.0
        %1940 = vmatprep.subr.mxu0 0.0
        %1941 = vmatpush1.msra.mxu0 0.0
        %1942 = vmatprep.subr.mxu0 0.0
        %1943 = vmatpush1.msra.mxu0 0.0
        %1944 = vmatprep.subr.mxu0 0.0
        %1945 = vmatpush1.msra.mxu0 0.0
        %1946 = vmatprep.subr.mxu0 0.0
        %1947 = vmatpush1.msra.mxu0 0.0
        %1948 = vmatprep.subr.mxu0 0.0
        %1949 = vmatpush1.msra.mxu0 0.0
        %1950 = vmatprep.subr.mxu0 0.0
        %1951 = vmatpush1.msra.mxu0 0.0
        %1952 = vmatprep.subr.mxu0 0.0
        %1953 = vmatpush1.msra.mxu0 0.0
        %1954 = vmatprep.subr.mxu0 0.0
        %1955 = vmatpush1.msra.mxu0 0.0
        %1956 = vmatprep.subr.mxu0 0.0
        %1957 = vmatpush1.msra.mxu0 0.0
        %1958 = vmatprep.subr.mxu0 0.0
        %1959 = vmatpush1.msra.mxu0 0.0
        %1960 = vmatprep.subr.mxu0 0.0
        %1961 = vmatpush1.msra.mxu0 0.0
        %1962 = vmatprep.subr.mxu0 0.0
        %1963 = vmatpush1.msra.mxu0 0.0
        %1964 = vmatprep.mubr.f32.mxu0 0.0
        %1965 = vmatmul.mubr.f32.gmra.mrb[0].mxu0 %v1814
        %v1966 = vpop.f32.mrb[0].mxu0
        %v1967 = vadd.f32 %v613, %v1966
        %v1968 = vpop.f32.mrb[0].mxu0
        %1969 = vmatprep.mubr.f32.mxu0 0.0
        %1970 = vmatmul.mubr.f32.gmra.mrb[0].mxu0 %v1815
        %v1971 = vpop.f32.mrb[0].mxu0
        %v1972 = vadd.f32 %v613, %v1971
        %v1973 = vpop.f32.mrb[0].mxu0
        %1974 = vdwg.mxu0
        %v1975 = vadd.f32 %v1817, %v1890
        %v1976 = vadd.f32 %v1820, %v1896
        %v1977 = vxor.u32 %v1975, 2147483648
        %v1978 = vxor.u32 %v1976, 2147483648
        %v1979 = vmul.f32 %v1977, 1.442695
        %v1980 = vpow.pop %v1979
        %v1981 = vmul.f32 %v1978, 1.442695
        %v1982 = vpow.pop %v1981
        %v1983 = vadd.f32 %v1980, 1.0
        %v1984 = vadd.f32 %v1982, 1.0
        %v1985 = vrcp.pop %v1983
        %v1986 = vmul.f32 1.0, %v1985
        %v1987 = vrcp.pop %v1984
        %v1988 = vmul.f32 1.0, %v1987
        %v1989 = vadd.f32 %v1818, %v1892
        %v1990 = vadd.f32 %v1821, %v1898
        %v1991 = vxor.u32 %v1989, 2147483648
        %v1992 = vxor.u32 %v1990, 2147483648
        %v1993 = vmul.f32 %v1991, 1.442695
        %v1994 = vpow.pop %v1993
        %v1995 = vmul.f32 %v1992, 1.442695
        %v1996 = vpow.pop %v1995
        %v1997 = vadd.f32 %v1994, 1.0
        %v1998 = vadd.f32 %v1996, 1.0
        %v1999 = vrcp.pop %v1997
        %v2000 = vmul.f32 1.0, %v1999
        %v2001 = vrcp.pop %v1998
        %v2002 = vmul.f32 1.0, %v2001
        %v2003 = vmul.f32 %v1986, %v1967
        %v2004 = vmul.f32 %v1988, %v1972
        %v2005 = vadd.f32 %v1819, %v2003
        %v2006 = vadd.f32 %v1822, %v2004
        %v2007 = vtanh.pop %v2005
        %v2008 = vtanh.pop %v2006
        %v2009 = vsub.f32 1.0, %v2000
        %v2010 = vsub.f32 1.0, %v2002
        %v2011 = vmul.f32 %v2009, %v2007
        %v2012 = vmul.f32 %v2010, %v2008
        %v2013 = vmul.f32 %v2000, %v1814
        %v2014 = vmul.f32 %v2002, %v1815
        %v2015 = vadd.f32 %v2011, %v2013
        %v2016 = vadd.f32 %v2012, %v2014
        %s2017 = scalar_lea.vmem %s495, 336 [#allocation3]
        %v2018 = vld [vmem:[%s2017] sm:$0xff]
        %v2019 = vld [vmem:[%s2017 + $0x8] sm:$0xff]
        %v2020 = vld [vmem:[%s2017 + $0x10] sm:$0xff]
        %v2021 = vld [vmem:[%s2017 + $0x18] sm:$0xff]
        %v2022 = vld [vmem:[%s2017 + $0x20] sm:$0xff]
        %v2023 = vld [vmem:[%s2017 + $0x28] sm:$0xff]
        %2024 = vmatprep.subr.mxu0 %v547
        %2025 = vmatpush1.msra.mxu0 %v546
        %2026 = vmatprep.subr.mxu0 %v550
        %2027 = vmatpush1.msra.mxu0 %v549
        %2028 = vmatprep.subr.mxu0 %v553
        %2029 = vmatpush1.msra.mxu0 %v552
        %2030 = vmatprep.subr.mxu0 %v556
        %2031 = vmatpush1.msra.mxu0 %v555
        %2032 = vmatprep.subr.mxu0 %v559
        %2033 = vmatpush1.msra.mxu0 %v558
        %2034 = vmatprep.subr.mxu0 %v562
        %2035 = vmatpush1.msra.mxu0 %v561
        %2036 = vmatprep.subr.mxu0 %v565
        %2037 = vmatpush1.msra.mxu0 %v564
        %2038 = vmatprep.subr.mxu0 %v568
        %2039 = vmatpush1.msra.mxu0 %v567
        %2040 = vmatprep.subr.mxu0 %v571
        %2041 = vmatpush1.msra.mxu0 %v570
        %2042 = vmatprep.subr.mxu0 %v574
        %2043 = vmatpush1.msra.mxu0 %v573
        %2044 = vmatprep.subr.mxu0 %v577
        %2045 = vmatpush1.msra.mxu0 %v576
        %2046 = vmatprep.subr.mxu0 %v580
        %2047 = vmatpush1.msra.mxu0 %v579
        %2048 = vmatprep.subr.mxu0 %v583
        %2049 = vmatpush1.msra.mxu0 %v582
        %2050 = vmatprep.subr.mxu0 %v586
        %2051 = vmatpush1.msra.mxu0 %v585
        %2052 = vmatprep.subr.mxu0 %v589
        %2053 = vmatpush1.msra.mxu0 %v588
        %2054 = vmatprep.subr.mxu0 %v592
        %2055 = vmatpush1.msra.mxu0 %v591
        %2056 = vmatprep.subr.mxu0 0.0
        %2057 = vmatpush1.msra.mxu0 0.0
        %2058 = vmatprep.subr.mxu0 0.0
        %2059 = vmatpush1.msra.mxu0 0.0
        %2060 = vmatprep.subr.mxu0 0.0
        %2061 = vmatpush1.msra.mxu0 0.0
        %2062 = vmatprep.subr.mxu0 0.0
        %2063 = vmatpush1.msra.mxu0 0.0
        %2064 = vmatprep.subr.mxu0 0.0
        %2065 = vmatpush1.msra.mxu0 0.0
        %2066 = vmatprep.subr.mxu0 0.0
        %2067 = vmatpush1.msra.mxu0 0.0
        %2068 = vmatprep.subr.mxu0 0.0
        %2069 = vmatpush1.msra.mxu0 0.0
        %2070 = vmatprep.subr.mxu0 0.0
        %2071 = vmatpush1.msra.mxu0 0.0
        %2072 = vmatprep.subr.mxu0 0.0
        %2073 = vmatpush1.msra.mxu0 0.0
        %2074 = vmatprep.subr.mxu0 0.0
        %2075 = vmatpush1.msra.mxu0 0.0
        %2076 = vmatprep.subr.mxu0 0.0
        %2077 = vmatpush1.msra.mxu0 0.0
        %2078 = vmatprep.subr.mxu0 0.0
        %2079 = vmatpush1.msra.mxu0 0.0
        %2080 = vmatprep.subr.mxu0 0.0
        %2081 = vmatpush1.msra.mxu0 0.0
        %2082 = vmatprep.subr.mxu0 0.0
        %2083 = vmatpush1.msra.mxu0 0.0
        %2084 = vmatprep.subr.mxu0 0.0
        %2085 = vmatpush1.msra.mxu0 0.0
        %2086 = vmatprep.subr.mxu0 0.0
        %2087 = vmatpush1.msra.mxu0 0.0
        %2088 = vmatprep.mubr.f32.mxu0 0.0
        %2089 = vmatmul.mubr.f32.gmra.mrb[0].mxu0 %v2015
        %v2090 = vpop.f32.mrb[0].mxu0
        %v2091 = vadd.f32 %v605, %v2090
        %v2092 = vpop.f32.mrb[0].mxu0
        %v2093 = vadd.f32 %v609, %v2092
        %2094 = vmatprep.mubr.f32.mxu0 0.0
        %2095 = vmatmul.mubr.f32.gmra.mrb[0].mxu0 %v2016
        %v2096 = vpop.f32.mrb[0].mxu0
        %v2097 = vadd.f32 %v605, %v2096
        %v2098 = vpop.f32.mrb[0].mxu0
        %v2099 = vadd.f32 %v609, %v2098
        %2100 = vdwg.mxu0
        %2101 = vmatprep.subr.mxu0 0.0
        %2102 = vmatpush1.msra.mxu0 %v548
        %2103 = vmatprep.subr.mxu0 0.0
        %2104 = vmatpush1.msra.mxu0 %v551
        %2105 = vmatprep.subr.mxu0 0.0
        %2106 = vmatpush1.msra.mxu0 %v554
        %2107 = vmatprep.subr.mxu0 0.0
        %2108 = vmatpush1.msra.mxu0 %v557
        %2109 = vmatprep.subr.mxu0 0.0
        %2110 = vmatpush1.msra.mxu0 %v560
        %2111 = vmatprep.subr.mxu0 0.0
        %2112 = vmatpush1.msra.mxu0 %v563
        %2113 = vmatprep.subr.mxu0 0.0
        %2114 = vmatpush1.msra.mxu0 %v566
        %2115 = vmatprep.subr.mxu0 0.0
        %2116 = vmatpush1.msra.mxu0 %v569
        %2117 = vmatprep.subr.mxu0 0.0
        %2118 = vmatpush1.msra.mxu0 %v572
        %2119 = vmatprep.subr.mxu0 0.0
        %2120 = vmatpush1.msra.mxu0 %v575
        %2121 = vmatprep.subr.mxu0 0.0
        %2122 = vmatpush1.msra.mxu0 %v578
        %2123 = vmatprep.subr.mxu0 0.0
        %2124 = vmatpush1.msra.mxu0 %v581
        %2125 = vmatprep.subr.mxu0 0.0
        %2126 = vmatpush1.msra.mxu0 %v584
        %2127 = vmatprep.subr.mxu0 0.0
        %2128 = vmatpush1.msra.mxu0 %v587
        %2129 = vmatprep.subr.mxu0 0.0
        %2130 = vmatpush1.msra.mxu0 %v590
        %2131 = vmatprep.subr.mxu0 0.0
        %2132 = vmatpush1.msra.mxu0 %v593
        %2133 = vmatprep.subr.mxu0 0.0
        %2134 = vmatpush1.msra.mxu0 0.0
        %2135 = vmatprep.subr.mxu0 0.0
        %2136 = vmatpush1.msra.mxu0 0.0
        %2137 = vmatprep.subr.mxu0 0.0
        %2138 = vmatpush1.msra.mxu0 0.0
        %2139 = vmatprep.subr.mxu0 0.0
        %2140 = vmatpush1.msra.mxu0 0.0
        %2141 = vmatprep.subr.mxu0 0.0
        %2142 = vmatpush1.msra.mxu0 0.0
        %2143 = vmatprep.subr.mxu0 0.0
        %2144 = vmatpush1.msra.mxu0 0.0
        %2145 = vmatprep.subr.mxu0 0.0
        %2146 = vmatpush1.msra.mxu0 0.0
        %2147 = vmatprep.subr.mxu0 0.0
        %2148 = vmatpush1.msra.mxu0 0.0
        %2149 = vmatprep.subr.mxu0 0.0
        %2150 = vmatpush1.msra.mxu0 0.0
        %2151 = vmatprep.subr.mxu0 0.0
        %2152 = vmatpush1.msra.mxu0 0.0
        %2153 = vmatprep.subr.mxu0 0.0
        %2154 = vmatpush1.msra.mxu0 0.0
        %2155 = vmatprep.subr.mxu0 0.0
        %2156 = vmatpush1.msra.mxu0 0.0
        %2157 = vmatprep.subr.mxu0 0.0
        %2158 = vmatpush1.msra.mxu0 0.0
        %2159 = vmatprep.subr.mxu0 0.0
        %2160 = vmatpush1.msra.mxu0 0.0
        %2161 = vmatprep.subr.mxu0 0.0
        %2162 = vmatpush1.msra.mxu0 0.0
        %2163 = vmatprep.subr.mxu0 0.0
        %2164 = vmatpush1.msra.mxu0 0.0
        %2165 = vmatprep.mubr.f32.mxu0 0.0
        %2166 = vmatmul.mubr.f32.gmra.mrb[0].mxu0 %v2015
        %v2167 = vpop.f32.mrb[0].mxu0
        %v2168 = vadd.f32 %v613, %v2167
        %v2169 = vpop.f32.mrb[0].mxu0
        %2170 = vmatprep.mubr.f32.mxu0 0.0
        %2171 = vmatmul.mubr.f32.gmra.mrb[0].mxu0 %v2016
        %v2172 = vpop.f32.mrb[0].mxu0
        %v2173 = vadd.f32 %v613, %v2172
        %v2174 = vpop.f32.mrb[0].mxu0
        %2175 = vdwg.mxu0
        %v2176 = vadd.f32 %v2018, %v2091
        %v2177 = vadd.f32 %v2021, %v2097
        %v2178 = vxor.u32 %v2176, 2147483648
        %v2179 = vxor.u32 %v2177, 2147483648
        %v2180 = vmul.f32 %v2178, 1.442695
        %v2181 = vpow.pop %v2180
        %v2182 = vmul.f32 %v2179, 1.442695
        %v2183 = vpow.pop %v2182
        %v2184 = vadd.f32 %v2181, 1.0
        %v2185 = vadd.f32 %v2183, 1.0
        %v2186 = vrcp.pop %v2184
        %v2187 = vmul.f32 1.0, %v2186
        %v2188 = vrcp.pop %v2185
        %v2189 = vmul.f32 1.0, %v2188
        %v2190 = vadd.f32 %v2019, %v2093
        %v2191 = vadd.f32 %v2022, %v2099
        %v2192 = vxor.u32 %v2190, 2147483648
        %v2193 = vxor.u32 %v2191, 2147483648
        %v2194 = vmul.f32 %v2192, 1.442695
        %v2195 = vpow.pop %v2194
        %v2196 = vmul.f32 %v2193, 1.442695
        %v2197 = vpow.pop %v2196
        %v2198 = vadd.f32 %v2195, 1.0
        %v2199 = vadd.f32 %v2197, 1.0
        %v2200 = vrcp.pop %v2198
        %v2201 = vmul.f32 1.0, %v2200
        %v2202 = vrcp.pop %v2199
        %v2203 = vmul.f32 1.0, %v2202
        %v2204 = vmul.f32 %v2187, %v2168
        %v2205 = vmul.f32 %v2189, %v2173
        %v2206 = vadd.f32 %v2020, %v2204
        %v2207 = vadd.f32 %v2023, %v2205
        %v2208 = vtanh.pop %v2206
        %v2209 = vtanh.pop %v2207
        %v2210 = vsub.f32 1.0, %v2201
        %v2211 = vsub.f32 1.0, %v2203
        %v2212 = vmul.f32 %v2210, %v2208
        %v2213 = vmul.f32 %v2211, %v2209
        %v2214 = vmul.f32 %v2201, %v2015
        %v2215 = vmul.f32 %v2203, %v2016
        %v2216 = vadd.f32 %v2212, %v2214
        %v2217 = vadd.f32 %v2213, %v2215
        %s2218 = scalar_lea.vmem %s495, 384 [#allocation3]
        %v2219 = vld [vmem:[%s2218] sm:$0xff]
        %v2220 = vld [vmem:[%s2218 + $0x8] sm:$0xff]
        %v2221 = vld [vmem:[%s2218 + $0x10] sm:$0xff]
        %v2222 = vld [vmem:[%s2218 + $0x18] sm:$0xff]
        %v2223 = vld [vmem:[%s2218 + $0x20] sm:$0xff]
        %v2224 = vld [vmem:[%s2218 + $0x28] sm:$0xff]
        %2225 = vmatprep.subr.mxu0 %v547
        %2226 = vmatpush1.msra.mxu0 %v546
        %2227 = vmatprep.subr.mxu0 %v550
        %2228 = vmatpush1.msra.mxu0 %v549
        %2229 = vmatprep.subr.mxu0 %v553
        %2230 = vmatpush1.msra.mxu0 %v552
        %2231 = vmatprep.subr.mxu0 %v556
        %2232 = vmatpush1.msra.mxu0 %v555
        %2233 = vmatprep.subr.mxu0 %v559
        %2234 = vmatpush1.msra.mxu0 %v558
        %2235 = vmatprep.subr.mxu0 %v562
        %2236 = vmatpush1.msra.mxu0 %v561
        %2237 = vmatprep.subr.mxu0 %v565
        %2238 = vmatpush1.msra.mxu0 %v564
        %2239 = vmatprep.subr.mxu0 %v568
        %2240 = vmatpush1.msra.mxu0 %v567
        %2241 = vmatprep.subr.mxu0 %v571
        %2242 = vmatpush1.msra.mxu0 %v570
        %2243 = vmatprep.subr.mxu0 %v574
        %2244 = vmatpush1.msra.mxu0 %v573
        %2245 = vmatprep.subr.mxu0 %v577
        %2246 = vmatpush1.msra.mxu0 %v576
        %2247 = vmatprep.subr.mxu0 %v580
        %2248 = vmatpush1.msra.mxu0 %v579
        %2249 = vmatprep.subr.mxu0 %v583
        %2250 = vmatpush1.msra.mxu0 %v582
        %2251 = vmatprep.subr.mxu0 %v586
        %2252 = vmatpush1.msra.mxu0 %v585
        %2253 = vmatprep.subr.mxu0 %v589
        %2254 = vmatpush1.msra.mxu0 %v588
        %2255 = vmatprep.subr.mxu0 %v592
        %2256 = vmatpush1.msra.mxu0 %v591
        %2257 = vmatprep.subr.mxu0 0.0
        %2258 = vmatpush1.msra.mxu0 0.0
        %2259 = vmatprep.subr.mxu0 0.0
        %2260 = vmatpush1.msra.mxu0 0.0
        %2261 = vmatprep.subr.mxu0 0.0
        %2262 = vmatpush1.msra.mxu0 0.0
        %2263 = vmatprep.subr.mxu0 0.0
        %2264 = vmatpush1.msra.mxu0 0.0
        %2265 = vmatprep.subr.mxu0 0.0
        %2266 = vmatpush1.msra.mxu0 0.0
        %2267 = vmatprep.subr.mxu0 0.0
        %2268 = vmatpush1.msra.mxu0 0.0
        %2269 = vmatprep.subr.mxu0 0.0
        %2270 = vmatpush1.msra.mxu0 0.0
        %2271 = vmatprep.subr.mxu0 0.0
        %2272 = vmatpush1.msra.mxu0 0.0
        %2273 = vmatprep.subr.mxu0 0.0
        %2274 = vmatpush1.msra.mxu0 0.0
        %2275 = vmatprep.subr.mxu0 0.0
        %2276 = vmatpush1.msra.mxu0 0.0
        %2277 = vmatprep.subr.mxu0 0.0
        %2278 = vmatpush1.msra.mxu0 0.0
        %2279 = vmatprep.subr.mxu0 0.0
        %2280 = vmatpush1.msra.mxu0 0.0
        %2281 = vmatprep.subr.mxu0 0.0
        %2282 = vmatpush1.msra.mxu0 0.0
        %2283 = vmatprep.subr.mxu0 0.0
        %2284 = vmatpush1.msra.mxu0 0.0
        %2285 = vmatprep.subr.mxu0 0.0
        %2286 = vmatpush1.msra.mxu0 0.0
        %2287 = vmatprep.subr.mxu0 0.0
        %2288 = vmatpush1.msra.mxu0 0.0
        %2289 = vmatprep.mubr.f32.mxu0 0.0
        %2290 = vmatmul.mubr.f32.gmra.mrb[0].mxu0 %v2216
        %v2291 = vpop.f32.mrb[0].mxu0
        %v2292 = vadd.f32 %v605, %v2291
        %v2293 = vpop.f32.mrb[0].mxu0
        %v2294 = vadd.f32 %v609, %v2293
        %2295 = vmatprep.mubr.f32.mxu0 0.0
        %2296 = vmatmul.mubr.f32.gmra.mrb[0].mxu0 %v2217
        %v2297 = vpop.f32.mrb[0].mxu0
        %v2298 = vadd.f32 %v605, %v2297
        %v2299 = vpop.f32.mrb[0].mxu0
        %v2300 = vadd.f32 %v609, %v2299
        %2301 = vdwg.mxu0
        %2302 = vmatprep.subr.mxu0 0.0
        %2303 = vmatpush1.msra.mxu0 %v548
        %2304 = vmatprep.subr.mxu0 0.0
        %2305 = vmatpush1.msra.mxu0 %v551
        %2306 = vmatprep.subr.mxu0 0.0
        %2307 = vmatpush1.msra.mxu0 %v554
        %2308 = vmatprep.subr.mxu0 0.0
        %2309 = vmatpush1.msra.mxu0 %v557
        %2310 = vmatprep.subr.mxu0 0.0
        %2311 = vmatpush1.msra.mxu0 %v560
        %2312 = vmatprep.subr.mxu0 0.0
        %2313 = vmatpush1.msra.mxu0 %v563
        %2314 = vmatprep.subr.mxu0 0.0
        %2315 = vmatpush1.msra.mxu0 %v566
        %2316 = vmatprep.subr.mxu0 0.0
        %2317 = vmatpush1.msra.mxu0 %v569
        %2318 = vmatprep.subr.mxu0 0.0
        %2319 = vmatpush1.msra.mxu0 %v572
        %2320 = vmatprep.subr.mxu0 0.0
        %2321 = vmatpush1.msra.mxu0 %v575
        %2322 = vmatprep.subr.mxu0 0.0
        %2323 = vmatpush1.msra.mxu0 %v578
        %2324 = vmatprep.subr.mxu0 0.0
        %2325 = vmatpush1.msra.mxu0 %v581
        %2326 = vmatprep.subr.mxu0 0.0
        %2327 = vmatpush1.msra.mxu0 %v584
        %2328 = vmatprep.subr.mxu0 0.0
        %2329 = vmatpush1.msra.mxu0 %v587
        %2330 = vmatprep.subr.mxu0 0.0
        %2331 = vmatpush1.msra.mxu0 %v590
        %2332 = vmatprep.subr.mxu0 0.0
        %2333 = vmatpush1.msra.mxu0 %v593
        %2334 = vmatprep.subr.mxu0 0.0
        %2335 = vmatpush1.msra.mxu0 0.0
        %2336 = vmatprep.subr.mxu0 0.0
        %2337 = vmatpush1.msra.mxu0 0.0
        %2338 = vmatprep.subr.mxu0 0.0
        %2339 = vmatpush1.msra.mxu0 0.0
        %2340 = vmatprep.subr.mxu0 0.0
        %2341 = vmatpush1.msra.mxu0 0.0
        %2342 = vmatprep.subr.mxu0 0.0
        %2343 = vmatpush1.msra.mxu0 0.0
        %2344 = vmatprep.subr.mxu0 0.0
        %2345 = vmatpush1.msra.mxu0 0.0
        %2346 = vmatprep.subr.mxu0 0.0
        %2347 = vmatpush1.msra.mxu0 0.0
        %2348 = vmatprep.subr.mxu0 0.0
        %2349 = vmatpush1.msra.mxu0 0.0
        %2350 = vmatprep.subr.mxu0 0.0
        %2351 = vmatpush1.msra.mxu0 0.0
        %2352 = vmatprep.subr.mxu0 0.0
        %2353 = vmatpush1.msra.mxu0 0.0
        %2354 = vmatprep.subr.mxu0 0.0
        %2355 = vmatpush1.msra.mxu0 0.0
        %2356 = vmatprep.subr.mxu0 0.0
        %2357 = vmatpush1.msra.mxu0 0.0
        %2358 = vmatprep.subr.mxu0 0.0
        %2359 = vmatpush1.msra.mxu0 0.0
        %2360 = vmatprep.subr.mxu0 0.0
        %2361 = vmatpush1.msra.mxu0 0.0
        %2362 = vmatprep.subr.mxu0 0.0
        %2363 = vmatpush1.msra.mxu0 0.0
        %2364 = vmatprep.subr.mxu0 0.0
        %2365 = vmatpush1.msra.mxu0 0.0
        %2366 = vmatprep.mubr.f32.mxu0 0.0
        %2367 = vmatmul.mubr.f32.gmra.mrb[0].mxu0 %v2216
        %v2368 = vpop.f32.mrb[0].mxu0
        %v2369 = vadd.f32 %v613, %v2368
        %v2370 = vpop.f32.mrb[0].mxu0
        %2371 = vmatprep.mubr.f32.mxu0 0.0
        %2372 = vmatmul.mubr.f32.gmra.mrb[0].mxu0 %v2217
        %v2373 = vpop.f32.mrb[0].mxu0
        %v2374 = vadd.f32 %v613, %v2373
        %v2375 = vpop.f32.mrb[0].mxu0
        %2376 = vdwg.mxu0
        %v2377 = vadd.f32 %v2219, %v2292
        %v2378 = vadd.f32 %v2222, %v2298
        %v2379 = vxor.u32 %v2377, 2147483648
        %v2380 = vxor.u32 %v2378, 2147483648
        %v2381 = vmul.f32 %v2379, 1.442695
        %v2382 = vpow.pop %v2381
        %v2383 = vmul.f32 %v2380, 1.442695
        %v2384 = vpow.pop %v2383
        %v2385 = vadd.f32 %v2382, 1.0
        %v2386 = vadd.f32 %v2384, 1.0
        %v2387 = vrcp.pop %v2385
        %v2388 = vmul.f32 1.0, %v2387
        %v2389 = vrcp.pop %v2386
        %v2390 = vmul.f32 1.0, %v2389
        %v2391 = vadd.f32 %v2220, %v2294
        %v2392 = vadd.f32 %v2223, %v2300
        %v2393 = vxor.u32 %v2391, 2147483648
        %v2394 = vxor.u32 %v2392, 2147483648
        %v2395 = vmul.f32 %v2393, 1.442695
        %v2396 = vpow.pop %v2395
        %v2397 = vmul.f32 %v2394, 1.442695
        %v2398 = vpow.pop %v2397
        %v2399 = vadd.f32 %v2396, 1.0
        %v2400 = vadd.f32 %v2398, 1.0
        %v2401 = vrcp.pop %v2399
        %v2402 = vmul.f32 1.0, %v2401
        %v2403 = vrcp.pop %v2400
        %v2404 = vmul.f32 1.0, %v2403
        %v2405 = vmul.f32 %v2388, %v2369
        %v2406 = vmul.f32 %v2390, %v2374
        %v2407 = vadd.f32 %v2221, %v2405
        %v2408 = vadd.f32 %v2224, %v2406
        %v2409 = vtanh.pop %v2407
        %v2410 = vtanh.pop %v2408
        %v2411 = vsub.f32 1.0, %v2402
        %v2412 = vsub.f32 1.0, %v2404
        %v2413 = vmul.f32 %v2411, %v2409
        %v2414 = vmul.f32 %v2412, %v2410
        %v2415 = vmul.f32 %v2402, %v2216
        %v2416 = vmul.f32 %v2404, %v2217
        %v2417 = vadd.f32 %v2413, %v2415
        %v2418 = vadd.f32 %v2414, %v2416
        %s2419 = scalar_lea.vmem %s495, 432 [#allocation3]
        %v2420 = vld [vmem:[%s2419] sm:$0xff]
        %v2421 = vld [vmem:[%s2419 + $0x8] sm:$0xff]
        %v2422 = vld [vmem:[%s2419 + $0x10] sm:$0xff]
        %v2423 = vld [vmem:[%s2419 + $0x18] sm:$0xff]
        %v2424 = vld [vmem:[%s2419 + $0x20] sm:$0xff]
        %v2425 = vld [vmem:[%s2419 + $0x28] sm:$0xff]
        %2426 = vmatprep.subr.mxu0 %v547
        %2427 = vmatpush1.msra.mxu0 %v546
        %2428 = vmatprep.subr.mxu0 %v550
        %2429 = vmatpush1.msra.mxu0 %v549
        %2430 = vmatprep.subr.mxu0 %v553
        %2431 = vmatpush1.msra.mxu0 %v552
        %2432 = vmatprep.subr.mxu0 %v556
        %2433 = vmatpush1.msra.mxu0 %v555
        %2434 = vmatprep.subr.mxu0 %v559
        %2435 = vmatpush1.msra.mxu0 %v558
        %2436 = vmatprep.subr.mxu0 %v562
        %2437 = vmatpush1.msra.mxu0 %v561
        %2438 = vmatprep.subr.mxu0 %v565
        %2439 = vmatpush1.msra.mxu0 %v564
        %2440 = vmatprep.subr.mxu0 %v568
        %2441 = vmatpush1.msra.mxu0 %v567
        %2442 = vmatprep.subr.mxu0 %v571
        %2443 = vmatpush1.msra.mxu0 %v570
        %2444 = vmatprep.subr.mxu0 %v574
        %2445 = vmatpush1.msra.mxu0 %v573
        %2446 = vmatprep.subr.mxu0 %v577
        %2447 = vmatpush1.msra.mxu0 %v576
        %2448 = vmatprep.subr.mxu0 %v580
        %2449 = vmatpush1.msra.mxu0 %v579
        %2450 = vmatprep.subr.mxu0 %v583
        %2451 = vmatpush1.msra.mxu0 %v582
        %2452 = vmatprep.subr.mxu0 %v586
        %2453 = vmatpush1.msra.mxu0 %v585
        %2454 = vmatprep.subr.mxu0 %v589
        %2455 = vmatpush1.msra.mxu0 %v588
        %2456 = vmatprep.subr.mxu0 %v592
        %2457 = vmatpush1.msra.mxu0 %v591
        %2458 = vmatprep.subr.mxu0 0.0
        %2459 = vmatpush1.msra.mxu0 0.0
        %2460 = vmatprep.subr.mxu0 0.0
        %2461 = vmatpush1.msra.mxu0 0.0
        %2462 = vmatprep.subr.mxu0 0.0
        %2463 = vmatpush1.msra.mxu0 0.0
        %2464 = vmatprep.subr.mxu0 0.0
        %2465 = vmatpush1.msra.mxu0 0.0
        %2466 = vmatprep.subr.mxu0 0.0
        %2467 = vmatpush1.msra.mxu0 0.0
        %2468 = vmatprep.subr.mxu0 0.0
        %2469 = vmatpush1.msra.mxu0 0.0
        %2470 = vmatprep.subr.mxu0 0.0
        %2471 = vmatpush1.msra.mxu0 0.0
        %2472 = vmatprep.subr.mxu0 0.0
        %2473 = vmatpush1.msra.mxu0 0.0
        %2474 = vmatprep.subr.mxu0 0.0
        %2475 = vmatpush1.msra.mxu0 0.0
        %2476 = vmatprep.subr.mxu0 0.0
        %2477 = vmatpush1.msra.mxu0 0.0
        %2478 = vmatprep.subr.mxu0 0.0
        %2479 = vmatpush1.msra.mxu0 0.0
        %2480 = vmatprep.subr.mxu0 0.0
        %2481 = vmatpush1.msra.mxu0 0.0
        %2482 = vmatprep.subr.mxu0 0.0
        %2483 = vmatpush1.msra.mxu0 0.0
        %2484 = vmatprep.subr.mxu0 0.0
        %2485 = vmatpush1.msra.mxu0 0.0
        %2486 = vmatprep.subr.mxu0 0.0
        %2487 = vmatpush1.msra.mxu0 0.0
        %2488 = vmatprep.subr.mxu0 0.0
        %2489 = vmatpush1.msra.mxu0 0.0
        %2490 = vmatprep.mubr.f32.mxu0 0.0
        %2491 = vmatmul.mubr.f32.gmra.mrb[0].mxu0 %v2417
        %v2492 = vpop.f32.mrb[0].mxu0
        %v2493 = vadd.f32 %v605, %v2492
        %v2494 = vpop.f32.mrb[0].mxu0
        %v2495 = vadd.f32 %v609, %v2494
        %2496 = vmatprep.mubr.f32.mxu0 0.0
        %2497 = vmatmul.mubr.f32.gmra.mrb[0].mxu0 %v2418
        %v2498 = vpop.f32.mrb[0].mxu0
        %v2499 = vadd.f32 %v605, %v2498
        %v2500 = vpop.f32.mrb[0].mxu0
        %v2501 = vadd.f32 %v609, %v2500
        %2502 = vdwg.mxu0
        %2503 = vmatprep.subr.mxu0 0.0
        %2504 = vmatpush1.msra.mxu0 %v548
        %2505 = vmatprep.subr.mxu0 0.0
        %2506 = vmatpush1.msra.mxu0 %v551
        %2507 = vmatprep.subr.mxu0 0.0
        %2508 = vmatpush1.msra.mxu0 %v554
        %2509 = vmatprep.subr.mxu0 0.0
        %2510 = vmatpush1.msra.mxu0 %v557
        %2511 = vmatprep.subr.mxu0 0.0
        %2512 = vmatpush1.msra.mxu0 %v560
        %2513 = vmatprep.subr.mxu0 0.0
        %2514 = vmatpush1.msra.mxu0 %v563
        %2515 = vmatprep.subr.mxu0 0.0
        %2516 = vmatpush1.msra.mxu0 %v566
        %2517 = vmatprep.subr.mxu0 0.0
        %2518 = vmatpush1.msra.mxu0 %v569
        %2519 = vmatprep.subr.mxu0 0.0
        %2520 = vmatpush1.msra.mxu0 %v572
        %2521 = vmatprep.subr.mxu0 0.0
        %2522 = vmatpush1.msra.mxu0 %v575
        %2523 = vmatprep.subr.mxu0 0.0
        %2524 = vmatpush1.msra.mxu0 %v578
        %2525 = vmatprep.subr.mxu0 0.0
        %2526 = vmatpush1.msra.mxu0 %v581
        %2527 = vmatprep.subr.mxu0 0.0
        %2528 = vmatpush1.msra.mxu0 %v584
        %2529 = vmatprep.subr.mxu0 0.0
        %2530 = vmatpush1.msra.mxu0 %v587
        %2531 = vmatprep.subr.mxu0 0.0
        %2532 = vmatpush1.msra.mxu0 %v590
        %2533 = vmatprep.subr.mxu0 0.0
        %2534 = vmatpush1.msra.mxu0 %v593
        %2535 = vmatprep.subr.mxu0 0.0
        %2536 = vmatpush1.msra.mxu0 0.0
        %2537 = vmatprep.subr.mxu0 0.0
        %2538 = vmatpush1.msra.mxu0 0.0
        %2539 = vmatprep.subr.mxu0 0.0
        %2540 = vmatpush1.msra.mxu0 0.0
        %2541 = vmatprep.subr.mxu0 0.0
        %2542 = vmatpush1.msra.mxu0 0.0
        %2543 = vmatprep.subr.mxu0 0.0
        %2544 = vmatpush1.msra.mxu0 0.0
        %2545 = vmatprep.subr.mxu0 0.0
        %2546 = vmatpush1.msra.mxu0 0.0
        %2547 = vmatprep.subr.mxu0 0.0
        %2548 = vmatpush1.msra.mxu0 0.0
        %2549 = vmatprep.subr.mxu0 0.0
        %2550 = vmatpush1.msra.mxu0 0.0
        %2551 = vmatprep.subr.mxu0 0.0
        %2552 = vmatpush1.msra.mxu0 0.0
        %2553 = vmatprep.subr.mxu0 0.0
        %2554 = vmatpush1.msra.mxu0 0.0
        %2555 = vmatprep.subr.mxu0 0.0
        %2556 = vmatpush1.msra.mxu0 0.0
        %2557 = vmatprep.subr.mxu0 0.0
        %2558 = vmatpush1.msra.mxu0 0.0
        %2559 = vmatprep.subr.mxu0 0.0
        %2560 = vmatpush1.msra.mxu0 0.0
        %2561 = vmatprep.subr.mxu0 0.0
        %2562 = vmatpush1.msra.mxu0 0.0
        %2563 = vmatprep.subr.mxu0 0.0
        %2564 = vmatpush1.msra.mxu0 0.0
        %2565 = vmatprep.subr.mxu0 0.0
        %2566 = vmatpush1.msra.mxu0 0.0
        %2567 = vmatprep.mubr.f32.mxu0 0.0
        %2568 = vmatmul.mubr.f32.gmra.mrb[0].mxu0 %v2417
        %v2569 = vpop.f32.mrb[0].mxu0
        %v2570 = vadd.f32 %v613, %v2569
        %v2571 = vpop.f32.mrb[0].mxu0
        %2572 = vmatprep.mubr.f32.mxu0 0.0
        %2573 = vmatmul.mubr.f32.gmra.mrb[0].mxu0 %v2418
        %v2574 = vpop.f32.mrb[0].mxu0
        %v2575 = vadd.f32 %v613, %v2574
        %v2576 = vpop.f32.mrb[0].mxu0
        %2577 = vdwg.mxu0
        %v2578 = vadd.f32 %v2420, %v2493
        %v2579 = vadd.f32 %v2423, %v2499
        %v2580 = vxor.u32 %v2578, 2147483648
        %v2581 = vxor.u32 %v2579, 2147483648
        %v2582 = vmul.f32 %v2580, 1.442695
        %v2583 = vpow.pop %v2582
        %v2584 = vmul.f32 %v2581, 1.442695
        %v2585 = vpow.pop %v2584
        %v2586 = vadd.f32 %v2583, 1.0
        %v2587 = vadd.f32 %v2585, 1.0
        %v2588 = vrcp.pop %v2586
        %v2589 = vmul.f32 1.0, %v2588
        %v2590 = vrcp.pop %v2587
        %v2591 = vmul.f32 1.0, %v2590
        %v2592 = vadd.f32 %v2421, %v2495
        %v2593 = vadd.f32 %v2424, %v2501
        %v2594 = vxor.u32 %v2592, 2147483648
        %v2595 = vxor.u32 %v2593, 2147483648
        %v2596 = vmul.f32 %v2594, 1.442695
        %v2597 = vpow.pop %v2596
        %v2598 = vmul.f32 %v2595, 1.442695
        %v2599 = vpow.pop %v2598
        %v2600 = vadd.f32 %v2597, 1.0
        %v2601 = vadd.f32 %v2599, 1.0
        %v2602 = vrcp.pop %v2600
        %v2603 = vmul.f32 1.0, %v2602
        %v2604 = vrcp.pop %v2601
        %v2605 = vmul.f32 1.0, %v2604
        %v2606 = vmul.f32 %v2589, %v2570
        %v2607 = vmul.f32 %v2591, %v2575
        %v2608 = vadd.f32 %v2422, %v2606
        %v2609 = vadd.f32 %v2425, %v2607
        %v2610 = vtanh.pop %v2608
        %v2611 = vtanh.pop %v2609
        %v2612 = vsub.f32 1.0, %v2603
        %v2613 = vsub.f32 1.0, %v2605
        %v2614 = vmul.f32 %v2612, %v2610
        %v2615 = vmul.f32 %v2613, %v2611
        %v2616 = vmul.f32 %v2603, %v2417
        %v2617 = vmul.f32 %v2605, %v2418
        %v2618 = vadd.f32 %v2614, %v2616
        %v2619 = vadd.f32 %v2615, %v2617
        %s2620 = scalar_lea.vmem %s495, 480 [#allocation3]
        %v2621 = vld [vmem:[%s2620] sm:$0xff]
        %v2622 = vld [vmem:[%s2620 + $0x8] sm:$0xff]
        %v2623 = vld [vmem:[%s2620 + $0x10] sm:$0xff]
        %v2624 = vld [vmem:[%s2620 + $0x18] sm:$0xff]
        %v2625 = vld [vmem:[%s2620 + $0x20] sm:$0xff]
        %v2626 = vld [vmem:[%s2620 + $0x28] sm:$0xff]
        %2627 = vmatprep.subr.mxu0 %v547
        %2628 = vmatpush1.msra.mxu0 %v546
        %2629 = vmatprep.subr.mxu0 %v550
        %2630 = vmatpush1.msra.mxu0 %v549
        %2631 = vmatprep.subr.mxu0 %v553
        %2632 = vmatpush1.msra.mxu0 %v552
        %2633 = vmatprep.subr.mxu0 %v556
        %2634 = vmatpush1.msra.mxu0 %v555
        %2635 = vmatprep.subr.mxu0 %v559
        %2636 = vmatpush1.msra.mxu0 %v558
        %2637 = vmatprep.subr.mxu0 %v562
        %2638 = vmatpush1.msra.mxu0 %v561
        %2639 = vmatprep.subr.mxu0 %v565
        %2640 = vmatpush1.msra.mxu0 %v564
        %2641 = vmatprep.subr.mxu0 %v568
        %2642 = vmatpush1.msra.mxu0 %v567
        %2643 = vmatprep.subr.mxu0 %v571
        %2644 = vmatpush1.msra.mxu0 %v570
        %2645 = vmatprep.subr.mxu0 %v574
        %2646 = vmatpush1.msra.mxu0 %v573
        %2647 = vmatprep.subr.mxu0 %v577
        %2648 = vmatpush1.msra.mxu0 %v576
        %2649 = vmatprep.subr.mxu0 %v580
        %2650 = vmatpush1.msra.mxu0 %v579
        %2651 = vmatprep.subr.mxu0 %v583
        %2652 = vmatpush1.msra.mxu0 %v582
        %2653 = vmatprep.subr.mxu0 %v586
        %2654 = vmatpush1.msra.mxu0 %v585
        %2655 = vmatprep.subr.mxu0 %v589
        %2656 = vmatpush1.msra.mxu0 %v588
        %2657 = vmatprep.subr.mxu0 %v592
        %2658 = vmatpush1.msra.mxu0 %v591
        %2659 = vmatprep.subr.mxu0 0.0
        %2660 = vmatpush1.msra.mxu0 0.0
        %2661 = vmatprep.subr.mxu0 0.0
        %2662 = vmatpush1.msra.mxu0 0.0
        %2663 = vmatprep.subr.mxu0 0.0
        %2664 = vmatpush1.msra.mxu0 0.0
        %2665 = vmatprep.subr.mxu0 0.0
        %2666 = vmatpush1.msra.mxu0 0.0
        %2667 = vmatprep.subr.mxu0 0.0
        %2668 = vmatpush1.msra.mxu0 0.0
        %2669 = vmatprep.subr.mxu0 0.0
        %2670 = vmatpush1.msra.mxu0 0.0
        %2671 = vmatprep.subr.mxu0 0.0
        %2672 = vmatpush1.msra.mxu0 0.0
        %2673 = vmatprep.subr.mxu0 0.0
        %2674 = vmatpush1.msra.mxu0 0.0
        %2675 = vmatprep.subr.mxu0 0.0
        %2676 = vmatpush1.msra.mxu0 0.0
        %2677 = vmatprep.subr.mxu0 0.0
        %2678 = vmatpush1.msra.mxu0 0.0
        %2679 = vmatprep.subr.mxu0 0.0
        %2680 = vmatpush1.msra.mxu0 0.0
        %2681 = vmatprep.subr.mxu0 0.0
        %2682 = vmatpush1.msra.mxu0 0.0
        %2683 = vmatprep.subr.mxu0 0.0
        %2684 = vmatpush1.msra.mxu0 0.0
        %2685 = vmatprep.subr.mxu0 0.0
        %2686 = vmatpush1.msra.mxu0 0.0
        %2687 = vmatprep.subr.mxu0 0.0
        %2688 = vmatpush1.msra.mxu0 0.0
        %2689 = vmatprep.subr.mxu0 0.0
        %2690 = vmatpush1.msra.mxu0 0.0
        %2691 = vmatprep.mubr.f32.mxu0 0.0
        %2692 = vmatmul.mubr.f32.gmra.mrb[0].mxu0 %v2618
        %v2693 = vpop.f32.mrb[0].mxu0
        %v2694 = vadd.f32 %v605, %v2693
        %v2695 = vpop.f32.mrb[0].mxu0
        %v2696 = vadd.f32 %v609, %v2695
        %2697 = vmatprep.mubr.f32.mxu0 0.0
        %2698 = vmatmul.mubr.f32.gmra.mrb[0].mxu0 %v2619
        %v2699 = vpop.f32.mrb[0].mxu0
        %v2700 = vadd.f32 %v605, %v2699
        %v2701 = vpop.f32.mrb[0].mxu0
        %v2702 = vadd.f32 %v609, %v2701
        %2703 = vdwg.mxu0
        %2704 = vmatprep.subr.mxu0 0.0
        %2705 = vmatpush1.msra.mxu0 %v548
        %2706 = vmatprep.subr.mxu0 0.0
        %2707 = vmatpush1.msra.mxu0 %v551
        %2708 = vmatprep.subr.mxu0 0.0
        %2709 = vmatpush1.msra.mxu0 %v554
        %2710 = vmatprep.subr.mxu0 0.0
        %2711 = vmatpush1.msra.mxu0 %v557
        %2712 = vmatprep.subr.mxu0 0.0
        %2713 = vmatpush1.msra.mxu0 %v560
        %2714 = vmatprep.subr.mxu0 0.0
        %2715 = vmatpush1.msra.mxu0 %v563
        %2716 = vmatprep.subr.mxu0 0.0
        %2717 = vmatpush1.msra.mxu0 %v566
        %2718 = vmatprep.subr.mxu0 0.0
        %2719 = vmatpush1.msra.mxu0 %v569
        %2720 = vmatprep.subr.mxu0 0.0
        %2721 = vmatpush1.msra.mxu0 %v572
        %2722 = vmatprep.subr.mxu0 0.0
        %2723 = vmatpush1.msra.mxu0 %v575
        %2724 = vmatprep.subr.mxu0 0.0
        %2725 = vmatpush1.msra.mxu0 %v578
        %2726 = vmatprep.subr.mxu0 0.0
        %2727 = vmatpush1.msra.mxu0 %v581
        %2728 = vmatprep.subr.mxu0 0.0
        %2729 = vmatpush1.msra.mxu0 %v584
        %2730 = vmatprep.subr.mxu0 0.0
        %2731 = vmatpush1.msra.mxu0 %v587
        %2732 = vmatprep.subr.mxu0 0.0
        %2733 = vmatpush1.msra.mxu0 %v590
        %2734 = vmatprep.subr.mxu0 0.0
        %2735 = vmatpush1.msra.mxu0 %v593
        %2736 = vmatprep.subr.mxu0 0.0
        %2737 = vmatpush1.msra.mxu0 0.0
        %2738 = vmatprep.subr.mxu0 0.0
        %2739 = vmatpush1.msra.mxu0 0.0
        %2740 = vmatprep.subr.mxu0 0.0
        %2741 = vmatpush1.msra.mxu0 0.0
        %2742 = vmatprep.subr.mxu0 0.0
        %2743 = vmatpush1.msra.mxu0 0.0
        %2744 = vmatprep.subr.mxu0 0.0
        %2745 = vmatpush1.msra.mxu0 0.0
        %2746 = vmatprep.subr.mxu0 0.0
        %2747 = vmatpush1.msra.mxu0 0.0
        %2748 = vmatprep.subr.mxu0 0.0
        %2749 = vmatpush1.msra.mxu0 0.0
        %2750 = vmatprep.subr.mxu0 0.0
        %2751 = vmatpush1.msra.mxu0 0.0
        %2752 = vmatprep.subr.mxu0 0.0
        %2753 = vmatpush1.msra.mxu0 0.0
        %2754 = vmatprep.subr.mxu0 0.0
        %2755 = vmatpush1.msra.mxu0 0.0
        %2756 = vmatprep.subr.mxu0 0.0
        %2757 = vmatpush1.msra.mxu0 0.0
        %2758 = vmatprep.subr.mxu0 0.0
        %2759 = vmatpush1.msra.mxu0 0.0
        %2760 = vmatprep.subr.mxu0 0.0
        %2761 = vmatpush1.msra.mxu0 0.0
        %2762 = vmatprep.subr.mxu0 0.0
        %2763 = vmatpush1.msra.mxu0 0.0
        %2764 = vmatprep.subr.mxu0 0.0
        %2765 = vmatpush1.msra.mxu0 0.0
        %2766 = vmatprep.subr.mxu0 0.0
        %2767 = vmatpush1.msra.mxu0 0.0
        %2768 = vmatprep.mubr.f32.mxu0 0.0
        %2769 = vmatmul.mubr.f32.gmra.mrb[0].mxu0 %v2618
        %v2770 = vpop.f32.mrb[0].mxu0
        %v2771 = vadd.f32 %v613, %v2770
        %v2772 = vpop.f32.mrb[0].mxu0
        %2773 = vmatprep.mubr.f32.mxu0 0.0
        %2774 = vmatmul.mubr.f32.gmra.mrb[0].mxu0 %v2619
        %v2775 = vpop.f32.mrb[0].mxu0
        %v2776 = vadd.f32 %v613, %v2775
        %v2777 = vpop.f32.mrb[0].mxu0
        %2778 = vdwg.mxu0
        %v2779 = vadd.f32 %v2621, %v2694
        %v2780 = vadd.f32 %v2624, %v2700
        %v2781 = vxor.u32 %v2779, 2147483648
        %v2782 = vxor.u32 %v2780, 2147483648
        %v2783 = vmul.f32 %v2781, 1.442695
        %v2784 = vpow.pop %v2783
        %v2785 = vmul.f32 %v2782, 1.442695
        %v2786 = vpow.pop %v2785
        %v2787 = vadd.f32 %v2784, 1.0
        %v2788 = vadd.f32 %v2786, 1.0
        %v2789 = vrcp.pop %v2787
        %v2790 = vmul.f32 1.0, %v2789
        %v2791 = vrcp.pop %v2788
        %v2792 = vmul.f32 1.0, %v2791
        %v2793 = vadd.f32 %v2622, %v2696
        %v2794 = vadd.f32 %v2625, %v2702
        %v2795 = vxor.u32 %v2793, 2147483648
        %v2796 = vxor.u32 %v2794, 2147483648
        %v2797 = vmul.f32 %v2795, 1.442695
        %v2798 = vpow.pop %v2797
        %v2799 = vmul.f32 %v2796, 1.442695
        %v2800 = vpow.pop %v2799
        %v2801 = vadd.f32 %v2798, 1.0
        %v2802 = vadd.f32 %v2800, 1.0
        %v2803 = vrcp.pop %v2801
        %v2804 = vmul.f32 1.0, %v2803
        %v2805 = vrcp.pop %v2802
        %v2806 = vmul.f32 1.0, %v2805
        %v2807 = vmul.f32 %v2790, %v2771
        %v2808 = vmul.f32 %v2792, %v2776
        %v2809 = vadd.f32 %v2623, %v2807
        %v2810 = vadd.f32 %v2626, %v2808
        %v2811 = vtanh.pop %v2809
        %v2812 = vtanh.pop %v2810
        %v2813 = vsub.f32 1.0, %v2804
        %v2814 = vsub.f32 1.0, %v2806
        %v2815 = vmul.f32 %v2813, %v2811
        %v2816 = vmul.f32 %v2814, %v2812
        %v2817 = vmul.f32 %v2804, %v2618
        %v2818 = vmul.f32 %v2806, %v2619
        %v2819 = vadd.f32 %v2815, %v2817
        %v2820 = vadd.f32 %v2816, %v2818
        %s2821 = scalar_lea.vmem %s495, 528 [#allocation3]
        %v2822 = vld [vmem:[%s2821] sm:$0xff]
        %v2823 = vld [vmem:[%s2821 + $0x8] sm:$0xff]
        %v2824 = vld [vmem:[%s2821 + $0x10] sm:$0xff]
        %v2825 = vld [vmem:[%s2821 + $0x18] sm:$0xff]
        %v2826 = vld [vmem:[%s2821 + $0x20] sm:$0xff]
        %v2827 = vld [vmem:[%s2821 + $0x28] sm:$0xff]
        %2828 = vmatprep.subr.mxu0 %v547
        %2829 = vmatpush1.msra.mxu0 %v546
        %2830 = vmatprep.subr.mxu0 %v550
        %2831 = vmatpush1.msra.mxu0 %v549
        %2832 = vmatprep.subr.mxu0 %v553
        %2833 = vmatpush1.msra.mxu0 %v552
        %2834 = vmatprep.subr.mxu0 %v556
        %2835 = vmatpush1.msra.mxu0 %v555
        %2836 = vmatprep.subr.mxu0 %v559
        %2837 = vmatpush1.msra.mxu0 %v558
        %2838 = vmatprep.subr.mxu0 %v562
        %2839 = vmatpush1.msra.mxu0 %v561
        %2840 = vmatprep.subr.mxu0 %v565
        %2841 = vmatpush1.msra.mxu0 %v564
        %2842 = vmatprep.subr.mxu0 %v568
        %2843 = vmatpush1.msra.mxu0 %v567
        %2844 = vmatprep.subr.mxu0 %v571
        %2845 = vmatpush1.msra.mxu0 %v570
        %2846 = vmatprep.subr.mxu0 %v574
        %2847 = vmatpush1.msra.mxu0 %v573
        %2848 = vmatprep.subr.mxu0 %v577
        %2849 = vmatpush1.msra.mxu0 %v576
        %2850 = vmatprep.subr.mxu0 %v580
        %2851 = vmatpush1.msra.mxu0 %v579
        %2852 = vmatprep.subr.mxu0 %v583
        %2853 = vmatpush1.msra.mxu0 %v582
        %2854 = vmatprep.subr.mxu0 %v586
        %2855 = vmatpush1.msra.mxu0 %v585
        %2856 = vmatprep.subr.mxu0 %v589
        %2857 = vmatpush1.msra.mxu0 %v588
        %2858 = vmatprep.subr.mxu0 %v592
        %2859 = vmatpush1.msra.mxu0 %v591
        %2860 = vmatprep.subr.mxu0 0.0
        %2861 = vmatpush1.msra.mxu0 0.0
        %2862 = vmatprep.subr.mxu0 0.0
        %2863 = vmatpush1.msra.mxu0 0.0
        %2864 = vmatprep.subr.mxu0 0.0
        %2865 = vmatpush1.msra.mxu0 0.0
        %2866 = vmatprep.subr.mxu0 0.0
        %2867 = vmatpush1.msra.mxu0 0.0
        %2868 = vmatprep.subr.mxu0 0.0
        %2869 = vmatpush1.msra.mxu0 0.0
        %2870 = vmatprep.subr.mxu0 0.0
        %2871 = vmatpush1.msra.mxu0 0.0
        %2872 = vmatprep.subr.mxu0 0.0
        %2873 = vmatpush1.msra.mxu0 0.0
        %2874 = vmatprep.subr.mxu0 0.0
        %2875 = vmatpush1.msra.mxu0 0.0
        %2876 = vmatprep.subr.mxu0 0.0
        %2877 = vmatpush1.msra.mxu0 0.0
        %2878 = vmatprep.subr.mxu0 0.0
        %2879 = vmatpush1.msra.mxu0 0.0
        %2880 = vmatprep.subr.mxu0 0.0
        %2881 = vmatpush1.msra.mxu0 0.0
        %2882 = vmatprep.subr.mxu0 0.0
        %2883 = vmatpush1.msra.mxu0 0.0
        %2884 = vmatprep.subr.mxu0 0.0
        %2885 = vmatpush1.msra.mxu0 0.0
        %2886 = vmatprep.subr.mxu0 0.0
        %2887 = vmatpush1.msra.mxu0 0.0
        %2888 = vmatprep.subr.mxu0 0.0
        %2889 = vmatpush1.msra.mxu0 0.0
        %2890 = vmatprep.subr.mxu0 0.0
        %2891 = vmatpush1.msra.mxu0 0.0
        %2892 = vmatprep.mubr.f32.mxu0 0.0
        %2893 = vmatmul.mubr.f32.gmra.mrb[0].mxu0 %v2819
        %v2894 = vpop.f32.mrb[0].mxu0
        %v2895 = vadd.f32 %v605, %v2894
        %v2896 = vpop.f32.mrb[0].mxu0
        %v2897 = vadd.f32 %v609, %v2896
        %2898 = vmatprep.mubr.f32.mxu0 0.0
        %2899 = vmatmul.mubr.f32.gmra.mrb[0].mxu0 %v2820
        %v2900 = vpop.f32.mrb[0].mxu0
        %v2901 = vadd.f32 %v605, %v2900
        %v2902 = vpop.f32.mrb[0].mxu0
        %v2903 = vadd.f32 %v609, %v2902
        %2904 = vdwg.mxu0
        %2905 = vmatprep.subr.mxu0 0.0
        %2906 = vmatpush1.msra.mxu0 %v548
        %2907 = vmatprep.subr.mxu0 0.0
        %2908 = vmatpush1.msra.mxu0 %v551
        %2909 = vmatprep.subr.mxu0 0.0
        %2910 = vmatpush1.msra.mxu0 %v554
        %2911 = vmatprep.subr.mxu0 0.0
        %2912 = vmatpush1.msra.mxu0 %v557
        %2913 = vmatprep.subr.mxu0 0.0
        %2914 = vmatpush1.msra.mxu0 %v560
        %2915 = vmatprep.subr.mxu0 0.0
        %2916 = vmatpush1.msra.mxu0 %v563
        %2917 = vmatprep.subr.mxu0 0.0
        %2918 = vmatpush1.msra.mxu0 %v566
        %2919 = vmatprep.subr.mxu0 0.0
        %2920 = vmatpush1.msra.mxu0 %v569
        %2921 = vmatprep.subr.mxu0 0.0
        %2922 = vmatpush1.msra.mxu0 %v572
        %2923 = vmatprep.subr.mxu0 0.0
        %2924 = vmatpush1.msra.mxu0 %v575
        %2925 = vmatprep.subr.mxu0 0.0
        %2926 = vmatpush1.msra.mxu0 %v578
        %2927 = vmatprep.subr.mxu0 0.0
        %2928 = vmatpush1.msra.mxu0 %v581
        %2929 = vmatprep.subr.mxu0 0.0
        %2930 = vmatpush1.msra.mxu0 %v584
        %2931 = vmatprep.subr.mxu0 0.0
        %2932 = vmatpush1.msra.mxu0 %v587
        %2933 = vmatprep.subr.mxu0 0.0
        %2934 = vmatpush1.msra.mxu0 %v590
        %2935 = vmatprep.subr.mxu0 0.0
        %2936 = vmatpush1.msra.mxu0 %v593
        %2937 = vmatprep.subr.mxu0 0.0
        %2938 = vmatpush1.msra.mxu0 0.0
        %2939 = vmatprep.subr.mxu0 0.0
        %2940 = vmatpush1.msra.mxu0 0.0
        %2941 = vmatprep.subr.mxu0 0.0
        %2942 = vmatpush1.msra.mxu0 0.0
        %2943 = vmatprep.subr.mxu0 0.0
        %2944 = vmatpush1.msra.mxu0 0.0
        %2945 = vmatprep.subr.mxu0 0.0
        %2946 = vmatpush1.msra.mxu0 0.0
        %2947 = vmatprep.subr.mxu0 0.0
        %2948 = vmatpush1.msra.mxu0 0.0
        %2949 = vmatprep.subr.mxu0 0.0
        %2950 = vmatpush1.msra.mxu0 0.0
        %2951 = vmatprep.subr.mxu0 0.0
        %2952 = vmatpush1.msra.mxu0 0.0
        %2953 = vmatprep.subr.mxu0 0.0
        %2954 = vmatpush1.msra.mxu0 0.0
        %2955 = vmatprep.subr.mxu0 0.0
        %2956 = vmatpush1.msra.mxu0 0.0
        %2957 = vmatprep.subr.mxu0 0.0
        %2958 = vmatpush1.msra.mxu0 0.0
        %2959 = vmatprep.subr.mxu0 0.0
        %2960 = vmatpush1.msra.mxu0 0.0
        %2961 = vmatprep.subr.mxu0 0.0
        %2962 = vmatpush1.msra.mxu0 0.0
        %2963 = vmatprep.subr.mxu0 0.0
        %2964 = vmatpush1.msra.mxu0 0.0
        %2965 = vmatprep.subr.mxu0 0.0
        %2966 = vmatpush1.msra.mxu0 0.0
        %2967 = vmatprep.subr.mxu0 0.0
        %2968 = vmatpush1.msra.mxu0 0.0
        %2969 = vmatprep.mubr.f32.mxu0 0.0
        %2970 = vmatmul.mubr.f32.gmra.mrb[0].mxu0 %v2819
        %v2971 = vpop.f32.mrb[0].mxu0
        %v2972 = vadd.f32 %v613, %v2971
        %v2973 = vpop.f32.mrb[0].mxu0
        %2974 = vmatprep.mubr.f32.mxu0 0.0
        %2975 = vmatmul.mubr.f32.gmra.mrb[0].mxu0 %v2820
        %v2976 = vpop.f32.mrb[0].mxu0
        %v2977 = vadd.f32 %v613, %v2976
        %v2978 = vpop.f32.mrb[0].mxu0
        %2979 = vdwg.mxu0
        %v2980 = vadd.f32 %v2822, %v2895
        %v2981 = vadd.f32 %v2825, %v2901
        %v2982 = vxor.u32 %v2980, 2147483648
        %v2983 = vxor.u32 %v2981, 2147483648
        %v2984 = vmul.f32 %v2982, 1.442695
        %v2985 = vpow.pop %v2984
        %v2986 = vmul.f32 %v2983, 1.442695
        %v2987 = vpow.pop %v2986
        %v2988 = vadd.f32 %v2985, 1.0
        %v2989 = vadd.f32 %v2987, 1.0
        %v2990 = vrcp.pop %v2988
        %v2991 = vmul.f32 1.0, %v2990
        %v2992 = vrcp.pop %v2989
        %v2993 = vmul.f32 1.0, %v2992
        %v2994 = vadd.f32 %v2823, %v2897
        %v2995 = vadd.f32 %v2826, %v2903
        %v2996 = vxor.u32 %v2994, 2147483648
        %v2997 = vxor.u32 %v2995, 2147483648
        %v2998 = vmul.f32 %v2996, 1.442695
        %v2999 = vpow.pop %v2998
        %v3000 = vmul.f32 %v2997, 1.442695
        %v3001 = vpow.pop %v3000
        %v3002 = vadd.f32 %v2999, 1.0
        %v3003 = vadd.f32 %v3001, 1.0
        %v3004 = vrcp.pop %v3002
        %v3005 = vmul.f32 1.0, %v3004
        %v3006 = vrcp.pop %v3003
        %v3007 = vmul.f32 1.0, %v3006
        %v3008 = vmul.f32 %v2991, %v2972
        %v3009 = vmul.f32 %v2993, %v2977
        %v3010 = vadd.f32 %v2824, %v3008
        %v3011 = vadd.f32 %v2827, %v3009
        %v3012 = vtanh.pop %v3010
        %v3013 = vtanh.pop %v3011
        %v3014 = vsub.f32 1.0, %v3005
        %v3015 = vsub.f32 1.0, %v3007
        %v3016 = vmul.f32 %v3014, %v3012
        %v3017 = vmul.f32 %v3015, %v3013
        %v3018 = vmul.f32 %v3005, %v2819
        %v3019 = vmul.f32 %v3007, %v2820
        %v3020 = vadd.f32 %v3016, %v3018
        %v3021 = vadd.f32 %v3017, %v3019
        %s3022 = scalar_lea.vmem %s495, 576 [#allocation3]
        %v3023 = vld [vmem:[%s3022] sm:$0xff]
        %v3024 = vld [vmem:[%s3022 + $0x8] sm:$0xff]
        %v3025 = vld [vmem:[%s3022 + $0x10] sm:$0xff]
        %v3026 = vld [vmem:[%s3022 + $0x18] sm:$0xff]
        %v3027 = vld [vmem:[%s3022 + $0x20] sm:$0xff]
        %v3028 = vld [vmem:[%s3022 + $0x28] sm:$0xff]
        %3029 = vmatprep.subr.mxu0 %v547
        %3030 = vmatpush1.msra.mxu0 %v546
        %3031 = vmatprep.subr.mxu0 %v550
        %3032 = vmatpush1.msra.mxu0 %v549
        %3033 = vmatprep.subr.mxu0 %v553
        %3034 = vmatpush1.msra.mxu0 %v552
        %3035 = vmatprep.subr.mxu0 %v556
        %3036 = vmatpush1.msra.mxu0 %v555
        %3037 = vmatprep.subr.mxu0 %v559
        %3038 = vmatpush1.msra.mxu0 %v558
        %3039 = vmatprep.subr.mxu0 %v562
        %3040 = vmatpush1.msra.mxu0 %v561
        %3041 = vmatprep.subr.mxu0 %v565
        %3042 = vmatpush1.msra.mxu0 %v564
        %3043 = vmatprep.subr.mxu0 %v568
        %3044 = vmatpush1.msra.mxu0 %v567
        %3045 = vmatprep.subr.mxu0 %v571
        %3046 = vmatpush1.msra.mxu0 %v570
        %3047 = vmatprep.subr.mxu0 %v574
        %3048 = vmatpush1.msra.mxu0 %v573
        %3049 = vmatprep.subr.mxu0 %v577
        %3050 = vmatpush1.msra.mxu0 %v576
        %3051 = vmatprep.subr.mxu0 %v580
        %3052 = vmatpush1.msra.mxu0 %v579
        %3053 = vmatprep.subr.mxu0 %v583
        %3054 = vmatpush1.msra.mxu0 %v582
        %3055 = vmatprep.subr.mxu0 %v586
        %3056 = vmatpush1.msra.mxu0 %v585
        %3057 = vmatprep.subr.mxu0 %v589
        %3058 = vmatpush1.msra.mxu0 %v588
        %3059 = vmatprep.subr.mxu0 %v592
        %3060 = vmatpush1.msra.mxu0 %v591
        %3061 = vmatprep.subr.mxu0 0.0
        %3062 = vmatpush1.msra.mxu0 0.0
        %3063 = vmatprep.subr.mxu0 0.0
        %3064 = vmatpush1.msra.mxu0 0.0
        %3065 = vmatprep.subr.mxu0 0.0
        %3066 = vmatpush1.msra.mxu0 0.0
        %3067 = vmatprep.subr.mxu0 0.0
        %3068 = vmatpush1.msra.mxu0 0.0
        %3069 = vmatprep.subr.mxu0 0.0
        %3070 = vmatpush1.msra.mxu0 0.0
        %3071 = vmatprep.subr.mxu0 0.0
        %3072 = vmatpush1.msra.mxu0 0.0
        %3073 = vmatprep.subr.mxu0 0.0
        %3074 = vmatpush1.msra.mxu0 0.0
        %3075 = vmatprep.subr.mxu0 0.0
        %3076 = vmatpush1.msra.mxu0 0.0
        %3077 = vmatprep.subr.mxu0 0.0
        %3078 = vmatpush1.msra.mxu0 0.0
        %3079 = vmatprep.subr.mxu0 0.0
        %3080 = vmatpush1.msra.mxu0 0.0
        %3081 = vmatprep.subr.mxu0 0.0
        %3082 = vmatpush1.msra.mxu0 0.0
        %3083 = vmatprep.subr.mxu0 0.0
        %3084 = vmatpush1.msra.mxu0 0.0
        %3085 = vmatprep.subr.mxu0 0.0
        %3086 = vmatpush1.msra.mxu0 0.0
        %3087 = vmatprep.subr.mxu0 0.0
        %3088 = vmatpush1.msra.mxu0 0.0
        %3089 = vmatprep.subr.mxu0 0.0
        %3090 = vmatpush1.msra.mxu0 0.0
        %3091 = vmatprep.subr.mxu0 0.0
        %3092 = vmatpush1.msra.mxu0 0.0
        %3093 = vmatprep.mubr.f32.mxu0 0.0
        %3094 = vmatmul.mubr.f32.gmra.mrb[0].mxu0 %v3020
        %v3095 = vpop.f32.mrb[0].mxu0
        %v3096 = vadd.f32 %v605, %v3095
        %v3097 = vpop.f32.mrb[0].mxu0
        %v3098 = vadd.f32 %v609, %v3097
        %3099 = vmatprep.mubr.f32.mxu0 0.0
        %3100 = vmatmul.mubr.f32.gmra.mrb[0].mxu0 %v3021
        %v3101 = vpop.f32.mrb[0].mxu0
        %v3102 = vadd.f32 %v605, %v3101
        %v3103 = vpop.f32.mrb[0].mxu0
        %v3104 = vadd.f32 %v609, %v3103
        %3105 = vdwg.mxu0
        %3106 = vmatprep.subr.mxu0 0.0
        %3107 = vmatpush1.msra.mxu0 %v548
        %3108 = vmatprep.subr.mxu0 0.0
        %3109 = vmatpush1.msra.mxu0 %v551
        %3110 = vmatprep.subr.mxu0 0.0
        %3111 = vmatpush1.msra.mxu0 %v554
        %3112 = vmatprep.subr.mxu0 0.0
        %3113 = vmatpush1.msra.mxu0 %v557
        %3114 = vmatprep.subr.mxu0 0.0
        %3115 = vmatpush1.msra.mxu0 %v560
        %3116 = vmatprep.subr.mxu0 0.0
        %3117 = vmatpush1.msra.mxu0 %v563
        %3118 = vmatprep.subr.mxu0 0.0
        %3119 = vmatpush1.msra.mxu0 %v566
        %3120 = vmatprep.subr.mxu0 0.0
        %3121 = vmatpush1.msra.mxu0 %v569
        %3122 = vmatprep.subr.mxu0 0.0
        %3123 = vmatpush1.msra.mxu0 %v572
        %3124 = vmatprep.subr.mxu0 0.0
        %3125 = vmatpush1.msra.mxu0 %v575
        %3126 = vmatprep.subr.mxu0 0.0
        %3127 = vmatpush1.msra.mxu0 %v578
        %3128 = vmatprep.subr.mxu0 0.0
        %3129 = vmatpush1.msra.mxu0 %v581
        %3130 = vmatprep.subr.mxu0 0.0
        %3131 = vmatpush1.msra.mxu0 %v584
        %3132 = vmatprep.subr.mxu0 0.0
        %3133 = vmatpush1.msra.mxu0 %v587
        %3134 = vmatprep.subr.mxu0 0.0
        %3135 = vmatpush1.msra.mxu0 %v590
        %3136 = vmatprep.subr.mxu0 0.0
        %3137 = vmatpush1.msra.mxu0 %v593
        %3138 = vmatprep.subr.mxu0 0.0
        %3139 = vmatpush1.msra.mxu0 0.0
        %3140 = vmatprep.subr.mxu0 0.0
        %3141 = vmatpush1.msra.mxu0 0.0
        %3142 = vmatprep.subr.mxu0 0.0
        %3143 = vmatpush1.msra.mxu0 0.0
        %3144 = vmatprep.subr.mxu0 0.0
        %3145 = vmatpush1.msra.mxu0 0.0
        %3146 = vmatprep.subr.mxu0 0.0
        %3147 = vmatpush1.msra.mxu0 0.0
        %3148 = vmatprep.subr.mxu0 0.0
        %3149 = vmatpush1.msra.mxu0 0.0
        %3150 = vmatprep.subr.mxu0 0.0
        %3151 = vmatpush1.msra.mxu0 0.0
        %3152 = vmatprep.subr.mxu0 0.0
        %3153 = vmatpush1.msra.mxu0 0.0
        %3154 = vmatprep.subr.mxu0 0.0
        %3155 = vmatpush1.msra.mxu0 0.0
        %3156 = vmatprep.subr.mxu0 0.0
        %3157 = vmatpush1.msra.mxu0 0.0
        %3158 = vmatprep.subr.mxu0 0.0
        %3159 = vmatpush1.msra.mxu0 0.0
        %3160 = vmatprep.subr.mxu0 0.0
        %3161 = vmatpush1.msra.mxu0 0.0
        %3162 = vmatprep.subr.mxu0 0.0
        %3163 = vmatpush1.msra.mxu0 0.0
        %3164 = vmatprep.subr.mxu0 0.0
        %3165 = vmatpush1.msra.mxu0 0.0
        %3166 = vmatprep.subr.mxu0 0.0
        %3167 = vmatpush1.msra.mxu0 0.0
        %3168 = vmatprep.subr.mxu0 0.0
        %3169 = vmatpush1.msra.mxu0 0.0
        %3170 = vmatprep.mubr.f32.mxu0 0.0
        %3171 = vmatmul.mubr.f32.gmra.mrb[0].mxu0 %v3020
        %v3172 = vpop.f32.mrb[0].mxu0
        %v3173 = vadd.f32 %v613, %v3172
        %v3174 = vpop.f32.mrb[0].mxu0
        %3175 = vmatprep.mubr.f32.mxu0 0.0
        %3176 = vmatmul.mubr.f32.gmra.mrb[0].mxu0 %v3021
        %v3177 = vpop.f32.mrb[0].mxu0
        %v3178 = vadd.f32 %v613, %v3177
        %v3179 = vpop.f32.mrb[0].mxu0
        %3180 = vdwg.mxu0
        %v3181 = vadd.f32 %v3023, %v3096
        %v3182 = vadd.f32 %v3026, %v3102
        %v3183 = vxor.u32 %v3181, 2147483648
        %v3184 = vxor.u32 %v3182, 2147483648
        %v3185 = vmul.f32 %v3183, 1.442695
        %v3186 = vpow.pop %v3185
        %v3187 = vmul.f32 %v3184, 1.442695
        %v3188 = vpow.pop %v3187
        %v3189 = vadd.f32 %v3186, 1.0
        %v3190 = vadd.f32 %v3188, 1.0
        %v3191 = vrcp.pop %v3189
        %v3192 = vmul.f32 1.0, %v3191
        %v3193 = vrcp.pop %v3190
        %v3194 = vmul.f32 1.0, %v3193
        %v3195 = vadd.f32 %v3024, %v3098
        %v3196 = vadd.f32 %v3027, %v3104
        %v3197 = vxor.u32 %v3195, 2147483648
        %v3198 = vxor.u32 %v3196, 2147483648
        %v3199 = vmul.f32 %v3197, 1.442695
        %v3200 = vpow.pop %v3199
        %v3201 = vmul.f32 %v3198, 1.442695
        %v3202 = vpow.pop %v3201
        %v3203 = vadd.f32 %v3200, 1.0
        %v3204 = vadd.f32 %v3202, 1.0
        %v3205 = vrcp.pop %v3203
        %v3206 = vmul.f32 1.0, %v3205
        %v3207 = vrcp.pop %v3204
        %v3208 = vmul.f32 1.0, %v3207
        %v3209 = vmul.f32 %v3192, %v3173
        %v3210 = vmul.f32 %v3194, %v3178
        %v3211 = vadd.f32 %v3025, %v3209
        %v3212 = vadd.f32 %v3028, %v3210
        %v3213 = vtanh.pop %v3211
        %v3214 = vtanh.pop %v3212
        %v3215 = vsub.f32 1.0, %v3206
        %v3216 = vsub.f32 1.0, %v3208
        %v3217 = vmul.f32 %v3215, %v3213
        %v3218 = vmul.f32 %v3216, %v3214
        %v3219 = vmul.f32 %v3206, %v3020
        %v3220 = vmul.f32 %v3208, %v3021
        %v3221 = vadd.f32 %v3217, %v3219
        %v3222 = vadd.f32 %v3218, %v3220
        %s3223 = scalar_lea.vmem %s495, 624 [#allocation3]
        %v3224 = vld [vmem:[%s3223] sm:$0xff]
        %v3225 = vld [vmem:[%s3223 + $0x8] sm:$0xff]
        %v3226 = vld [vmem:[%s3223 + $0x10] sm:$0xff]
        %v3227 = vld [vmem:[%s3223 + $0x18] sm:$0xff]
        %v3228 = vld [vmem:[%s3223 + $0x20] sm:$0xff]
        %v3229 = vld [vmem:[%s3223 + $0x28] sm:$0xff]
        %3230 = vmatprep.subr.mxu0 %v547
        %3231 = vmatpush1.msra.mxu0 %v546
        %3232 = vmatprep.subr.mxu0 %v550
        %3233 = vmatpush1.msra.mxu0 %v549
        %3234 = vmatprep.subr.mxu0 %v553
        %3235 = vmatpush1.msra.mxu0 %v552
        %3236 = vmatprep.subr.mxu0 %v556
        %3237 = vmatpush1.msra.mxu0 %v555
        %3238 = vmatprep.subr.mxu0 %v559
        %3239 = vmatpush1.msra.mxu0 %v558
        %3240 = vmatprep.subr.mxu0 %v562
        %3241 = vmatpush1.msra.mxu0 %v561
        %3242 = vmatprep.subr.mxu0 %v565
        %3243 = vmatpush1.msra.mxu0 %v564
        %3244 = vmatprep.subr.mxu0 %v568
        %3245 = vmatpush1.msra.mxu0 %v567
        %3246 = vmatprep.subr.mxu0 %v571
        %3247 = vmatpush1.msra.mxu0 %v570
        %3248 = vmatprep.subr.mxu0 %v574
        %3249 = vmatpush1.msra.mxu0 %v573
        %3250 = vmatprep.subr.mxu0 %v577
        %3251 = vmatpush1.msra.mxu0 %v576
        %3252 = vmatprep.subr.mxu0 %v580
        %3253 = vmatpush1.msra.mxu0 %v579
        %3254 = vmatprep.subr.mxu0 %v583
        %3255 = vmatpush1.msra.mxu0 %v582
        %3256 = vmatprep.subr.mxu0 %v586
        %3257 = vmatpush1.msra.mxu0 %v585
        %3258 = vmatprep.subr.mxu0 %v589
        %3259 = vmatpush1.msra.mxu0 %v588
        %3260 = vmatprep.subr.mxu0 %v592
        %3261 = vmatpush1.msra.mxu0 %v591
        %3262 = vmatprep.subr.mxu0 0.0
        %3263 = vmatpush1.msra.mxu0 0.0
        %3264 = vmatprep.subr.mxu0 0.0
        %3265 = vmatpush1.msra.mxu0 0.0
        %3266 = vmatprep.subr.mxu0 0.0
        %3267 = vmatpush1.msra.mxu0 0.0
        %3268 = vmatprep.subr.mxu0 0.0
        %3269 = vmatpush1.msra.mxu0 0.0
        %3270 = vmatprep.subr.mxu0 0.0
        %3271 = vmatpush1.msra.mxu0 0.0
        %3272 = vmatprep.subr.mxu0 0.0
        %3273 = vmatpush1.msra.mxu0 0.0
        %3274 = vmatprep.subr.mxu0 0.0
        %3275 = vmatpush1.msra.mxu0 0.0
        %3276 = vmatprep.subr.mxu0 0.0
        %3277 = vmatpush1.msra.mxu0 0.0
        %3278 = vmatprep.subr.mxu0 0.0
        %3279 = vmatpush1.msra.mxu0 0.0
        %3280 = vmatprep.subr.mxu0 0.0
        %3281 = vmatpush1.msra.mxu0 0.0
        %3282 = vmatprep.subr.mxu0 0.0
        %3283 = vmatpush1.msra.mxu0 0.0
        %3284 = vmatprep.subr.mxu0 0.0
        %3285 = vmatpush1.msra.mxu0 0.0
        %3286 = vmatprep.subr.mxu0 0.0
        %3287 = vmatpush1.msra.mxu0 0.0
        %3288 = vmatprep.subr.mxu0 0.0
        %3289 = vmatpush1.msra.mxu0 0.0
        %3290 = vmatprep.subr.mxu0 0.0
        %3291 = vmatpush1.msra.mxu0 0.0
        %3292 = vmatprep.subr.mxu0 0.0
        %3293 = vmatpush1.msra.mxu0 0.0
        %3294 = vmatprep.mubr.f32.mxu0 0.0
        %3295 = vmatmul.mubr.f32.gmra.mrb[0].mxu0 %v3221
        %v3296 = vpop.f32.mrb[0].mxu0
        %v3297 = vadd.f32 %v605, %v3296
        %v3298 = vpop.f32.mrb[0].mxu0
        %v3299 = vadd.f32 %v609, %v3298
        %3300 = vmatprep.mubr.f32.mxu0 0.0
        %3301 = vmatmul.mubr.f32.gmra.mrb[0].mxu0 %v3222
        %v3302 = vpop.f32.mrb[0].mxu0
        %v3303 = vadd.f32 %v605, %v3302
        %v3304 = vpop.f32.mrb[0].mxu0
        %v3305 = vadd.f32 %v609, %v3304
        %3306 = vdwg.mxu0
        %3307 = vmatprep.subr.mxu0 0.0
        %3308 = vmatpush1.msra.mxu0 %v548
        %3309 = vmatprep.subr.mxu0 0.0
        %3310 = vmatpush1.msra.mxu0 %v551
        %3311 = vmatprep.subr.mxu0 0.0
        %3312 = vmatpush1.msra.mxu0 %v554
        %3313 = vmatprep.subr.mxu0 0.0
        %3314 = vmatpush1.msra.mxu0 %v557
        %3315 = vmatprep.subr.mxu0 0.0
        %3316 = vmatpush1.msra.mxu0 %v560
        %3317 = vmatprep.subr.mxu0 0.0
        %3318 = vmatpush1.msra.mxu0 %v563
        %3319 = vmatprep.subr.mxu0 0.0
        %3320 = vmatpush1.msra.mxu0 %v566
        %3321 = vmatprep.subr.mxu0 0.0
        %3322 = vmatpush1.msra.mxu0 %v569
        %3323 = vmatprep.subr.mxu0 0.0
        %3324 = vmatpush1.msra.mxu0 %v572
        %3325 = vmatprep.subr.mxu0 0.0
        %3326 = vmatpush1.msra.mxu0 %v575
        %3327 = vmatprep.subr.mxu0 0.0
        %3328 = vmatpush1.msra.mxu0 %v578
        %3329 = vmatprep.subr.mxu0 0.0
        %3330 = vmatpush1.msra.mxu0 %v581
        %3331 = vmatprep.subr.mxu0 0.0
        %3332 = vmatpush1.msra.mxu0 %v584
        %3333 = vmatprep.subr.mxu0 0.0
        %3334 = vmatpush1.msra.mxu0 %v587
        %3335 = vmatprep.subr.mxu0 0.0
        %3336 = vmatpush1.msra.mxu0 %v590
        %3337 = vmatprep.subr.mxu0 0.0
        %3338 = vmatpush1.msra.mxu0 %v593
        %3339 = vmatprep.subr.mxu0 0.0
        %3340 = vmatpush1.msra.mxu0 0.0
        %3341 = vmatprep.subr.mxu0 0.0
        %3342 = vmatpush1.msra.mxu0 0.0
        %3343 = vmatprep.subr.mxu0 0.0
        %3344 = vmatpush1.msra.mxu0 0.0
        %3345 = vmatprep.subr.mxu0 0.0
        %3346 = vmatpush1.msra.mxu0 0.0
        %3347 = vmatprep.subr.mxu0 0.0
        %3348 = vmatpush1.msra.mxu0 0.0
        %3349 = vmatprep.subr.mxu0 0.0
        %3350 = vmatpush1.msra.mxu0 0.0
        %3351 = vmatprep.subr.mxu0 0.0
        %3352 = vmatpush1.msra.mxu0 0.0
        %3353 = vmatprep.subr.mxu0 0.0
        %3354 = vmatpush1.msra.mxu0 0.0
        %3355 = vmatprep.subr.mxu0 0.0
        %3356 = vmatpush1.msra.mxu0 0.0
        %3357 = vmatprep.subr.mxu0 0.0
        %3358 = vmatpush1.msra.mxu0 0.0
        %3359 = vmatprep.subr.mxu0 0.0
        %3360 = vmatpush1.msra.mxu0 0.0
        %3361 = vmatprep.subr.mxu0 0.0
        %3362 = vmatpush1.msra.mxu0 0.0
        %3363 = vmatprep.subr.mxu0 0.0
        %3364 = vmatpush1.msra.mxu0 0.0
        %3365 = vmatprep.subr.mxu0 0.0
        %3366 = vmatpush1.msra.mxu0 0.0
        %3367 = vmatprep.subr.mxu0 0.0
        %3368 = vmatpush1.msra.mxu0 0.0
        %3369 = vmatprep.subr.mxu0 0.0
        %3370 = vmatpush1.msra.mxu0 0.0
        %3371 = vmatprep.mubr.f32.mxu0 0.0
        %3372 = vmatmul.mubr.f32.gmra.mrb[0].mxu0 %v3221
        %v3373 = vpop.f32.mrb[0].mxu0
        %v3374 = vadd.f32 %v613, %v3373
        %v3375 = vpop.f32.mrb[0].mxu0
        %3376 = vmatprep.mubr.f32.mxu0 0.0
        %3377 = vmatmul.mubr.f32.gmra.mrb[0].mxu0 %v3222
        %v3378 = vpop.f32.mrb[0].mxu0
        %v3379 = vadd.f32 %v613, %v3378
        %v3380 = vpop.f32.mrb[0].mxu0
        %3381 = vdwg.mxu0
        %v3382 = vadd.f32 %v3224, %v3297
        %v3383 = vadd.f32 %v3227, %v3303
        %v3384 = vxor.u32 %v3382, 2147483648
        %v3385 = vxor.u32 %v3383, 2147483648
        %v3386 = vmul.f32 %v3384, 1.442695
        %v3387 = vpow.pop %v3386
        %v3388 = vmul.f32 %v3385, 1.442695
        %v3389 = vpow.pop %v3388
        %v3390 = vadd.f32 %v3387, 1.0
        %v3391 = vadd.f32 %v3389, 1.0
        %v3392 = vrcp.pop %v3390
        %v3393 = vmul.f32 1.0, %v3392
        %v3394 = vrcp.pop %v3391
        %v3395 = vmul.f32 1.0, %v3394
        %v3396 = vadd.f32 %v3225, %v3299
        %v3397 = vadd.f32 %v3228, %v3305
        %v3398 = vxor.u32 %v3396, 2147483648
        %v3399 = vxor.u32 %v3397, 2147483648
        %v3400 = vmul.f32 %v3398, 1.442695
        %v3401 = vpow.pop %v3400
        %v3402 = vmul.f32 %v3399, 1.442695
        %v3403 = vpow.pop %v3402
        %v3404 = vadd.f32 %v3401, 1.0
        %v3405 = vadd.f32 %v3403, 1.0
        %v3406 = vrcp.pop %v3404
        %v3407 = vmul.f32 1.0, %v3406
        %v3408 = vrcp.pop %v3405
        %v3409 = vmul.f32 1.0, %v3408
        %v3410 = vmul.f32 %v3393, %v3374
        %v3411 = vmul.f32 %v3395, %v3379
        %v3412 = vadd.f32 %v3226, %v3410
        %v3413 = vadd.f32 %v3229, %v3411
        %v3414 = vtanh.pop %v3412
        %v3415 = vtanh.pop %v3413
        %v3416 = vsub.f32 1.0, %v3407
        %v3417 = vsub.f32 1.0, %v3409
        %v3418 = vmul.f32 %v3416, %v3414
        %v3419 = vmul.f32 %v3417, %v3415
        %v3420 = vmul.f32 %v3407, %v3221
        %v3421 = vmul.f32 %v3409, %v3222
        %v3422 = vadd.f32 %v3418, %v3420
        %v3423 = vadd.f32 %v3419, %v3421
        %s3424 = scalar_lea.vmem %s495, 672 [#allocation3]
        %v3425 = vld [vmem:[%s3424] sm:$0xff]
        %v3426 = vld [vmem:[%s3424 + $0x8] sm:$0xff]
        %v3427 = vld [vmem:[%s3424 + $0x10] sm:$0xff]
        %v3428 = vld [vmem:[%s3424 + $0x18] sm:$0xff]
        %v3429 = vld [vmem:[%s3424 + $0x20] sm:$0xff]
        %v3430 = vld [vmem:[%s3424 + $0x28] sm:$0xff]
        %3431 = vmatprep.subr.mxu0 %v547
        %3432 = vmatpush1.msra.mxu0 %v546
        %3433 = vmatprep.subr.mxu0 %v550
        %3434 = vmatpush1.msra.mxu0 %v549
        %3435 = vmatprep.subr.mxu0 %v553
        %3436 = vmatpush1.msra.mxu0 %v552
        %3437 = vmatprep.subr.mxu0 %v556
        %3438 = vmatpush1.msra.mxu0 %v555
        %3439 = vmatprep.subr.mxu0 %v559
        %3440 = vmatpush1.msra.mxu0 %v558
        %3441 = vmatprep.subr.mxu0 %v562
        %3442 = vmatpush1.msra.mxu0 %v561
        %3443 = vmatprep.subr.mxu0 %v565
        %3444 = vmatpush1.msra.mxu0 %v564
        %3445 = vmatprep.subr.mxu0 %v568
        %3446 = vmatpush1.msra.mxu0 %v567
        %3447 = vmatprep.subr.mxu0 %v571
        %3448 = vmatpush1.msra.mxu0 %v570
        %3449 = vmatprep.subr.mxu0 %v574
        %3450 = vmatpush1.msra.mxu0 %v573
        %3451 = vmatprep.subr.mxu0 %v577
        %3452 = vmatpush1.msra.mxu0 %v576
        %3453 = vmatprep.subr.mxu0 %v580
        %3454 = vmatpush1.msra.mxu0 %v579
        %3455 = vmatprep.subr.mxu0 %v583
        %3456 = vmatpush1.msra.mxu0 %v582
        %3457 = vmatprep.subr.mxu0 %v586
        %3458 = vmatpush1.msra.mxu0 %v585
        %3459 = vmatprep.subr.mxu0 %v589
        %3460 = vmatpush1.msra.mxu0 %v588
        %3461 = vmatprep.subr.mxu0 %v592
        %3462 = vmatpush1.msra.mxu0 %v591
        %3463 = vmatprep.subr.mxu0 0.0
        %3464 = vmatpush1.msra.mxu0 0.0
        %3465 = vmatprep.subr.mxu0 0.0
        %3466 = vmatpush1.msra.mxu0 0.0
        %3467 = vmatprep.subr.mxu0 0.0
        %3468 = vmatpush1.msra.mxu0 0.0
        %3469 = vmatprep.subr.mxu0 0.0
        %3470 = vmatpush1.msra.mxu0 0.0
        %3471 = vmatprep.subr.mxu0 0.0
        %3472 = vmatpush1.msra.mxu0 0.0
        %3473 = vmatprep.subr.mxu0 0.0
        %3474 = vmatpush1.msra.mxu0 0.0
        %3475 = vmatprep.subr.mxu0 0.0
        %3476 = vmatpush1.msra.mxu0 0.0
        %3477 = vmatprep.subr.mxu0 0.0
        %3478 = vmatpush1.msra.mxu0 0.0
        %3479 = vmatprep.subr.mxu0 0.0
        %3480 = vmatpush1.msra.mxu0 0.0
        %3481 = vmatprep.subr.mxu0 0.0
        %3482 = vmatpush1.msra.mxu0 0.0
        %3483 = vmatprep.subr.mxu0 0.0
        %3484 = vmatpush1.msra.mxu0 0.0
        %3485 = vmatprep.subr.mxu0 0.0
        %3486 = vmatpush1.msra.mxu0 0.0
        %3487 = vmatprep.subr.mxu0 0.0
        %3488 = vmatpush1.msra.mxu0 0.0
        %3489 = vmatprep.subr.mxu0 0.0
        %3490 = vmatpush1.msra.mxu0 0.0
        %3491 = vmatprep.subr.mxu0 0.0
        %3492 = vmatpush1.msra.mxu0 0.0
        %3493 = vmatprep.subr.mxu0 0.0
        %3494 = vmatpush1.msra.mxu0 0.0
        %3495 = vmatprep.mubr.f32.mxu0 0.0
        %3496 = vmatmul.mubr.f32.gmra.mrb[0].mxu0 %v3422
        %v3497 = vpop.f32.mrb[0].mxu0
        %v3498 = vadd.f32 %v605, %v3497
        %v3499 = vpop.f32.mrb[0].mxu0
        %v3500 = vadd.f32 %v609, %v3499
        %3501 = vmatprep.mubr.f32.mxu0 0.0
        %3502 = vmatmul.mubr.f32.gmra.mrb[0].mxu0 %v3423
        %v3503 = vpop.f32.mrb[0].mxu0
        %v3504 = vadd.f32 %v605, %v3503
        %v3505 = vpop.f32.mrb[0].mxu0
        %v3506 = vadd.f32 %v609, %v3505
        %3507 = vdwg.mxu0
        %3508 = vmatprep.subr.mxu0 0.0
        %3509 = vmatpush1.msra.mxu0 %v548
        %3510 = vmatprep.subr.mxu0 0.0
        %3511 = vmatpush1.msra.mxu0 %v551
        %3512 = vmatprep.subr.mxu0 0.0
        %3513 = vmatpush1.msra.mxu0 %v554
        %3514 = vmatprep.subr.mxu0 0.0
        %3515 = vmatpush1.msra.mxu0 %v557
        %3516 = vmatprep.subr.mxu0 0.0
        %3517 = vmatpush1.msra.mxu0 %v560
        %3518 = vmatprep.subr.mxu0 0.0
        %3519 = vmatpush1.msra.mxu0 %v563
        %3520 = vmatprep.subr.mxu0 0.0
        %3521 = vmatpush1.msra.mxu0 %v566
        %3522 = vmatprep.subr.mxu0 0.0
        %3523 = vmatpush1.msra.mxu0 %v569
        %3524 = vmatprep.subr.mxu0 0.0
        %3525 = vmatpush1.msra.mxu0 %v572
        %3526 = vmatprep.subr.mxu0 0.0
        %3527 = vmatpush1.msra.mxu0 %v575
        %3528 = vmatprep.subr.mxu0 0.0
        %3529 = vmatpush1.msra.mxu0 %v578
        %3530 = vmatprep.subr.mxu0 0.0
        %3531 = vmatpush1.msra.mxu0 %v581
        %3532 = vmatprep.subr.mxu0 0.0
        %3533 = vmatpush1.msra.mxu0 %v584
        %3534 = vmatprep.subr.mxu0 0.0
        %3535 = vmatpush1.msra.mxu0 %v587
        %3536 = vmatprep.subr.mxu0 0.0
        %3537 = vmatpush1.msra.mxu0 %v590
        %3538 = vmatprep.subr.mxu0 0.0
        %3539 = vmatpush1.msra.mxu0 %v593
        %3540 = vmatprep.subr.mxu0 0.0
        %3541 = vmatpush1.msra.mxu0 0.0
        %3542 = vmatprep.subr.mxu0 0.0
        %3543 = vmatpush1.msra.mxu0 0.0
        %3544 = vmatprep.subr.mxu0 0.0
        %3545 = vmatpush1.msra.mxu0 0.0
        %3546 = vmatprep.subr.mxu0 0.0
        %3547 = vmatpush1.msra.mxu0 0.0
        %3548 = vmatprep.subr.mxu0 0.0
        %3549 = vmatpush1.msra.mxu0 0.0
        %3550 = vmatprep.subr.mxu0 0.0
        %3551 = vmatpush1.msra.mxu0 0.0
        %3552 = vmatprep.subr.mxu0 0.0
        %3553 = vmatpush1.msra.mxu0 0.0
        %3554 = vmatprep.subr.mxu0 0.0
        %3555 = vmatpush1.msra.mxu0 0.0
        %3556 = vmatprep.subr.mxu0 0.0
        %3557 = vmatpush1.msra.mxu0 0.0
        %3558 = vmatprep.subr.mxu0 0.0
        %3559 = vmatpush1.msra.mxu0 0.0
        %3560 = vmatprep.subr.mxu0 0.0
        %3561 = vmatpush1.msra.mxu0 0.0
        %3562 = vmatprep.subr.mxu0 0.0
        %3563 = vmatpush1.msra.mxu0 0.0
        %3564 = vmatprep.subr.mxu0 0.0
        %3565 = vmatpush1.msra.mxu0 0.0
        %3566 = vmatprep.subr.mxu0 0.0
        %3567 = vmatpush1.msra.mxu0 0.0
        %3568 = vmatprep.subr.mxu0 0.0
        %3569 = vmatpush1.msra.mxu0 0.0
        %3570 = vmatprep.subr.mxu0 0.0
        %3571 = vmatpush1.msra.mxu0 0.0
        %3572 = vmatprep.mubr.f32.mxu0 0.0
        %3573 = vmatmul.mubr.f32.gmra.mrb[0].mxu0 %v3422
        %v3574 = vpop.f32.mrb[0].mxu0
        %v3575 = vadd.f32 %v613, %v3574
        %v3576 = vpop.f32.mrb[0].mxu0
        %3577 = vmatprep.mubr.f32.mxu0 0.0
        %3578 = vmatmul.mubr.f32.gmra.mrb[0].mxu0 %v3423
        %v3579 = vpop.f32.mrb[0].mxu0
        %v3580 = vadd.f32 %v613, %v3579
        %v3581 = vpop.f32.mrb[0].mxu0
        %3582 = vdwg.mxu0
        %v3583 = vadd.f32 %v3425, %v3498
        %v3584 = vadd.f32 %v3428, %v3504
        %v3585 = vxor.u32 %v3583, 2147483648
        %v3586 = vxor.u32 %v3584, 2147483648
        %v3587 = vmul.f32 %v3585, 1.442695
        %v3588 = vpow.pop %v3587
        %v3589 = vmul.f32 %v3586, 1.442695
        %v3590 = vpow.pop %v3589
        %v3591 = vadd.f32 %v3588, 1.0
        %v3592 = vadd.f32 %v3590, 1.0
        %v3593 = vrcp.pop %v3591
        %v3594 = vmul.f32 1.0, %v3593
        %v3595 = vrcp.pop %v3592
        %v3596 = vmul.f32 1.0, %v3595
        %v3597 = vadd.f32 %v3426, %v3500
        %v3598 = vadd.f32 %v3429, %v3506
        %v3599 = vxor.u32 %v3597, 2147483648
        %v3600 = vxor.u32 %v3598, 2147483648
        %v3601 = vmul.f32 %v3599, 1.442695
        %v3602 = vpow.pop %v3601
        %v3603 = vmul.f32 %v3600, 1.442695
        %v3604 = vpow.pop %v3603
        %v3605 = vadd.f32 %v3602, 1.0
        %v3606 = vadd.f32 %v3604, 1.0
        %v3607 = vrcp.pop %v3605
        %v3608 = vmul.f32 1.0, %v3607
        %v3609 = vrcp.pop %v3606
        %v3610 = vmul.f32 1.0, %v3609
        %v3611 = vmul.f32 %v3594, %v3575
        %v3612 = vmul.f32 %v3596, %v3580
        %v3613 = vadd.f32 %v3427, %v3611
        %v3614 = vadd.f32 %v3430, %v3612
        %v3615 = vtanh.pop %v3613
        %v3616 = vtanh.pop %v3614
        %v3617 = vsub.f32 1.0, %v3608
        %v3618 = vsub.f32 1.0, %v3610
        %v3619 = vmul.f32 %v3617, %v3615
        %v3620 = vmul.f32 %v3618, %v3616
        %v3621 = vmul.f32 %v3608, %v3422
        %v3622 = vmul.f32 %v3610, %v3423
        %v3623 = vadd.f32 %v3619, %v3621
        %v3624 = vadd.f32 %v3620, %v3622
        %s3625 = scalar_lea.vmem %s495, 720 [#allocation3]
        %v3626 = vld [vmem:[%s3625] sm:$0xff]
        %v3627 = vld [vmem:[%s3625 + $0x8] sm:$0xff]
        %v3628 = vld [vmem:[%s3625 + $0x10] sm:$0xff]
        %v3629 = vld [vmem:[%s3625 + $0x18] sm:$0xff]
        %v3630 = vld [vmem:[%s3625 + $0x20] sm:$0xff]
        %v3631 = vld [vmem:[%s3625 + $0x28] sm:$0xff]
        %3632 = vmatprep.subr.mxu0 %v547
        %3633 = vmatpush1.msra.mxu0 %v546
        %3634 = vmatprep.subr.mxu0 %v550
        %3635 = vmatpush1.msra.mxu0 %v549
        %3636 = vmatprep.subr.mxu0 %v553
        %3637 = vmatpush1.msra.mxu0 %v552
        %3638 = vmatprep.subr.mxu0 %v556
        %3639 = vmatpush1.msra.mxu0 %v555
        %3640 = vmatprep.subr.mxu0 %v559
        %3641 = vmatpush1.msra.mxu0 %v558
        %3642 = vmatprep.subr.mxu0 %v562
        %3643 = vmatpush1.msra.mxu0 %v561
        %3644 = vmatprep.subr.mxu0 %v565
        %3645 = vmatpush1.msra.mxu0 %v564
        %3646 = vmatprep.subr.mxu0 %v568
        %3647 = vmatpush1.msra.mxu0 %v567
        %3648 = vmatprep.subr.mxu0 %v571
        %3649 = vmatpush1.msra.mxu0 %v570
        %3650 = vmatprep.subr.mxu0 %v574
        %3651 = vmatpush1.msra.mxu0 %v573
        %3652 = vmatprep.subr.mxu0 %v577
        %3653 = vmatpush1.msra.mxu0 %v576
        %3654 = vmatprep.subr.mxu0 %v580
        %3655 = vmatpush1.msra.mxu0 %v579
        %3656 = vmatprep.subr.mxu0 %v583
        %3657 = vmatpush1.msra.mxu0 %v582
        %3658 = vmatprep.subr.mxu0 %v586
        %3659 = vmatpush1.msra.mxu0 %v585
        %3660 = vmatprep.subr.mxu0 %v589
        %3661 = vmatpush1.msra.mxu0 %v588
        %3662 = vmatprep.subr.mxu0 %v592
        %3663 = vmatpush1.msra.mxu0 %v591
        %3664 = vmatprep.subr.mxu0 0.0
        %3665 = vmatpush1.msra.mxu0 0.0
        %3666 = vmatprep.subr.mxu0 0.0
        %3667 = vmatpush1.msra.mxu0 0.0
        %3668 = vmatprep.subr.mxu0 0.0
        %3669 = vmatpush1.msra.mxu0 0.0
        %3670 = vmatprep.subr.mxu0 0.0
        %3671 = vmatpush1.msra.mxu0 0.0
        %3672 = vmatprep.subr.mxu0 0.0
        %3673 = vmatpush1.msra.mxu0 0.0
        %3674 = vmatprep.subr.mxu0 0.0
        %3675 = vmatpush1.msra.mxu0 0.0
        %3676 = vmatprep.subr.mxu0 0.0
        %3677 = vmatpush1.msra.mxu0 0.0
        %3678 = vmatprep.subr.mxu0 0.0
        %3679 = vmatpush1.msra.mxu0 0.0
        %3680 = vmatprep.subr.mxu0 0.0
        %3681 = vmatpush1.msra.mxu0 0.0
        %3682 = vmatprep.subr.mxu0 0.0
        %3683 = vmatpush1.msra.mxu0 0.0
        %3684 = vmatprep.subr.mxu0 0.0
        %3685 = vmatpush1.msra.mxu0 0.0
        %3686 = vmatprep.subr.mxu0 0.0
        %3687 = vmatpush1.msra.mxu0 0.0
        %3688 = vmatprep.subr.mxu0 0.0
        %3689 = vmatpush1.msra.mxu0 0.0
        %3690 = vmatprep.subr.mxu0 0.0
        %3691 = vmatpush1.msra.mxu0 0.0
        %3692 = vmatprep.subr.mxu0 0.0
        %3693 = vmatpush1.msra.mxu0 0.0
        %3694 = vmatprep.subr.mxu0 0.0
        %3695 = vmatpush1.msra.mxu0 0.0
        %3696 = vmatprep.mubr.f32.mxu0 0.0
        %3697 = vmatmul.mubr.f32.gmra.mrb[0].mxu0 %v3623
        %v3698 = vpop.f32.mrb[0].mxu0
        %v3699 = vadd.f32 %v605, %v3698
        %v3700 = vpop.f32.mrb[0].mxu0
        %v3701 = vadd.f32 %v609, %v3700
        %3702 = vmatprep.mubr.f32.mxu0 0.0
        %3703 = vmatmul.mubr.f32.gmra.mrb[0].mxu0 %v3624
        %v3704 = vpop.f32.mrb[0].mxu0
        %v3705 = vadd.f32 %v605, %v3704
        %v3706 = vpop.f32.mrb[0].mxu0
        %v3707 = vadd.f32 %v609, %v3706
        %3708 = vdwg.mxu0
        %3709 = vmatprep.subr.mxu0 0.0
        %3710 = vmatpush1.msra.mxu0 %v548
        %3711 = vmatprep.subr.mxu0 0.0
        %3712 = vmatpush1.msra.mxu0 %v551
        %3713 = vmatprep.subr.mxu0 0.0
        %3714 = vmatpush1.msra.mxu0 %v554
        %3715 = vmatprep.subr.mxu0 0.0
        %3716 = vmatpush1.msra.mxu0 %v557
        %3717 = vmatprep.subr.mxu0 0.0
        %3718 = vmatpush1.msra.mxu0 %v560
        %3719 = vmatprep.subr.mxu0 0.0
        %3720 = vmatpush1.msra.mxu0 %v563
        %3721 = vmatprep.subr.mxu0 0.0
        %3722 = vmatpush1.msra.mxu0 %v566
        %3723 = vmatprep.subr.mxu0 0.0
        %3724 = vmatpush1.msra.mxu0 %v569
        %3725 = vmatprep.subr.mxu0 0.0
        %3726 = vmatpush1.msra.mxu0 %v572
        %3727 = vmatprep.subr.mxu0 0.0
        %3728 = vmatpush1.msra.mxu0 %v575
        %3729 = vmatprep.subr.mxu0 0.0
        %3730 = vmatpush1.msra.mxu0 %v578
        %3731 = vmatprep.subr.mxu0 0.0
        %3732 = vmatpush1.msra.mxu0 %v581
        %3733 = vmatprep.subr.mxu0 0.0
        %3734 = vmatpush1.msra.mxu0 %v584
        %3735 = vmatprep.subr.mxu0 0.0
        %3736 = vmatpush1.msra.mxu0 %v587
        %3737 = vmatprep.subr.mxu0 0.0
        %3738 = vmatpush1.msra.mxu0 %v590
        %3739 = vmatprep.subr.mxu0 0.0
        %3740 = vmatpush1.msra.mxu0 %v593
        %3741 = vmatprep.subr.mxu0 0.0
        %3742 = vmatpush1.msra.mxu0 0.0
        %3743 = vmatprep.subr.mxu0 0.0
        %3744 = vmatpush1.msra.mxu0 0.0
        %3745 = vmatprep.subr.mxu0 0.0
        %3746 = vmatpush1.msra.mxu0 0.0
        %3747 = vmatprep.subr.mxu0 0.0
        %3748 = vmatpush1.msra.mxu0 0.0
        %3749 = vmatprep.subr.mxu0 0.0
        %3750 = vmatpush1.msra.mxu0 0.0
        %3751 = vmatprep.subr.mxu0 0.0
        %3752 = vmatpush1.msra.mxu0 0.0
        %3753 = vmatprep.subr.mxu0 0.0
        %3754 = vmatpush1.msra.mxu0 0.0
        %3755 = vmatprep.subr.mxu0 0.0
        %3756 = vmatpush1.msra.mxu0 0.0
        %3757 = vmatprep.subr.mxu0 0.0
        %3758 = vmatpush1.msra.mxu0 0.0
        %3759 = vmatprep.subr.mxu0 0.0
        %3760 = vmatpush1.msra.mxu0 0.0
        %3761 = vmatprep.subr.mxu0 0.0
        %3762 = vmatpush1.msra.mxu0 0.0
        %3763 = vmatprep.subr.mxu0 0.0
        %3764 = vmatpush1.msra.mxu0 0.0
        %3765 = vmatprep.subr.mxu0 0.0
        %3766 = vmatpush1.msra.mxu0 0.0
        %3767 = vmatprep.subr.mxu0 0.0
        %3768 = vmatpush1.msra.mxu0 0.0
        %3769 = vmatprep.subr.mxu0 0.0
        %3770 = vmatpush1.msra.mxu0 0.0
        %3771 = vmatprep.subr.mxu0 0.0
        %3772 = vmatpush1.msra.mxu0 0.0
        %3773 = vmatprep.mubr.f32.mxu0 0.0
        %3774 = vmatmul.mubr.f32.gmra.mrb[0].mxu0 %v3623
        %v3775 = vpop.f32.mrb[0].mxu0
        %v3776 = vadd.f32 %v613, %v3775
        %v3777 = vpop.f32.mrb[0].mxu0
        %3778 = vmatprep.mubr.f32.mxu0 0.0
        %3779 = vmatmul.mubr.f32.gmra.mrb[0].mxu0 %v3624
        %v3780 = vpop.f32.mrb[0].mxu0
        %v3781 = vadd.f32 %v613, %v3780
        %v3782 = vpop.f32.mrb[0].mxu0
        %3783 = vdwg.mxu0
        %v3784 = vadd.f32 %v3626, %v3699
        %v3785 = vadd.f32 %v3629, %v3705
        %v3786 = vxor.u32 %v3784, 2147483648
        %v3787 = vxor.u32 %v3785, 2147483648
        %v3788 = vmul.f32 %v3786, 1.442695
        %v3789 = vpow.pop %v3788
        %v3790 = vmul.f32 %v3787, 1.442695
        %v3791 = vpow.pop %v3790
        %v3792 = vadd.f32 %v3789, 1.0
        %v3793 = vadd.f32 %v3791, 1.0
        %v3794 = vrcp.pop %v3792
        %v3795 = vmul.f32 1.0, %v3794
        %v3796 = vrcp.pop %v3793
        %v3797 = vmul.f32 1.0, %v3796
        %v3798 = vadd.f32 %v3627, %v3701
        %v3799 = vadd.f32 %v3630, %v3707
        %v3800 = vxor.u32 %v3798, 2147483648
        %v3801 = vxor.u32 %v3799, 2147483648
        %v3802 = vmul.f32 %v3800, 1.442695
        %v3803 = vpow.pop %v3802
        %v3804 = vmul.f32 %v3801, 1.442695
        %v3805 = vpow.pop %v3804
        %v3806 = vadd.f32 %v3803, 1.0
        %v3807 = vadd.f32 %v3805, 1.0
        %v3808 = vrcp.pop %v3806
        %v3809 = vmul.f32 1.0, %v3808
        %v3810 = vrcp.pop %v3807
        %v3811 = vmul.f32 1.0, %v3810
        %v3812 = vmul.f32 %v3795, %v3776
        %v3813 = vmul.f32 %v3797, %v3781
        %v3814 = vadd.f32 %v3628, %v3812
        %v3815 = vadd.f32 %v3631, %v3813
        %v3816 = vtanh.pop %v3814
        %v3817 = vtanh.pop %v3815
        %v3818 = vsub.f32 1.0, %v3809
        %v3819 = vsub.f32 1.0, %v3811
        %v3820 = vmul.f32 %v3818, %v3816
        %v3821 = vmul.f32 %v3819, %v3817
        %v3822 = vmul.f32 %v3809, %v3623
        %v3823 = vmul.f32 %v3811, %v3624
        %v3824 = vadd.f32 %v3820, %v3822
        %v3825 = vadd.f32 %v3821, %v3823
        %v3826 = vld [vmem:[%s4] sm:$0xff]
        %v3827 = vld [vmem:[%s4 + $0x8] sm:$0xff]
        %v3828 = vld [vmem:[%s4 + $0x10] sm:$0xff]
        %v3829 = vld [vmem:[%s4 + $0x18] sm:$0xff]
        %v3830 = vld [vmem:[%s4 + $0x20] sm:$0xff]
        %v3831 = vld [vmem:[%s4 + $0x28] sm:$0xff]
        %v3832 = vld [vmem:[%s4 + $0x30] sm:$0xff]
        %v3833 = vld [vmem:[%s4 + $0x38] sm:$0xff]
        %v3834 = vld [vmem:[%s4 + $0x40] sm:$0xff]
        %v3835 = vld [vmem:[%s4 + $0x48] sm:$0xff]
        %v3836 = vld [vmem:[%s4 + $0x50] sm:$0xff]
        %v3837 = vld [vmem:[%s4 + $0x58] sm:$0xff]
        %v3838 = vld [vmem:[%s4 + $0x60] sm:$0xff]
        %v3839 = vld [vmem:[%s4 + $0x68] sm:$0xff]
        %v3840 = vld [vmem:[%s4 + $0x70] sm:$0xff]
        %v3841 = vld [vmem:[%s4 + $0x78] sm:$0xff]
        %v3842 = vld [vmem:[%s4 + $0x80] sm:$0xff]
        %v3843 = vld [vmem:[%s4 + $0x88] sm:$0xff]
        %v3844 = vld [vmem:[%s4 + $0x90] sm:$0xff]
        %v3845 = vld [vmem:[%s4 + $0x98] sm:$0xff]
        %v3846 = vld [vmem:[%s4 + $0xa0] sm:$0xff]
        %v3847 = vld [vmem:[%s4 + $0xa8] sm:$0xff]
        %v3848 = vld [vmem:[%s4 + $0xb0] sm:$0xff]
        %v3849 = vld [vmem:[%s4 + $0xb8] sm:$0xff]
        %v3850 = vld [vmem:[%s4 + $0xc0] sm:$0xff]
        %v3851 = vld [vmem:[%s4 + $0xc8] sm:$0xff]
        %v3852 = vld [vmem:[%s4 + $0xd0] sm:$0xff]
        %v3853 = vld [vmem:[%s4 + $0xd8] sm:$0xff]
        %v3854 = vld [vmem:[%s4 + $0xe0] sm:$0xff]
        %v3855 = vld [vmem:[%s4 + $0xe8] sm:$0xff]
        %v3856 = vld [vmem:[%s4 + $0xf0] sm:$0xff]
        %v3857 = vld [vmem:[%s4 + $0xf8] sm:$0xff]
        %v3858 = vld [vmem:[%s4 + $0x100] sm:$0xff]
        %v3859 = vld [vmem:[%s4 + $0x108] sm:$0xff]
        %v3860 = vld [vmem:[%s4 + $0x110] sm:$0xff]
        %v3861 = vld [vmem:[%s4 + $0x118] sm:$0xff]
        %v3862 = vld [vmem:[%s4 + $0x120] sm:$0xff]
        %v3863 = vld [vmem:[%s4 + $0x128] sm:$0xff]
        %v3864 = vld [vmem:[%s4 + $0x130] sm:$0xff]
        %v3865 = vld [vmem:[%s4 + $0x138] sm:$0xff]
        %v3866 = vld [vmem:[%s4 + $0x140] sm:$0xff]
        %v3867 = vld [vmem:[%s4 + $0x148] sm:$0xff]
        %v3868 = vld [vmem:[%s4 + $0x150] sm:$0xff]
        %v3869 = vld [vmem:[%s4 + $0x158] sm:$0xff]
        %v3870 = vld [vmem:[%s4 + $0x160] sm:$0xff]
        %v3871 = vld [vmem:[%s4 + $0x168] sm:$0xff]
        %v3872 = vld [vmem:[%s4 + $0x170] sm:$0xff]
        %v3873 = vld [vmem:[%s4 + $0x178] sm:$0xff]
        %v3874 = vld [vmem:[%s4 + $0x180] sm:$0xff]
        %v3875 = vld [vmem:[%s4 + $0x188] sm:$0xff]
        %v3876 = vld [vmem:[%s4 + $0x190] sm:$0xff]
        %v3877 = vld [vmem:[%s4 + $0x198] sm:$0xff]
        %v3878 = vld [vmem:[%s4 + $0x1a0] sm:$0xff]
        %v3879 = vld [vmem:[%s4 + $0x1a8] sm:$0xff]
        %v3880 = vld [vmem:[%s4 + $0x1b0] sm:$0xff]
        %v3881 = vld [vmem:[%s4 + $0x1b8] sm:$0xff]
        %v3882 = vld [vmem:[%s4 + $0x1c0] sm:$0xff]
        %v3883 = vld [vmem:[%s4 + $0x1c8] sm:$0xff]
        %v3884 = vld [vmem:[%s4 + $0x1d0] sm:$0xff]
        %v3885 = vld [vmem:[%s4 + $0x1d8] sm:$0xff]
        %v3886 = vld [vmem:[%s4 + $0x1e0] sm:$0xff]
        %v3887 = vld [vmem:[%s4 + $0x1e8] sm:$0xff]
        %v3888 = vld [vmem:[%s4 + $0x1f0] sm:$0xff]
        %v3889 = vld [vmem:[%s4 + $0x1f8] sm:$0xff]
        %3890 = vmatprep.subr.mxu0 %v3827
        %3891 = vmatpush1.msra.mxu0 %v3826
        %3892 = vmatprep.subr.mxu0 %v3831
        %3893 = vmatpush1.msra.mxu0 %v3830
        %3894 = vmatprep.subr.mxu0 %v3835
        %3895 = vmatpush1.msra.mxu0 %v3834
        %3896 = vmatprep.subr.mxu0 %v3839
        %3897 = vmatpush1.msra.mxu0 %v3838
        %3898 = vmatprep.subr.mxu0 %v3843
        %3899 = vmatpush1.msra.mxu0 %v3842
        %3900 = vmatprep.subr.mxu0 %v3847
        %3901 = vmatpush1.msra.mxu0 %v3846
        %3902 = vmatprep.subr.mxu0 %v3851
        %3903 = vmatpush1.msra.mxu0 %v3850
        %3904 = vmatprep.subr.mxu0 %v3855
        %3905 = vmatpush1.msra.mxu0 %v3854
        %3906 = vmatprep.subr.mxu0 %v3859
        %3907 = vmatpush1.msra.mxu0 %v3858
        %3908 = vmatprep.subr.mxu0 %v3863
        %3909 = vmatpush1.msra.mxu0 %v3862
        %3910 = vmatprep.subr.mxu0 %v3867
        %3911 = vmatpush1.msra.mxu0 %v3866
        %3912 = vmatprep.subr.mxu0 %v3871
        %3913 = vmatpush1.msra.mxu0 %v3870
        %3914 = vmatprep.subr.mxu0 %v3875
        %3915 = vmatpush1.msra.mxu0 %v3874
        %3916 = vmatprep.subr.mxu0 %v3879
        %3917 = vmatpush1.msra.mxu0 %v3878
        %3918 = vmatprep.subr.mxu0 %v3883
        %3919 = vmatpush1.msra.mxu0 %v3882
        %3920 = vmatprep.subr.mxu0 %v3887
        %3921 = vmatpush1.msra.mxu0 %v3886
        %3922 = vmatprep.subr.mxu0 0.0
        %3923 = vmatpush1.msra.mxu0 0.0
        %3924 = vmatprep.subr.mxu0 0.0
        %3925 = vmatpush1.msra.mxu0 0.0
        %3926 = vmatprep.subr.mxu0 0.0
        %3927 = vmatpush1.msra.mxu0 0.0
        %3928 = vmatprep.subr.mxu0 0.0
        %3929 = vmatpush1.msra.mxu0 0.0
        %3930 = vmatprep.subr.mxu0 0.0
        %3931 = vmatpush1.msra.mxu0 0.0
        %3932 = vmatprep.subr.mxu0 0.0
        %3933 = vmatpush1.msra.mxu0 0.0
        %3934 = vmatprep.subr.mxu0 0.0
        %3935 = vmatpush1.msra.mxu0 0.0
        %3936 = vmatprep.subr.mxu0 0.0
        %3937 = vmatpush1.msra.mxu0 0.0
        %3938 = vmatprep.subr.mxu0 0.0
        %3939 = vmatpush1.msra.mxu0 0.0
        %3940 = vmatprep.subr.mxu0 0.0
        %3941 = vmatpush1.msra.mxu0 0.0
        %3942 = vmatprep.subr.mxu0 0.0
        %3943 = vmatpush1.msra.mxu0 0.0
        %3944 = vmatprep.subr.mxu0 0.0
        %3945 = vmatpush1.msra.mxu0 0.0
        %3946 = vmatprep.subr.mxu0 0.0
        %3947 = vmatpush1.msra.mxu0 0.0
        %3948 = vmatprep.subr.mxu0 0.0
        %3949 = vmatpush1.msra.mxu0 0.0
        %3950 = vmatprep.subr.mxu0 0.0
        %3951 = vmatpush1.msra.mxu0 0.0
        %3952 = vmatprep.subr.mxu0 0.0
        %3953 = vmatpush1.msra.mxu0 0.0
        %3954 = vmatprep.mubr.f32.mxu0 0.0
        %3955 = vmatmul.mubr.f32.gmra.mrb[0].mxu0 %v3824
        %v3956 = vpop.f32.mrb[0].mxu0
        %v3957 = vadd.f32 0.0, %v3956
        %v3958 = vpop.f32.mrb[0].mxu0
        %v3959 = vadd.f32 0.0, %v3958
        %3960 = vmatprep.mubr.f32.mxu0 0.0
        %3961 = vmatmul.mubr.f32.gmra.mrb[0].mxu0 %v3825
        %v3962 = vpop.f32.mrb[0].mxu0
        %v3963 = vadd.f32 0.0, %v3962
        %v3964 = vpop.f32.mrb[0].mxu0
        %v3965 = vadd.f32 0.0, %v3964
        %3966 = vdwg.mxu0
        %3967 = vmatprep.subr.mxu0 %v3829
        %3968 = vmatpush1.msra.mxu0 %v3828
        %3969 = vmatprep.subr.mxu0 %v3833
        %3970 = vmatpush1.msra.mxu0 %v3832
        %3971 = vmatprep.subr.mxu0 %v3837
        %3972 = vmatpush1.msra.mxu0 %v3836
        %3973 = vmatprep.subr.mxu0 %v3841
        %3974 = vmatpush1.msra.mxu0 %v3840
        %3975 = vmatprep.subr.mxu0 %v3845
        %3976 = vmatpush1.msra.mxu0 %v3844
        %3977 = vmatprep.subr.mxu0 %v3849
        %3978 = vmatpush1.msra.mxu0 %v3848
        %3979 = vmatprep.subr.mxu0 %v3853
        %3980 = vmatpush1.msra.mxu0 %v3852
        %3981 = vmatprep.subr.mxu0 %v3857
        %3982 = vmatpush1.msra.mxu0 %v3856
        %3983 = vmatprep.subr.mxu0 %v3861
        %3984 = vmatpush1.msra.mxu0 %v3860
        %3985 = vmatprep.subr.mxu0 %v3865
        %3986 = vmatpush1.msra.mxu0 %v3864
        %3987 = vmatprep.subr.mxu0 %v3869
        %3988 = vmatpush1.msra.mxu0 %v3868
        %3989 = vmatprep.subr.mxu0 %v3873
        %3990 = vmatpush1.msra.mxu0 %v3872
        %3991 = vmatprep.subr.mxu0 %v3877
        %3992 = vmatpush1.msra.mxu0 %v3876
        %3993 = vmatprep.subr.mxu0 %v3881
        %3994 = vmatpush1.msra.mxu0 %v3880
        %3995 = vmatprep.subr.mxu0 %v3885
        %3996 = vmatpush1.msra.mxu0 %v3884
        %3997 = vmatprep.subr.mxu0 %v3889
        %3998 = vmatpush1.msra.mxu0 %v3888
        %3999 = vmatprep.subr.mxu0 0.0
        %4000 = vmatpush1.msra.mxu0 0.0
        %4001 = vmatprep.subr.mxu0 0.0
        %4002 = vmatpush1.msra.mxu0 0.0
        %4003 = vmatprep.subr.mxu0 0.0
        %4004 = vmatpush1.msra.mxu0 0.0
        %4005 = vmatprep.subr.mxu0 0.0
        %4006 = vmatpush1.msra.mxu0 0.0
        %4007 = vmatprep.subr.mxu0 0.0
        %4008 = vmatpush1.msra.mxu0 0.0
        %4009 = vmatprep.subr.mxu0 0.0
        %4010 = vmatpush1.msra.mxu0 0.0
        %4011 = vmatprep.subr.mxu0 0.0
        %4012 = vmatpush1.msra.mxu0 0.0
        %4013 = vmatprep.subr.mxu0 0.0
        %4014 = vmatpush1.msra.mxu0 0.0
        %4015 = vmatprep.subr.mxu0 0.0
        %4016 = vmatpush1.msra.mxu0 0.0
        %4017 = vmatprep.subr.mxu0 0.0
        %4018 = vmatpush1.msra.mxu0 0.0
        %4019 = vmatprep.subr.mxu0 0.0
        %4020 = vmatpush1.msra.mxu0 0.0
        %4021 = vmatprep.subr.mxu0 0.0
        %4022 = vmatpush1.msra.mxu0 0.0
        %4023 = vmatprep.subr.mxu0 0.0
        %4024 = vmatpush1.msra.mxu0 0.0
        %4025 = vmatprep.subr.mxu0 0.0
        %4026 = vmatpush1.msra.mxu0 0.0
        %4027 = vmatprep.subr.mxu0 0.0
        %4028 = vmatpush1.msra.mxu0 0.0
        %4029 = vmatprep.subr.mxu0 0.0
        %4030 = vmatpush1.msra.mxu0 0.0
        %4031 = vmatprep.mubr.f32.mxu0 0.0
        %4032 = vmatmul.mubr.f32.gmra.mrb[0].mxu0 %v3824
        %v4033 = vpop.f32.mrb[0].mxu0
        %v4034 = vadd.f32 0.0, %v4033
        %v4035 = vpop.f32.mrb[0].mxu0
        %v4036 = vadd.f32 0.0, %v4035
        %4037 = vmatprep.mubr.f32.mxu0 0.0
        %4038 = vmatmul.mubr.f32.gmra.mrb[0].mxu0 %v3825
        %v4039 = vpop.f32.mrb[0].mxu0
        %v4040 = vadd.f32 0.0, %v4039
        %v4041 = vpop.f32.mrb[0].mxu0
        %v4042 = vadd.f32 0.0, %v4041
        %4043 = vdwg.mxu0
        %v4044 = vld [vmem:[%s538] sm:$0xff]
        %v4045 = vld [vmem:[%s538 + $0x8] sm:$0xff]
        %v4046 = vld [vmem:[%s538 + $0x10] sm:$0xff]
        %v4047 = vld [vmem:[%s538 + $0x18] sm:$0xff]
        %v4048 = vld [vmem:[%s538 + $0x20] sm:$0xff]
        %v4049 = vld [vmem:[%s538 + $0x28] sm:$0xff]
        %v4050 = vld [vmem:[%s538 + $0x30] sm:$0xff]
        %v4051 = vld [vmem:[%s538 + $0x38] sm:$0xff]
        %v4052 = vadd.f32 %v3957, %v4044
        %v4053 = vadd.f32 %v3959, %v4045
        %v4054 = vadd.f32 %v4034, %v4046
        %v4055 = vadd.f32 %v4036, %v4047
        %v4056 = vadd.f32 %v3963, %v4048
        %v4057 = vadd.f32 %v3965, %v4049
        %v4058 = vadd.f32 %v4040, %v4050
        %v4059 = vadd.f32 %v4042, %v4051
        %v4060 = vld [vmem:[%s5] sm:$0xff]
        %v4061 = vld [vmem:[%s5 + $0x8] sm:$0xff]
        %v4062 = vld [vmem:[%s5 + $0x10] sm:$0xff]
        %v4063 = vld [vmem:[%s5 + $0x18] sm:$0xff]
        %v4064 = vld [vmem:[%s5 + $0x20] sm:$0xff]
        %v4065 = vld [vmem:[%s5 + $0x28] sm:$0xff]
        %v4066 = vld [vmem:[%s5 + $0x30] sm:$0xff]
        %v4067 = vld [vmem:[%s5 + $0x38] sm:$0xff]
        %v4068 = vld [vmem:[%s5 + $0x40] sm:$0xff]
        %v4069 = vld [vmem:[%s5 + $0x48] sm:$0xff]
        %v4070 = vld [vmem:[%s5 + $0x50] sm:$0xff]
        %v4071 = vld [vmem:[%s5 + $0x58] sm:$0xff]
        %v4072 = vld [vmem:[%s5 + $0x60] sm:$0xff]
        %v4073 = vld [vmem:[%s5 + $0x68] sm:$0xff]
        %v4074 = vld [vmem:[%s5 + $0x70] sm:$0xff]
        %v4075 = vld [vmem:[%s5 + $0x78] sm:$0xff]
        %v4076 = vld [vmem:[%s5 + $0x80] sm:$0xff]
        %v4077 = vld [vmem:[%s5 + $0x88] sm:$0xff]
        %v4078 = vld [vmem:[%s5 + $0x90] sm:$0xff]
        %v4079 = vld [vmem:[%s5 + $0x98] sm:$0xff]
        %v4080 = vld [vmem:[%s5 + $0xa0] sm:$0xff]
        %v4081 = vld [vmem:[%s5 + $0xa8] sm:$0xff]
        %v4082 = vld [vmem:[%s5 + $0xb0] sm:$0xff]
        %v4083 = vld [vmem:[%s5 + $0xb8] sm:$0xff]
        %v4084 = vld [vmem:[%s5 + $0xc0] sm:$0xff]
        %v4085 = vld [vmem:[%s5 + $0xc8] sm:$0xff]
        %v4086 = vld [vmem:[%s5 + $0xd0] sm:$0xff]
        %v4087 = vld [vmem:[%s5 + $0xd8] sm:$0xff]
        %v4088 = vld [vmem:[%s5 + $0xe0] sm:$0xff]
        %v4089 = vld [vmem:[%s5 + $0xe8] sm:$0xff]
        %v4090 = vld [vmem:[%s5 + $0xf0] sm:$0xff]
        %v4091 = vld [vmem:[%s5 + $0xf8] sm:$0xff]
        %v4092 = vld [vmem:[%s5 + $0x100] sm:$0xff]
        %v4093 = vld [vmem:[%s5 + $0x108] sm:$0xff]
        %v4094 = vld [vmem:[%s5 + $0x110] sm:$0xff]
        %v4095 = vld [vmem:[%s5 + $0x118] sm:$0xff]
        %v4096 = vld [vmem:[%s5 + $0x120] sm:$0xff]
        %v4097 = vld [vmem:[%s5 + $0x128] sm:$0xff]
        %v4098 = vld [vmem:[%s5 + $0x130] sm:$0xff]
        %v4099 = vld [vmem:[%s5 + $0x138] sm:$0xff]
        %v4100 = vld [vmem:[%s5 + $0x140] sm:$0xff]
        %v4101 = vld [vmem:[%s5 + $0x148] sm:$0xff]
        %v4102 = vld [vmem:[%s5 + $0x150] sm:$0xff]
        %v4103 = vld [vmem:[%s5 + $0x158] sm:$0xff]
        %v4104 = vld [vmem:[%s5 + $0x160] sm:$0xff]
        %v4105 = vld [vmem:[%s5 + $0x168] sm:$0xff]
        %v4106 = vld [vmem:[%s5 + $0x170] sm:$0xff]
        %v4107 = vld [vmem:[%s5 + $0x178] sm:$0xff]
        %v4108 = vld [vmem:[%s5 + $0x180] sm:$0xff]
        %v4109 = vld [vmem:[%s5 + $0x188] sm:$0xff]
        %v4110 = vld [vmem:[%s5 + $0x190] sm:$0xff]
        %v4111 = vld [vmem:[%s5 + $0x198] sm:$0xff]
        %v4112 = vld [vmem:[%s5 + $0x1a0] sm:$0xff]
        %v4113 = vld [vmem:[%s5 + $0x1a8] sm:$0xff]
        %v4114 = vld [vmem:[%s5 + $0x1b0] sm:$0xff]
        %v4115 = vld [vmem:[%s5 + $0x1b8] sm:$0xff]
        %v4116 = vld [vmem:[%s5 + $0x1c0] sm:$0xff]
        %v4117 = vld [vmem:[%s5 + $0x1c8] sm:$0xff]
        %v4118 = vld [vmem:[%s5 + $0x1d0] sm:$0xff]
        %v4119 = vld [vmem:[%s5 + $0x1d8] sm:$0xff]
        %v4120 = vld [vmem:[%s5 + $0x1e0] sm:$0xff]
        %v4121 = vld [vmem:[%s5 + $0x1e8] sm:$0xff]
        %v4122 = vld [vmem:[%s5 + $0x1f0] sm:$0xff]
        %v4123 = vld [vmem:[%s5 + $0x1f8] sm:$0xff]
        %v4124 = vld [vmem:[%s6] sm:$0x1]
        %v4125 = vld [vmem:[#allocation2] sm:$0x1]
        %4126 = vmatprep.subr.mxu0 %v4061
        %4127 = vmatpush1.msra.mxu0 %v4060
        %4128 = vmatprep.subr.mxu0 %v4065
        %4129 = vmatpush1.msra.mxu0 %v4064
        %4130 = vmatprep.subr.mxu0 %v4069
        %4131 = vmatpush1.msra.mxu0 %v4068
        %4132 = vmatprep.subr.mxu0 %v4073
        %4133 = vmatpush1.msra.mxu0 %v4072
        %4134 = vmatprep.subr.mxu0 %v4077
        %4135 = vmatpush1.msra.mxu0 %v4076
        %4136 = vmatprep.subr.mxu0 %v4081
        %4137 = vmatpush1.msra.mxu0 %v4080
        %4138 = vmatprep.subr.mxu0 %v4085
        %4139 = vmatpush1.msra.mxu0 %v4084
        %4140 = vmatprep.subr.mxu0 %v4089
        %4141 = vmatpush1.msra.mxu0 %v4088
        %4142 = vmatprep.subr.mxu0 %v4093
        %4143 = vmatpush1.msra.mxu0 %v4092
        %4144 = vmatprep.subr.mxu0 %v4097
        %4145 = vmatpush1.msra.mxu0 %v4096
        %4146 = vmatprep.subr.mxu0 %v4101
        %4147 = vmatpush1.msra.mxu0 %v4100
        %4148 = vmatprep.subr.mxu0 %v4105
        %4149 = vmatpush1.msra.mxu0 %v4104
        %4150 = vmatprep.subr.mxu0 %v4109
        %4151 = vmatpush1.msra.mxu0 %v4108
        %4152 = vmatprep.subr.mxu0 %v4113
        %4153 = vmatpush1.msra.mxu0 %v4112
        %4154 = vmatprep.subr.mxu0 %v4117
        %4155 = vmatpush1.msra.mxu0 %v4116
        %4156 = vmatprep.subr.mxu0 %v4121
        %4157 = vmatpush1.msra.mxu0 %v4120
        %4158 = vmatprep.subr.mxu0 0.0
        %4159 = vmatpush1.msra.mxu0 0.0
        %4160 = vmatprep.subr.mxu0 0.0
        %4161 = vmatpush1.msra.mxu0 0.0
        %4162 = vmatprep.subr.mxu0 0.0
        %4163 = vmatpush1.msra.mxu0 0.0
        %4164 = vmatprep.subr.mxu0 0.0
        %4165 = vmatpush1.msra.mxu0 0.0
        %4166 = vmatprep.subr.mxu0 0.0
        %4167 = vmatpush1.msra.mxu0 0.0
        %4168 = vmatprep.subr.mxu0 0.0
        %4169 = vmatpush1.msra.mxu0 0.0
        %4170 = vmatprep.subr.mxu0 0.0
        %4171 = vmatpush1.msra.mxu0 0.0
        %4172 = vmatprep.subr.mxu0 0.0
        %4173 = vmatpush1.msra.mxu0 0.0
        %4174 = vmatprep.subr.mxu0 0.0
        %4175 = vmatpush1.msra.mxu0 0.0
        %4176 = vmatprep.subr.mxu0 0.0
        %4177 = vmatpush1.msra.mxu0 0.0
        %4178 = vmatprep.subr.mxu0 0.0
        %4179 = vmatpush1.msra.mxu0 0.0
        %4180 = vmatprep.subr.mxu0 0.0
        %4181 = vmatpush1.msra.mxu0 0.0
        %4182 = vmatprep.subr.mxu0 0.0
        %4183 = vmatpush1.msra.mxu0 0.0
        %4184 = vmatprep.subr.mxu0 0.0
        %4185 = vmatpush1.msra.mxu0 0.0
        %4186 = vmatprep.subr.mxu0 0.0
        %4187 = vmatpush1.msra.mxu0 0.0
        %4188 = vmatprep.subr.mxu0 0.0
        %4189 = vmatpush1.msra.mxu0 0.0
        %4190 = vmatprep.mubr.f32.mxu0 0.0
        %4191 = vmatmul.mubr.f32.gmra.mrb[0].mxu0 0.0
        %v4192 = vpop.f32.mrb[0].mxu0
        %v4193 = vadd.f32 0.0, %v4192
        %v4194 = vpop.f32.mrb[0].mxu0
        %v4195 = vadd.f32 0.0, %v4194
        %4196 = vdwg.mxu0
        %4197 = vmatprep.subr.mxu0 %v4063
        %4198 = vmatpush1.msra.mxu0 %v4062
        %4199 = vmatprep.subr.mxu0 %v4067
        %4200 = vmatpush1.msra.mxu0 %v4066
        %4201 = vmatprep.subr.mxu0 %v4071
        %4202 = vmatpush1.msra.mxu0 %v4070
        %4203 = vmatprep.subr.mxu0 %v4075
        %4204 = vmatpush1.msra.mxu0 %v4074
        %4205 = vmatprep.subr.mxu0 %v4079
        %4206 = vmatpush1.msra.mxu0 %v4078
        %4207 = vmatprep.subr.mxu0 %v4083
        %4208 = vmatpush1.msra.mxu0 %v4082
        %4209 = vmatprep.subr.mxu0 %v4087
        %4210 = vmatpush1.msra.mxu0 %v4086
        %4211 = vmatprep.subr.mxu0 %v4091
        %4212 = vmatpush1.msra.mxu0 %v4090
        %4213 = vmatprep.subr.mxu0 %v4095
        %4214 = vmatpush1.msra.mxu0 %v4094
        %4215 = vmatprep.subr.mxu0 %v4099
        %4216 = vmatpush1.msra.mxu0 %v4098
        %4217 = vmatprep.subr.mxu0 %v4103
        %4218 = vmatpush1.msra.mxu0 %v4102
        %4219 = vmatprep.subr.mxu0 %v4107
        %4220 = vmatpush1.msra.mxu0 %v4106
        %4221 = vmatprep.subr.mxu0 %v4111
        %4222 = vmatpush1.msra.mxu0 %v4110
        %4223 = vmatprep.subr.mxu0 %v4115
        %4224 = vmatpush1.msra.mxu0 %v4114
        %4225 = vmatprep.subr.mxu0 %v4119
        %4226 = vmatpush1.msra.mxu0 %v4118
        %4227 = vmatprep.subr.mxu0 %v4123
        %4228 = vmatpush1.msra.mxu0 %v4122
        %4229 = vmatprep.subr.mxu0 0.0
        %4230 = vmatpush1.msra.mxu0 0.0
        %4231 = vmatprep.subr.mxu0 0.0
        %4232 = vmatpush1.msra.mxu0 0.0
        %4233 = vmatprep.subr.mxu0 0.0
        %4234 = vmatpush1.msra.mxu0 0.0
        %4235 = vmatprep.subr.mxu0 0.0
        %4236 = vmatpush1.msra.mxu0 0.0
        %4237 = vmatprep.subr.mxu0 0.0
        %4238 = vmatpush1.msra.mxu0 0.0
        %4239 = vmatprep.subr.mxu0 0.0
        %4240 = vmatpush1.msra.mxu0 0.0
        %4241 = vmatprep.subr.mxu0 0.0
        %4242 = vmatpush1.msra.mxu0 0.0
        %4243 = vmatprep.subr.mxu0 0.0
        %4244 = vmatpush1.msra.mxu0 0.0
        %4245 = vmatprep.subr.mxu0 0.0
        %4246 = vmatpush1.msra.mxu0 0.0
        %4247 = vmatprep.subr.mxu0 0.0
        %4248 = vmatpush1.msra.mxu0 0.0
        %4249 = vmatprep.subr.mxu0 0.0
        %4250 = vmatpush1.msra.mxu0 0.0
        %4251 = vmatprep.subr.mxu0 0.0
        %4252 = vmatpush1.msra.mxu0 0.0
        %4253 = vmatprep.subr.mxu0 0.0
        %4254 = vmatpush1.msra.mxu0 0.0
        %4255 = vmatprep.subr.mxu0 0.0
        %4256 = vmatpush1.msra.mxu0 0.0
        %4257 = vmatprep.subr.mxu0 0.0
        %4258 = vmatpush1.msra.mxu0 0.0
        %4259 = vmatprep.subr.mxu0 0.0
        %4260 = vmatpush1.msra.mxu0 0.0
        %4261 = vmatprep.mubr.f32.mxu0 0.0
        %4262 = vmatmul.mubr.f32.gmra.mrb[0].mxu0 0.0
        %v4263 = vpop.f32.mrb[0].mxu0
        %v4264 = vadd.f32 0.0, %v4263
        %v4265 = vpop.f32.mrb[0].mxu0
        %v4266 = vadd.f32 0.0, %v4265
        %4267 = vdwg.mxu0
        %v4272 = vrot.slane %v4193, 1
        %v4273 = vrot.slane %v4195, 1
        %v4274 = vrot.slane %v4264, 1
        %v4275 = vrot.slane %v4266, 1
        %v4284 = vadd.f32 %v4052, %v4193
        %v4285 = vadd.f32 %v4053, %v4195
        %v4286 = vadd.f32 %v4054, %v4264
        %v4287 = vadd.f32 %v4055, %v4266
        %v4288 = vadd.f32 %v4056, %v4272
        %v4289 = vadd.f32 %v4057, %v4273
        %v4290 = vadd.f32 %v4058, %v4274
        %v4291 = vadd.f32 %v4059, %v4275
        %v4292 = vxor.u32 %v4284, 2147483648
        %v4293 = vxor.u32 %v4288, 2147483648
        %v4294 = vmul.f32 %v4292, 1.442695
        %v4295 = vpow.pop %v4294
        %v4296 = vmul.f32 %v4293, 1.442695
        %v4297 = vpow.pop %v4296
        %v4298 = vadd.f32 %v4295, 1.0
        %v4299 = vadd.f32 %v4297, 1.0
        %v4300 = vrcp.pop %v4298
        %v4301 = vmul.f32 1.0, %v4300
        %v4302 = vrcp.pop %v4299
        %v4303 = vmul.f32 1.0, %v4302
        %v4304 = vxor.u32 %v4285, 2147483648
        %v4305 = vxor.u32 %v4289, 2147483648
        %v4306 = vmul.f32 %v4304, 1.442695
        %v4307 = vpow.pop %v4306
        %v4308 = vmul.f32 %v4305, 1.442695
        %v4309 = vpow.pop %v4308
        %v4310 = vadd.f32 %v4307, 1.0
        %v4311 = vadd.f32 %v4309, 1.0
        %v4312 = vrcp.pop %v4310
        %v4313 = vmul.f32 1.0, %v4312
        %v4314 = vrcp.pop %v4311
        %v4315 = vmul.f32 1.0, %v4314
        %v4316 = vtanh.pop %v4286
        %v4317 = vtanh.pop %v4290
        %v4318 = vxor.u32 %v4287, 2147483648
        %v4319 = vxor.u32 %v4291, 2147483648
        %v4320 = vmul.f32 %v4318, 1.442695
        %v4321 = vpow.pop %v4320
        %v4322 = vmul.f32 %v4319, 1.442695
        %v4323 = vpow.pop %v4322
        %v4324 = vadd.f32 %v4321, 1.0
        %v4325 = vadd.f32 %v4323, 1.0
        %v4326 = vrcp.pop %v4324
        %v4327 = vmul.f32 1.0, %v4326
        %v4328 = vrcp.pop %v4325
        %v4329 = vmul.f32 1.0, %v4328
        %v4330 = vmul.f32 %v4313, 0.0
        %v4331 = vmul.f32 %v4315, 0.0
        %v4332 = vmul.f32 %v4301, %v4316
        %v4333 = vmul.f32 %v4303, %v4317
        %v4334 = vadd.f32 %v4330, %v4332
        %v4335 = vadd.f32 %v4331, %v4333
        %v4336 = vtanh.pop %v4334
        %v4337 = vtanh.pop %v4335
        %v4338 = vmul.f32 %v4327, %v4336
        %v4339 = vmul.f32 %v4329, %v4337
        %v4341 = vlaneseq
        %v4342 = vshrl.u32 %v4341, 7
        %v4343 = vsub.s32 0, %v4342
        %v4344 = vrot.slane %v4124, %v4343
        %v4346 = vmul.f32 %v4338, %v4344
        %v4347 = vmul.f32 %v4339, %v4344
        %v4350 = vrot.slane %v4347, 7
        %vm4351 = vcmask 1041409
        %v4352 = vsel %vm4351, %v4350, %v4346
        %vm4354 = vcmask 1041408
        %v4355 = vsel %vm4354, %v4352, 0.0
        %4356 = vadd.xlane.f32.xlu0 %v4355
        %v4357 = vpop.xlane.xlu0 %4356
        %v4359 = vlaneseq
        %v4360 = vshrl.u32 %v4359, 7
        %v4361 = vsub.s32 0, %v4360
        %v4362 = vrot.slane %v4125, %v4361
        %v4364 = vadd.f32 %v4357, %v4362
        %v4367 = vunpack.c.l.s4 1966171168
        %v4368 = vunpack.c.0.s8 %v4367
        %v4369 = vlaneseq
        %v4370 = vshrl.u32 %v4369, 7
        %v4371 = vsub.s32 %v4368, %v4370
        %v4372 = vrot.slane %v4364, %v4371
        %v4373 = vcombine.high %v4372, %v4372
        %v4375 = vunpack.c.l.s4 1966171168
        %v4376 = vunpack.c.0.s8 %v4375
        %v4377 = vlaneseq
        %v4378 = vshrl.u32 %v4377, 7
        %v4379 = vsub.s32 %v4376, %v4378
        %v4380 = vrot.slane %v4372, %v4379
        %v4382 = vunpack.c.l.s4 1966171168
        %v4383 = vunpack.c.0.s8 %v4382
        %v4384 = vlaneseq
        %v4385 = vshrl.u32 %v4384, 7
        %v4386 = vsub.s32 %v4383, %v4385
        %v4387 = vrot.slane %v4373, %v4386
        %vm4390 = vcmask 0
        %4391 = vst.msk [vmem:[%s544] sm:$0x1] %vm4390, %v4380
        %4392 = vst.msk [vmem:[%s544 + $0x8] sm:$0x1] %vm4390, %v4387
        %v4395 = vrot.slane %v4339, 7
        %v4396 = vsel %vm4351, %v4395, %v4338
        %4398 = vmatprep.subr.mxu0 %v4061
        %4399 = vmatpush1.msra.mxu0 %v4060
        %4400 = vmatprep.subr.mxu0 %v4065
        %4401 = vmatpush1.msra.mxu0 %v4064
        %4402 = vmatprep.subr.mxu0 %v4069
        %4403 = vmatpush1.msra.mxu0 %v4068
        %4404 = vmatprep.subr.mxu0 %v4073
        %4405 = vmatpush1.msra.mxu0 %v4072
        %4406 = vmatprep.subr.mxu0 %v4077
        %4407 = vmatpush1.msra.mxu0 %v4076
        %4408 = vmatprep.subr.mxu0 %v4081
        %4409 = vmatpush1.msra.mxu0 %v4080
        %4410 = vmatprep.subr.mxu0 %v4085
        %4411 = vmatpush1.msra.mxu0 %v4084
        %4412 = vmatprep.subr.mxu0 %v4089
        %4413 = vmatpush1.msra.mxu0 %v4088
        %4414 = vmatprep.subr.mxu0 %v4093
        %4415 = vmatpush1.msra.mxu0 %v4092
        %4416 = vmatprep.subr.mxu0 %v4097
        %4417 = vmatpush1.msra.mxu0 %v4096
        %4418 = vmatprep.subr.mxu0 %v4101
        %4419 = vmatpush1.msra.mxu0 %v4100
        %4420 = vmatprep.subr.mxu0 %v4105
        %4421 = vmatpush1.msra.mxu0 %v4104
        %4422 = vmatprep.subr.mxu0 %v4109
        %4423 = vmatpush1.msra.mxu0 %v4108
        %4424 = vmatprep.subr.mxu0 %v4113
        %4425 = vmatpush1.msra.mxu0 %v4112
        %4426 = vmatprep.subr.mxu0 %v4117
        %4427 = vmatpush1.msra.mxu0 %v4116
        %4428 = vmatprep.subr.mxu0 %v4121
        %4429 = vmatpush1.msra.mxu0 %v4120
        %4430 = vmatprep.subr.mxu0 0.0
        %4431 = vmatpush1.msra.mxu0 0.0
        %4432 = vmatprep.subr.mxu0 0.0
        %4433 = vmatpush1.msra.mxu0 0.0
        %4434 = vmatprep.subr.mxu0 0.0
        %4435 = vmatpush1.msra.mxu0 0.0
        %4436 = vmatprep.subr.mxu0 0.0
        %4437 = vmatpush1.msra.mxu0 0.0
        %4438 = vmatprep.subr.mxu0 0.0
        %4439 = vmatpush1.msra.mxu0 0.0
        %4440 = vmatprep.subr.mxu0 0.0
        %4441 = vmatpush1.msra.mxu0 0.0
        %4442 = vmatprep.subr.mxu0 0.0
        %4443 = vmatpush1.msra.mxu0 0.0
        %4444 = vmatprep.subr.mxu0 0.0
        %4445 = vmatpush1.msra.mxu0 0.0
        %4446 = vmatprep.subr.mxu0 0.0
        %4447 = vmatpush1.msra.mxu0 0.0
        %4448 = vmatprep.subr.mxu0 0.0
        %4449 = vmatpush1.msra.mxu0 0.0
        %4450 = vmatprep.subr.mxu0 0.0
        %4451 = vmatpush1.msra.mxu0 0.0
        %4452 = vmatprep.subr.mxu0 0.0
        %4453 = vmatpush1.msra.mxu0 0.0
        %4454 = vmatprep.subr.mxu0 0.0
        %4455 = vmatpush1.msra.mxu0 0.0
        %4456 = vmatprep.subr.mxu0 0.0
        %4457 = vmatpush1.msra.mxu0 0.0
        %4458 = vmatprep.subr.mxu0 0.0
        %4459 = vmatpush1.msra.mxu0 0.0
        %4460 = vmatprep.subr.mxu0 0.0
        %4461 = vmatpush1.msra.mxu0 0.0
        %4462 = vmatprep.mubr.f32.mxu0 0.0
        %4463 = vmatmul.mubr.f32.gmra.mrb[0].mxu0 %v4396
        %v4464 = vpop.f32.mrb[0].mxu0
        %v4465 = vadd.f32 0.0, %v4464
        %v4466 = vpop.f32.mrb[0].mxu0
        %v4467 = vadd.f32 0.0, %v4466
        %4468 = vdwg.mxu0
        %4469 = vmatprep.subr.mxu0 %v4063
        %4470 = vmatpush1.msra.mxu0 %v4062
        %4471 = vmatprep.subr.mxu0 %v4067
        %4472 = vmatpush1.msra.mxu0 %v4066
        %4473 = vmatprep.subr.mxu0 %v4071
        %4474 = vmatpush1.msra.mxu0 %v4070
        %4475 = vmatprep.subr.mxu0 %v4075
        %4476 = vmatpush1.msra.mxu0 %v4074
        %4477 = vmatprep.subr.mxu0 %v4079
        %4478 = vmatpush1.msra.mxu0 %v4078
        %4479 = vmatprep.subr.mxu0 %v4083
        %4480 = vmatpush1.msra.mxu0 %v4082
        %4481 = vmatprep.subr.mxu0 %v4087
        %4482 = vmatpush1.msra.mxu0 %v4086
        %4483 = vmatprep.subr.mxu0 %v4091
        %4484 = vmatpush1.msra.mxu0 %v4090
        %4485 = vmatprep.subr.mxu0 %v4095
        %4486 = vmatpush1.msra.mxu0 %v4094
        %4487 = vmatprep.subr.mxu0 %v4099
        %4488 = vmatpush1.msra.mxu0 %v4098
        %4489 = vmatprep.subr.mxu0 %v4103
        %4490 = vmatpush1.msra.mxu0 %v4102
        %4491 = vmatprep.subr.mxu0 %v4107
        %4492 = vmatpush1.msra.mxu0 %v4106
        %4493 = vmatprep.subr.mxu0 %v4111
        %4494 = vmatpush1.msra.mxu0 %v4110
        %4495 = vmatprep.subr.mxu0 %v4115
        %4496 = vmatpush1.msra.mxu0 %v4114
        %4497 = vmatprep.subr.mxu0 %v4119
        %4498 = vmatpush1.msra.mxu0 %v4118
        %4499 = vmatprep.subr.mxu0 %v4123
        %4500 = vmatpush1.msra.mxu0 %v4122
        %4501 = vmatprep.subr.mxu0 0.0
        %4502 = vmatpush1.msra.mxu0 0.0
        %4503 = vmatprep.subr.mxu0 0.0
        %4504 = vmatpush1.msra.mxu0 0.0
        %4505 = vmatprep.subr.mxu0 0.0
        %4506 = vmatpush1.msra.mxu0 0.0
        %4507 = vmatprep.subr.mxu0 0.0
        %4508 = vmatpush1.msra.mxu0 0.0
        %4509 = vmatprep.subr.mxu0 0.0
        %4510 = vmatpush1.msra.mxu0 0.0
        %4511 = vmatprep.subr.mxu0 0.0
        %4512 = vmatpush1.msra.mxu0 0.0
        %4513 = vmatprep.subr.mxu0 0.0
        %4514 = vmatpush1.msra.mxu0 0.0
        %4515 = vmatprep.subr.mxu0 0.0
        %4516 = vmatpush1.msra.mxu0 0.0
        %4517 = vmatprep.subr.mxu0 0.0
        %4518 = vmatpush1.msra.mxu0 0.0
        %4519 = vmatprep.subr.mxu0 0.0
        %4520 = vmatpush1.msra.mxu0 0.0
        %4521 = vmatprep.subr.mxu0 0.0
        %4522 = vmatpush1.msra.mxu0 0.0
        %4523 = vmatprep.subr.mxu0 0.0
        %4524 = vmatpush1.msra.mxu0 0.0
        %4525 = vmatprep.subr.mxu0 0.0
        %4526 = vmatpush1.msra.mxu0 0.0
        %4527 = vmatprep.subr.mxu0 0.0
        %4528 = vmatpush1.msra.mxu0 0.0
        %4529 = vmatprep.subr.mxu0 0.0
        %4530 = vmatpush1.msra.mxu0 0.0
        %4531 = vmatprep.subr.mxu0 0.0
        %4532 = vmatpush1.msra.mxu0 0.0
        %4533 = vmatprep.mubr.f32.mxu0 0.0
        %4534 = vmatmul.mubr.f32.gmra.mrb[0].mxu0 %v4396
        %v4535 = vpop.f32.mrb[0].mxu0
        %v4536 = vadd.f32 0.0, %v4535
        %v4537 = vpop.f32.mrb[0].mxu0
        %v4538 = vadd.f32 0.0, %v4537
        %4539 = vdwg.mxu0
        %v4544 = vrot.slane %v4465, 7
        %v4545 = vrot.slane %v4467, 7
        %v4546 = vrot.slane %v4536, 7
        %v4547 = vrot.slane %v4538, 7
        %v4556 = vadd.f32 %v4052, %v4544
        %v4557 = vadd.f32 %v4053, %v4545
        %v4558 = vadd.f32 %v4054, %v4546
        %v4559 = vadd.f32 %v4055, %v4547
        %v4560 = vadd.f32 %v4056, %v4465
        %v4561 = vadd.f32 %v4057, %v4467
        %v4562 = vadd.f32 %v4058, %v4536
        %v4563 = vadd.f32 %v4059, %v4538
        %v4564 = vxor.u32 %v4556, 2147483648
        %v4565 = vxor.u32 %v4560, 2147483648
        %v4566 = vmul.f32 %v4564, 1.442695
        %v4567 = vpow.pop %v4566
        %v4568 = vmul.f32 %v4565, 1.442695
        %v4569 = vpow.pop %v4568
        %v4570 = vadd.f32 %v4567, 1.0
        %v4571 = vadd.f32 %v4569, 1.0
        %v4572 = vrcp.pop %v4570
        %v4573 = vmul.f32 1.0, %v4572
        %v4574 = vrcp.pop %v4571
        %v4575 = vmul.f32 1.0, %v4574
        %v4576 = vxor.u32 %v4557, 2147483648
        %v4577 = vxor.u32 %v4561, 2147483648
        %v4578 = vmul.f32 %v4576, 1.442695
        %v4579 = vpow.pop %v4578
        %v4580 = vmul.f32 %v4577, 1.442695
        %v4581 = vpow.pop %v4580
        %v4582 = vadd.f32 %v4579, 1.0
        %v4583 = vadd.f32 %v4581, 1.0
        %v4584 = vrcp.pop %v4582
        %v4585 = vmul.f32 1.0, %v4584
        %v4586 = vrcp.pop %v4583
        %v4587 = vmul.f32 1.0, %v4586
        %v4588 = vtanh.pop %v4558
        %v4589 = vtanh.pop %v4562
        %v4590 = vxor.u32 %v4559, 2147483648
        %v4591 = vxor.u32 %v4563, 2147483648
        %v4592 = vmul.f32 %v4590, 1.442695
        %v4593 = vpow.pop %v4592
        %v4594 = vmul.f32 %v4591, 1.442695
        %v4595 = vpow.pop %v4594
        %v4596 = vadd.f32 %v4593, 1.0
        %v4597 = vadd.f32 %v4595, 1.0
        %v4598 = vrcp.pop %v4596
        %v4599 = vmul.f32 1.0, %v4598
        %v4600 = vrcp.pop %v4597
        %v4601 = vmul.f32 1.0, %v4600
        %v4604 = vrot.slane %v4334, 7
        %v4605 = vrot.slane %v4335, 7
        %v4608 = vmul.f32 %v4585, %v4604
        %v4609 = vmul.f32 %v4587, %v4605
        %v4610 = vmul.f32 %v4573, %v4588
        %v4611 = vmul.f32 %v4575, %v4589
        %v4612 = vadd.f32 %v4608, %v4610
        %v4613 = vadd.f32 %v4609, %v4611
        %v4614 = vtanh.pop %v4612
        %v4615 = vtanh.pop %v4613
        %v4616 = vmul.f32 %v4599, %v4614
        %v4617 = vmul.f32 %v4601, %v4615
        %v4618 = vmul.f32 %v4616, %v4344
        %v4619 = vmul.f32 %v4617, %v4344
        %v4622 = vrot.slane %v4619, 7
        %vm4623 = vcmask 1042434
        %v4624 = vsel %vm4623, %v4622, %v4618
        %vm4626 = vcmask 1042433
        %v4627 = vsel %vm4626, %v4624, 0.0
        %4628 = vadd.xlane.f32.xlu0 %v4627
        %v4629 = vpop.xlane.xlu0 %4628
        %v4630 = vadd.f32 %v4629, %v4362
        %v4633 = vunpack.c.l.s4 1966171168
        %v4634 = vunpack.c.0.s8 %v4633
        %v4635 = vlaneseq
        %v4636 = vshrl.u32 %v4635, 7
        %v4637 = vsub.s32 %v4634, %v4636
        %v4638 = vrot.slane %v4630, %v4637
        %v4639 = vcombine.high %v4638, %v4638
        %v4641 = vunpack.c.l.s4 1966171168
        %v4642 = vunpack.c.0.s8 %v4641
        %v4643 = vlaneseq
        %v4644 = vshrl.u32 %v4643, 7
        %v4645 = vsub.s32 %v4642, %v4644
        %v4646 = vrot.slane %v4638, %v4645
        %v4648 = vunpack.c.l.s4 1966171168
        %v4649 = vunpack.c.0.s8 %v4648
        %v4650 = vlaneseq
        %v4651 = vshrl.u32 %v4650, 7
        %v4652 = vsub.s32 %v4649, %v4651
        %v4653 = vrot.slane %v4639, %v4652
        %v4654 = vcombine.high %v4646, %v4646
        %4657 = vst.msk [vmem:[%s544 + $0x1] sm:$0x1] %vm4390, %v4653
        %4658 = vst.msk [vmem:[%s544 + $0x9] sm:$0x1] %vm4390, %v4654
        %v4661 = vrot.slane %v4616, 1
        %v4662 = vsel %vm4351, %v4617, %v4661
        %4664 = vmatprep.subr.mxu0 %v4061
        %4665 = vmatpush1.msra.mxu0 %v4060
        %4666 = vmatprep.subr.mxu0 %v4065
        %4667 = vmatpush1.msra.mxu0 %v4064
        %4668 = vmatprep.subr.mxu0 %v4069
        %4669 = vmatpush1.msra.mxu0 %v4068
        %4670 = vmatprep.subr.mxu0 %v4073
        %4671 = vmatpush1.msra.mxu0 %v4072
        %4672 = vmatprep.subr.mxu0 %v4077
        %4673 = vmatpush1.msra.mxu0 %v4076
        %4674 = vmatprep.subr.mxu0 %v4081
        %4675 = vmatpush1.msra.mxu0 %v4080
        %4676 = vmatprep.subr.mxu0 %v4085
        %4677 = vmatpush1.msra.mxu0 %v4084
        %4678 = vmatprep.subr.mxu0 %v4089
        %4679 = vmatpush1.msra.mxu0 %v4088
        %4680 = vmatprep.subr.mxu0 %v4093
        %4681 = vmatpush1.msra.mxu0 %v4092
        %4682 = vmatprep.subr.mxu0 %v4097
        %4683 = vmatpush1.msra.mxu0 %v4096
        %4684 = vmatprep.subr.mxu0 %v4101
        %4685 = vmatpush1.msra.mxu0 %v4100
        %4686 = vmatprep.subr.mxu0 %v4105
        %4687 = vmatpush1.msra.mxu0 %v4104
        %4688 = vmatprep.subr.mxu0 %v4109
        %4689 = vmatpush1.msra.mxu0 %v4108
        %4690 = vmatprep.subr.mxu0 %v4113
        %4691 = vmatpush1.msra.mxu0 %v4112
        %4692 = vmatprep.subr.mxu0 %v4117
        %4693 = vmatpush1.msra.mxu0 %v4116
        %4694 = vmatprep.subr.mxu0 %v4121
        %4695 = vmatpush1.msra.mxu0 %v4120
        %4696 = vmatprep.subr.mxu0 0.0
        %4697 = vmatpush1.msra.mxu0 0.0
        %4698 = vmatprep.subr.mxu0 0.0
        %4699 = vmatpush1.msra.mxu0 0.0
        %4700 = vmatprep.subr.mxu0 0.0
        %4701 = vmatpush1.msra.mxu0 0.0
        %4702 = vmatprep.subr.mxu0 0.0
        %4703 = vmatpush1.msra.mxu0 0.0
        %4704 = vmatprep.subr.mxu0 0.0
        %4705 = vmatpush1.msra.mxu0 0.0
        %4706 = vmatprep.subr.mxu0 0.0
        %4707 = vmatpush1.msra.mxu0 0.0
        %4708 = vmatprep.subr.mxu0 0.0
        %4709 = vmatpush1.msra.mxu0 0.0
        %4710 = vmatprep.subr.mxu0 0.0
        %4711 = vmatpush1.msra.mxu0 0.0
        %4712 = vmatprep.subr.mxu0 0.0
        %4713 = vmatpush1.msra.mxu0 0.0
        %4714 = vmatprep.subr.mxu0 0.0
        %4715 = vmatpush1.msra.mxu0 0.0
        %4716 = vmatprep.subr.mxu0 0.0
        %4717 = vmatpush1.msra.mxu0 0.0
        %4718 = vmatprep.subr.mxu0 0.0
        %4719 = vmatpush1.msra.mxu0 0.0
        %4720 = vmatprep.subr.mxu0 0.0
        %4721 = vmatpush1.msra.mxu0 0.0
        %4722 = vmatprep.subr.mxu0 0.0
        %4723 = vmatpush1.msra.mxu0 0.0
        %4724 = vmatprep.subr.mxu0 0.0
        %4725 = vmatpush1.msra.mxu0 0.0
        %4726 = vmatprep.subr.mxu0 0.0
        %4727 = vmatpush1.msra.mxu0 0.0
        %4728 = vmatprep.mubr.f32.mxu0 0.0
        %4729 = vmatmul.mubr.f32.gmra.mrb[0].mxu0 %v4662
        %v4730 = vpop.f32.mrb[0].mxu0
        %v4731 = vadd.f32 0.0, %v4730
        %v4732 = vpop.f32.mrb[0].mxu0
        %v4733 = vadd.f32 0.0, %v4732
        %4734 = vdwg.mxu0
        %4735 = vmatprep.subr.mxu0 %v4063
        %4736 = vmatpush1.msra.mxu0 %v4062
        %4737 = vmatprep.subr.mxu0 %v4067
        %4738 = vmatpush1.msra.mxu0 %v4066
        %4739 = vmatprep.subr.mxu0 %v4071
        %4740 = vmatpush1.msra.mxu0 %v4070
        %4741 = vmatprep.subr.mxu0 %v4075
        %4742 = vmatpush1.msra.mxu0 %v4074
        %4743 = vmatprep.subr.mxu0 %v4079
        %4744 = vmatpush1.msra.mxu0 %v4078
        %4745 = vmatprep.subr.mxu0 %v4083
        %4746 = vmatpush1.msra.mxu0 %v4082
        %4747 = vmatprep.subr.mxu0 %v4087
        %4748 = vmatpush1.msra.mxu0 %v4086
        %4749 = vmatprep.subr.mxu0 %v4091
        %4750 = vmatpush1.msra.mxu0 %v4090
        %4751 = vmatprep.subr.mxu0 %v4095
        %4752 = vmatpush1.msra.mxu0 %v4094
        %4753 = vmatprep.subr.mxu0 %v4099
        %4754 = vmatpush1.msra.mxu0 %v4098
        %4755 = vmatprep.subr.mxu0 %v4103
        %4756 = vmatpush1.msra.mxu0 %v4102
        %4757 = vmatprep.subr.mxu0 %v4107
        %4758 = vmatpush1.msra.mxu0 %v4106
        %4759 = vmatprep.subr.mxu0 %v4111
        %4760 = vmatpush1.msra.mxu0 %v4110
        %4761 = vmatprep.subr.mxu0 %v4115
        %4762 = vmatpush1.msra.mxu0 %v4114
        %4763 = vmatprep.subr.mxu0 %v4119
        %4764 = vmatpush1.msra.mxu0 %v4118
        %4765 = vmatprep.subr.mxu0 %v4123
        %4766 = vmatpush1.msra.mxu0 %v4122
        %4767 = vmatprep.subr.mxu0 0.0
        %4768 = vmatpush1.msra.mxu0 0.0
        %4769 = vmatprep.subr.mxu0 0.0
        %4770 = vmatpush1.msra.mxu0 0.0
        %4771 = vmatprep.subr.mxu0 0.0
        %4772 = vmatpush1.msra.mxu0 0.0
        %4773 = vmatprep.subr.mxu0 0.0
        %4774 = vmatpush1.msra.mxu0 0.0
        %4775 = vmatprep.subr.mxu0 0.0
        %4776 = vmatpush1.msra.mxu0 0.0
        %4777 = vmatprep.subr.mxu0 0.0
        %4778 = vmatpush1.msra.mxu0 0.0
        %4779 = vmatprep.subr.mxu0 0.0
        %4780 = vmatpush1.msra.mxu0 0.0
        %4781 = vmatprep.subr.mxu0 0.0
        %4782 = vmatpush1.msra.mxu0 0.0
        %4783 = vmatprep.subr.mxu0 0.0
        %4784 = vmatpush1.msra.mxu0 0.0
        %4785 = vmatprep.subr.mxu0 0.0
        %4786 = vmatpush1.msra.mxu0 0.0
        %4787 = vmatprep.subr.mxu0 0.0
        %4788 = vmatpush1.msra.mxu0 0.0
        %4789 = vmatprep.subr.mxu0 0.0
        %4790 = vmatpush1.msra.mxu0 0.0
        %4791 = vmatprep.subr.mxu0 0.0
        %4792 = vmatpush1.msra.mxu0 0.0
        %4793 = vmatprep.subr.mxu0 0.0
        %4794 = vmatpush1.msra.mxu0 0.0
        %4795 = vmatprep.subr.mxu0 0.0
        %4796 = vmatpush1.msra.mxu0 0.0
        %4797 = vmatprep.subr.mxu0 0.0
        %4798 = vmatpush1.msra.mxu0 0.0
        %4799 = vmatprep.mubr.f32.mxu0 0.0
        %4800 = vmatmul.mubr.f32.gmra.mrb[0].mxu0 %v4662
        %v4801 = vpop.f32.mrb[0].mxu0
        %v4802 = vadd.f32 0.0, %v4801
        %v4803 = vpop.f32.mrb[0].mxu0
        %v4804 = vadd.f32 0.0, %v4803
        %4805 = vdwg.mxu0
        %v4810 = vrot.slane %v4731, 6
        %v4811 = vrot.slane %v4733, 6
        %v4812 = vrot.slane %v4802, 6
        %v4813 = vrot.slane %v4804, 6
        %v4814 = vrot.slane %v4731, 7
        %v4815 = vrot.slane %v4733, 7
        %v4816 = vrot.slane %v4802, 7
        %v4817 = vrot.slane %v4804, 7
        %v4826 = vadd.f32 %v4052, %v4810
        %v4827 = vadd.f32 %v4053, %v4811
        %v4828 = vadd.f32 %v4054, %v4812
        %v4829 = vadd.f32 %v4055, %v4813
        %v4830 = vadd.f32 %v4056, %v4814
        %v4831 = vadd.f32 %v4057, %v4815
        %v4832 = vadd.f32 %v4058, %v4816
        %v4833 = vadd.f32 %v4059, %v4817
        %v4834 = vxor.u32 %v4826, 2147483648
        %v4835 = vxor.u32 %v4830, 2147483648
        %v4836 = vmul.f32 %v4834, 1.442695
        %v4837 = vpow.pop %v4836
        %v4838 = vmul.f32 %v4835, 1.442695
        %v4839 = vpow.pop %v4838
        %v4840 = vadd.f32 %v4837, 1.0
        %v4841 = vadd.f32 %v4839, 1.0
        %v4842 = vrcp.pop %v4840
        %v4843 = vmul.f32 1.0, %v4842
        %v4844 = vrcp.pop %v4841
        %v4845 = vmul.f32 1.0, %v4844
        %v4846 = vxor.u32 %v4827, 2147483648
        %v4847 = vxor.u32 %v4831, 2147483648
        %v4848 = vmul.f32 %v4846, 1.442695
        %v4849 = vpow.pop %v4848
        %v4850 = vmul.f32 %v4847, 1.442695
        %v4851 = vpow.pop %v4850
        %v4852 = vadd.f32 %v4849, 1.0
        %v4853 = vadd.f32 %v4851, 1.0
        %v4854 = vrcp.pop %v4852
        %v4855 = vmul.f32 1.0, %v4854
        %v4856 = vrcp.pop %v4853
        %v4857 = vmul.f32 1.0, %v4856
        %v4858 = vtanh.pop %v4828
        %v4859 = vtanh.pop %v4832
        %v4860 = vxor.u32 %v4829, 2147483648
        %v4861 = vxor.u32 %v4833, 2147483648
        %v4862 = vmul.f32 %v4860, 1.442695
        %v4863 = vpow.pop %v4862
        %v4864 = vmul.f32 %v4861, 1.442695
        %v4865 = vpow.pop %v4864
        %v4866 = vadd.f32 %v4863, 1.0
        %v4867 = vadd.f32 %v4865, 1.0
        %v4868 = vrcp.pop %v4866
        %v4869 = vmul.f32 1.0, %v4868
        %v4870 = vrcp.pop %v4867
        %v4871 = vmul.f32 1.0, %v4870
        %v4874 = vrot.slane %v4612, 7
        %v4875 = vrot.slane %v4613, 7
        %v4878 = vmul.f32 %v4855, %v4874
        %v4879 = vmul.f32 %v4857, %v4875
        %v4880 = vmul.f32 %v4843, %v4858
        %v4881 = vmul.f32 %v4845, %v4859
        %v4882 = vadd.f32 %v4878, %v4880
        %v4883 = vadd.f32 %v4879, %v4881
        %v4884 = vtanh.pop %v4882
        %v4885 = vtanh.pop %v4883
        %v4886 = vmul.f32 %v4869, %v4884
        %v4887 = vmul.f32 %v4871, %v4885
        %v4888 = vmul.f32 %v4886, %v4344
        %v4889 = vmul.f32 %v4887, %v4344
        %v4892 = vrot.slane %v4889, 7
        %vm4893 = vcmask 1043459
        %v4894 = vsel %vm4893, %v4892, %v4888
        %vm4896 = vcmask 1043458
        %v4897 = vsel %vm4896, %v4894, 0.0
        %4898 = vadd.xlane.f32.xlu0 %v4897
        %v4899 = vpop.xlane.xlu0 %4898
        %v4900 = vadd.f32 %v4899, %v4362
        %v4903 = vunpack.c.l.s4 1966171168
        %v4904 = vunpack.c.0.s8 %v4903
        %v4905 = vlaneseq
        %v4906 = vshrl.u32 %v4905, 7
        %v4907 = vsub.s32 %v4904, %v4906
        %v4908 = vrot.slane %v4900, %v4907
        %v4909 = vcombine.high %v4908, %v4908
        %v4911 = vunpack.c.l.s4 1966171168
        %v4912 = vunpack.c.0.s8 %v4911
        %v4913 = vlaneseq
        %v4914 = vshrl.u32 %v4913, 7
        %v4915 = vsub.s32 %v4912, %v4914
        %v4916 = vrot.slane %v4908, %v4915
        %v4918 = vunpack.c.l.s4 1966171168
        %v4919 = vunpack.c.0.s8 %v4918
        %v4920 = vlaneseq
        %v4921 = vshrl.u32 %v4920, 7
        %v4922 = vsub.s32 %v4919, %v4921
        %v4923 = vrot.slane %v4909, %v4922
        %v4924 = vcombine.high %v4916, %v4916
        %v4925 = vcombine.high %v4923, %v4923
        %4928 = vst.msk [vmem:[%s544 + $0x2] sm:$0x1] %vm4390, %v4924
        %4929 = vst.msk [vmem:[%s544 + $0xa] sm:$0x1] %vm4390, %v4925
        %v4932 = vrot.slane %v4886, 2
        %v4933 = vrot.slane %v4887, 1
        %v4934 = vsel %vm4351, %v4933, %v4932
        %4936 = vmatprep.subr.mxu0 %v4061
        %4937 = vmatpush1.msra.mxu0 %v4060
        %4938 = vmatprep.subr.mxu0 %v4065
        %4939 = vmatpush1.msra.mxu0 %v4064
        %4940 = vmatprep.subr.mxu0 %v4069
        %4941 = vmatpush1.msra.mxu0 %v4068
        %4942 = vmatprep.subr.mxu0 %v4073
        %4943 = vmatpush1.msra.mxu0 %v4072
        %4944 = vmatprep.subr.mxu0 %v4077
        %4945 = vmatpush1.msra.mxu0 %v4076
        %4946 = vmatprep.subr.mxu0 %v4081
        %4947 = vmatpush1.msra.mxu0 %v4080
        %4948 = vmatprep.subr.mxu0 %v4085
        %4949 = vmatpush1.msra.mxu0 %v4084
        %4950 = vmatprep.subr.mxu0 %v4089
        %4951 = vmatpush1.msra.mxu0 %v4088
        %4952 = vmatprep.subr.mxu0 %v4093
        %4953 = vmatpush1.msra.mxu0 %v4092
        %4954 = vmatprep.subr.mxu0 %v4097
        %4955 = vmatpush1.msra.mxu0 %v4096
        %4956 = vmatprep.subr.mxu0 %v4101
        %4957 = vmatpush1.msra.mxu0 %v4100
        %4958 = vmatprep.subr.mxu0 %v4105
        %4959 = vmatpush1.msra.mxu0 %v4104
        %4960 = vmatprep.subr.mxu0 %v4109
        %4961 = vmatpush1.msra.mxu0 %v4108
        %4962 = vmatprep.subr.mxu0 %v4113
        %4963 = vmatpush1.msra.mxu0 %v4112
        %4964 = vmatprep.subr.mxu0 %v4117
        %4965 = vmatpush1.msra.mxu0 %v4116
        %4966 = vmatprep.subr.mxu0 %v4121
        %4967 = vmatpush1.msra.mxu0 %v4120
        %4968 = vmatprep.subr.mxu0 0.0
        %4969 = vmatpush1.msra.mxu0 0.0
        %4970 = vmatprep.subr.mxu0 0.0
        %4971 = vmatpush1.msra.mxu0 0.0
        %4972 = vmatprep.subr.mxu0 0.0
        %4973 = vmatpush1.msra.mxu0 0.0
        %4974 = vmatprep.subr.mxu0 0.0
        %4975 = vmatpush1.msra.mxu0 0.0
        %4976 = vmatprep.subr.mxu0 0.0
        %4977 = vmatpush1.msra.mxu0 0.0
        %4978 = vmatprep.subr.mxu0 0.0
        %4979 = vmatpush1.msra.mxu0 0.0
        %4980 = vmatprep.subr.mxu0 0.0
        %4981 = vmatpush1.msra.mxu0 0.0
        %4982 = vmatprep.subr.mxu0 0.0
        %4983 = vmatpush1.msra.mxu0 0.0
        %4984 = vmatprep.subr.mxu0 0.0
        %4985 = vmatpush1.msra.mxu0 0.0
        %4986 = vmatprep.subr.mxu0 0.0
        %4987 = vmatpush1.msra.mxu0 0.0
        %4988 = vmatprep.subr.mxu0 0.0
        %4989 = vmatpush1.msra.mxu0 0.0
        %4990 = vmatprep.subr.mxu0 0.0
        %4991 = vmatpush1.msra.mxu0 0.0
        %4992 = vmatprep.subr.mxu0 0.0
        %4993 = vmatpush1.msra.mxu0 0.0
        %4994 = vmatprep.subr.mxu0 0.0
        %4995 = vmatpush1.msra.mxu0 0.0
        %4996 = vmatprep.subr.mxu0 0.0
        %4997 = vmatpush1.msra.mxu0 0.0
        %4998 = vmatprep.subr.mxu0 0.0
        %4999 = vmatpush1.msra.mxu0 0.0
        %5000 = vmatprep.mubr.f32.mxu0 0.0
        %5001 = vmatmul.mubr.f32.gmra.mrb[0].mxu0 %v4934
        %v5002 = vpop.f32.mrb[0].mxu0
        %v5003 = vadd.f32 0.0, %v5002
        %v5004 = vpop.f32.mrb[0].mxu0
        %v5005 = vadd.f32 0.0, %v5004
        %5006 = vdwg.mxu0
        %5007 = vmatprep.subr.mxu0 %v4063
        %5008 = vmatpush1.msra.mxu0 %v4062
        %5009 = vmatprep.subr.mxu0 %v4067
        %5010 = vmatpush1.msra.mxu0 %v4066
        %5011 = vmatprep.subr.mxu0 %v4071
        %5012 = vmatpush1.msra.mxu0 %v4070
        %5013 = vmatprep.subr.mxu0 %v4075
        %5014 = vmatpush1.msra.mxu0 %v4074
        %5015 = vmatprep.subr.mxu0 %v4079
        %5016 = vmatpush1.msra.mxu0 %v4078
        %5017 = vmatprep.subr.mxu0 %v4083
        %5018 = vmatpush1.msra.mxu0 %v4082
        %5019 = vmatprep.subr.mxu0 %v4087
        %5020 = vmatpush1.msra.mxu0 %v4086
        %5021 = vmatprep.subr.mxu0 %v4091
        %5022 = vmatpush1.msra.mxu0 %v4090
        %5023 = vmatprep.subr.mxu0 %v4095
        %5024 = vmatpush1.msra.mxu0 %v4094
        %5025 = vmatprep.subr.mxu0 %v4099
        %5026 = vmatpush1.msra.mxu0 %v4098
        %5027 = vmatprep.subr.mxu0 %v4103
        %5028 = vmatpush1.msra.mxu0 %v4102
        %5029 = vmatprep.subr.mxu0 %v4107
        %5030 = vmatpush1.msra.mxu0 %v4106
        %5031 = vmatprep.subr.mxu0 %v4111
        %5032 = vmatpush1.msra.mxu0 %v4110
        %5033 = vmatprep.subr.mxu0 %v4115
        %5034 = vmatpush1.msra.mxu0 %v4114
        %5035 = vmatprep.subr.mxu0 %v4119
        %5036 = vmatpush1.msra.mxu0 %v4118
        %5037 = vmatprep.subr.mxu0 %v4123
        %5038 = vmatpush1.msra.mxu0 %v4122
        %5039 = vmatprep.subr.mxu0 0.0
        %5040 = vmatpush1.msra.mxu0 0.0
        %5041 = vmatprep.subr.mxu0 0.0
        %5042 = vmatpush1.msra.mxu0 0.0
        %5043 = vmatprep.subr.mxu0 0.0
        %5044 = vmatpush1.msra.mxu0 0.0
        %5045 = vmatprep.subr.mxu0 0.0
        %5046 = vmatpush1.msra.mxu0 0.0
        %5047 = vmatprep.subr.mxu0 0.0
        %5048 = vmatpush1.msra.mxu0 0.0
        %5049 = vmatprep.subr.mxu0 0.0
        %5050 = vmatpush1.msra.mxu0 0.0
        %5051 = vmatprep.subr.mxu0 0.0
        %5052 = vmatpush1.msra.mxu0 0.0
        %5053 = vmatprep.subr.mxu0 0.0
        %5054 = vmatpush1.msra.mxu0 0.0
        %5055 = vmatprep.subr.mxu0 0.0
        %5056 = vmatpush1.msra.mxu0 0.0
        %5057 = vmatprep.subr.mxu0 0.0
        %5058 = vmatpush1.msra.mxu0 0.0
        %5059 = vmatprep.subr.mxu0 0.0
        %5060 = vmatpush1.msra.mxu0 0.0
        %5061 = vmatprep.subr.mxu0 0.0
        %5062 = vmatpush1.msra.mxu0 0.0
        %5063 = vmatprep.subr.mxu0 0.0
        %5064 = vmatpush1.msra.mxu0 0.0
        %5065 = vmatprep.subr.mxu0 0.0
        %5066 = vmatpush1.msra.mxu0 0.0
        %5067 = vmatprep.subr.mxu0 0.0
        %5068 = vmatpush1.msra.mxu0 0.0
        %5069 = vmatprep.subr.mxu0 0.0
        %5070 = vmatpush1.msra.mxu0 0.0
        %5071 = vmatprep.mubr.f32.mxu0 0.0
        %5072 = vmatmul.mubr.f32.gmra.mrb[0].mxu0 %v4934
        %v5073 = vpop.f32.mrb[0].mxu0
        %v5074 = vadd.f32 0.0, %v5073
        %v5075 = vpop.f32.mrb[0].mxu0
        %v5076 = vadd.f32 0.0, %v5075
        %5077 = vdwg.mxu0
        %v5082 = vrot.slane %v5003, 5
        %v5083 = vrot.slane %v5005, 5
        %v5084 = vrot.slane %v5074, 5
        %v5085 = vrot.slane %v5076, 5
        %v5086 = vrot.slane %v5003, 6
        %v5087 = vrot.slane %v5005, 6
        %v5088 = vrot.slane %v5074, 6
        %v5089 = vrot.slane %v5076, 6
        %v5098 = vadd.f32 %v4052, %v5082
        %v5099 = vadd.f32 %v4053, %v5083
        %v5100 = vadd.f32 %v4054, %v5084
        %v5101 = vadd.f32 %v4055, %v5085
        %v5102 = vadd.f32 %v4056, %v5086
        %v5103 = vadd.f32 %v4057, %v5087
        %v5104 = vadd.f32 %v4058, %v5088
        %v5105 = vadd.f32 %v4059, %v5089
        %v5106 = vxor.u32 %v5098, 2147483648
        %v5107 = vxor.u32 %v5102, 2147483648
        %v5108 = vmul.f32 %v5106, 1.442695
        %v5109 = vpow.pop %v5108
        %v5110 = vmul.f32 %v5107, 1.442695
        %v5111 = vpow.pop %v5110
        %v5112 = vadd.f32 %v5109, 1.0
        %v5113 = vadd.f32 %v5111, 1.0
        %v5114 = vrcp.pop %v5112
        %v5115 = vmul.f32 1.0, %v5114
        %v5116 = vrcp.pop %v5113
        %v5117 = vmul.f32 1.0, %v5116
        %v5118 = vxor.u32 %v5099, 2147483648
        %v5119 = vxor.u32 %v5103, 2147483648
        %v5120 = vmul.f32 %v5118, 1.442695
        %v5121 = vpow.pop %v5120
        %v5122 = vmul.f32 %v5119, 1.442695
        %v5123 = vpow.pop %v5122
        %v5124 = vadd.f32 %v5121, 1.0
        %v5125 = vadd.f32 %v5123, 1.0
        %v5126 = vrcp.pop %v5124
        %v5127 = vmul.f32 1.0, %v5126
        %v5128 = vrcp.pop %v5125
        %v5129 = vmul.f32 1.0, %v5128
        %v5130 = vtanh.pop %v5100
        %v5131 = vtanh.pop %v5104
        %v5132 = vxor.u32 %v5101, 2147483648
        %v5133 = vxor.u32 %v5105, 2147483648
        %v5134 = vmul.f32 %v5132, 1.442695
        %v5135 = vpow.pop %v5134
        %v5136 = vmul.f32 %v5133, 1.442695
        %v5137 = vpow.pop %v5136
        %v5138 = vadd.f32 %v5135, 1.0
        %v5139 = vadd.f32 %v5137, 1.0
        %v5140 = vrcp.pop %v5138
        %v5141 = vmul.f32 1.0, %v5140
        %v5142 = vrcp.pop %v5139
        %v5143 = vmul.f32 1.0, %v5142
        %v5146 = vrot.slane %v4882, 7
        %v5147 = vrot.slane %v4883, 7
        %v5150 = vmul.f32 %v5127, %v5146
        %v5151 = vmul.f32 %v5129, %v5147
        %v5152 = vmul.f32 %v5115, %v5130
        %v5153 = vmul.f32 %v5117, %v5131
        %v5154 = vadd.f32 %v5150, %v5152
        %v5155 = vadd.f32 %v5151, %v5153
        %v5156 = vtanh.pop %v5154
        %v5157 = vtanh.pop %v5155
        %v5158 = vmul.f32 %v5141, %v5156
        %v5159 = vmul.f32 %v5143, %v5157
        %v5160 = vmul.f32 %v5158, %v4344
        %v5161 = vmul.f32 %v5159, %v4344
        %v5164 = vrot.slane %v5161, 7
        %vm5165 = vcmask 1044484
        %v5166 = vsel %vm5165, %v5164, %v5160
        %vm5168 = vcmask 1044483
        %v5169 = vsel %vm5168, %v5166, 0.0
        %5170 = vadd.xlane.f32.xlu0 %v5169
        %v5171 = vpop.xlane.xlu0 %5170
        %v5172 = vadd.f32 %v5171, %v4362
        %v5174 = vcombine.high %v5172, %v5172
        %v5176 = vunpack.c.l.s4 1966171168
        %v5177 = vunpack.c.0.s8 %v5176
        %v5178 = vlaneseq
        %v5179 = vshrl.u32 %v5178, 7
        %v5180 = vsub.s32 %v5177, %v5179
        %v5181 = vrot.slane %v5172, %v5180
        %v5183 = vunpack.c.l.s4 1966171168
        %v5184 = vunpack.c.0.s8 %v5183
        %v5185 = vlaneseq
        %v5186 = vshrl.u32 %v5185, 7
        %v5187 = vsub.s32 %v5184, %v5186
        %v5188 = vrot.slane %v5174, %v5187
        %v5189 = vcombine.high %v5181, %v5181
        %v5191 = vunpack.c.l.s4 1966171168
        %v5192 = vunpack.c.0.s8 %v5191
        %v5193 = vlaneseq
        %v5194 = vshrl.u32 %v5193, 7
        %v5195 = vsub.s32 %v5192, %v5194
        %v5196 = vrot.slane %v5188, %v5195
        %v5198 = vunpack.c.l.s4 1966171168
        %v5199 = vunpack.c.0.s8 %v5198
        %v5200 = vlaneseq
        %v5201 = vshrl.u32 %v5200, 7
        %v5202 = vsub.s32 %v5199, %v5201
        %v5203 = vrot.slane %v5189, %v5202
        %v5204 = vcombine.high %v5203, %v5203
        %5207 = vst.msk [vmem:[%s544 + $0x3] sm:$0x1] %vm4390, %v5204
        %5208 = vst.msk [vmem:[%s544 + $0xb] sm:$0x1] %vm4390, %v5196
        %v5211 = vrot.slane %v5158, 3
        %v5212 = vrot.slane %v5159, 2
        %v5213 = vsel %vm4351, %v5212, %v5211
        %5215 = vmatprep.subr.mxu0 %v4061
        %5216 = vmatpush1.msra.mxu0 %v4060
        %5217 = vmatprep.subr.mxu0 %v4065
        %5218 = vmatpush1.msra.mxu0 %v4064
        %5219 = vmatprep.subr.mxu0 %v4069
        %5220 = vmatpush1.msra.mxu0 %v4068
        %5221 = vmatprep.subr.mxu0 %v4073
        %5222 = vmatpush1.msra.mxu0 %v4072
        %5223 = vmatprep.subr.mxu0 %v4077
        %5224 = vmatpush1.msra.mxu0 %v4076
        %5225 = vmatprep.subr.mxu0 %v4081
        %5226 = vmatpush1.msra.mxu0 %v4080
        %5227 = vmatprep.subr.mxu0 %v4085
        %5228 = vmatpush1.msra.mxu0 %v4084
        %5229 = vmatprep.subr.mxu0 %v4089
        %5230 = vmatpush1.msra.mxu0 %v4088
        %5231 = vmatprep.subr.mxu0 %v4093
        %5232 = vmatpush1.msra.mxu0 %v4092
        %5233 = vmatprep.subr.mxu0 %v4097
        %5234 = vmatpush1.msra.mxu0 %v4096
        %5235 = vmatprep.subr.mxu0 %v4101
        %5236 = vmatpush1.msra.mxu0 %v4100
        %5237 = vmatprep.subr.mxu0 %v4105
        %5238 = vmatpush1.msra.mxu0 %v4104
        %5239 = vmatprep.subr.mxu0 %v4109
        %5240 = vmatpush1.msra.mxu0 %v4108
        %5241 = vmatprep.subr.mxu0 %v4113
        %5242 = vmatpush1.msra.mxu0 %v4112
        %5243 = vmatprep.subr.mxu0 %v4117
        %5244 = vmatpush1.msra.mxu0 %v4116
        %5245 = vmatprep.subr.mxu0 %v4121
        %5246 = vmatpush1.msra.mxu0 %v4120
        %5247 = vmatprep.subr.mxu0 0.0
        %5248 = vmatpush1.msra.mxu0 0.0
        %5249 = vmatprep.subr.mxu0 0.0
        %5250 = vmatpush1.msra.mxu0 0.0
        %5251 = vmatprep.subr.mxu0 0.0
        %5252 = vmatpush1.msra.mxu0 0.0
        %5253 = vmatprep.subr.mxu0 0.0
        %5254 = vmatpush1.msra.mxu0 0.0
        %5255 = vmatprep.subr.mxu0 0.0
        %5256 = vmatpush1.msra.mxu0 0.0
        %5257 = vmatprep.subr.mxu0 0.0
        %5258 = vmatpush1.msra.mxu0 0.0
        %5259 = vmatprep.subr.mxu0 0.0
        %5260 = vmatpush1.msra.mxu0 0.0
        %5261 = vmatprep.subr.mxu0 0.0
        %5262 = vmatpush1.msra.mxu0 0.0
        %5263 = vmatprep.subr.mxu0 0.0
        %5264 = vmatpush1.msra.mxu0 0.0
        %5265 = vmatprep.subr.mxu0 0.0
        %5266 = vmatpush1.msra.mxu0 0.0
        %5267 = vmatprep.subr.mxu0 0.0
        %5268 = vmatpush1.msra.mxu0 0.0
        %5269 = vmatprep.subr.mxu0 0.0
        %5270 = vmatpush1.msra.mxu0 0.0
        %5271 = vmatprep.subr.mxu0 0.0
        %5272 = vmatpush1.msra.mxu0 0.0
        %5273 = vmatprep.subr.mxu0 0.0
        %5274 = vmatpush1.msra.mxu0 0.0
        %5275 = vmatprep.subr.mxu0 0.0
        %5276 = vmatpush1.msra.mxu0 0.0
        %5277 = vmatprep.subr.mxu0 0.0
        %5278 = vmatpush1.msra.mxu0 0.0
        %5279 = vmatprep.mubr.f32.mxu0 0.0
        %5280 = vmatmul.mubr.f32.gmra.mrb[0].mxu0 %v5213
        %v5281 = vpop.f32.mrb[0].mxu0
        %v5282 = vadd.f32 0.0, %v5281
        %v5283 = vpop.f32.mrb[0].mxu0
        %v5284 = vadd.f32 0.0, %v5283
        %5285 = vdwg.mxu0
        %5286 = vmatprep.subr.mxu0 %v4063
        %5287 = vmatpush1.msra.mxu0 %v4062
        %5288 = vmatprep.subr.mxu0 %v4067
        %5289 = vmatpush1.msra.mxu0 %v4066
        %5290 = vmatprep.subr.mxu0 %v4071
        %5291 = vmatpush1.msra.mxu0 %v4070
        %5292 = vmatprep.subr.mxu0 %v4075
        %5293 = vmatpush1.msra.mxu0 %v4074
        %5294 = vmatprep.subr.mxu0 %v4079
        %5295 = vmatpush1.msra.mxu0 %v4078
        %5296 = vmatprep.subr.mxu0 %v4083
        %5297 = vmatpush1.msra.mxu0 %v4082
        %5298 = vmatprep.subr.mxu0 %v4087
        %5299 = vmatpush1.msra.mxu0 %v4086
        %5300 = vmatprep.subr.mxu0 %v4091
        %5301 = vmatpush1.msra.mxu0 %v4090
        %5302 = vmatprep.subr.mxu0 %v4095
        %5303 = vmatpush1.msra.mxu0 %v4094
        %5304 = vmatprep.subr.mxu0 %v4099
        %5305 = vmatpush1.msra.mxu0 %v4098
        %5306 = vmatprep.subr.mxu0 %v4103
        %5307 = vmatpush1.msra.mxu0 %v4102
        %5308 = vmatprep.subr.mxu0 %v4107
        %5309 = vmatpush1.msra.mxu0 %v4106
        %5310 = vmatprep.subr.mxu0 %v4111
        %5311 = vmatpush1.msra.mxu0 %v4110
        %5312 = vmatprep.subr.mxu0 %v4115
        %5313 = vmatpush1.msra.mxu0 %v4114
        %5314 = vmatprep.subr.mxu0 %v4119
        %5315 = vmatpush1.msra.mxu0 %v4118
        %5316 = vmatprep.subr.mxu0 %v4123
        %5317 = vmatpush1.msra.mxu0 %v4122
        %5318 = vmatprep.subr.mxu0 0.0
        %5319 = vmatpush1.msra.mxu0 0.0
        %5320 = vmatprep.subr.mxu0 0.0
        %5321 = vmatpush1.msra.mxu0 0.0
        %5322 = vmatprep.subr.mxu0 0.0
        %5323 = vmatpush1.msra.mxu0 0.0
        %5324 = vmatprep.subr.mxu0 0.0
        %5325 = vmatpush1.msra.mxu0 0.0
        %5326 = vmatprep.subr.mxu0 0.0
        %5327 = vmatpush1.msra.mxu0 0.0
        %5328 = vmatprep.subr.mxu0 0.0
        %5329 = vmatpush1.msra.mxu0 0.0
        %5330 = vmatprep.subr.mxu0 0.0
        %5331 = vmatpush1.msra.mxu0 0.0
        %5332 = vmatprep.subr.mxu0 0.0
        %5333 = vmatpush1.msra.mxu0 0.0
        %5334 = vmatprep.subr.mxu0 0.0
        %5335 = vmatpush1.msra.mxu0 0.0
        %5336 = vmatprep.subr.mxu0 0.0
        %5337 = vmatpush1.msra.mxu0 0.0
        %5338 = vmatprep.subr.mxu0 0.0
        %5339 = vmatpush1.msra.mxu0 0.0
        %5340 = vmatprep.subr.mxu0 0.0
        %5341 = vmatpush1.msra.mxu0 0.0
        %5342 = vmatprep.subr.mxu0 0.0
        %5343 = vmatpush1.msra.mxu0 0.0
        %5344 = vmatprep.subr.mxu0 0.0
        %5345 = vmatpush1.msra.mxu0 0.0
        %5346 = vmatprep.subr.mxu0 0.0
        %5347 = vmatpush1.msra.mxu0 0.0
        %5348 = vmatprep.subr.mxu0 0.0
        %5349 = vmatpush1.msra.mxu0 0.0
        %5350 = vmatprep.mubr.f32.mxu0 0.0
        %5351 = vmatmul.mubr.f32.gmra.mrb[0].mxu0 %v5213
        %v5352 = vpop.f32.mrb[0].mxu0
        %v5353 = vadd.f32 0.0, %v5352
        %v5354 = vpop.f32.mrb[0].mxu0
        %v5355 = vadd.f32 0.0, %v5354
        %5356 = vdwg.mxu0
        %v5361 = vrot.slane %v5282, 4
        %v5362 = vrot.slane %v5284, 4
        %v5363 = vrot.slane %v5353, 4
        %v5364 = vrot.slane %v5355, 4
        %v5365 = vrot.slane %v5282, 5
        %v5366 = vrot.slane %v5284, 5
        %v5367 = vrot.slane %v5353, 5
        %v5368 = vrot.slane %v5355, 5
        %v5377 = vadd.f32 %v4052, %v5361
        %v5378 = vadd.f32 %v4053, %v5362
        %v5379 = vadd.f32 %v4054, %v5363
        %v5380 = vadd.f32 %v4055, %v5364
        %v5381 = vadd.f32 %v4056, %v5365
        %v5382 = vadd.f32 %v4057, %v5366
        %v5383 = vadd.f32 %v4058, %v5367
        %v5384 = vadd.f32 %v4059, %v5368
        %v5385 = vxor.u32 %v5377, 2147483648
        %v5386 = vxor.u32 %v5381, 2147483648
        %v5387 = vmul.f32 %v5385, 1.442695
        %v5388 = vpow.pop %v5387
        %v5389 = vmul.f32 %v5386, 1.442695
        %v5390 = vpow.pop %v5389
        %v5391 = vadd.f32 %v5388, 1.0
        %v5392 = vadd.f32 %v5390, 1.0
        %v5393 = vrcp.pop %v5391
        %v5394 = vmul.f32 1.0, %v5393
        %v5395 = vrcp.pop %v5392
        %v5396 = vmul.f32 1.0, %v5395
        %v5397 = vxor.u32 %v5378, 2147483648
        %v5398 = vxor.u32 %v5382, 2147483648
        %v5399 = vmul.f32 %v5397, 1.442695
        %v5400 = vpow.pop %v5399
        %v5401 = vmul.f32 %v5398, 1.442695
        %v5402 = vpow.pop %v5401
        %v5403 = vadd.f32 %v5400, 1.0
        %v5404 = vadd.f32 %v5402, 1.0
        %v5405 = vrcp.pop %v5403
        %v5406 = vmul.f32 1.0, %v5405
        %v5407 = vrcp.pop %v5404
        %v5408 = vmul.f32 1.0, %v5407
        %v5409 = vtanh.pop %v5379
        %v5410 = vtanh.pop %v5383
        %v5411 = vxor.u32 %v5380, 2147483648
        %v5412 = vxor.u32 %v5384, 2147483648
        %v5413 = vmul.f32 %v5411, 1.442695
        %v5414 = vpow.pop %v5413
        %v5415 = vmul.f32 %v5412, 1.442695
        %v5416 = vpow.pop %v5415
        %v5417 = vadd.f32 %v5414, 1.0
        %v5418 = vadd.f32 %v5416, 1.0
        %v5419 = vrcp.pop %v5417
        %v5420 = vmul.f32 1.0, %v5419
        %v5421 = vrcp.pop %v5418
        %v5422 = vmul.f32 1.0, %v5421
        %v5425 = vrot.slane %v5154, 7
        %v5426 = vrot.slane %v5155, 7
        %v5429 = vmul.f32 %v5406, %v5425
        %v5430 = vmul.f32 %v5408, %v5426
        %v5431 = vmul.f32 %v5394, %v5409
        %v5432 = vmul.f32 %v5396, %v5410
        %v5433 = vadd.f32 %v5429, %v5431
        %v5434 = vadd.f32 %v5430, %v5432
        %v5435 = vtanh.pop %v5433
        %v5436 = vtanh.pop %v5434
        %v5437 = vmul.f32 %v5420, %v5435
        %v5438 = vmul.f32 %v5422, %v5436
        %v5439 = vmul.f32 %v5437, %v4344
        %v5440 = vmul.f32 %v5438, %v4344
        %v5443 = vrot.slane %v5440, 7
        %vm5444 = vcmask 1045509
        %v5445 = vsel %vm5444, %v5443, %v5439
        %vm5447 = vcmask 1045508
        %v5448 = vsel %vm5447, %v5445, 0.0
        %5449 = vadd.xlane.f32.xlu0 %v5448
        %v5450 = vpop.xlane.xlu0 %5449
        %v5451 = vadd.f32 %v5450, %v4362
        %v5453 = vcombine.high %v5451, %v5451
        %v5455 = vunpack.c.l.s4 1966171168
        %v5456 = vunpack.c.0.s8 %v5455
        %v5457 = vlaneseq
        %v5458 = vshrl.u32 %v5457, 7
        %v5459 = vsub.s32 %v5456, %v5458
        %v5460 = vrot.slane %v5453, %v5459
        %v5461 = vcombine.high %v5460, %v5460
        %v5463 = vunpack.c.l.s4 1966171168
        %v5464 = vunpack.c.0.s8 %v5463
        %v5465 = vlaneseq
        %v5466 = vshrl.u32 %v5465, 7
        %v5467 = vsub.s32 %v5464, %v5466
        %v5468 = vrot.slane %v5460, %v5467
        %v5470 = vunpack.c.l.s4 1966171168
        %v5471 = vunpack.c.0.s8 %v5470
        %v5472 = vlaneseq
        %v5473 = vshrl.u32 %v5472, 7
        %v5474 = vsub.s32 %v5471, %v5473
        %v5475 = vrot.slane %v5461, %v5474
        %5478 = vst.msk [vmem:[%s544 + $0x4] sm:$0x1] %vm4390, %v5468
        %5479 = vst.msk [vmem:[%s544 + $0xc] sm:$0x1] %vm4390, %v5475
        %v5482 = vrot.slane %v5437, 4
        %v5483 = vrot.slane %v5438, 3
        %v5484 = vsel %vm4351, %v5483, %v5482
        %5486 = vmatprep.subr.mxu0 %v4061
        %5487 = vmatpush1.msra.mxu0 %v4060
        %5488 = vmatprep.subr.mxu0 %v4065
        %5489 = vmatpush1.msra.mxu0 %v4064
        %5490 = vmatprep.subr.mxu0 %v4069
        %5491 = vmatpush1.msra.mxu0 %v4068
        %5492 = vmatprep.subr.mxu0 %v4073
        %5493 = vmatpush1.msra.mxu0 %v4072
        %5494 = vmatprep.subr.mxu0 %v4077
        %5495 = vmatpush1.msra.mxu0 %v4076
        %5496 = vmatprep.subr.mxu0 %v4081
        %5497 = vmatpush1.msra.mxu0 %v4080
        %5498 = vmatprep.subr.mxu0 %v4085
        %5499 = vmatpush1.msra.mxu0 %v4084
        %5500 = vmatprep.subr.mxu0 %v4089
        %5501 = vmatpush1.msra.mxu0 %v4088
        %5502 = vmatprep.subr.mxu0 %v4093
        %5503 = vmatpush1.msra.mxu0 %v4092
        %5504 = vmatprep.subr.mxu0 %v4097
        %5505 = vmatpush1.msra.mxu0 %v4096
        %5506 = vmatprep.subr.mxu0 %v4101
        %5507 = vmatpush1.msra.mxu0 %v4100
        %5508 = vmatprep.subr.mxu0 %v4105
        %5509 = vmatpush1.msra.mxu0 %v4104
        %5510 = vmatprep.subr.mxu0 %v4109
        %5511 = vmatpush1.msra.mxu0 %v4108
        %5512 = vmatprep.subr.mxu0 %v4113
        %5513 = vmatpush1.msra.mxu0 %v4112
        %5514 = vmatprep.subr.mxu0 %v4117
        %5515 = vmatpush1.msra.mxu0 %v4116
        %5516 = vmatprep.subr.mxu0 %v4121
        %5517 = vmatpush1.msra.mxu0 %v4120
        %5518 = vmatprep.subr.mxu0 0.0
        %5519 = vmatpush1.msra.mxu0 0.0
        %5520 = vmatprep.subr.mxu0 0.0
        %5521 = vmatpush1.msra.mxu0 0.0
        %5522 = vmatprep.subr.mxu0 0.0
        %5523 = vmatpush1.msra.mxu0 0.0
        %5524 = vmatprep.subr.mxu0 0.0
        %5525 = vmatpush1.msra.mxu0 0.0
        %5526 = vmatprep.subr.mxu0 0.0
        %5527 = vmatpush1.msra.mxu0 0.0
        %5528 = vmatprep.subr.mxu0 0.0
        %5529 = vmatpush1.msra.mxu0 0.0
        %5530 = vmatprep.subr.mxu0 0.0
        %5531 = vmatpush1.msra.mxu0 0.0
        %5532 = vmatprep.subr.mxu0 0.0
        %5533 = vmatpush1.msra.mxu0 0.0
        %5534 = vmatprep.subr.mxu0 0.0
        %5535 = vmatpush1.msra.mxu0 0.0
        %5536 = vmatprep.subr.mxu0 0.0
        %5537 = vmatpush1.msra.mxu0 0.0
        %5538 = vmatprep.subr.mxu0 0.0
        %5539 = vmatpush1.msra.mxu0 0.0
        %5540 = vmatprep.subr.mxu0 0.0
        %5541 = vmatpush1.msra.mxu0 0.0
        %5542 = vmatprep.subr.mxu0 0.0
        %5543 = vmatpush1.msra.mxu0 0.0
        %5544 = vmatprep.subr.mxu0 0.0
        %5545 = vmatpush1.msra.mxu0 0.0
        %5546 = vmatprep.subr.mxu0 0.0
        %5547 = vmatpush1.msra.mxu0 0.0
        %5548 = vmatprep.subr.mxu0 0.0
        %5549 = vmatpush1.msra.mxu0 0.0
        %5550 = vmatprep.mubr.f32.mxu0 0.0
        %5551 = vmatmul.mubr.f32.gmra.mrb[0].mxu0 %v5484
        %v5552 = vpop.f32.mrb[0].mxu0
        %v5553 = vadd.f32 0.0, %v5552
        %v5554 = vpop.f32.mrb[0].mxu0
        %v5555 = vadd.f32 0.0, %v5554
        %5556 = vdwg.mxu0
        %5557 = vmatprep.subr.mxu0 %v4063
        %5558 = vmatpush1.msra.mxu0 %v4062
        %5559 = vmatprep.subr.mxu0 %v4067
        %5560 = vmatpush1.msra.mxu0 %v4066
        %5561 = vmatprep.subr.mxu0 %v4071
        %5562 = vmatpush1.msra.mxu0 %v4070
        %5563 = vmatprep.subr.mxu0 %v4075
        %5564 = vmatpush1.msra.mxu0 %v4074
        %5565 = vmatprep.subr.mxu0 %v4079
        %5566 = vmatpush1.msra.mxu0 %v4078
        %5567 = vmatprep.subr.mxu0 %v4083
        %5568 = vmatpush1.msra.mxu0 %v4082
        %5569 = vmatprep.subr.mxu0 %v4087
        %5570 = vmatpush1.msra.mxu0 %v4086
        %5571 = vmatprep.subr.mxu0 %v4091
        %5572 = vmatpush1.msra.mxu0 %v4090
        %5573 = vmatprep.subr.mxu0 %v4095
        %5574 = vmatpush1.msra.mxu0 %v4094
        %5575 = vmatprep.subr.mxu0 %v4099
        %5576 = vmatpush1.msra.mxu0 %v4098
        %5577 = vmatprep.subr.mxu0 %v4103
        %5578 = vmatpush1.msra.mxu0 %v4102
        %5579 = vmatprep.subr.mxu0 %v4107
        %5580 = vmatpush1.msra.mxu0 %v4106
        %5581 = vmatprep.subr.mxu0 %v4111
        %5582 = vmatpush1.msra.mxu0 %v4110
        %5583 = vmatprep.subr.mxu0 %v4115
        %5584 = vmatpush1.msra.mxu0 %v4114
        %5585 = vmatprep.subr.mxu0 %v4119
        %5586 = vmatpush1.msra.mxu0 %v4118
        %5587 = vmatprep.subr.mxu0 %v4123
        %5588 = vmatpush1.msra.mxu0 %v4122
        %5589 = vmatprep.subr.mxu0 0.0
        %5590 = vmatpush1.msra.mxu0 0.0
        %5591 = vmatprep.subr.mxu0 0.0
        %5592 = vmatpush1.msra.mxu0 0.0
        %5593 = vmatprep.subr.mxu0 0.0
        %5594 = vmatpush1.msra.mxu0 0.0
        %5595 = vmatprep.subr.mxu0 0.0
        %5596 = vmatpush1.msra.mxu0 0.0
        %5597 = vmatprep.subr.mxu0 0.0
        %5598 = vmatpush1.msra.mxu0 0.0
        %5599 = vmatprep.subr.mxu0 0.0
        %5600 = vmatpush1.msra.mxu0 0.0
        %5601 = vmatprep.subr.mxu0 0.0
        %5602 = vmatpush1.msra.mxu0 0.0
        %5603 = vmatprep.subr.mxu0 0.0
        %5604 = vmatpush1.msra.mxu0 0.0
        %5605 = vmatprep.subr.mxu0 0.0
        %5606 = vmatpush1.msra.mxu0 0.0
        %5607 = vmatprep.subr.mxu0 0.0
        %5608 = vmatpush1.msra.mxu0 0.0
        %5609 = vmatprep.subr.mxu0 0.0
        %5610 = vmatpush1.msra.mxu0 0.0
        %5611 = vmatprep.subr.mxu0 0.0
        %5612 = vmatpush1.msra.mxu0 0.0
        %5613 = vmatprep.subr.mxu0 0.0
        %5614 = vmatpush1.msra.mxu0 0.0
        %5615 = vmatprep.subr.mxu0 0.0
        %5616 = vmatpush1.msra.mxu0 0.0
        %5617 = vmatprep.subr.mxu0 0.0
        %5618 = vmatpush1.msra.mxu0 0.0
        %5619 = vmatprep.subr.mxu0 0.0
        %5620 = vmatpush1.msra.mxu0 0.0
        %5621 = vmatprep.mubr.f32.mxu0 0.0
        %5622 = vmatmul.mubr.f32.gmra.mrb[0].mxu0 %v5484
        %v5623 = vpop.f32.mrb[0].mxu0
        %v5624 = vadd.f32 0.0, %v5623
        %v5625 = vpop.f32.mrb[0].mxu0
        %v5626 = vadd.f32 0.0, %v5625
        %5627 = vdwg.mxu0
        %v5632 = vrot.slane %v5553, 3
        %v5633 = vrot.slane %v5555, 3
        %v5634 = vrot.slane %v5624, 3
        %v5635 = vrot.slane %v5626, 3
        %v5636 = vrot.slane %v5553, 4
        %v5637 = vrot.slane %v5555, 4
        %v5638 = vrot.slane %v5624, 4
        %v5639 = vrot.slane %v5626, 4
        %v5648 = vadd.f32 %v4052, %v5632
        %v5649 = vadd.f32 %v4053, %v5633
        %v5650 = vadd.f32 %v4054, %v5634
        %v5651 = vadd.f32 %v4055, %v5635
        %v5652 = vadd.f32 %v4056, %v5636
        %v5653 = vadd.f32 %v4057, %v5637
        %v5654 = vadd.f32 %v4058, %v5638
        %v5655 = vadd.f32 %v4059, %v5639
        %v5656 = vxor.u32 %v5648, 2147483648
        %v5657 = vxor.u32 %v5652, 2147483648
        %v5658 = vmul.f32 %v5656, 1.442695
        %v5659 = vpow.pop %v5658
        %v5660 = vmul.f32 %v5657, 1.442695
        %v5661 = vpow.pop %v5660
        %v5662 = vadd.f32 %v5659, 1.0
        %v5663 = vadd.f32 %v5661, 1.0
        %v5664 = vrcp.pop %v5662
        %v5665 = vmul.f32 1.0, %v5664
        %v5666 = vrcp.pop %v5663
        %v5667 = vmul.f32 1.0, %v5666
        %v5668 = vxor.u32 %v5649, 2147483648
        %v5669 = vxor.u32 %v5653, 2147483648
        %v5670 = vmul.f32 %v5668, 1.442695
        %v5671 = vpow.pop %v5670
        %v5672 = vmul.f32 %v5669, 1.442695
        %v5673 = vpow.pop %v5672
        %v5674 = vadd.f32 %v5671, 1.0
        %v5675 = vadd.f32 %v5673, 1.0
        %v5676 = vrcp.pop %v5674
        %v5677 = vmul.f32 1.0, %v5676
        %v5678 = vrcp.pop %v5675
        %v5679 = vmul.f32 1.0, %v5678
        %v5680 = vtanh.pop %v5650
        %v5681 = vtanh.pop %v5654
        %v5682 = vxor.u32 %v5651, 2147483648
        %v5683 = vxor.u32 %v5655, 2147483648
        %v5684 = vmul.f32 %v5682, 1.442695
        %v5685 = vpow.pop %v5684
        %v5686 = vmul.f32 %v5683, 1.442695
        %v5687 = vpow.pop %v5686
        %v5688 = vadd.f32 %v5685, 1.0
        %v5689 = vadd.f32 %v5687, 1.0
        %v5690 = vrcp.pop %v5688
        %v5691 = vmul.f32 1.0, %v5690
        %v5692 = vrcp.pop %v5689
        %v5693 = vmul.f32 1.0, %v5692
        %v5696 = vrot.slane %v5433, 7
        %v5697 = vrot.slane %v5434, 7
        %v5700 = vmul.f32 %v5677, %v5696
        %v5701 = vmul.f32 %v5679, %v5697
        %v5702 = vmul.f32 %v5665, %v5680
        %v5703 = vmul.f32 %v5667, %v5681
        %v5704 = vadd.f32 %v5700, %v5702
        %v5705 = vadd.f32 %v5701, %v5703
        %v5706 = vtanh.pop %v5704
        %v5707 = vtanh.pop %v5705
        %v5708 = vmul.f32 %v5691, %v5706
        %v5709 = vmul.f32 %v5693, %v5707
        %v5710 = vmul.f32 %v5708, %v4344
        %v5711 = vmul.f32 %v5709, %v4344
        %v5714 = vrot.slane %v5711, 7
        %vm5715 = vcmask 1046534
        %v5716 = vsel %vm5715, %v5714, %v5710
        %vm5718 = vcmask 1046533
        %v5719 = vsel %vm5718, %v5716, 0.0
        %5720 = vadd.xlane.f32.xlu0 %v5719
        %v5721 = vpop.xlane.xlu0 %5720
        %v5722 = vadd.f32 %v5721, %v4362
        %v5724 = vcombine.high %v5722, %v5722
        %v5726 = vunpack.c.l.s4 1966171168
        %v5727 = vunpack.c.0.s8 %v5726
        %v5728 = vlaneseq
        %v5729 = vshrl.u32 %v5728, 7
        %v5730 = vsub.s32 %v5727, %v5729
        %v5731 = vrot.slane %v5724, %v5730
        %v5732 = vcombine.high %v5731, %v5731
        %v5734 = vunpack.c.l.s4 1966171168
        %v5735 = vunpack.c.0.s8 %v5734
        %v5736 = vlaneseq
        %v5737 = vshrl.u32 %v5736, 7
        %v5738 = vsub.s32 %v5735, %v5737
        %v5739 = vrot.slane %v5731, %v5738
        %v5741 = vunpack.c.l.s4 1966171168
        %v5742 = vunpack.c.0.s8 %v5741
        %v5743 = vlaneseq
        %v5744 = vshrl.u32 %v5743, 7
        %v5745 = vsub.s32 %v5742, %v5744
        %v5746 = vrot.slane %v5732, %v5745
        %v5747 = vcombine.high %v5739, %v5739
        %5750 = vst.msk [vmem:[%s544 + $0x5] sm:$0x1] %vm4390, %v5746
        %5751 = vst.msk [vmem:[%s544 + $0xd] sm:$0x1] %vm4390, %v5747
        %v5754 = vrot.slane %v5708, 5
        %v5755 = vrot.slane %v5709, 4
        %v5756 = vsel %vm4351, %v5755, %v5754
        %5758 = vmatprep.subr.mxu0 %v4061
        %5759 = vmatpush1.msra.mxu0 %v4060
        %5760 = vmatprep.subr.mxu0 %v4065
        %5761 = vmatpush1.msra.mxu0 %v4064
        %5762 = vmatprep.subr.mxu0 %v4069
        %5763 = vmatpush1.msra.mxu0 %v4068
        %5764 = vmatprep.subr.mxu0 %v4073
        %5765 = vmatpush1.msra.mxu0 %v4072
        %5766 = vmatprep.subr.mxu0 %v4077
        %5767 = vmatpush1.msra.mxu0 %v4076
        %5768 = vmatprep.subr.mxu0 %v4081
        %5769 = vmatpush1.msra.mxu0 %v4080
        %5770 = vmatprep.subr.mxu0 %v4085
        %5771 = vmatpush1.msra.mxu0 %v4084
        %5772 = vmatprep.subr.mxu0 %v4089
        %5773 = vmatpush1.msra.mxu0 %v4088
        %5774 = vmatprep.subr.mxu0 %v4093
        %5775 = vmatpush1.msra.mxu0 %v4092
        %5776 = vmatprep.subr.mxu0 %v4097
        %5777 = vmatpush1.msra.mxu0 %v4096
        %5778 = vmatprep.subr.mxu0 %v4101
        %5779 = vmatpush1.msra.mxu0 %v4100
        %5780 = vmatprep.subr.mxu0 %v4105
        %5781 = vmatpush1.msra.mxu0 %v4104
        %5782 = vmatprep.subr.mxu0 %v4109
        %5783 = vmatpush1.msra.mxu0 %v4108
        %5784 = vmatprep.subr.mxu0 %v4113
        %5785 = vmatpush1.msra.mxu0 %v4112
        %5786 = vmatprep.subr.mxu0 %v4117
        %5787 = vmatpush1.msra.mxu0 %v4116
        %5788 = vmatprep.subr.mxu0 %v4121
        %5789 = vmatpush1.msra.mxu0 %v4120
        %5790 = vmatprep.subr.mxu0 0.0
        %5791 = vmatpush1.msra.mxu0 0.0
        %5792 = vmatprep.subr.mxu0 0.0
        %5793 = vmatpush1.msra.mxu0 0.0
        %5794 = vmatprep.subr.mxu0 0.0
        %5795 = vmatpush1.msra.mxu0 0.0
        %5796 = vmatprep.subr.mxu0 0.0
        %5797 = vmatpush1.msra.mxu0 0.0
        %5798 = vmatprep.subr.mxu0 0.0
        %5799 = vmatpush1.msra.mxu0 0.0
        %5800 = vmatprep.subr.mxu0 0.0
        %5801 = vmatpush1.msra.mxu0 0.0
        %5802 = vmatprep.subr.mxu0 0.0
        %5803 = vmatpush1.msra.mxu0 0.0
        %5804 = vmatprep.subr.mxu0 0.0
        %5805 = vmatpush1.msra.mxu0 0.0
        %5806 = vmatprep.subr.mxu0 0.0
        %5807 = vmatpush1.msra.mxu0 0.0
        %5808 = vmatprep.subr.mxu0 0.0
        %5809 = vmatpush1.msra.mxu0 0.0
        %5810 = vmatprep.subr.mxu0 0.0
        %5811 = vmatpush1.msra.mxu0 0.0
        %5812 = vmatprep.subr.mxu0 0.0
        %5813 = vmatpush1.msra.mxu0 0.0
        %5814 = vmatprep.subr.mxu0 0.0
        %5815 = vmatpush1.msra.mxu0 0.0
        %5816 = vmatprep.subr.mxu0 0.0
        %5817 = vmatpush1.msra.mxu0 0.0
        %5818 = vmatprep.subr.mxu0 0.0
        %5819 = vmatpush1.msra.mxu0 0.0
        %5820 = vmatprep.subr.mxu0 0.0
        %5821 = vmatpush1.msra.mxu0 0.0
        %5822 = vmatprep.mubr.f32.mxu0 0.0
        %5823 = vmatmul.mubr.f32.gmra.mrb[0].mxu0 %v5756
        %v5824 = vpop.f32.mrb[0].mxu0
        %v5825 = vadd.f32 0.0, %v5824
        %v5826 = vpop.f32.mrb[0].mxu0
        %v5827 = vadd.f32 0.0, %v5826
        %5828 = vdwg.mxu0
        %5829 = vmatprep.subr.mxu0 %v4063
        %5830 = vmatpush1.msra.mxu0 %v4062
        %5831 = vmatprep.subr.mxu0 %v4067
        %5832 = vmatpush1.msra.mxu0 %v4066
        %5833 = vmatprep.subr.mxu0 %v4071
        %5834 = vmatpush1.msra.mxu0 %v4070
        %5835 = vmatprep.subr.mxu0 %v4075
        %5836 = vmatpush1.msra.mxu0 %v4074
        %5837 = vmatprep.subr.mxu0 %v4079
        %5838 = vmatpush1.msra.mxu0 %v4078
        %5839 = vmatprep.subr.mxu0 %v4083
        %5840 = vmatpush1.msra.mxu0 %v4082
        %5841 = vmatprep.subr.mxu0 %v4087
        %5842 = vmatpush1.msra.mxu0 %v4086
        %5843 = vmatprep.subr.mxu0 %v4091
        %5844 = vmatpush1.msra.mxu0 %v4090
        %5845 = vmatprep.subr.mxu0 %v4095
        %5846 = vmatpush1.msra.mxu0 %v4094
        %5847 = vmatprep.subr.mxu0 %v4099
        %5848 = vmatpush1.msra.mxu0 %v4098
        %5849 = vmatprep.subr.mxu0 %v4103
        %5850 = vmatpush1.msra.mxu0 %v4102
        %5851 = vmatprep.subr.mxu0 %v4107
        %5852 = vmatpush1.msra.mxu0 %v4106
        %5853 = vmatprep.subr.mxu0 %v4111
        %5854 = vmatpush1.msra.mxu0 %v4110
        %5855 = vmatprep.subr.mxu0 %v4115
        %5856 = vmatpush1.msra.mxu0 %v4114
        %5857 = vmatprep.subr.mxu0 %v4119
        %5858 = vmatpush1.msra.mxu0 %v4118
        %5859 = vmatprep.subr.mxu0 %v4123
        %5860 = vmatpush1.msra.mxu0 %v4122
        %5861 = vmatprep.subr.mxu0 0.0
        %5862 = vmatpush1.msra.mxu0 0.0
        %5863 = vmatprep.subr.mxu0 0.0
        %5864 = vmatpush1.msra.mxu0 0.0
        %5865 = vmatprep.subr.mxu0 0.0
        %5866 = vmatpush1.msra.mxu0 0.0
        %5867 = vmatprep.subr.mxu0 0.0
        %5868 = vmatpush1.msra.mxu0 0.0
        %5869 = vmatprep.subr.mxu0 0.0
        %5870 = vmatpush1.msra.mxu0 0.0
        %5871 = vmatprep.subr.mxu0 0.0
        %5872 = vmatpush1.msra.mxu0 0.0
        %5873 = vmatprep.subr.mxu0 0.0
        %5874 = vmatpush1.msra.mxu0 0.0
        %5875 = vmatprep.subr.mxu0 0.0
        %5876 = vmatpush1.msra.mxu0 0.0
        %5877 = vmatprep.subr.mxu0 0.0
        %5878 = vmatpush1.msra.mxu0 0.0
        %5879 = vmatprep.subr.mxu0 0.0
        %5880 = vmatpush1.msra.mxu0 0.0
        %5881 = vmatprep.subr.mxu0 0.0
        %5882 = vmatpush1.msra.mxu0 0.0
        %5883 = vmatprep.subr.mxu0 0.0
        %5884 = vmatpush1.msra.mxu0 0.0
        %5885 = vmatprep.subr.mxu0 0.0
        %5886 = vmatpush1.msra.mxu0 0.0
        %5887 = vmatprep.subr.mxu0 0.0
        %5888 = vmatpush1.msra.mxu0 0.0
        %5889 = vmatprep.subr.mxu0 0.0
        %5890 = vmatpush1.msra.mxu0 0.0
        %5891 = vmatprep.subr.mxu0 0.0
        %5892 = vmatpush1.msra.mxu0 0.0
        %5893 = vmatprep.mubr.f32.mxu0 0.0
        %5894 = vmatmul.mubr.f32.gmra.mrb[0].mxu0 %v5756
        %v5895 = vpop.f32.mrb[0].mxu0
        %v5896 = vadd.f32 0.0, %v5895
        %v5897 = vpop.f32.mrb[0].mxu0
        %v5898 = vadd.f32 0.0, %v5897
        %5899 = vdwg.mxu0
        %v5904 = vrot.slane %v5825, 2
        %v5905 = vrot.slane %v5827, 2
        %v5906 = vrot.slane %v5896, 2
        %v5907 = vrot.slane %v5898, 2
        %v5908 = vrot.slane %v5825, 3
        %v5909 = vrot.slane %v5827, 3
        %v5910 = vrot.slane %v5896, 3
        %v5911 = vrot.slane %v5898, 3
        %v5920 = vadd.f32 %v4052, %v5904
        %v5921 = vadd.f32 %v4053, %v5905
        %v5922 = vadd.f32 %v4054, %v5906
        %v5923 = vadd.f32 %v4055, %v5907
        %v5924 = vadd.f32 %v4056, %v5908
        %v5925 = vadd.f32 %v4057, %v5909
        %v5926 = vadd.f32 %v4058, %v5910
        %v5927 = vadd.f32 %v4059, %v5911
        %v5928 = vxor.u32 %v5920, 2147483648
        %v5929 = vxor.u32 %v5924, 2147483648
        %v5930 = vmul.f32 %v5928, 1.442695
        %v5931 = vpow.pop %v5930
        %v5932 = vmul.f32 %v5929, 1.442695
        %v5933 = vpow.pop %v5932
        %v5934 = vadd.f32 %v5931, 1.0
        %v5935 = vadd.f32 %v5933, 1.0
        %v5936 = vrcp.pop %v5934
        %v5937 = vmul.f32 1.0, %v5936
        %v5938 = vrcp.pop %v5935
        %v5939 = vmul.f32 1.0, %v5938
        %v5940 = vxor.u32 %v5921, 2147483648
        %v5941 = vxor.u32 %v5925, 2147483648
        %v5942 = vmul.f32 %v5940, 1.442695
        %v5943 = vpow.pop %v5942
        %v5944 = vmul.f32 %v5941, 1.442695
        %v5945 = vpow.pop %v5944
        %v5946 = vadd.f32 %v5943, 1.0
        %v5947 = vadd.f32 %v5945, 1.0
        %v5948 = vrcp.pop %v5946
        %v5949 = vmul.f32 1.0, %v5948
        %v5950 = vrcp.pop %v5947
        %v5951 = vmul.f32 1.0, %v5950
        %v5952 = vtanh.pop %v5922
        %v5953 = vtanh.pop %v5926
        %v5954 = vxor.u32 %v5923, 2147483648
        %v5955 = vxor.u32 %v5927, 2147483648
        %v5956 = vmul.f32 %v5954, 1.442695
        %v5957 = vpow.pop %v5956
        %v5958 = vmul.f32 %v5955, 1.442695
        %v5959 = vpow.pop %v5958
        %v5960 = vadd.f32 %v5957, 1.0
        %v5961 = vadd.f32 %v5959, 1.0
        %v5962 = vrcp.pop %v5960
        %v5963 = vmul.f32 1.0, %v5962
        %v5964 = vrcp.pop %v5961
        %v5965 = vmul.f32 1.0, %v5964
        %v5968 = vrot.slane %v5704, 7
        %v5969 = vrot.slane %v5705, 7
        %v5972 = vmul.f32 %v5949, %v5968
        %v5973 = vmul.f32 %v5951, %v5969
        %v5974 = vmul.f32 %v5937, %v5952
        %v5975 = vmul.f32 %v5939, %v5953
        %v5976 = vadd.f32 %v5972, %v5974
        %v5977 = vadd.f32 %v5973, %v5975
        %v5978 = vtanh.pop %v5976
        %v5979 = vtanh.pop %v5977
        %v5980 = vmul.f32 %v5963, %v5978
        %v5981 = vmul.f32 %v5965, %v5979
        %v5982 = vmul.f32 %v5980, %v4344
        %v5983 = vmul.f32 %v5981, %v4344
        %v5986 = vrot.slane %v5983, 7
        %vm5987 = vcmask 1047559
        %v5988 = vsel %vm5987, %v5986, %v5982
        %vm5990 = vcmask 1047558
        %v5991 = vsel %vm5990, %v5988, 0.0
        %5992 = vadd.xlane.f32.xlu0 %v5991
        %v5993 = vpop.xlane.xlu0 %5992
        %v5994 = vadd.f32 %v5993, %v4362
        %v5996 = vcombine.high %v5994, %v5994
        %v5998 = vunpack.c.l.s4 1966171168
        %v5999 = vunpack.c.0.s8 %v5998
        %v6000 = vlaneseq
        %v6001 = vshrl.u32 %v6000, 7
        %v6002 = vsub.s32 %v5999, %v6001
        %v6003 = vrot.slane %v5996, %v6002
        %v6004 = vcombine.high %v6003, %v6003
        %v6006 = vunpack.c.l.s4 1966171168
        %v6007 = vunpack.c.0.s8 %v6006
        %v6008 = vlaneseq
        %v6009 = vshrl.u32 %v6008, 7
        %v6010 = vsub.s32 %v6007, %v6009
        %v6011 = vrot.slane %v6003, %v6010
        %v6013 = vunpack.c.l.s4 1966171168
        %v6014 = vunpack.c.0.s8 %v6013
        %v6015 = vlaneseq
        %v6016 = vshrl.u32 %v6015, 7
        %v6017 = vsub.s32 %v6014, %v6016
        %v6018 = vrot.slane %v6004, %v6017
        %v6019 = vcombine.high %v6011, %v6011
        %v6020 = vcombine.high %v6018, %v6018
        %6023 = vst.msk [vmem:[%s544 + $0x6] sm:$0x1] %vm4390, %v6019
        %6024 = vst.msk [vmem:[%s544 + $0xe] sm:$0x1] %vm4390, %v6020
        %v6027 = vrot.slane %v5980, 6
        %v6028 = vrot.slane %v5981, 5
        %v6029 = vsel %vm4351, %v6028, %v6027
        %6031 = vmatprep.subr.mxu0 %v4061
        %6032 = vmatpush1.msra.mxu0 %v4060
        %6033 = vmatprep.subr.mxu0 %v4065
        %6034 = vmatpush1.msra.mxu0 %v4064
        %6035 = vmatprep.subr.mxu0 %v4069
        %6036 = vmatpush1.msra.mxu0 %v4068
        %6037 = vmatprep.subr.mxu0 %v4073
        %6038 = vmatpush1.msra.mxu0 %v4072
        %6039 = vmatprep.subr.mxu0 %v4077
        %6040 = vmatpush1.msra.mxu0 %v4076
        %6041 = vmatprep.subr.mxu0 %v4081
        %6042 = vmatpush1.msra.mxu0 %v4080
        %6043 = vmatprep.subr.mxu0 %v4085
        %6044 = vmatpush1.msra.mxu0 %v4084
        %6045 = vmatprep.subr.mxu0 %v4089
        %6046 = vmatpush1.msra.mxu0 %v4088
        %6047 = vmatprep.subr.mxu0 %v4093
        %6048 = vmatpush1.msra.mxu0 %v4092
        %6049 = vmatprep.subr.mxu0 %v4097
        %6050 = vmatpush1.msra.mxu0 %v4096
        %6051 = vmatprep.subr.mxu0 %v4101
        %6052 = vmatpush1.msra.mxu0 %v4100
        %6053 = vmatprep.subr.mxu0 %v4105
        %6054 = vmatpush1.msra.mxu0 %v4104
        %6055 = vmatprep.subr.mxu0 %v4109
        %6056 = vmatpush1.msra.mxu0 %v4108
        %6057 = vmatprep.subr.mxu0 %v4113
        %6058 = vmatpush1.msra.mxu0 %v4112
        %6059 = vmatprep.subr.mxu0 %v4117
        %6060 = vmatpush1.msra.mxu0 %v4116
        %6061 = vmatprep.subr.mxu0 %v4121
        %6062 = vmatpush1.msra.mxu0 %v4120
        %6063 = vmatprep.subr.mxu0 0.0
        %6064 = vmatpush1.msra.mxu0 0.0
        %6065 = vmatprep.subr.mxu0 0.0
        %6066 = vmatpush1.msra.mxu0 0.0
        %6067 = vmatprep.subr.mxu0 0.0
        %6068 = vmatpush1.msra.mxu0 0.0
        %6069 = vmatprep.subr.mxu0 0.0
        %6070 = vmatpush1.msra.mxu0 0.0
        %6071 = vmatprep.subr.mxu0 0.0
        %6072 = vmatpush1.msra.mxu0 0.0
        %6073 = vmatprep.subr.mxu0 0.0
        %6074 = vmatpush1.msra.mxu0 0.0
        %6075 = vmatprep.subr.mxu0 0.0
        %6076 = vmatpush1.msra.mxu0 0.0
        %6077 = vmatprep.subr.mxu0 0.0
        %6078 = vmatpush1.msra.mxu0 0.0
        %6079 = vmatprep.subr.mxu0 0.0
        %6080 = vmatpush1.msra.mxu0 0.0
        %6081 = vmatprep.subr.mxu0 0.0
        %6082 = vmatpush1.msra.mxu0 0.0
        %6083 = vmatprep.subr.mxu0 0.0
        %6084 = vmatpush1.msra.mxu0 0.0
        %6085 = vmatprep.subr.mxu0 0.0
        %6086 = vmatpush1.msra.mxu0 0.0
        %6087 = vmatprep.subr.mxu0 0.0
        %6088 = vmatpush1.msra.mxu0 0.0
        %6089 = vmatprep.subr.mxu0 0.0
        %6090 = vmatpush1.msra.mxu0 0.0
        %6091 = vmatprep.subr.mxu0 0.0
        %6092 = vmatpush1.msra.mxu0 0.0
        %6093 = vmatprep.subr.mxu0 0.0
        %6094 = vmatpush1.msra.mxu0 0.0
        %6095 = vmatprep.mubr.f32.mxu0 0.0
        %6096 = vmatmul.mubr.f32.gmra.mrb[0].mxu0 %v6029
        %v6097 = vpop.f32.mrb[0].mxu0
        %v6098 = vadd.f32 0.0, %v6097
        %v6099 = vpop.f32.mrb[0].mxu0
        %v6100 = vadd.f32 0.0, %v6099
        %6101 = vdwg.mxu0
        %6102 = vmatprep.subr.mxu0 %v4063
        %6103 = vmatpush1.msra.mxu0 %v4062
        %6104 = vmatprep.subr.mxu0 %v4067
        %6105 = vmatpush1.msra.mxu0 %v4066
        %6106 = vmatprep.subr.mxu0 %v4071
        %6107 = vmatpush1.msra.mxu0 %v4070
        %6108 = vmatprep.subr.mxu0 %v4075
        %6109 = vmatpush1.msra.mxu0 %v4074
        %6110 = vmatprep.subr.mxu0 %v4079
        %6111 = vmatpush1.msra.mxu0 %v4078
        %6112 = vmatprep.subr.mxu0 %v4083
        %6113 = vmatpush1.msra.mxu0 %v4082
        %6114 = vmatprep.subr.mxu0 %v4087
        %6115 = vmatpush1.msra.mxu0 %v4086
        %6116 = vmatprep.subr.mxu0 %v4091
        %6117 = vmatpush1.msra.mxu0 %v4090
        %6118 = vmatprep.subr.mxu0 %v4095
        %6119 = vmatpush1.msra.mxu0 %v4094
        %6120 = vmatprep.subr.mxu0 %v4099
        %6121 = vmatpush1.msra.mxu0 %v4098
        %6122 = vmatprep.subr.mxu0 %v4103
        %6123 = vmatpush1.msra.mxu0 %v4102
        %6124 = vmatprep.subr.mxu0 %v4107
        %6125 = vmatpush1.msra.mxu0 %v4106
        %6126 = vmatprep.subr.mxu0 %v4111
        %6127 = vmatpush1.msra.mxu0 %v4110
        %6128 = vmatprep.subr.mxu0 %v4115
        %6129 = vmatpush1.msra.mxu0 %v4114
        %6130 = vmatprep.subr.mxu0 %v4119
        %6131 = vmatpush1.msra.mxu0 %v4118
        %6132 = vmatprep.subr.mxu0 %v4123
        %6133 = vmatpush1.msra.mxu0 %v4122
        %6134 = vmatprep.subr.mxu0 0.0
        %6135 = vmatpush1.msra.mxu0 0.0
        %6136 = vmatprep.subr.mxu0 0.0
        %6137 = vmatpush1.msra.mxu0 0.0
        %6138 = vmatprep.subr.mxu0 0.0
        %6139 = vmatpush1.msra.mxu0 0.0
        %6140 = vmatprep.subr.mxu0 0.0
        %6141 = vmatpush1.msra.mxu0 0.0
        %6142 = vmatprep.subr.mxu0 0.0
        %6143 = vmatpush1.msra.mxu0 0.0
        %6144 = vmatprep.subr.mxu0 0.0
        %6145 = vmatpush1.msra.mxu0 0.0
        %6146 = vmatprep.subr.mxu0 0.0
        %6147 = vmatpush1.msra.mxu0 0.0
        %6148 = vmatprep.subr.mxu0 0.0
        %6149 = vmatpush1.msra.mxu0 0.0
        %6150 = vmatprep.subr.mxu0 0.0
        %6151 = vmatpush1.msra.mxu0 0.0
        %6152 = vmatprep.subr.mxu0 0.0
        %6153 = vmatpush1.msra.mxu0 0.0
        %6154 = vmatprep.subr.mxu0 0.0
        %6155 = vmatpush1.msra.mxu0 0.0
        %6156 = vmatprep.subr.mxu0 0.0
        %6157 = vmatpush1.msra.mxu0 0.0
        %6158 = vmatprep.subr.mxu0 0.0
        %6159 = vmatpush1.msra.mxu0 0.0
        %6160 = vmatprep.subr.mxu0 0.0
        %6161 = vmatpush1.msra.mxu0 0.0
        %6162 = vmatprep.subr.mxu0 0.0
        %6163 = vmatpush1.msra.mxu0 0.0
        %6164 = vmatprep.subr.mxu0 0.0
        %6165 = vmatpush1.msra.mxu0 0.0
        %6166 = vmatprep.mubr.f32.mxu0 0.0
        %6167 = vmatmul.mubr.f32.gmra.mrb[0].mxu0 %v6029
        %v6168 = vpop.f32.mrb[0].mxu0
        %v6169 = vadd.f32 0.0, %v6168
        %v6170 = vpop.f32.mrb[0].mxu0
        %v6171 = vadd.f32 0.0, %v6170
        %6172 = vdwg.mxu0
        %v6177 = vrot.slane %v6098, 1
        %v6178 = vrot.slane %v6100, 1
        %v6179 = vrot.slane %v6169, 1
        %v6180 = vrot.slane %v6171, 1
        %v6181 = vrot.slane %v6098, 2
        %v6182 = vrot.slane %v6100, 2
        %v6183 = vrot.slane %v6169, 2
        %v6184 = vrot.slane %v6171, 2
        %v6193 = vadd.f32 %v4052, %v6177
        %v6194 = vadd.f32 %v4053, %v6178
        %v6195 = vadd.f32 %v4054, %v6179
        %v6196 = vadd.f32 %v4055, %v6180
        %v6197 = vadd.f32 %v4056, %v6181
        %v6198 = vadd.f32 %v4057, %v6182
        %v6199 = vadd.f32 %v4058, %v6183
        %v6200 = vadd.f32 %v4059, %v6184
        %v6201 = vxor.u32 %v6193, 2147483648
        %v6202 = vxor.u32 %v6197, 2147483648
        %v6203 = vmul.f32 %v6201, 1.442695
        %v6204 = vpow.pop %v6203
        %v6205 = vmul.f32 %v6202, 1.442695
        %v6206 = vpow.pop %v6205
        %v6207 = vadd.f32 %v6204, 1.0
        %v6208 = vadd.f32 %v6206, 1.0
        %v6209 = vrcp.pop %v6207
        %v6210 = vmul.f32 1.0, %v6209
        %v6211 = vrcp.pop %v6208
        %v6212 = vmul.f32 1.0, %v6211
        %v6213 = vxor.u32 %v6194, 2147483648
        %v6214 = vxor.u32 %v6198, 2147483648
        %v6215 = vmul.f32 %v6213, 1.442695
        %v6216 = vpow.pop %v6215
        %v6217 = vmul.f32 %v6214, 1.442695
        %v6218 = vpow.pop %v6217
        %v6219 = vadd.f32 %v6216, 1.0
        %v6220 = vadd.f32 %v6218, 1.0
        %v6221 = vrcp.pop %v6219
        %v6222 = vmul.f32 1.0, %v6221
        %v6223 = vrcp.pop %v6220
        %v6224 = vmul.f32 1.0, %v6223
        %v6225 = vtanh.pop %v6195
        %v6226 = vtanh.pop %v6199
        %v6227 = vxor.u32 %v6196, 2147483648
        %v6228 = vxor.u32 %v6200, 2147483648
        %v6229 = vmul.f32 %v6227, 1.442695
        %v6230 = vpow.pop %v6229
        %v6231 = vmul.f32 %v6228, 1.442695
        %v6232 = vpow.pop %v6231
        %v6233 = vadd.f32 %v6230, 1.0
        %v6234 = vadd.f32 %v6232, 1.0
        %v6235 = vrcp.pop %v6233
        %v6236 = vmul.f32 1.0, %v6235
        %v6237 = vrcp.pop %v6234
        %v6238 = vmul.f32 1.0, %v6237
        %v6241 = vrot.slane %v5976, 7
        %v6242 = vrot.slane %v5977, 7
        %v6245 = vmul.f32 %v6222, %v6241
        %v6246 = vmul.f32 %v6224, %v6242
        %v6247 = vmul.f32 %v6210, %v6225
        %v6248 = vmul.f32 %v6212, %v6226
        %v6249 = vadd.f32 %v6245, %v6247
        %v6250 = vadd.f32 %v6246, %v6248
        %v6251 = vtanh.pop %v6249
        %v6252 = vtanh.pop %v6250
        %v6253 = vmul.f32 %v6236, %v6251
        %v6254 = vmul.f32 %v6238, %v6252
        %v6255 = vmul.f32 %v6253, %v4344
        %v6256 = vmul.f32 %v6254, %v4344
        %v6259 = vrot.slane %v6256, 7
        %v6262 = vsel %vm5987, %v6255, 0.0
        %6263 = vadd.xlane.f32.xlu0 %v6262
        %v6264 = vpop.xlane.xlu0 %6263
        %vm6265 = vcmask 1040384
        %v6266 = vsel %vm6265, %v6259, 0.0
        %6267 = vadd.xlane.f32.xlu0 %v6266
        %v6268 = vpop.xlane.xlu0 %6267
        %v6269 = vadd.f32 %v6264, %v4362
        %v6270 = vadd.f32 %v6268, %v4362
        %v6273 = vcombine.high %v6269, %v6269
        %v6275 = vunpack.c.l.s4 1966171168
        %v6276 = vunpack.c.0.s8 %v6275
        %v6277 = vlaneseq
        %v6278 = vshrl.u32 %v6277, 7
        %v6279 = vsub.s32 %v6276, %v6278
        %v6280 = vrot.slane %v6273, %v6279
        %v6281 = vcombine.high %v6280, %v6280
        %v6283 = vunpack.c.l.s4 1966171168
        %v6284 = vunpack.c.0.s8 %v6283
        %v6285 = vlaneseq
        %v6286 = vshrl.u32 %v6285, 7
        %v6287 = vsub.s32 %v6284, %v6286
        %v6288 = vrot.slane %v6281, %v6287
        %v6289 = vcombine.high %v6288, %v6288
        %v6291 = vunpack.c.l.s4 1966171168
        %v6292 = vunpack.c.0.s8 %v6291
        %v6293 = vlaneseq
        %v6294 = vshrl.u32 %v6293, 7
        %v6295 = vsub.s32 %v6292, %v6294
        %v6296 = vrot.slane %v6270, %v6295
        %v6298 = vunpack.c.l.s4 1966171168
        %v6299 = vunpack.c.0.s8 %v6298
        %v6300 = vlaneseq
        %v6301 = vshrl.u32 %v6300, 7
        %v6302 = vsub.s32 %v6299, %v6301
        %v6303 = vrot.slane %v6296, %v6302
        %6306 = vst.msk [vmem:[%s544 + $0x7] sm:$0x1] %vm4390, %v6289
        %6307 = vst.msk [vmem:[%s544 + $0xf] sm:$0x1] %vm4390, %v6303
        %s6308 = smul.u32 2, %s21
        %p6309 = scmp.lt.s32.totalorder %s6308, 3
        %s6310 = scalar_select %p6309, %s6308, 3
        %s6311 = smul.addr %s6310, 8
        %s6312 = scalar_lea.vmem %s8, %s6311
        // Predicated region
        $region76: #{_lambda_.1} parent=70 // pred_check
          %p6313 = pneg %p217
        $region77: #{_lambda_.1} parent=70 // pred_check_branch
          %6315 = sbr.rel (%p6313) target = $region79
        $region78: #{_lambda_.1} parent=70 // pred_region
          %s6316 = smul.u32 2, %s21
        $region79: #{_lambda_.1} parent=70 // pred_fallthru
          _
      $region71: #{_lambda_.1} parent=5 // pred_fallthru
        _
      %p6317 = scmp.le.s32.totalorder 2, %s16
      // Predicated region
      $region80: #{_lambda_.1} parent=5 // pred_check
        %p6318 = pneg %p6317
      $region81: #{_lambda_.1} parent=5 // pred_check_branch
        %6320 = sbr.rel (%p6318) target = $region83
      $region82: #{_lambda_.1} parent=5 // pred_region
        %s6321 = ssub.s32 %s16, 2
        // Predicated region
        $region84: #{_lambda_.1} parent=82 // pred_check
          %p6322 = pneg %p223
        $region85: #{_lambda_.1} parent=82 // pred_check_branch
          %6324 = sbr.rel (%p6322) target = $region87
        $region86: #{_lambda_.1} parent=82 // pred_region
          %s6325 = smul.u32 2, %s22
          %p6326 = scmp.lt.s32.totalorder %s6325, 3
          %s6327 = scalar_select %p6326, %s6325, 3
          %s6328 = smul.addr %s6327, 8
          %s6329 = scalar_lea.vmem %s8, %s6328
        $region87: #{_lambda_.1} parent=82 // pred_fallthru
          _
      $region83: #{_lambda_.1} parent=5 // pred_fallthru
        _
    $region6: #{_lambda_.1} parent=1 // loop_footer
      %s20 = sadd.s32 1, %s16
    $region7: #{_lambda_.1} parent=1 // loop_footer_branch
      %15 = sbr.rel target = $region3
    $region8: #{_lambda_.1} parent=1 // loop_exit
      _

</llo_original>
